<compile_context>
chip_gen: v7x
topology: tpu7x:2x2x1
jax: 0.10.0
libtpu: 0.0.40
codegen_flags: <defaults>
</compile_context>

<pallas_src>
import math

import jax
import jax.numpy as jnp
from jax.experimental import pallas as pl
from jax.experimental.pallas import tpu as pltpu


# ----------------------------------------------------------------------------- kernel

def _layer_norm(y, gamma, beta, eps=1e-5):
    # f32 row-wise LayerNorm (biased variance, eps=1e-5 -> matches PyTorch).
    mean = jnp.mean(y, axis=-1, keepdims=True)
    var = jnp.mean((y - mean) ** 2, axis=-1, keepdims=True)
    return (y - mean) * jax.lax.rsqrt(var + eps) * gamma + beta


def make_fused_kernel(num_layers, num_heads, batch, seqlen, ff_chunk=512):
    def kernel(x_ref, emb_w_ref, emb_b_ref,
               attn_mask_ref, head_mask_ref,
               wq_ref, bq_ref, wk_ref, bk_ref, wv_ref, bv_ref,
               wo_ref, bo_ref,
               w1_ref, b1_ref, w2_ref, b2_ref,
               g1_ref, be1_ref, g2_ref, be2_ref,
               fc_w_ref, fc_b_ref, o_ref):
        E = emb_w_ref.shape[-1]
        FF = w1_ref.shape[-1]
        hd = E // num_heads
        NL = batch * seqlen
        scale = 1.0 / math.sqrt(hd)
        fc = ff_chunk if (FF % ff_chunk == 0) else FF
        n_chunks = FF // fc

        # additive block-diagonal mask (0 within a batch element, -1e30 across batches)
        amask = attn_mask_ref[...]                                  # (NL, NL) f32

        # ---- embedding Linear (input pre-padded to 128 lanes, pre-cast to bf16) ----
        h = (jnp.dot(x_ref[...], emb_w_ref[...],
                     preferred_element_type=jnp.float32)
             + emb_b_ref[...])                                      # (NL, E) f32

        # ---- encoder layers (post-norm, ReLU FFN) -----------------------------------
        # TODO(synk): dropout omitted -- inference/eval mode (identity).
        for l in range(num_layers):
            xb = h.astype(jnp.bfloat16)

            # full-width projections: no activation lane slicing anywhere
            q = jnp.dot(xb, wq_ref[l], preferred_element_type=jnp.float32) + bq_ref[l]
            k = jnp.dot(xb, wk_ref[l], preferred_element_type=jnp.float32) + bk_ref[l]
            v = jnp.dot(xb, wv_ref[l], preferred_element_type=jnp.float32) + bv_ref[l]
            kb = k.astype(jnp.bfloat16)
            vb = v.astype(jnp.bfloat16)

            # head-batched attention via lane masks + block-diagonal batch mask
            ctx = jnp.zeros((NL, E), jnp.float32)
            for hh in range(num_heads):
                hm = head_mask_ref[hh]                              # (1, E) f32, 0/1
                qh = (q * hm).astype(jnp.bfloat16)                  # select head dims
                s = jnp.einsum('id,jd->ij', qh, kb,
                               preferred_element_type=jnp.float32) * scale + amask
                m = jnp.max(s, axis=-1, keepdims=True)
                p = jnp.exp(s - m)                                  # off-block -> exact 0
                p = p / jnp.sum(p, axis=-1, keepdims=True)          # exact normalization
                ctx = ctx + jnp.dot(p.astype(jnp.bfloat16), vb,
                                    preferred_element_type=jnp.float32) * hm

            attn = (jnp.dot(ctx.astype(jnp.bfloat16), wo_ref[l],
                            preferred_element_type=jnp.float32) + bo_ref[l])

            # residual + LayerNorm 1
            y = _layer_norm(h + attn, g1_ref[l], be1_ref[l])

            # feed-forward (ReLU), chunked over FF to keep the live intermediate small
            yb = y.astype(jnp.bfloat16)
            ff = jnp.zeros((NL, E), jnp.float32)
            for c in range(n_chunks):
                lo = c * fc
                h1 = (jnp.dot(yb, w1_ref[l, :, lo:lo + fc],
                              preferred_element_type=jnp.float32)
                      + b1_ref[l, :, lo:lo + fc])                   # (NL, fc) f32
                h1 = jnp.maximum(h1, 0.0).astype(jnp.bfloat16)
                ff = ff + jnp.dot(h1, w2_ref[l, lo:lo + fc, :],
                                  preferred_element_type=jnp.float32)
            ff = ff + b2_ref[l]

            # residual + LayerNorm 2
            h = _layer_norm(y + ff, g2_ref[l], be2_ref[l])

        # ---- PyTorch: transformer_output[:, -1, :]  == last batch element ----------
        last = h[(batch - 1) * seqlen:, :].astype(jnp.bfloat16)     # (L, E)
        o_ref[...] = (jnp.dot(last, fc_w_ref[...],
                              preferred_element_type=jnp.float32)
                      + fc_b_ref[...])                               # (L, 128) lane-dense

    return kernel


# ----------------------------------------------------------------------------- wrapper

def simple_transformer_forward(x, params):
    """x: (L, N, V) f32.  Matches PyTorch semantics (batch_first=False encoder,
    then output[:, -1, :]) -> returns (L, output_dim) f32."""
    L, N, V = x.shape
    E = params["emb_w"].shape[-1]
    Vp = params["emb_w"].shape[0]          # padded input width (128)
    Op = params["fc_w"].shape[-1]          # padded output width (128)
    O = params["output_dim"]
    num_layers = params["wq"].shape[0]
    num_heads = params["num_heads"]
    hd = E // num_heads
    NL = N * L

    # batch-major flatten, zero-pad feature dim to a full lane tile, pre-cast to bf16
    x_flat = jnp.transpose(x, (1, 0, 2)).reshape(NL, V)
    x_flat = jnp.pad(x_flat, ((0, 0), (0, Vp - V))).astype(jnp.bfloat16)

    # additive block-diagonal attention mask (batch separation)
    rb = jnp.arange(NL) // L
    attn_mask = jnp.where(rb[:, None] == rb[None, :], 0.0, -1e30).astype(jnp.float32)

    # per-head lane masks (select each head's hd columns of the E-wide activations)
    lane = jnp.arange(E)
    head_mask = ((lane[None, :] // hd) == jnp.arange(num_heads)[:, None])
    head_mask = head_mask.astype(jnp.float32).reshape(num_heads, 1, E)

    ins = [
        x_flat, params["emb_w"], params["emb_b"],
        attn_mask, head_mask,
        params["wq"], params["bq"], params["wk"], params["bk"],
        params["wv"], params["bv"], params["wo"], params["bo"],
        params["w1"], params["b1"], params["w2"], params["b2"],
        params["g1"], params["be1"], params["g2"], params["be2"],
        params["fc_w"], params["fc_b"],
    ]

    vmem_spec = pl.BlockSpec(memory_space=pltpu.MemorySpace.VMEM)

    out = pl.pallas_call(
        make_fused_kernel(num_layers, num_heads, N, L),
        out_shape=jax.ShapeDtypeStruct((L, Op), jnp.float32),
        in_specs=[vmem_spec] * len(ins),
        out_specs=vmem_spec,
    )(*ins)
    return out[:, :O]


# ----------------------------------------------------------------------------- params

def init_params(key, embed_dim, num_heads, num_layers, output_dim,
                num_time_varying_vars, dim_feedforward=2048,
                in_pad=128, out_pad=128):
    def nrm(k, shape, scale=0.05):
        return (scale * jax.random.normal(k, shape)).astype(jnp.float32)

    E, FF, V = embed_dim, dim_feedforward, num_time_varying_vars
    Vp = max(in_pad, V)
    Op = max(out_pad, output_dim)

    keys = jax.random.split(key, 2 + 6 * num_layers)
    ki = iter(keys)

    # lane-dense (zero-padded) embedding and output weights
    emb_w = jnp.zeros((Vp, E), jnp.float32).at[:V].set(nrm(next(ki), (V, E)))
    fc_w = jnp.zeros((E, Op), jnp.float32).at[:, :output_dim].set(
        nrm(next(ki), (E, output_dim)))

    params = {
        "num_heads": num_heads,
        "output_dim": output_dim,
        # weights in bf16 (matmul operands), biases / LN params in f32
        "emb_w": emb_w.astype(jnp.bfloat16),
        "emb_b": jnp.zeros((1, E), jnp.float32),
        "fc_w": fc_w.astype(jnp.bfloat16),
        "fc_b": jnp.zeros((1, Op), jnp.float32),
    }

    wq, wk, wv, wo, w1, w2 = [], [], [], [], [], []
    for _ in range(num_layers):
        wq.append(nrm(next(ki), (E, E)))
        wk.append(nrm(next(ki), (E, E)))
        wv.append(nrm(next(ki), (E, E)))
        wo.append(nrm(next(ki), (E, E)))
        w1.append(nrm(next(ki), (E, FF)))
        w2.append(nrm(next(ki), (FF, E)))

    params["wq"] = jnp.stack(wq).astype(jnp.bfloat16)       # (Lr, E, E)
    params["bq"] = jnp.zeros((num_layers, 1, E), jnp.float32)
    params["wk"] = jnp.stack(wk).astype(jnp.bfloat16)
    params["bk"] = jnp.zeros((num_layers, 1, E), jnp.float32)
    params["wv"] = jnp.stack(wv).astype(jnp.bfloat16)
    params["bv"] = jnp.zeros((num_layers, 1, E), jnp.float32)
    params["wo"] = jnp.stack(wo).astype(jnp.bfloat16)        # full-width out-proj
    params["bo"] = jnp.zeros((num_layers, 1, E), jnp.float32)
    params["w1"] = jnp.stack(w1).astype(jnp.bfloat16)        # (Lr, E, FF)
    params["b1"] = jnp.zeros((num_layers, 1, FF), jnp.float32)
    params["w2"] = jnp.stack(w2).astype(jnp.bfloat16)        # (Lr, FF, E)
    params["b2"] = jnp.zeros((num_layers, 1, E), jnp.float32)
    params["g1"] = jnp.ones((num_layers, 1, E), jnp.float32)
    params["be1"] = jnp.zeros((num_layers, 1, E), jnp.float32)
    params["g2"] = jnp.ones((num_layers, 1, E), jnp.float32)
    params["be2"] = jnp.zeros((num_layers, 1, E), jnp.float32)
    return params


# ----------------------------------------------------------------------------- main

if __name__ == "__main__":
    embed_dim = 32
    num_heads = 4
    num_layers = 2
    output_dim = 3
    num_time_varying_vars = 6

    key = jax.random.PRNGKey(0)
    kx, kp = jax.random.split(key)

    # x_time_varying: (L=8, N=4, V=6)
    x = jax.random.normal(kx, (8, 4, num_time_varying_vars), dtype=jnp.float32)

    params = init_params(kp, embed_dim, num_heads, num_layers,
                         output_dim, num_time_varying_vars)

    out = simple_transformer_forward(x, params)
    out = jax.block_until_ready(out)
    assert out.shape == (8, output_dim), out.shape
    print("KERNEL_OK")
</pallas_src>

<mosaic_0001>
module attributes {stable_mosaic.version = 11 : i64} {
  func.func @kernel(%arg0: memref<32x128xbf16, #tpu.memory_space<vmem>>, %arg1: memref<128x32xbf16, #tpu.memory_space<vmem>>, %arg2: memref<1x32xf32, #tpu.memory_space<vmem>>, %arg3: memref<32x32xf32, #tpu.memory_space<vmem>>, %arg4: memref<4x1x32xf32, #tpu.memory_space<vmem>>, %arg5: memref<2x32x32xbf16, #tpu.memory_space<vmem>>, %arg6: memref<2x1x32xf32, #tpu.memory_space<vmem>>, %arg7: memref<2x32x32xbf16, #tpu.memory_space<vmem>>, %arg8: memref<2x1x32xf32, #tpu.memory_space<vmem>>, %arg9: memref<2x32x32xbf16, #tpu.memory_space<vmem>>, %arg10: memref<2x1x32xf32, #tpu.memory_space<vmem>>, %arg11: memref<2x32x32xbf16, #tpu.memory_space<vmem>>, %arg12: memref<2x1x32xf32, #tpu.memory_space<vmem>>, %arg13: memref<2x32x2048xbf16, #tpu.memory_space<vmem>>, %arg14: memref<2x1x2048xf32, #tpu.memory_space<vmem>>, %arg15: memref<2x2048x32xbf16, #tpu.memory_space<vmem>>, %arg16: memref<2x1x32xf32, #tpu.memory_space<vmem>>, %arg17: memref<2x1x32xf32, #tpu.memory_space<vmem>>, %arg18: memref<2x1x32xf32, #tpu.memory_space<vmem>>, %arg19: memref<2x1x32xf32, #tpu.memory_space<vmem>>, %arg20: memref<2x1x32xf32, #tpu.memory_space<vmem>>, %arg21: memref<32x128xbf16, #tpu.memory_space<vmem>>, %arg22: memref<1x128xf32, #tpu.memory_space<vmem>>, %arg23: memref<8x128xf32, #tpu.memory_space<vmem>>) attributes {dimension_semantics = [], scalar_prefetch = 0 : i64, scratch_operands = 0 : i64, tpu.core_type = #tpu.core_type<tc>} {
    %c0 = arith.constant 0 : index
    %c0_0 = arith.constant 0 : index
    %0 = vector.load %arg3[%c0, %c0_0] : memref<32x32xf32, #tpu.memory_space<vmem>>, vector<32x32xf32>
    %c0_1 = arith.constant 0 : index
    %c0_2 = arith.constant 0 : index
    %1 = vector.load %arg0[%c0_1, %c0_2] : memref<32x128xbf16, #tpu.memory_space<vmem>>, vector<32x128xbf16>
    %c0_3 = arith.constant 0 : index
    %c0_4 = arith.constant 0 : index
    %2 = vector.load %arg1[%c0_3, %c0_4] : memref<128x32xbf16, #tpu.memory_space<vmem>>, vector<128x32xbf16>
    %cst = arith.constant dense<0.000000e+00> : vector<32x32xf32>
    %3 = tpu.matmul %1, %2, %cst {dimension_numbers = #tpu.dot_dimension_numbers<[1], [0], [0], [1], [0, 0, 1, 1], [], []>} : vector<32x128xbf16>, vector<128x32xbf16>, vector<32x32xf32> -> vector<32x32xf32>
    %c0_5 = arith.constant 0 : index
    %c0_6 = arith.constant 0 : index
    %4 = vector.load %arg2[%c0_5, %c0_6] : memref<1x32xf32, #tpu.memory_space<vmem>>, vector<1x32xf32>
    %5 = vector.broadcast %4 : vector<1x32xf32> to vector<32x32xf32>
    %6 = arith.addf %3, %5 : vector<32x32xf32>
    %7 = arith.truncf %6 : vector<32x32xf32> to vector<32x32xbf16>
    %c0_7 = arith.constant 0 : index
    %c0_8 = arith.constant 0 : index
    %c0_9 = arith.constant 0 : index
    %8 = vector.load %arg5[%c0_7, %c0_8, %c0_9] : memref<2x32x32xbf16, #tpu.memory_space<vmem>>, vector<1x32x32xbf16>
    %9 = vector.shape_cast %8 : vector<1x32x32xbf16> to vector<32x32xbf16>
    %cst_10 = arith.constant dense<0.000000e+00> : vector<32x32xf32>
    %10 = tpu.matmul %7, %9, %cst_10 {dimension_numbers = #tpu.dot_dimension_numbers<[1], [0], [0], [1], [0, 0, 1, 1], [], []>} : vector<32x32xbf16>, vector<32x32xbf16>, vector<32x32xf32> -> vector<32x32xf32>
    %c0_11 = arith.constant 0 : index
    %c0_12 = arith.constant 0 : index
    %c0_13 = arith.constant 0 : index
    %11 = vector.load %arg6[%c0_11, %c0_12, %c0_13] : memref<2x1x32xf32, #tpu.memory_space<vmem>>, vector<1x1x32xf32>
    %12 = vector.shape_cast %11 : vector<1x1x32xf32> to vector<1x32xf32>
    %13 = vector.broadcast %12 : vector<1x32xf32> to vector<32x32xf32>
    %14 = arith.addf %10, %13 : vector<32x32xf32>
    %c0_14 = arith.constant 0 : index
    %c0_15 = arith.constant 0 : index
    %c0_16 = arith.constant 0 : index
    %15 = vector.load %arg7[%c0_14, %c0_15, %c0_16] : memref<2x32x32xbf16, #tpu.memory_space<vmem>>, vector<1x32x32xbf16>
    %16 = vector.shape_cast %15 : vector<1x32x32xbf16> to vector<32x32xbf16>
    %cst_17 = arith.constant dense<0.000000e+00> : vector<32x32xf32>
    %17 = tpu.matmul %7, %16, %cst_17 {dimension_numbers = #tpu.dot_dimension_numbers<[1], [0], [0], [1], [0, 0, 1, 1], [], []>} : vector<32x32xbf16>, vector<32x32xbf16>, vector<32x32xf32> -> vector<32x32xf32>
    %c0_18 = arith.constant 0 : index
    %c0_19 = arith.constant 0 : index
    %c0_20 = arith.constant 0 : index
    %18 = vector.load %arg8[%c0_18, %c0_19, %c0_20] : memref<2x1x32xf32, #tpu.memory_space<vmem>>, vector<1x1x32xf32>
    %19 = vector.shape_cast %18 : vector<1x1x32xf32> to vector<1x32xf32>
    %20 = vector.broadcast %19 : vector<1x32xf32> to vector<32x32xf32>
    %21 = arith.addf %17, %20 : vector<32x32xf32>
    %c0_21 = arith.constant 0 : index
    %c0_22 = arith.constant 0 : index
    %c0_23 = arith.constant 0 : index
    %22 = vector.load %arg9[%c0_21, %c0_22, %c0_23] : memref<2x32x32xbf16, #tpu.memory_space<vmem>>, vector<1x32x32xbf16>
    %23 = vector.shape_cast %22 : vector<1x32x32xbf16> to vector<32x32xbf16>
    %cst_24 = arith.constant dense<0.000000e+00> : vector<32x32xf32>
    %24 = tpu.matmul %7, %23, %cst_24 {dimension_numbers = #tpu.dot_dimension_numbers<[1], [0], [0], [1], [0, 0, 1, 1], [], []>} : vector<32x32xbf16>, vector<32x32xbf16>, vector<32x32xf32> -> vector<32x32xf32>
    %c0_25 = arith.constant 0 : index
    %c0_26 = arith.constant 0 : index
    %c0_27 = arith.constant 0 : index
    %25 = vector.load %arg10[%c0_25, %c0_26, %c0_27] : memref<2x1x32xf32, #tpu.memory_space<vmem>>, vector<1x1x32xf32>
    %26 = vector.shape_cast %25 : vector<1x1x32xf32> to vector<1x32xf32>
    %27 = vector.broadcast %26 : vector<1x32xf32> to vector<32x32xf32>
    %28 = arith.addf %24, %27 : vector<32x32xf32>
    %29 = arith.truncf %21 : vector<32x32xf32> to vector<32x32xbf16>
    %30 = arith.truncf %28 : vector<32x32xf32> to vector<32x32xbf16>
    %cst_28 = arith.constant 0.000000e+00 : f32
    %31 = vector.broadcast %cst_28 : f32 to vector<32x32xf32>
    %c0_29 = arith.constant 0 : index
    %c0_30 = arith.constant 0 : index
    %c0_31 = arith.constant 0 : index
    %32 = vector.load %arg4[%c0_29, %c0_30, %c0_31] : memref<4x1x32xf32, #tpu.memory_space<vmem>>, vector<1x1x32xf32>
    %33 = vector.shape_cast %32 : vector<1x1x32xf32> to vector<1x32xf32>
    %34 = vector.broadcast %33 : vector<1x32xf32> to vector<32x32xf32>
    %35 = arith.mulf %14, %34 : vector<32x32xf32>
    %36 = arith.truncf %35 : vector<32x32xf32> to vector<32x32xbf16>
    "tpu.trace_start"() <{level = 10 : i32, message = "id,jd->ij"}> : () -> ()
    %cst_32 = arith.constant dense<0.000000e+00> : vector<32x32xf32>
    %37 = tpu.matmul %36, %29, %cst_32 {dimension_numbers = #tpu.dot_dimension_numbers<[1], [1], [0], [0], [0, 0, 1, 0], [], []>} : vector<32x32xbf16>, vector<32x32xbf16>, vector<32x32xf32> -> vector<32x32xf32>
    "tpu.trace_stop"() : () -> ()
    %cst_33 = arith.constant 0.353553385 : f32
    %38 = vector.broadcast %cst_33 : f32 to vector<32x32xf32>
    %39 = arith.mulf %37, %38 : vector<32x32xf32>
    %40 = arith.addf %39, %0 : vector<32x32xf32>
    %cst_34 = arith.constant dense<0xFF800000> : vector<32xf32>
    %41 = vector.multi_reduction <maximumf>, %40, %cst_34 [1] : vector<32x32xf32> to vector<32xf32>
    %42 = vector.shape_cast %41 : vector<32xf32> to vector<32x1xf32>
    %43 = vector.broadcast %42 : vector<32x1xf32> to vector<32x32xf32>
    %44 = arith.subf %40, %43 : vector<32x32xf32>
    %45 = math.exp %44 : vector<32x32xf32>
    %cst_35 = arith.constant dense<0.000000e+00> : vector<32xf32>
    %46 = vector.multi_reduction <add>, %45, %cst_35 [1] : vector<32x32xf32> to vector<32xf32>
    %47 = vector.shape_cast %46 : vector<32xf32> to vector<32x1xf32>
    %48 = vector.broadcast %47 : vector<32x1xf32> to vector<32x32xf32>
    %49 = arith.divf %45, %48 : vector<32x32xf32>
    %50 = arith.truncf %49 : vector<32x32xf32> to vector<32x32xbf16>
    %cst_36 = arith.constant dense<0.000000e+00> : vector<32x32xf32>
    %51 = tpu.matmul %50, %30, %cst_36 {dimension_numbers = #tpu.dot_dimension_numbers<[1], [0], [0], [1], [0, 0, 1, 1], [], []>} : vector<32x32xbf16>, vector<32x32xbf16>, vector<32x32xf32> -> vector<32x32xf32>
    %52 = vector.broadcast %33 : vector<1x32xf32> to vector<32x32xf32>
    %53 = arith.mulf %51, %52 : vector<32x32xf32>
    %54 = arith.addf %31, %53 : vector<32x32xf32>
    %c1 = arith.constant 1 : index
    %c0_37 = arith.constant 0 : index
    %c0_38 = arith.constant 0 : index
    %55 = vector.load %arg4[%c1, %c0_37, %c0_38] : memref<4x1x32xf32, #tpu.memory_space<vmem>>, vector<1x1x32xf32>
    %56 = vector.shape_cast %55 : vector<1x1x32xf32> to vector<1x32xf32>
    %57 = vector.broadcast %56 : vector<1x32xf32> to vector<32x32xf32>
    %58 = arith.mulf %14, %57 : vector<32x32xf32>
    %59 = arith.truncf %58 : vector<32x32xf32> to vector<32x32xbf16>
    "tpu.trace_start"() <{level = 10 : i32, message = "id,jd->ij"}> : () -> ()
    %cst_39 = arith.constant dense<0.000000e+00> : vector<32x32xf32>
    %60 = tpu.matmul %59, %29, %cst_39 {dimension_numbers = #tpu.dot_dimension_numbers<[1], [1], [0], [0], [0, 0, 1, 0], [], []>} : vector<32x32xbf16>, vector<32x32xbf16>, vector<32x32xf32> -> vector<32x32xf32>
    "tpu.trace_stop"() : () -> ()
    %cst_40 = arith.constant 0.353553385 : f32
    %61 = vector.broadcast %cst_40 : f32 to vector<32x32xf32>
    %62 = arith.mulf %60, %61 : vector<32x32xf32>
    %63 = arith.addf %62, %0 : vector<32x32xf32>
    %cst_41 = arith.constant dense<0xFF800000> : vector<32xf32>
    %64 = vector.multi_reduction <maximumf>, %63, %cst_41 [1] : vector<32x32xf32> to vector<32xf32>
    %65 = vector.shape_cast %64 : vector<32xf32> to vector<32x1xf32>
    %66 = vector.broadcast %65 : vector<32x1xf32> to vector<32x32xf32>
    %67 = arith.subf %63, %66 : vector<32x32xf32>
    %68 = math.exp %67 : vector<32x32xf32>
    %cst_42 = arith.constant dense<0.000000e+00> : vector<32xf32>
    %69 = vector.multi_reduction <add>, %68, %cst_42 [1] : vector<32x32xf32> to vector<32xf32>
    %70 = vector.shape_cast %69 : vector<32xf32> to vector<32x1xf32>
    %71 = vector.broadcast %70 : vector<32x1xf32> to vector<32x32xf32>
    %72 = arith.divf %68, %71 : vector<32x32xf32>
    %73 = arith.truncf %72 : vector<32x32xf32> to vector<32x32xbf16>
    %cst_43 = arith.constant dense<0.000000e+00> : vector<32x32xf32>
    %74 = tpu.matmul %73, %30, %cst_43 {dimension_numbers = #tpu.dot_dimension_numbers<[1], [0], [0], [1], [0, 0, 1, 1], [], []>} : vector<32x32xbf16>, vector<32x32xbf16>, vector<32x32xf32> -> vector<32x32xf32>
    %75 = vector.broadcast %56 : vector<1x32xf32> to vector<32x32xf32>
    %76 = arith.mulf %74, %75 : vector<32x32xf32>
    %77 = arith.addf %54, %76 : vector<32x32xf32>
    %c2 = arith.constant 2 : index
    %c0_44 = arith.constant 0 : index
    %c0_45 = arith.constant 0 : index
    %78 = vector.load %arg4[%c2, %c0_44, %c0_45] : memref<4x1x32xf32, #tpu.memory_space<vmem>>, vector<1x1x32xf32>
    %79 = vector.shape_cast %78 : vector<1x1x32xf32> to vector<1x32xf32>
    %80 = vector.broadcast %79 : vector<1x32xf32> to vector<32x32xf32>
    %81 = arith.mulf %14, %80 : vector<32x32xf32>
    %82 = arith.truncf %81 : vector<32x32xf32> to vector<32x32xbf16>
    "tpu.trace_start"() <{level = 10 : i32, message = "id,jd->ij"}> : () -> ()
    %cst_46 = arith.constant dense<0.000000e+00> : vector<32x32xf32>
    %83 = tpu.matmul %82, %29, %cst_46 {dimension_numbers = #tpu.dot_dimension_numbers<[1], [1], [0], [0], [0, 0, 1, 0], [], []>} : vector<32x32xbf16>, vector<32x32xbf16>, vector<32x32xf32> -> vector<32x32xf32>
    "tpu.trace_stop"() : () -> ()
    %cst_47 = arith.constant 0.353553385 : f32
    %84 = vector.broadcast %cst_47 : f32 to vector<32x32xf32>
    %85 = arith.mulf %83, %84 : vector<32x32xf32>
    %86 = arith.addf %85, %0 : vector<32x32xf32>
    %cst_48 = arith.constant dense<0xFF800000> : vector<32xf32>
    %87 = vector.multi_reduction <maximumf>, %86, %cst_48 [1] : vector<32x32xf32> to vector<32xf32>
    %88 = vector.shape_cast %87 : vector<32xf32> to vector<32x1xf32>
    %89 = vector.broadcast %88 : vector<32x1xf32> to vector<32x32xf32>
    %90 = arith.subf %86, %89 : vector<32x32xf32>
    %91 = math.exp %90 : vector<32x32xf32>
    %cst_49 = arith.constant dense<0.000000e+00> : vector<32xf32>
    %92 = vector.multi_reduction <add>, %91, %cst_49 [1] : vector<32x32xf32> to vector<32xf32>
    %93 = vector.shape_cast %92 : vector<32xf32> to vector<32x1xf32>
    %94 = vector.broadcast %93 : vector<32x1xf32> to vector<32x32xf32>
    %95 = arith.divf %91, %94 : vector<32x32xf32>
    %96 = arith.truncf %95 : vector<32x32xf32> to vector<32x32xbf16>
    %cst_50 = arith.constant dense<0.000000e+00> : vector<32x32xf32>
    %97 = tpu.matmul %96, %30, %cst_50 {dimension_numbers = #tpu.dot_dimension_numbers<[1], [0], [0], [1], [0, 0, 1, 1], [], []>} : vector<32x32xbf16>, vector<32x32xbf16>, vector<32x32xf32> -> vector<32x32xf32>
    %98 = vector.broadcast %79 : vector<1x32xf32> to vector<32x32xf32>
    %99 = arith.mulf %97, %98 : vector<32x32xf32>
    %100 = arith.addf %77, %99 : vector<32x32xf32>
    %c3 = arith.constant 3 : index
    %c0_51 = arith.constant 0 : index
    %c0_52 = arith.constant 0 : index
    %101 = vector.load %arg4[%c3, %c0_51, %c0_52] : memref<4x1x32xf32, #tpu.memory_space<vmem>>, vector<1x1x32xf32>
    %102 = vector.shape_cast %101 : vector<1x1x32xf32> to vector<1x32xf32>
    %103 = vector.broadcast %102 : vector<1x32xf32> to vector<32x32xf32>
    %104 = arith.mulf %14, %103 : vector<32x32xf32>
    %105 = arith.truncf %104 : vector<32x32xf32> to vector<32x32xbf16>
    "tpu.trace_start"() <{level = 10 : i32, message = "id,jd->ij"}> : () -> ()
    %cst_53 = arith.constant dense<0.000000e+00> : vector<32x32xf32>
    %106 = tpu.matmul %105, %29, %cst_53 {dimension_numbers = #tpu.dot_dimension_numbers<[1], [1], [0], [0], [0, 0, 1, 0], [], []>} : vector<32x32xbf16>, vector<32x32xbf16>, vector<32x32xf32> -> vector<32x32xf32>
    "tpu.trace_stop"() : () -> ()
    %cst_54 = arith.constant 0.353553385 : f32
    %107 = vector.broadcast %cst_54 : f32 to vector<32x32xf32>
    %108 = arith.mulf %106, %107 : vector<32x32xf32>
    %109 = arith.addf %108, %0 : vector<32x32xf32>
    %cst_55 = arith.constant dense<0xFF800000> : vector<32xf32>
    %110 = vector.multi_reduction <maximumf>, %109, %cst_55 [1] : vector<32x32xf32> to vector<32xf32>
    %111 = vector.shape_cast %110 : vector<32xf32> to vector<32x1xf32>
    %112 = vector.broadcast %111 : vector<32x1xf32> to vector<32x32xf32>
    %113 = arith.subf %109, %112 : vector<32x32xf32>
    %114 = math.exp %113 : vector<32x32xf32>
    %cst_56 = arith.constant dense<0.000000e+00> : vector<32xf32>
    %115 = vector.multi_reduction <add>, %114, %cst_56 [1] : vector<32x32xf32> to vector<32xf32>
    %116 = vector.shape_cast %115 : vector<32xf32> to vector<32x1xf32>
    %117 = vector.broadcast %116 : vector<32x1xf32> to vector<32x32xf32>
    %118 = arith.divf %114, %117 : vector<32x32xf32>
    %119 = arith.truncf %118 : vector<32x32xf32> to vector<32x32xbf16>
    %cst_57 = arith.constant dense<0.000000e+00> : vector<32x32xf32>
    %120 = tpu.matmul %119, %30, %cst_57 {dimension_numbers = #tpu.dot_dimension_numbers<[1], [0], [0], [1], [0, 0, 1, 1], [], []>} : vector<32x32xbf16>, vector<32x32xbf16>, vector<32x32xf32> -> vector<32x32xf32>
    %121 = vector.broadcast %102 : vector<1x32xf32> to vector<32x32xf32>
    %122 = arith.mulf %120, %121 : vector<32x32xf32>
    %123 = arith.addf %100, %122 : vector<32x32xf32>
    %124 = arith.truncf %123 : vector<32x32xf32> to vector<32x32xbf16>
    %c0_58 = arith.constant 0 : index
    %c0_59 = arith.constant 0 : index
    %c0_60 = arith.constant 0 : index
    %125 = vector.load %arg11[%c0_58, %c0_59, %c0_60] : memref<2x32x32xbf16, #tpu.memory_space<vmem>>, vector<1x32x32xbf16>
    %126 = vector.shape_cast %125 : vector<1x32x32xbf16> to vector<32x32xbf16>
    %cst_61 = arith.constant dense<0.000000e+00> : vector<32x32xf32>
    %127 = tpu.matmul %124, %126, %cst_61 {dimension_numbers = #tpu.dot_dimension_numbers<[1], [0], [0], [1], [0, 0, 1, 1], [], []>} : vector<32x32xbf16>, vector<32x32xbf16>, vector<32x32xf32> -> vector<32x32xf32>
    %c0_62 = arith.constant 0 : index
    %c0_63 = arith.constant 0 : index
    %c0_64 = arith.constant 0 : index
    %128 = vector.load %arg12[%c0_62, %c0_63, %c0_64] : memref<2x1x32xf32, #tpu.memory_space<vmem>>, vector<1x1x32xf32>
    %129 = vector.shape_cast %128 : vector<1x1x32xf32> to vector<1x32xf32>
    %130 = vector.broadcast %129 : vector<1x32xf32> to vector<32x32xf32>
    %131 = arith.addf %127, %130 : vector<32x32xf32>
    %132 = arith.addf %6, %131 : vector<32x32xf32>
    %c0_65 = arith.constant 0 : index
    %c0_66 = arith.constant 0 : index
    %c0_67 = arith.constant 0 : index
    %133 = vector.load %arg17[%c0_65, %c0_66, %c0_67] : memref<2x1x32xf32, #tpu.memory_space<vmem>>, vector<1x1x32xf32>
    %134 = vector.shape_cast %133 : vector<1x1x32xf32> to vector<1x32xf32>
    %c0_68 = arith.constant 0 : index
    %c0_69 = arith.constant 0 : index
    %c0_70 = arith.constant 0 : index
    %135 = vector.load %arg18[%c0_68, %c0_69, %c0_70] : memref<2x1x32xf32, #tpu.memory_space<vmem>>, vector<1x1x32xf32>
    %136 = vector.shape_cast %135 : vector<1x1x32xf32> to vector<1x32xf32>
    %cst_71 = arith.constant dense<0.000000e+00> : vector<32xf32>
    %137 = vector.multi_reduction <add>, %132, %cst_71 [1] : vector<32x32xf32> to vector<32xf32>
    %138 = vector.shape_cast %137 : vector<32xf32> to vector<32x1xf32>
    %cst_72 = arith.constant 3.200000e+01 : f32
    %139 = vector.broadcast %cst_72 : f32 to vector<32x1xf32>
    %140 = arith.divf %138, %139 : vector<32x1xf32>
    %141 = vector.broadcast %140 : vector<32x1xf32> to vector<32x32xf32>
    %142 = arith.subf %132, %141 : vector<32x32xf32>
    %143 = arith.mulf %142, %142 : vector<32x32xf32>
    %cst_73 = arith.constant dense<0.000000e+00> : vector<32xf32>
    %144 = vector.multi_reduction <add>, %143, %cst_73 [1] : vector<32x32xf32> to vector<32xf32>
    %145 = vector.shape_cast %144 : vector<32xf32> to vector<32x1xf32>
    %cst_74 = arith.constant 3.200000e+01 : f32
    %146 = vector.broadcast %cst_74 : f32 to vector<32x1xf32>
    %147 = arith.divf %145, %146 : vector<32x1xf32>
    %148 = vector.broadcast %140 : vector<32x1xf32> to vector<32x32xf32>
    %149 = arith.subf %132, %148 : vector<32x32xf32>
    %cst_75 = arith.constant 9.99999974E-6 : f32
    %150 = vector.broadcast %cst_75 : f32 to vector<32x1xf32>
    %151 = arith.addf %147, %150 : vector<32x1xf32>
    %152 = math.rsqrt %151 : vector<32x1xf32>
    %153 = vector.broadcast %152 : vector<32x1xf32> to vector<32x32xf32>
    %154 = arith.mulf %149, %153 : vector<32x32xf32>
    %155 = vector.broadcast %134 : vector<1x32xf32> to vector<32x32xf32>
    %156 = arith.mulf %154, %155 : vector<32x32xf32>
    %157 = vector.broadcast %136 : vector<1x32xf32> to vector<32x32xf32>
    %158 = arith.addf %156, %157 : vector<32x32xf32>
    %159 = arith.truncf %158 : vector<32x32xf32> to vector<32x32xbf16>
    %cst_76 = arith.constant 0.000000e+00 : f32
    %160 = vector.broadcast %cst_76 : f32 to vector<32x32xf32>
    %c0_77 = arith.constant 0 : index
    %c0_78 = arith.constant 0 : index
    %c0_79 = arith.constant 0 : index
    %161 = vector.load %arg13[%c0_77, %c0_78, %c0_79] : memref<2x32x2048xbf16, #tpu.memory_space<vmem>>, vector<1x32x512xbf16>
    %162 = vector.shape_cast %161 : vector<1x32x512xbf16> to vector<32x512xbf16>
    %cst_80 = arith.constant dense<0.000000e+00> : vector<32x512xf32>
    %163 = tpu.matmul %159, %162, %cst_80 {dimension_numbers = #tpu.dot_dimension_numbers<[1], [0], [0], [1], [0, 0, 1, 1], [], []>} : vector<32x32xbf16>, vector<32x512xbf16>, vector<32x512xf32> -> vector<32x512xf32>
    %c0_81 = arith.constant 0 : index
    %c0_82 = arith.constant 0 : index
    %c0_83 = arith.constant 0 : index
    %164 = vector.load %arg14[%c0_81, %c0_82, %c0_83] : memref<2x1x2048xf32, #tpu.memory_space<vmem>>, vector<1x1x512xf32>
    %165 = vector.shape_cast %164 : vector<1x1x512xf32> to vector<1x512xf32>
    %166 = vector.broadcast %165 : vector<1x512xf32> to vector<32x512xf32>
    %167 = arith.addf %163, %166 : vector<32x512xf32>
    %cst_84 = arith.constant 0.000000e+00 : f32
    %168 = vector.broadcast %cst_84 : f32 to vector<32x512xf32>
    %169 = arith.maximumf %167, %168 : vector<32x512xf32>
    %170 = arith.truncf %169 : vector<32x512xf32> to vector<32x512xbf16>
    %c0_85 = arith.constant 0 : index
    %c0_86 = arith.constant 0 : index
    %c0_87 = arith.constant 0 : index
    %171 = vector.load %arg15[%c0_85, %c0_86, %c0_87] : memref<2x2048x32xbf16, #tpu.memory_space<vmem>>, vector<1x512x32xbf16>
    %172 = vector.shape_cast %171 : vector<1x512x32xbf16> to vector<512x32xbf16>
    %cst_88 = arith.constant dense<0.000000e+00> : vector<32x32xf32>
    %173 = tpu.matmul %170, %172, %cst_88 {dimension_numbers = #tpu.dot_dimension_numbers<[1], [0], [0], [1], [0, 0, 1, 1], [], []>} : vector<32x512xbf16>, vector<512x32xbf16>, vector<32x32xf32> -> vector<32x32xf32>
    %174 = arith.addf %160, %173 : vector<32x32xf32>
    %c0_89 = arith.constant 0 : index
    %c0_90 = arith.constant 0 : index
    %c512 = arith.constant 512 : index
    %175 = vector.load %arg13[%c0_89, %c0_90, %c512] : memref<2x32x2048xbf16, #tpu.memory_space<vmem>>, vector<1x32x512xbf16>
    %176 = vector.shape_cast %175 : vector<1x32x512xbf16> to vector<32x512xbf16>
    %cst_91 = arith.constant dense<0.000000e+00> : vector<32x512xf32>
    %177 = tpu.matmul %159, %176, %cst_91 {dimension_numbers = #tpu.dot_dimension_numbers<[1], [0], [0], [1], [0, 0, 1, 1], [], []>} : vector<32x32xbf16>, vector<32x512xbf16>, vector<32x512xf32> -> vector<32x512xf32>
    %c0_92 = arith.constant 0 : index
    %c0_93 = arith.constant 0 : index
    %c512_94 = arith.constant 512 : index
    %178 = vector.load %arg14[%c0_92, %c0_93, %c512_94] : memref<2x1x2048xf32, #tpu.memory_space<vmem>>, vector<1x1x512xf32>
    %179 = vector.shape_cast %178 : vector<1x1x512xf32> to vector<1x512xf32>
    %180 = vector.broadcast %179 : vector<1x512xf32> to vector<32x512xf32>
    %181 = arith.addf %177, %180 : vector<32x512xf32>
    %cst_95 = arith.constant 0.000000e+00 : f32
    %182 = vector.broadcast %cst_95 : f32 to vector<32x512xf32>
    %183 = arith.maximumf %181, %182 : vector<32x512xf32>
    %184 = arith.truncf %183 : vector<32x512xf32> to vector<32x512xbf16>
    %c0_96 = arith.constant 0 : index
    %c512_97 = arith.constant 512 : index
    %c0_98 = arith.constant 0 : index
    %185 = vector.load %arg15[%c0_96, %c512_97, %c0_98] : memref<2x2048x32xbf16, #tpu.memory_space<vmem>>, vector<1x512x32xbf16>
    %186 = vector.shape_cast %185 : vector<1x512x32xbf16> to vector<512x32xbf16>
    %cst_99 = arith.constant dense<0.000000e+00> : vector<32x32xf32>
    %187 = tpu.matmul %184, %186, %cst_99 {dimension_numbers = #tpu.dot_dimension_numbers<[1], [0], [0], [1], [0, 0, 1, 1], [], []>} : vector<32x512xbf16>, vector<512x32xbf16>, vector<32x32xf32> -> vector<32x32xf32>
    %188 = arith.addf %174, %187 : vector<32x32xf32>
    %c0_100 = arith.constant 0 : index
    %c0_101 = arith.constant 0 : index
    %c1024 = arith.constant 1024 : index
    %189 = vector.load %arg13[%c0_100, %c0_101, %c1024] : memref<2x32x2048xbf16, #tpu.memory_space<vmem>>, vector<1x32x512xbf16>
    %190 = vector.shape_cast %189 : vector<1x32x512xbf16> to vector<32x512xbf16>
    %cst_102 = arith.constant dense<0.000000e+00> : vector<32x512xf32>
    %191 = tpu.matmul %159, %190, %cst_102 {dimension_numbers = #tpu.dot_dimension_numbers<[1], [0], [0], [1], [0, 0, 1, 1], [], []>} : vector<32x32xbf16>, vector<32x512xbf16>, vector<32x512xf32> -> vector<32x512xf32>
    %c0_103 = arith.constant 0 : index
    %c0_104 = arith.constant 0 : index
    %c1024_105 = arith.constant 1024 : index
    %192 = vector.load %arg14[%c0_103, %c0_104, %c1024_105] : memref<2x1x2048xf32, #tpu.memory_space<vmem>>, vector<1x1x512xf32>
    %193 = vector.shape_cast %192 : vector<1x1x512xf32> to vector<1x512xf32>
    %194 = vector.broadcast %193 : vector<1x512xf32> to vector<32x512xf32>
    %195 = arith.addf %191, %194 : vector<32x512xf32>
    %cst_106 = arith.constant 0.000000e+00 : f32
    %196 = vector.broadcast %cst_106 : f32 to vector<32x512xf32>
    %197 = arith.maximumf %195, %196 : vector<32x512xf32>
    %198 = arith.truncf %197 : vector<32x512xf32> to vector<32x512xbf16>
    %c0_107 = arith.constant 0 : index
    %c1024_108 = arith.constant 1024 : index
    %c0_109 = arith.constant 0 : index
    %199 = vector.load %arg15[%c0_107, %c1024_108, %c0_109] : memref<2x2048x32xbf16, #tpu.memory_space<vmem>>, vector<1x512x32xbf16>
    %200 = vector.shape_cast %199 : vector<1x512x32xbf16> to vector<512x32xbf16>
    %cst_110 = arith.constant dense<0.000000e+00> : vector<32x32xf32>
    %201 = tpu.matmul %198, %200, %cst_110 {dimension_numbers = #tpu.dot_dimension_numbers<[1], [0], [0], [1], [0, 0, 1, 1], [], []>} : vector<32x512xbf16>, vector<512x32xbf16>, vector<32x32xf32> -> vector<32x32xf32>
    %202 = arith.addf %188, %201 : vector<32x32xf32>
    %c0_111 = arith.constant 0 : index
    %c0_112 = arith.constant 0 : index
    %c1536 = arith.constant 1536 : index
    %203 = vector.load %arg13[%c0_111, %c0_112, %c1536] : memref<2x32x2048xbf16, #tpu.memory_space<vmem>>, vector<1x32x512xbf16>
    %204 = vector.shape_cast %203 : vector<1x32x512xbf16> to vector<32x512xbf16>
    %cst_113 = arith.constant dense<0.000000e+00> : vector<32x512xf32>
    %205 = tpu.matmul %159, %204, %cst_113 {dimension_numbers = #tpu.dot_dimension_numbers<[1], [0], [0], [1], [0, 0, 1, 1], [], []>} : vector<32x32xbf16>, vector<32x512xbf16>, vector<32x512xf32> -> vector<32x512xf32>
    %c0_114 = arith.constant 0 : index
    %c0_115 = arith.constant 0 : index
    %c1536_116 = arith.constant 1536 : index
    %206 = vector.load %arg14[%c0_114, %c0_115, %c1536_116] : memref<2x1x2048xf32, #tpu.memory_space<vmem>>, vector<1x1x512xf32>
    %207 = vector.shape_cast %206 : vector<1x1x512xf32> to vector<1x512xf32>
    %208 = vector.broadcast %207 : vector<1x512xf32> to vector<32x512xf32>
    %209 = arith.addf %205, %208 : vector<32x512xf32>
    %cst_117 = arith.constant 0.000000e+00 : f32
    %210 = vector.broadcast %cst_117 : f32 to vector<32x512xf32>
    %211 = arith.maximumf %209, %210 : vector<32x512xf32>
    %212 = arith.truncf %211 : vector<32x512xf32> to vector<32x512xbf16>
    %c0_118 = arith.constant 0 : index
    %c1536_119 = arith.constant 1536 : index
    %c0_120 = arith.constant 0 : index
    %213 = vector.load %arg15[%c0_118, %c1536_119, %c0_120] : memref<2x2048x32xbf16, #tpu.memory_space<vmem>>, vector<1x512x32xbf16>
    %214 = vector.shape_cast %213 : vector<1x512x32xbf16> to vector<512x32xbf16>
    %cst_121 = arith.constant dense<0.000000e+00> : vector<32x32xf32>
    %215 = tpu.matmul %212, %214, %cst_121 {dimension_numbers = #tpu.dot_dimension_numbers<[1], [0], [0], [1], [0, 0, 1, 1], [], []>} : vector<32x512xbf16>, vector<512x32xbf16>, vector<32x32xf32> -> vector<32x32xf32>
    %216 = arith.addf %202, %215 : vector<32x32xf32>
    %c0_122 = arith.constant 0 : index
    %c0_123 = arith.constant 0 : index
    %c0_124 = arith.constant 0 : index
    %217 = vector.load %arg16[%c0_122, %c0_123, %c0_124] : memref<2x1x32xf32, #tpu.memory_space<vmem>>, vector<1x1x32xf32>
    %218 = vector.shape_cast %217 : vector<1x1x32xf32> to vector<1x32xf32>
    %219 = vector.broadcast %218 : vector<1x32xf32> to vector<32x32xf32>
    %220 = arith.addf %216, %219 : vector<32x32xf32>
    %221 = arith.addf %158, %220 : vector<32x32xf32>
    %c0_125 = arith.constant 0 : index
    %c0_126 = arith.constant 0 : index
    %c0_127 = arith.constant 0 : index
    %222 = vector.load %arg19[%c0_125, %c0_126, %c0_127] : memref<2x1x32xf32, #tpu.memory_space<vmem>>, vector<1x1x32xf32>
    %223 = vector.shape_cast %222 : vector<1x1x32xf32> to vector<1x32xf32>
    %c0_128 = arith.constant 0 : index
    %c0_129 = arith.constant 0 : index
    %c0_130 = arith.constant 0 : index
    %224 = vector.load %arg20[%c0_128, %c0_129, %c0_130] : memref<2x1x32xf32, #tpu.memory_space<vmem>>, vector<1x1x32xf32>
    %225 = vector.shape_cast %224 : vector<1x1x32xf32> to vector<1x32xf32>
    %cst_131 = arith.constant dense<0.000000e+00> : vector<32xf32>
    %226 = vector.multi_reduction <add>, %221, %cst_131 [1] : vector<32x32xf32> to vector<32xf32>
    %227 = vector.shape_cast %226 : vector<32xf32> to vector<32x1xf32>
    %cst_132 = arith.constant 3.200000e+01 : f32
    %228 = vector.broadcast %cst_132 : f32 to vector<32x1xf32>
    %229 = arith.divf %227, %228 : vector<32x1xf32>
    %230 = vector.broadcast %229 : vector<32x1xf32> to vector<32x32xf32>
    %231 = arith.subf %221, %230 : vector<32x32xf32>
    %232 = arith.mulf %231, %231 : vector<32x32xf32>
    %cst_133 = arith.constant dense<0.000000e+00> : vector<32xf32>
    %233 = vector.multi_reduction <add>, %232, %cst_133 [1] : vector<32x32xf32> to vector<32xf32>
    %234 = vector.shape_cast %233 : vector<32xf32> to vector<32x1xf32>
    %cst_134 = arith.constant 3.200000e+01 : f32
    %235 = vector.broadcast %cst_134 : f32 to vector<32x1xf32>
    %236 = arith.divf %234, %235 : vector<32x1xf32>
    %237 = vector.broadcast %229 : vector<32x1xf32> to vector<32x32xf32>
    %238 = arith.subf %221, %237 : vector<32x32xf32>
    %cst_135 = arith.constant 9.99999974E-6 : f32
    %239 = vector.broadcast %cst_135 : f32 to vector<32x1xf32>
    %240 = arith.addf %236, %239 : vector<32x1xf32>
    %241 = math.rsqrt %240 : vector<32x1xf32>
    %242 = vector.broadcast %241 : vector<32x1xf32> to vector<32x32xf32>
    %243 = arith.mulf %238, %242 : vector<32x32xf32>
    %244 = vector.broadcast %223 : vector<1x32xf32> to vector<32x32xf32>
    %245 = arith.mulf %243, %244 : vector<32x32xf32>
    %246 = vector.broadcast %225 : vector<1x32xf32> to vector<32x32xf32>
    %247 = arith.addf %245, %246 : vector<32x32xf32>
    %248 = arith.truncf %247 : vector<32x32xf32> to vector<32x32xbf16>
    %c1_136 = arith.constant 1 : index
    %c0_137 = arith.constant 0 : index
    %c0_138 = arith.constant 0 : index
    %249 = vector.load %arg5[%c1_136, %c0_137, %c0_138] : memref<2x32x32xbf16, #tpu.memory_space<vmem>>, vector<1x32x32xbf16>
    %250 = vector.shape_cast %249 : vector<1x32x32xbf16> to vector<32x32xbf16>
    %cst_139 = arith.constant dense<0.000000e+00> : vector<32x32xf32>
    %251 = tpu.matmul %248, %250, %cst_139 {dimension_numbers = #tpu.dot_dimension_numbers<[1], [0], [0], [1], [0, 0, 1, 1], [], []>} : vector<32x32xbf16>, vector<32x32xbf16>, vector<32x32xf32> -> vector<32x32xf32>
    %c1_140 = arith.constant 1 : index
    %c0_141 = arith.constant 0 : index
    %c0_142 = arith.constant 0 : index
    %252 = vector.load %arg6[%c1_140, %c0_141, %c0_142] : memref<2x1x32xf32, #tpu.memory_space<vmem>>, vector<1x1x32xf32>
    %253 = vector.shape_cast %252 : vector<1x1x32xf32> to vector<1x32xf32>
    %254 = vector.broadcast %253 : vector<1x32xf32> to vector<32x32xf32>
    %255 = arith.addf %251, %254 : vector<32x32xf32>
    %c1_143 = arith.constant 1 : index
    %c0_144 = arith.constant 0 : index
    %c0_145 = arith.constant 0 : index
    %256 = vector.load %arg7[%c1_143, %c0_144, %c0_145] : memref<2x32x32xbf16, #tpu.memory_space<vmem>>, vector<1x32x32xbf16>
    %257 = vector.shape_cast %256 : vector<1x32x32xbf16> to vector<32x32xbf16>
    %cst_146 = arith.constant dense<0.000000e+00> : vector<32x32xf32>
    %258 = tpu.matmul %248, %257, %cst_146 {dimension_numbers = #tpu.dot_dimension_numbers<[1], [0], [0], [1], [0, 0, 1, 1], [], []>} : vector<32x32xbf16>, vector<32x32xbf16>, vector<32x32xf32> -> vector<32x32xf32>
    %c1_147 = arith.constant 1 : index
    %c0_148 = arith.constant 0 : index
    %c0_149 = arith.constant 0 : index
    %259 = vector.load %arg8[%c1_147, %c0_148, %c0_149] : memref<2x1x32xf32, #tpu.memory_space<vmem>>, vector<1x1x32xf32>
    %260 = vector.shape_cast %259 : vector<1x1x32xf32> to vector<1x32xf32>
    %261 = vector.broadcast %260 : vector<1x32xf32> to vector<32x32xf32>
    %262 = arith.addf %258, %261 : vector<32x32xf32>
    %c1_150 = arith.constant 1 : index
    %c0_151 = arith.constant 0 : index
    %c0_152 = arith.constant 0 : index
    %263 = vector.load %arg9[%c1_150, %c0_151, %c0_152] : memref<2x32x32xbf16, #tpu.memory_space<vmem>>, vector<1x32x32xbf16>
    %264 = vector.shape_cast %263 : vector<1x32x32xbf16> to vector<32x32xbf16>
    %cst_153 = arith.constant dense<0.000000e+00> : vector<32x32xf32>
    %265 = tpu.matmul %248, %264, %cst_153 {dimension_numbers = #tpu.dot_dimension_numbers<[1], [0], [0], [1], [0, 0, 1, 1], [], []>} : vector<32x32xbf16>, vector<32x32xbf16>, vector<32x32xf32> -> vector<32x32xf32>
    %c1_154 = arith.constant 1 : index
    %c0_155 = arith.constant 0 : index
    %c0_156 = arith.constant 0 : index
    %266 = vector.load %arg10[%c1_154, %c0_155, %c0_156] : memref<2x1x32xf32, #tpu.memory_space<vmem>>, vector<1x1x32xf32>
    %267 = vector.shape_cast %266 : vector<1x1x32xf32> to vector<1x32xf32>
    %268 = vector.broadcast %267 : vector<1x32xf32> to vector<32x32xf32>
    %269 = arith.addf %265, %268 : vector<32x32xf32>
    %270 = arith.truncf %262 : vector<32x32xf32> to vector<32x32xbf16>
    %271 = arith.truncf %269 : vector<32x32xf32> to vector<32x32xbf16>
    %cst_157 = arith.constant 0.000000e+00 : f32
    %272 = vector.broadcast %cst_157 : f32 to vector<32x32xf32>
    %c0_158 = arith.constant 0 : index
    %c0_159 = arith.constant 0 : index
    %c0_160 = arith.constant 0 : index
    %273 = vector.load %arg4[%c0_158, %c0_159, %c0_160] : memref<4x1x32xf32, #tpu.memory_space<vmem>>, vector<1x1x32xf32>
    %274 = vector.shape_cast %273 : vector<1x1x32xf32> to vector<1x32xf32>
    %275 = vector.broadcast %274 : vector<1x32xf32> to vector<32x32xf32>
    %276 = arith.mulf %255, %275 : vector<32x32xf32>
    %277 = arith.truncf %276 : vector<32x32xf32> to vector<32x32xbf16>
    "tpu.trace_start"() <{level = 10 : i32, message = "id,jd->ij"}> : () -> ()
    %cst_161 = arith.constant dense<0.000000e+00> : vector<32x32xf32>
    %278 = tpu.matmul %277, %270, %cst_161 {dimension_numbers = #tpu.dot_dimension_numbers<[1], [1], [0], [0], [0, 0, 1, 0], [], []>} : vector<32x32xbf16>, vector<32x32xbf16>, vector<32x32xf32> -> vector<32x32xf32>
    "tpu.trace_stop"() : () -> ()
    %cst_162 = arith.constant 0.353553385 : f32
    %279 = vector.broadcast %cst_162 : f32 to vector<32x32xf32>
    %280 = arith.mulf %278, %279 : vector<32x32xf32>
    %281 = arith.addf %280, %0 : vector<32x32xf32>
    %cst_163 = arith.constant dense<0xFF800000> : vector<32xf32>
    %282 = vector.multi_reduction <maximumf>, %281, %cst_163 [1] : vector<32x32xf32> to vector<32xf32>
    %283 = vector.shape_cast %282 : vector<32xf32> to vector<32x1xf32>
    %284 = vector.broadcast %283 : vector<32x1xf32> to vector<32x32xf32>
    %285 = arith.subf %281, %284 : vector<32x32xf32>
    %286 = math.exp %285 : vector<32x32xf32>
    %cst_164 = arith.constant dense<0.000000e+00> : vector<32xf32>
    %287 = vector.multi_reduction <add>, %286, %cst_164 [1] : vector<32x32xf32> to vector<32xf32>
    %288 = vector.shape_cast %287 : vector<32xf32> to vector<32x1xf32>
    %289 = vector.broadcast %288 : vector<32x1xf32> to vector<32x32xf32>
    %290 = arith.divf %286, %289 : vector<32x32xf32>
    %291 = arith.truncf %290 : vector<32x32xf32> to vector<32x32xbf16>
    %cst_165 = arith.constant dense<0.000000e+00> : vector<32x32xf32>
    %292 = tpu.matmul %291, %271, %cst_165 {dimension_numbers = #tpu.dot_dimension_numbers<[1], [0], [0], [1], [0, 0, 1, 1], [], []>} : vector<32x32xbf16>, vector<32x32xbf16>, vector<32x32xf32> -> vector<32x32xf32>
    %293 = vector.broadcast %274 : vector<1x32xf32> to vector<32x32xf32>
    %294 = arith.mulf %292, %293 : vector<32x32xf32>
    %295 = arith.addf %272, %294 : vector<32x32xf32>
    %c1_166 = arith.constant 1 : index
    %c0_167 = arith.constant 0 : index
    %c0_168 = arith.constant 0 : index
    %296 = vector.load %arg4[%c1_166, %c0_167, %c0_168] : memref<4x1x32xf32, #tpu.memory_space<vmem>>, vector<1x1x32xf32>
    %297 = vector.shape_cast %296 : vector<1x1x32xf32> to vector<1x32xf32>
    %298 = vector.broadcast %297 : vector<1x32xf32> to vector<32x32xf32>
    %299 = arith.mulf %255, %298 : vector<32x32xf32>
    %300 = arith.truncf %299 : vector<32x32xf32> to vector<32x32xbf16>
    "tpu.trace_start"() <{level = 10 : i32, message = "id,jd->ij"}> : () -> ()
    %cst_169 = arith.constant dense<0.000000e+00> : vector<32x32xf32>
    %301 = tpu.matmul %300, %270, %cst_169 {dimension_numbers = #tpu.dot_dimension_numbers<[1], [1], [0], [0], [0, 0, 1, 0], [], []>} : vector<32x32xbf16>, vector<32x32xbf16>, vector<32x32xf32> -> vector<32x32xf32>
    "tpu.trace_stop"() : () -> ()
    %cst_170 = arith.constant 0.353553385 : f32
    %302 = vector.broadcast %cst_170 : f32 to vector<32x32xf32>
    %303 = arith.mulf %301, %302 : vector<32x32xf32>
    %304 = arith.addf %303, %0 : vector<32x32xf32>
    %cst_171 = arith.constant dense<0xFF800000> : vector<32xf32>
    %305 = vector.multi_reduction <maximumf>, %304, %cst_171 [1] : vector<32x32xf32> to vector<32xf32>
    %306 = vector.shape_cast %305 : vector<32xf32> to vector<32x1xf32>
    %307 = vector.broadcast %306 : vector<32x1xf32> to vector<32x32xf32>
    %308 = arith.subf %304, %307 : vector<32x32xf32>
    %309 = math.exp %308 : vector<32x32xf32>
    %cst_172 = arith.constant dense<0.000000e+00> : vector<32xf32>
    %310 = vector.multi_reduction <add>, %309, %cst_172 [1] : vector<32x32xf32> to vector<32xf32>
    %311 = vector.shape_cast %310 : vector<32xf32> to vector<32x1xf32>
    %312 = vector.broadcast %311 : vector<32x1xf32> to vector<32x32xf32>
    %313 = arith.divf %309, %312 : vector<32x32xf32>
    %314 = arith.truncf %313 : vector<32x32xf32> to vector<32x32xbf16>
    %cst_173 = arith.constant dense<0.000000e+00> : vector<32x32xf32>
    %315 = tpu.matmul %314, %271, %cst_173 {dimension_numbers = #tpu.dot_dimension_numbers<[1], [0], [0], [1], [0, 0, 1, 1], [], []>} : vector<32x32xbf16>, vector<32x32xbf16>, vector<32x32xf32> -> vector<32x32xf32>
    %316 = vector.broadcast %297 : vector<1x32xf32> to vector<32x32xf32>
    %317 = arith.mulf %315, %316 : vector<32x32xf32>
    %318 = arith.addf %295, %317 : vector<32x32xf32>
    %c2_174 = arith.constant 2 : index
    %c0_175 = arith.constant 0 : index
    %c0_176 = arith.constant 0 : index
    %319 = vector.load %arg4[%c2_174, %c0_175, %c0_176] : memref<4x1x32xf32, #tpu.memory_space<vmem>>, vector<1x1x32xf32>
    %320 = vector.shape_cast %319 : vector<1x1x32xf32> to vector<1x32xf32>
    %321 = vector.broadcast %320 : vector<1x32xf32> to vector<32x32xf32>
    %322 = arith.mulf %255, %321 : vector<32x32xf32>
    %323 = arith.truncf %322 : vector<32x32xf32> to vector<32x32xbf16>
    "tpu.trace_start"() <{level = 10 : i32, message = "id,jd->ij"}> : () -> ()
    %cst_177 = arith.constant dense<0.000000e+00> : vector<32x32xf32>
    %324 = tpu.matmul %323, %270, %cst_177 {dimension_numbers = #tpu.dot_dimension_numbers<[1], [1], [0], [0], [0, 0, 1, 0], [], []>} : vector<32x32xbf16>, vector<32x32xbf16>, vector<32x32xf32> -> vector<32x32xf32>
    "tpu.trace_stop"() : () -> ()
    %cst_178 = arith.constant 0.353553385 : f32
    %325 = vector.broadcast %cst_178 : f32 to vector<32x32xf32>
    %326 = arith.mulf %324, %325 : vector<32x32xf32>
    %327 = arith.addf %326, %0 : vector<32x32xf32>
    %cst_179 = arith.constant dense<0xFF800000> : vector<32xf32>
    %328 = vector.multi_reduction <maximumf>, %327, %cst_179 [1] : vector<32x32xf32> to vector<32xf32>
    %329 = vector.shape_cast %328 : vector<32xf32> to vector<32x1xf32>
    %330 = vector.broadcast %329 : vector<32x1xf32> to vector<32x32xf32>
    %331 = arith.subf %327, %330 : vector<32x32xf32>
    %332 = math.exp %331 : vector<32x32xf32>
    %cst_180 = arith.constant dense<0.000000e+00> : vector<32xf32>
    %333 = vector.multi_reduction <add>, %332, %cst_180 [1] : vector<32x32xf32> to vector<32xf32>
    %334 = vector.shape_cast %333 : vector<32xf32> to vector<32x1xf32>
    %335 = vector.broadcast %334 : vector<32x1xf32> to vector<32x32xf32>
    %336 = arith.divf %332, %335 : vector<32x32xf32>
    %337 = arith.truncf %336 : vector<32x32xf32> to vector<32x32xbf16>
    %cst_181 = arith.constant dense<0.000000e+00> : vector<32x32xf32>
    %338 = tpu.matmul %337, %271, %cst_181 {dimension_numbers = #tpu.dot_dimension_numbers<[1], [0], [0], [1], [0, 0, 1, 1], [], []>} : vector<32x32xbf16>, vector<32x32xbf16>, vector<32x32xf32> -> vector<32x32xf32>
    %339 = vector.broadcast %320 : vector<1x32xf32> to vector<32x32xf32>
    %340 = arith.mulf %338, %339 : vector<32x32xf32>
    %341 = arith.addf %318, %340 : vector<32x32xf32>
    %c3_182 = arith.constant 3 : index
    %c0_183 = arith.constant 0 : index
    %c0_184 = arith.constant 0 : index
    %342 = vector.load %arg4[%c3_182, %c0_183, %c0_184] : memref<4x1x32xf32, #tpu.memory_space<vmem>>, vector<1x1x32xf32>
    %343 = vector.shape_cast %342 : vector<1x1x32xf32> to vector<1x32xf32>
    %344 = vector.broadcast %343 : vector<1x32xf32> to vector<32x32xf32>
    %345 = arith.mulf %255, %344 : vector<32x32xf32>
    %346 = arith.truncf %345 : vector<32x32xf32> to vector<32x32xbf16>
    "tpu.trace_start"() <{level = 10 : i32, message = "id,jd->ij"}> : () -> ()
    %cst_185 = arith.constant dense<0.000000e+00> : vector<32x32xf32>
    %347 = tpu.matmul %346, %270, %cst_185 {dimension_numbers = #tpu.dot_dimension_numbers<[1], [1], [0], [0], [0, 0, 1, 0], [], []>} : vector<32x32xbf16>, vector<32x32xbf16>, vector<32x32xf32> -> vector<32x32xf32>
    "tpu.trace_stop"() : () -> ()
    %cst_186 = arith.constant 0.353553385 : f32
    %348 = vector.broadcast %cst_186 : f32 to vector<32x32xf32>
    %349 = arith.mulf %347, %348 : vector<32x32xf32>
    %350 = arith.addf %349, %0 : vector<32x32xf32>
    %cst_187 = arith.constant dense<0xFF800000> : vector<32xf32>
    %351 = vector.multi_reduction <maximumf>, %350, %cst_187 [1] : vector<32x32xf32> to vector<32xf32>
    %352 = vector.shape_cast %351 : vector<32xf32> to vector<32x1xf32>
    %353 = vector.broadcast %352 : vector<32x1xf32> to vector<32x32xf32>
    %354 = arith.subf %350, %353 : vector<32x32xf32>
    %355 = math.exp %354 : vector<32x32xf32>
    %cst_188 = arith.constant dense<0.000000e+00> : vector<32xf32>
    %356 = vector.multi_reduction <add>, %355, %cst_188 [1] : vector<32x32xf32> to vector<32xf32>
    %357 = vector.shape_cast %356 : vector<32xf32> to vector<32x1xf32>
    %358 = vector.broadcast %357 : vector<32x1xf32> to vector<32x32xf32>
    %359 = arith.divf %355, %358 : vector<32x32xf32>
    %360 = arith.truncf %359 : vector<32x32xf32> to vector<32x32xbf16>
    %cst_189 = arith.constant dense<0.000000e+00> : vector<32x32xf32>
    %361 = tpu.matmul %360, %271, %cst_189 {dimension_numbers = #tpu.dot_dimension_numbers<[1], [0], [0], [1], [0, 0, 1, 1], [], []>} : vector<32x32xbf16>, vector<32x32xbf16>, vector<32x32xf32> -> vector<32x32xf32>
    %362 = vector.broadcast %343 : vector<1x32xf32> to vector<32x32xf32>
    %363 = arith.mulf %361, %362 : vector<32x32xf32>
    %364 = arith.addf %341, %363 : vector<32x32xf32>
    %365 = arith.truncf %364 : vector<32x32xf32> to vector<32x32xbf16>
    %c1_190 = arith.constant 1 : index
    %c0_191 = arith.constant 0 : index
    %c0_192 = arith.constant 0 : index
    %366 = vector.load %arg11[%c1_190, %c0_191, %c0_192] : memref<2x32x32xbf16, #tpu.memory_space<vmem>>, vector<1x32x32xbf16>
    %367 = vector.shape_cast %366 : vector<1x32x32xbf16> to vector<32x32xbf16>
    %cst_193 = arith.constant dense<0.000000e+00> : vector<32x32xf32>
    %368 = tpu.matmul %365, %367, %cst_193 {dimension_numbers = #tpu.dot_dimension_numbers<[1], [0], [0], [1], [0, 0, 1, 1], [], []>} : vector<32x32xbf16>, vector<32x32xbf16>, vector<32x32xf32> -> vector<32x32xf32>
    %c1_194 = arith.constant 1 : index
    %c0_195 = arith.constant 0 : index
    %c0_196 = arith.constant 0 : index
    %369 = vector.load %arg12[%c1_194, %c0_195, %c0_196] : memref<2x1x32xf32, #tpu.memory_space<vmem>>, vector<1x1x32xf32>
    %370 = vector.shape_cast %369 : vector<1x1x32xf32> to vector<1x32xf32>
    %371 = vector.broadcast %370 : vector<1x32xf32> to vector<32x32xf32>
    %372 = arith.addf %368, %371 : vector<32x32xf32>
    %373 = arith.addf %247, %372 : vector<32x32xf32>
    %c1_197 = arith.constant 1 : index
    %c0_198 = arith.constant 0 : index
    %c0_199 = arith.constant 0 : index
    %374 = vector.load %arg17[%c1_197, %c0_198, %c0_199] : memref<2x1x32xf32, #tpu.memory_space<vmem>>, vector<1x1x32xf32>
    %375 = vector.shape_cast %374 : vector<1x1x32xf32> to vector<1x32xf32>
    %c1_200 = arith.constant 1 : index
    %c0_201 = arith.constant 0 : index
    %c0_202 = arith.constant 0 : index
    %376 = vector.load %arg18[%c1_200, %c0_201, %c0_202] : memref<2x1x32xf32, #tpu.memory_space<vmem>>, vector<1x1x32xf32>
    %377 = vector.shape_cast %376 : vector<1x1x32xf32> to vector<1x32xf32>
    %cst_203 = arith.constant dense<0.000000e+00> : vector<32xf32>
    %378 = vector.multi_reduction <add>, %373, %cst_203 [1] : vector<32x32xf32> to vector<32xf32>
    %379 = vector.shape_cast %378 : vector<32xf32> to vector<32x1xf32>
    %cst_204 = arith.constant 3.200000e+01 : f32
    %380 = vector.broadcast %cst_204 : f32 to vector<32x1xf32>
    %381 = arith.divf %379, %380 : vector<32x1xf32>
    %382 = vector.broadcast %381 : vector<32x1xf32> to vector<32x32xf32>
    %383 = arith.subf %373, %382 : vector<32x32xf32>
    %384 = arith.mulf %383, %383 : vector<32x32xf32>
    %cst_205 = arith.constant dense<0.000000e+00> : vector<32xf32>
    %385 = vector.multi_reduction <add>, %384, %cst_205 [1] : vector<32x32xf32> to vector<32xf32>
    %386 = vector.shape_cast %385 : vector<32xf32> to vector<32x1xf32>
    %cst_206 = arith.constant 3.200000e+01 : f32
    %387 = vector.broadcast %cst_206 : f32 to vector<32x1xf32>
    %388 = arith.divf %386, %387 : vector<32x1xf32>
    %389 = vector.broadcast %381 : vector<32x1xf32> to vector<32x32xf32>
    %390 = arith.subf %373, %389 : vector<32x32xf32>
    %cst_207 = arith.constant 9.99999974E-6 : f32
    %391 = vector.broadcast %cst_207 : f32 to vector<32x1xf32>
    %392 = arith.addf %388, %391 : vector<32x1xf32>
    %393 = math.rsqrt %392 : vector<32x1xf32>
    %394 = vector.broadcast %393 : vector<32x1xf32> to vector<32x32xf32>
    %395 = arith.mulf %390, %394 : vector<32x32xf32>
    %396 = vector.broadcast %375 : vector<1x32xf32> to vector<32x32xf32>
    %397 = arith.mulf %395, %396 : vector<32x32xf32>
    %398 = vector.broadcast %377 : vector<1x32xf32> to vector<32x32xf32>
    %399 = arith.addf %397, %398 : vector<32x32xf32>
    %400 = arith.truncf %399 : vector<32x32xf32> to vector<32x32xbf16>
    %cst_208 = arith.constant 0.000000e+00 : f32
    %401 = vector.broadcast %cst_208 : f32 to vector<32x32xf32>
    %c1_209 = arith.constant 1 : index
    %c0_210 = arith.constant 0 : index
    %c0_211 = arith.constant 0 : index
    %402 = vector.load %arg13[%c1_209, %c0_210, %c0_211] : memref<2x32x2048xbf16, #tpu.memory_space<vmem>>, vector<1x32x512xbf16>
    %403 = vector.shape_cast %402 : vector<1x32x512xbf16> to vector<32x512xbf16>
    %cst_212 = arith.constant dense<0.000000e+00> : vector<32x512xf32>
    %404 = tpu.matmul %400, %403, %cst_212 {dimension_numbers = #tpu.dot_dimension_numbers<[1], [0], [0], [1], [0, 0, 1, 1], [], []>} : vector<32x32xbf16>, vector<32x512xbf16>, vector<32x512xf32> -> vector<32x512xf32>
    %c1_213 = arith.constant 1 : index
    %c0_214 = arith.constant 0 : index
    %c0_215 = arith.constant 0 : index
    %405 = vector.load %arg14[%c1_213, %c0_214, %c0_215] : memref<2x1x2048xf32, #tpu.memory_space<vmem>>, vector<1x1x512xf32>
    %406 = vector.shape_cast %405 : vector<1x1x512xf32> to vector<1x512xf32>
    %407 = vector.broadcast %406 : vector<1x512xf32> to vector<32x512xf32>
    %408 = arith.addf %404, %407 : vector<32x512xf32>
    %cst_216 = arith.constant 0.000000e+00 : f32
    %409 = vector.broadcast %cst_216 : f32 to vector<32x512xf32>
    %410 = arith.maximumf %408, %409 : vector<32x512xf32>
    %411 = arith.truncf %410 : vector<32x512xf32> to vector<32x512xbf16>
    %c1_217 = arith.constant 1 : index
    %c0_218 = arith.constant 0 : index
    %c0_219 = arith.constant 0 : index
    %412 = vector.load %arg15[%c1_217, %c0_218, %c0_219] : memref<2x2048x32xbf16, #tpu.memory_space<vmem>>, vector<1x512x32xbf16>
    %413 = vector.shape_cast %412 : vector<1x512x32xbf16> to vector<512x32xbf16>
    %cst_220 = arith.constant dense<0.000000e+00> : vector<32x32xf32>
    %414 = tpu.matmul %411, %413, %cst_220 {dimension_numbers = #tpu.dot_dimension_numbers<[1], [0], [0], [1], [0, 0, 1, 1], [], []>} : vector<32x512xbf16>, vector<512x32xbf16>, vector<32x32xf32> -> vector<32x32xf32>
    %415 = arith.addf %401, %414 : vector<32x32xf32>
    %c1_221 = arith.constant 1 : index
    %c0_222 = arith.constant 0 : index
    %c512_223 = arith.constant 512 : index
    %416 = vector.load %arg13[%c1_221, %c0_222, %c512_223] : memref<2x32x2048xbf16, #tpu.memory_space<vmem>>, vector<1x32x512xbf16>
    %417 = vector.shape_cast %416 : vector<1x32x512xbf16> to vector<32x512xbf16>
    %cst_224 = arith.constant dense<0.000000e+00> : vector<32x512xf32>
    %418 = tpu.matmul %400, %417, %cst_224 {dimension_numbers = #tpu.dot_dimension_numbers<[1], [0], [0], [1], [0, 0, 1, 1], [], []>} : vector<32x32xbf16>, vector<32x512xbf16>, vector<32x512xf32> -> vector<32x512xf32>
    %c1_225 = arith.constant 1 : index
    %c0_226 = arith.constant 0 : index
    %c512_227 = arith.constant 512 : index
    %419 = vector.load %arg14[%c1_225, %c0_226, %c512_227] : memref<2x1x2048xf32, #tpu.memory_space<vmem>>, vector<1x1x512xf32>
    %420 = vector.shape_cast %419 : vector<1x1x512xf32> to vector<1x512xf32>
    %421 = vector.broadcast %420 : vector<1x512xf32> to vector<32x512xf32>
    %422 = arith.addf %418, %421 : vector<32x512xf32>
    %cst_228 = arith.constant 0.000000e+00 : f32
    %423 = vector.broadcast %cst_228 : f32 to vector<32x512xf32>
    %424 = arith.maximumf %422, %423 : vector<32x512xf32>
    %425 = arith.truncf %424 : vector<32x512xf32> to vector<32x512xbf16>
    %c1_229 = arith.constant 1 : index
    %c512_230 = arith.constant 512 : index
    %c0_231 = arith.constant 0 : index
    %426 = vector.load %arg15[%c1_229, %c512_230, %c0_231] : memref<2x2048x32xbf16, #tpu.memory_space<vmem>>, vector<1x512x32xbf16>
    %427 = vector.shape_cast %426 : vector<1x512x32xbf16> to vector<512x32xbf16>
    %cst_232 = arith.constant dense<0.000000e+00> : vector<32x32xf32>
    %428 = tpu.matmul %425, %427, %cst_232 {dimension_numbers = #tpu.dot_dimension_numbers<[1], [0], [0], [1], [0, 0, 1, 1], [], []>} : vector<32x512xbf16>, vector<512x32xbf16>, vector<32x32xf32> -> vector<32x32xf32>
    %429 = arith.addf %415, %428 : vector<32x32xf32>
    %c1_233 = arith.constant 1 : index
    %c0_234 = arith.constant 0 : index
    %c1024_235 = arith.constant 1024 : index
    %430 = vector.load %arg13[%c1_233, %c0_234, %c1024_235] : memref<2x32x2048xbf16, #tpu.memory_space<vmem>>, vector<1x32x512xbf16>
    %431 = vector.shape_cast %430 : vector<1x32x512xbf16> to vector<32x512xbf16>
    %cst_236 = arith.constant dense<0.000000e+00> : vector<32x512xf32>
    %432 = tpu.matmul %400, %431, %cst_236 {dimension_numbers = #tpu.dot_dimension_numbers<[1], [0], [0], [1], [0, 0, 1, 1], [], []>} : vector<32x32xbf16>, vector<32x512xbf16>, vector<32x512xf32> -> vector<32x512xf32>
    %c1_237 = arith.constant 1 : index
    %c0_238 = arith.constant 0 : index
    %c1024_239 = arith.constant 1024 : index
    %433 = vector.load %arg14[%c1_237, %c0_238, %c1024_239] : memref<2x1x2048xf32, #tpu.memory_space<vmem>>, vector<1x1x512xf32>
    %434 = vector.shape_cast %433 : vector<1x1x512xf32> to vector<1x512xf32>
    %435 = vector.broadcast %434 : vector<1x512xf32> to vector<32x512xf32>
    %436 = arith.addf %432, %435 : vector<32x512xf32>
    %cst_240 = arith.constant 0.000000e+00 : f32
    %437 = vector.broadcast %cst_240 : f32 to vector<32x512xf32>
    %438 = arith.maximumf %436, %437 : vector<32x512xf32>
    %439 = arith.truncf %438 : vector<32x512xf32> to vector<32x512xbf16>
    %c1_241 = arith.constant 1 : index
    %c1024_242 = arith.constant 1024 : index
    %c0_243 = arith.constant 0 : index
    %440 = vector.load %arg15[%c1_241, %c1024_242, %c0_243] : memref<2x2048x32xbf16, #tpu.memory_space<vmem>>, vector<1x512x32xbf16>
    %441 = vector.shape_cast %440 : vector<1x512x32xbf16> to vector<512x32xbf16>
    %cst_244 = arith.constant dense<0.000000e+00> : vector<32x32xf32>
    %442 = tpu.matmul %439, %441, %cst_244 {dimension_numbers = #tpu.dot_dimension_numbers<[1], [0], [0], [1], [0, 0, 1, 1], [], []>} : vector<32x512xbf16>, vector<512x32xbf16>, vector<32x32xf32> -> vector<32x32xf32>
    %443 = arith.addf %429, %442 : vector<32x32xf32>
    %c1_245 = arith.constant 1 : index
    %c0_246 = arith.constant 0 : index
    %c1536_247 = arith.constant 1536 : index
    %444 = vector.load %arg13[%c1_245, %c0_246, %c1536_247] : memref<2x32x2048xbf16, #tpu.memory_space<vmem>>, vector<1x32x512xbf16>
    %445 = vector.shape_cast %444 : vector<1x32x512xbf16> to vector<32x512xbf16>
    %cst_248 = arith.constant dense<0.000000e+00> : vector<32x512xf32>
    %446 = tpu.matmul %400, %445, %cst_248 {dimension_numbers = #tpu.dot_dimension_numbers<[1], [0], [0], [1], [0, 0, 1, 1], [], []>} : vector<32x32xbf16>, vector<32x512xbf16>, vector<32x512xf32> -> vector<32x512xf32>
    %c1_249 = arith.constant 1 : index
    %c0_250 = arith.constant 0 : index
    %c1536_251 = arith.constant 1536 : index
    %447 = vector.load %arg14[%c1_249, %c0_250, %c1536_251] : memref<2x1x2048xf32, #tpu.memory_space<vmem>>, vector<1x1x512xf32>
    %448 = vector.shape_cast %447 : vector<1x1x512xf32> to vector<1x512xf32>
    %449 = vector.broadcast %448 : vector<1x512xf32> to vector<32x512xf32>
    %450 = arith.addf %446, %449 : vector<32x512xf32>
    %cst_252 = arith.constant 0.000000e+00 : f32
    %451 = vector.broadcast %cst_252 : f32 to vector<32x512xf32>
    %452 = arith.maximumf %450, %451 : vector<32x512xf32>
    %453 = arith.truncf %452 : vector<32x512xf32> to vector<32x512xbf16>
    %c1_253 = arith.constant 1 : index
    %c1536_254 = arith.constant 1536 : index
    %c0_255 = arith.constant 0 : index
    %454 = vector.load %arg15[%c1_253, %c1536_254, %c0_255] : memref<2x2048x32xbf16, #tpu.memory_space<vmem>>, vector<1x512x32xbf16>
    %455 = vector.shape_cast %454 : vector<1x512x32xbf16> to vector<512x32xbf16>
    %cst_256 = arith.constant dense<0.000000e+00> : vector<32x32xf32>
    %456 = tpu.matmul %453, %455, %cst_256 {dimension_numbers = #tpu.dot_dimension_numbers<[1], [0], [0], [1], [0, 0, 1, 1], [], []>} : vector<32x512xbf16>, vector<512x32xbf16>, vector<32x32xf32> -> vector<32x32xf32>
    %457 = arith.addf %443, %456 : vector<32x32xf32>
    %c1_257 = arith.constant 1 : index
    %c0_258 = arith.constant 0 : index
    %c0_259 = arith.constant 0 : index
    %458 = vector.load %arg16[%c1_257, %c0_258, %c0_259] : memref<2x1x32xf32, #tpu.memory_space<vmem>>, vector<1x1x32xf32>
    %459 = vector.shape_cast %458 : vector<1x1x32xf32> to vector<1x32xf32>
    %460 = vector.broadcast %459 : vector<1x32xf32> to vector<32x32xf32>
    %461 = arith.addf %457, %460 : vector<32x32xf32>
    %462 = arith.addf %399, %461 : vector<32x32xf32>
    %c1_260 = arith.constant 1 : index
    %c0_261 = arith.constant 0 : index
    %c0_262 = arith.constant 0 : index
    %463 = vector.load %arg19[%c1_260, %c0_261, %c0_262] : memref<2x1x32xf32, #tpu.memory_space<vmem>>, vector<1x1x32xf32>
    %464 = vector.shape_cast %463 : vector<1x1x32xf32> to vector<1x32xf32>
    %c1_263 = arith.constant 1 : index
    %c0_264 = arith.constant 0 : index
    %c0_265 = arith.constant 0 : index
    %465 = vector.load %arg20[%c1_263, %c0_264, %c0_265] : memref<2x1x32xf32, #tpu.memory_space<vmem>>, vector<1x1x32xf32>
    %466 = vector.shape_cast %465 : vector<1x1x32xf32> to vector<1x32xf32>
    %cst_266 = arith.constant dense<0.000000e+00> : vector<32xf32>
    %467 = vector.multi_reduction <add>, %462, %cst_266 [1] : vector<32x32xf32> to vector<32xf32>
    %468 = vector.shape_cast %467 : vector<32xf32> to vector<32x1xf32>
    %cst_267 = arith.constant 3.200000e+01 : f32
    %469 = vector.broadcast %cst_267 : f32 to vector<32x1xf32>
    %470 = arith.divf %468, %469 : vector<32x1xf32>
    %471 = vector.broadcast %470 : vector<32x1xf32> to vector<32x32xf32>
    %472 = arith.subf %462, %471 : vector<32x32xf32>
    %473 = arith.mulf %472, %472 : vector<32x32xf32>
    %cst_268 = arith.constant dense<0.000000e+00> : vector<32xf32>
    %474 = vector.multi_reduction <add>, %473, %cst_268 [1] : vector<32x32xf32> to vector<32xf32>
    %475 = vector.shape_cast %474 : vector<32xf32> to vector<32x1xf32>
    %cst_269 = arith.constant 3.200000e+01 : f32
    %476 = vector.broadcast %cst_269 : f32 to vector<32x1xf32>
    %477 = arith.divf %475, %476 : vector<32x1xf32>
    %478 = vector.broadcast %470 : vector<32x1xf32> to vector<32x32xf32>
    %479 = arith.subf %462, %478 : vector<32x32xf32>
    %cst_270 = arith.constant 9.99999974E-6 : f32
    %480 = vector.broadcast %cst_270 : f32 to vector<32x1xf32>
    %481 = arith.addf %477, %480 : vector<32x1xf32>
    %482 = math.rsqrt %481 : vector<32x1xf32>
    %483 = vector.broadcast %482 : vector<32x1xf32> to vector<32x32xf32>
    %484 = arith.mulf %479, %483 : vector<32x32xf32>
    %485 = vector.broadcast %464 : vector<1x32xf32> to vector<32x32xf32>
    %486 = arith.mulf %484, %485 : vector<32x32xf32>
    %487 = vector.broadcast %466 : vector<1x32xf32> to vector<32x32xf32>
    %488 = arith.addf %486, %487 : vector<32x32xf32>
    %489 = vector.extract_strided_slice %488 {offsets = [24, 0], sizes = [8, 32], strides = [1, 1]} : vector<32x32xf32> to vector<8x32xf32>
    %490 = arith.truncf %489 : vector<8x32xf32> to vector<8x32xbf16>
    %c0_271 = arith.constant 0 : index
    %c0_272 = arith.constant 0 : index
    %491 = vector.load %arg21[%c0_271, %c0_272] : memref<32x128xbf16, #tpu.memory_space<vmem>>, vector<32x128xbf16>
    %cst_273 = arith.constant dense<0.000000e+00> : vector<8x128xf32>
    %492 = tpu.matmul %490, %491, %cst_273 {dimension_numbers = #tpu.dot_dimension_numbers<[1], [0], [0], [1], [0, 0, 1, 1], [], []>} : vector<8x32xbf16>, vector<32x128xbf16>, vector<8x128xf32> -> vector<8x128xf32>
    %c0_274 = arith.constant 0 : index
    %c0_275 = arith.constant 0 : index
    %493 = vector.load %arg22[%c0_274, %c0_275] : memref<1x128xf32, #tpu.memory_space<vmem>>, vector<1x128xf32>
    %494 = vector.broadcast %493 : vector<1x128xf32> to vector<8x128xf32>
    %495 = arith.addf %492, %494 : vector<8x128xf32>
    %c0_276 = arith.constant 0 : index
    %c0_277 = arith.constant 0 : index
    %496 = vector.load %arg23[%c0_276, %c0_277] : memref<8x128xf32, #tpu.memory_space<vmem>>, vector<8x128xf32>
    tpu.vector_store %arg23[%c0_276, %c0_277], %495 {strides = array<i32>} : memref<8x128xf32, #tpu.memory_space<vmem>>, vector<8x128xf32>,
    return
  }
}

</mosaic_0001>

<llo_original>
// kernel: tpu_custom_call.1
$region0: #{tpu_custom_call.1}
  #allocation0 [shape = 'u32[]', space=smem, size = 0x4, offset = 0x4, fixed_abs, tag = 'smem constant byte address 0x4 - core index']
  #allocation1 [shape = 'u32[144,128]{1,0:T(1,128)}', space=vmem, size = 0x12000, scoped, tag = 'internal scratch']
  %s0 = inlined_call_operand.vmem [shape: bf16[32,128], index: 0, kind: input, shape index: {}]
  %s1 = inlined_call_operand.vmem [shape: bf16[128,32], index: 1, kind: input, shape index: {}]
  %s2 = inlined_call_operand.vmem [shape: f32[1,32], index: 2, kind: input, shape index: {}]
  %s3 = inlined_call_operand.vmem [shape: f32[32,32], index: 3, kind: input, shape index: {}]
  %s4 = inlined_call_operand.vmem [shape: f32[4,1,32], index: 4, kind: input, shape index: {}]
  %s5 = inlined_call_operand.vmem [shape: bf16[2,32,32], index: 5, kind: input, shape index: {}]
  %s6 = inlined_call_operand.vmem [shape: f32[2,1,32], index: 6, kind: input, shape index: {}]
  %s7 = inlined_call_operand.vmem [shape: bf16[2,32,32], index: 7, kind: input, shape index: {}]
  %s8 = inlined_call_operand.vmem [shape: f32[2,1,32], index: 8, kind: input, shape index: {}]
  %s9 = inlined_call_operand.vmem [shape: bf16[2,32,32], index: 9, kind: input, shape index: {}]
  %s10 = inlined_call_operand.vmem [shape: f32[2,1,32], index: 10, kind: input, shape index: {}]
  %s11 = inlined_call_operand.vmem [shape: bf16[2,32,32], index: 11, kind: input, shape index: {}]
  %s12 = inlined_call_operand.vmem [shape: f32[2,1,32], index: 12, kind: input, shape index: {}]
  %s13 = inlined_call_operand.vmem [shape: bf16[2,32,2048], index: 13, kind: input, shape index: {}]
  %s14 = inlined_call_operand.vmem [shape: f32[2,1,2048], index: 14, kind: input, shape index: {}]
  %s15 = inlined_call_operand.vmem [shape: bf16[2,2048,32], index: 15, kind: input, shape index: {}]
  %s16 = inlined_call_operand.vmem [shape: f32[2,1,32], index: 16, kind: input, shape index: {}]
  %s17 = inlined_call_operand.vmem [shape: f32[2,1,32], index: 17, kind: input, shape index: {}]
  %s18 = inlined_call_operand.vmem [shape: f32[2,1,32], index: 18, kind: input, shape index: {}]
  %s19 = inlined_call_operand.vmem [shape: f32[2,1,32], index: 19, kind: input, shape index: {}]
  %s20 = inlined_call_operand.vmem [shape: f32[2,1,32], index: 20, kind: input, shape index: {}]
  %s21 = inlined_call_operand.vmem [shape: bf16[32,128], index: 21, kind: input, shape index: {}]
  %s22 = inlined_call_operand.vmem [shape: f32[1,128], index: 22, kind: input, shape index: {}]
  %s23 = inlined_call_operand.hbm [shape: f32[8,128], index: 23, kind: output, shape index: {}]
  %s24 = sld [smem:[#allocation0]]
  $region102: #{tpu_custom_call.1} parent=0
    _
  %s26 = ssub.s32 1, %s24
  %s27 = scalar_select 0, %s26, %s24
  $region1: #{tpu_custom_call.1} parent=0
    #allocation2 [shape = 'u8[4096]{0}', space=vmem, size = 0x1000, scoped, tag = 'output window, operand 0, single buffered']
    #allocation3 [shape = 's32[1]{0}', space=sflag, size = 0x4, scoped, tag = 'scoped memory for tpu_custom_call.1']
    %28 = vsyncpa [#allocation3], 0
    // Predicated region
    $region2: #{tpu_custom_call.1} parent=1 // pred_check
      _
    $region3: #{tpu_custom_call.1} parent=1 // pred_check_branch
      %30 = sbr.rel (0) target = $region5
    $region4: #{tpu_custom_call.1} parent=1 // pred_region
      _
    $region5: #{tpu_custom_call.1} parent=1 // pred_fallthru
      _
    // Predicated region
    $region6: #{tpu_custom_call.1} parent=1 // pred_check
      _
    $region7: #{tpu_custom_call.1} parent=1 // pred_check_branch
      %32 = sbr.rel (0) target = $region9
    $region8: #{tpu_custom_call.1} parent=1 // pred_region
      _
    $region9: #{tpu_custom_call.1} parent=1 // pred_fallthru
      _
    // Predicated region
    $region10: #{tpu_custom_call.1} parent=1 // pred_check
      _
    $region11: #{tpu_custom_call.1} parent=1 // pred_check_branch
      %34 = sbr.rel (0) target = $region13
    $region12: #{tpu_custom_call.1} parent=1 // pred_region
      _
    $region13: #{tpu_custom_call.1} parent=1 // pred_fallthru
      _
    // Predicated region
    $region14: #{tpu_custom_call.1} parent=1 // pred_check
      _
    $region15: #{tpu_custom_call.1} parent=1 // pred_check_branch
      %36 = sbr.rel (0) target = $region17
    $region16: #{tpu_custom_call.1} parent=1 // pred_region
      _
    $region17: #{tpu_custom_call.1} parent=1 // pred_fallthru
      _
    // Predicated region
    $region18: #{tpu_custom_call.1} parent=1 // pred_check
      _
    $region19: #{tpu_custom_call.1} parent=1 // pred_check_branch
      %38 = sbr.rel (0) target = $region21
    $region20: #{tpu_custom_call.1} parent=1 // pred_region
      _
    $region21: #{tpu_custom_call.1} parent=1 // pred_fallthru
      _
    // Predicated region
    $region22: #{tpu_custom_call.1} parent=1 // pred_check
      _
    $region23: #{tpu_custom_call.1} parent=1 // pred_check_branch
      %40 = sbr.rel (0) target = $region25
    $region24: #{tpu_custom_call.1} parent=1 // pred_region
      _
    $region25: #{tpu_custom_call.1} parent=1 // pred_fallthru
      _
    // Predicated region
    $region26: #{tpu_custom_call.1} parent=1 // pred_check
      _
    $region27: #{tpu_custom_call.1} parent=1 // pred_check_branch
      %42 = sbr.rel (0) target = $region29
    $region28: #{tpu_custom_call.1} parent=1 // pred_region
      _
    $region29: #{tpu_custom_call.1} parent=1 // pred_fallthru
      _
    // Predicated region
    $region30: #{tpu_custom_call.1} parent=1 // pred_check
      _
    $region31: #{tpu_custom_call.1} parent=1 // pred_check_branch
      %44 = sbr.rel (0) target = $region33
    $region32: #{tpu_custom_call.1} parent=1 // pred_region
      _
    $region33: #{tpu_custom_call.1} parent=1 // pred_fallthru
      _
    // Predicated region
    $region34: #{tpu_custom_call.1} parent=1 // pred_check
      _
    $region35: #{tpu_custom_call.1} parent=1 // pred_check_branch
      %46 = sbr.rel (0) target = $region37
    $region36: #{tpu_custom_call.1} parent=1 // pred_region
      _
    $region37: #{tpu_custom_call.1} parent=1 // pred_fallthru
      _
    // Predicated region
    $region38: #{tpu_custom_call.1} parent=1 // pred_check
      _
    $region39: #{tpu_custom_call.1} parent=1 // pred_check_branch
      %48 = sbr.rel (0) target = $region41
    $region40: #{tpu_custom_call.1} parent=1 // pred_region
      _
    $region41: #{tpu_custom_call.1} parent=1 // pred_fallthru
      _
    // Predicated region
    $region42: #{tpu_custom_call.1} parent=1 // pred_check
      _
    $region43: #{tpu_custom_call.1} parent=1 // pred_check_branch
      %50 = sbr.rel (0) target = $region45
    $region44: #{tpu_custom_call.1} parent=1 // pred_region
      _
    $region45: #{tpu_custom_call.1} parent=1 // pred_fallthru
      _
    // Predicated region
    $region46: #{tpu_custom_call.1} parent=1 // pred_check
      _
    $region47: #{tpu_custom_call.1} parent=1 // pred_check_branch
      %52 = sbr.rel (0) target = $region49
    $region48: #{tpu_custom_call.1} parent=1 // pred_region
      _
    $region49: #{tpu_custom_call.1} parent=1 // pred_fallthru
      _
    // Predicated region
    $region50: #{tpu_custom_call.1} parent=1 // pred_check
      _
    $region51: #{tpu_custom_call.1} parent=1 // pred_check_branch
      %54 = sbr.rel (0) target = $region53
    $region52: #{tpu_custom_call.1} parent=1 // pred_region
      _
    $region53: #{tpu_custom_call.1} parent=1 // pred_fallthru
      _
    // Predicated region
    $region54: #{tpu_custom_call.1} parent=1 // pred_check
      _
    $region55: #{tpu_custom_call.1} parent=1 // pred_check_branch
      %56 = sbr.rel (0) target = $region57
    $region56: #{tpu_custom_call.1} parent=1 // pred_region
      _
    $region57: #{tpu_custom_call.1} parent=1 // pred_fallthru
      _
    // Predicated region
    $region58: #{tpu_custom_call.1} parent=1 // pred_check
      _
    $region59: #{tpu_custom_call.1} parent=1 // pred_check_branch
      %58 = sbr.rel (0) target = $region61
    $region60: #{tpu_custom_call.1} parent=1 // pred_region
      _
    $region61: #{tpu_custom_call.1} parent=1 // pred_fallthru
      _
    // Predicated region
    $region62: #{tpu_custom_call.1} parent=1 // pred_check
      _
    $region63: #{tpu_custom_call.1} parent=1 // pred_check_branch
      %60 = sbr.rel (0) target = $region65
    $region64: #{tpu_custom_call.1} parent=1 // pred_region
      _
    $region65: #{tpu_custom_call.1} parent=1 // pred_fallthru
      _
    // Predicated region
    $region66: #{tpu_custom_call.1} parent=1 // pred_check
      _
    $region67: #{tpu_custom_call.1} parent=1 // pred_check_branch
      %62 = sbr.rel (0) target = $region69
    $region68: #{tpu_custom_call.1} parent=1 // pred_region
      _
    $region69: #{tpu_custom_call.1} parent=1 // pred_fallthru
      _
    // Predicated region
    $region70: #{tpu_custom_call.1} parent=1 // pred_check
      _
    $region71: #{tpu_custom_call.1} parent=1 // pred_check_branch
      %64 = sbr.rel (0) target = $region73
    $region72: #{tpu_custom_call.1} parent=1 // pred_region
      _
    $region73: #{tpu_custom_call.1} parent=1 // pred_fallthru
      _
    // Predicated region
    $region74: #{tpu_custom_call.1} parent=1 // pred_check
      _
    $region75: #{tpu_custom_call.1} parent=1 // pred_check_branch
      %66 = sbr.rel (0) target = $region77
    $region76: #{tpu_custom_call.1} parent=1 // pred_region
      _
    $region77: #{tpu_custom_call.1} parent=1 // pred_fallthru
      _
    // Predicated region
    $region78: #{tpu_custom_call.1} parent=1 // pred_check
      _
    $region79: #{tpu_custom_call.1} parent=1 // pred_check_branch
      %68 = sbr.rel (0) target = $region81
    $region80: #{tpu_custom_call.1} parent=1 // pred_region
      _
    $region81: #{tpu_custom_call.1} parent=1 // pred_fallthru
      _
    // Predicated region
    $region82: #{tpu_custom_call.1} parent=1 // pred_check
      _
    $region83: #{tpu_custom_call.1} parent=1 // pred_check_branch
      %70 = sbr.rel (0) target = $region85
    $region84: #{tpu_custom_call.1} parent=1 // pred_region
      _
    $region85: #{tpu_custom_call.1} parent=1 // pred_fallthru
      _
    // Predicated region
    $region86: #{tpu_custom_call.1} parent=1 // pred_check
      _
    $region87: #{tpu_custom_call.1} parent=1 // pred_check_branch
      %72 = sbr.rel (0) target = $region89
    $region88: #{tpu_custom_call.1} parent=1 // pred_region
      _
    $region89: #{tpu_custom_call.1} parent=1 // pred_fallthru
      _
    // Predicated region
    $region90: #{tpu_custom_call.1} parent=1 // pred_check
      _
    $region91: #{tpu_custom_call.1} parent=1 // pred_check_branch
      %74 = sbr.rel (0) target = $region93
    $region92: #{tpu_custom_call.1} parent=1 // pred_region
      _
    $region93: #{tpu_custom_call.1} parent=1 // pred_fallthru
      _
    %v76 = vld [vmem:[%s3] sm:$0xff]
    %v77 = vld [vmem:[%s3 + $0x8] sm:$0xff]
    %v78 = vld [vmem:[%s3 + $0x10] sm:$0xff]
    %v79 = vld [vmem:[%s3 + $0x18] sm:$0xff]
    %v80 = vld [vmem:[%s0] sm:$0xf]
    %v81 = vld [vmem:[%s0 + $0x4] sm:$0xf]
    %v82 = vld [vmem:[%s0 + $0x8] sm:$0xf]
    %v83 = vld [vmem:[%s0 + $0xc] sm:$0xf]
    %v84 = vld [vmem:[%s1] sm:$0xf]
    %v85 = vld [vmem:[%s1 + $0x4] sm:$0xf]
    %v86 = vld [vmem:[%s1 + $0x8] sm:$0xf]
    %v87 = vld [vmem:[%s1 + $0xc] sm:$0xf]
    %v88 = vld [vmem:[%s1 + $0x10] sm:$0xf]
    %v89 = vld [vmem:[%s1 + $0x14] sm:$0xf]
    %v90 = vld [vmem:[%s1 + $0x18] sm:$0xf]
    %v91 = vld [vmem:[%s1 + $0x1c] sm:$0xf]
    %v92 = vld [vmem:[%s1 + $0x20] sm:$0xf]
    %v93 = vld [vmem:[%s1 + $0x24] sm:$0xf]
    %v94 = vld [vmem:[%s1 + $0x28] sm:$0xf]
    %v95 = vld [vmem:[%s1 + $0x2c] sm:$0xf]
    %v96 = vld [vmem:[%s1 + $0x30] sm:$0xf]
    %v97 = vld [vmem:[%s1 + $0x34] sm:$0xf]
    %v98 = vld [vmem:[%s1 + $0x38] sm:$0xf]
    %v99 = vld [vmem:[%s1 + $0x3c] sm:$0xf]
    %v100 = vld [vmem:[%s2] sm:$0x1]
    %v102 = vlaneseq
    %v103 = vshrl.u32 %v102, 7
    %v104 = vsub.s32 0, %v103
    %v105 = vrot.slane %v100, %v104
    %v111 = vunpack.c.l.b16 %v80
    %v112 = vunpack.c.l.b16 %v81
    %v113 = vunpack.c.l.b16 %v82
    %v114 = vunpack.c.l.b16 %v83
    %v115 = vpack.c.b16 %v112, %v111
    %v116 = vpack.c.b16 %v114, %v113
    %v135 = vunpack.c.l.b16 %v84
    %v136 = vunpack.c.l.b16 %v85
    %v137 = vunpack.c.l.b16 %v86
    %v138 = vunpack.c.l.b16 %v87
    %v139 = vunpack.c.l.b16 %v88
    %v140 = vunpack.c.l.b16 %v89
    %v141 = vunpack.c.l.b16 %v90
    %v142 = vunpack.c.l.b16 %v91
    %v143 = vunpack.c.l.b16 %v92
    %v144 = vunpack.c.l.b16 %v93
    %v145 = vunpack.c.l.b16 %v94
    %v146 = vunpack.c.l.b16 %v95
    %v147 = vunpack.c.l.b16 %v96
    %v148 = vunpack.c.l.b16 %v97
    %v149 = vunpack.c.l.b16 %v98
    %v150 = vunpack.c.l.b16 %v99
    %v151 = vpack.c.b16 %v136, %v135
    %v152 = vpack.c.b16 %v138, %v137
    %v153 = vpack.c.b16 %v140, %v139
    %v154 = vpack.c.b16 %v142, %v141
    %v155 = vpack.c.b16 %v144, %v143
    %v156 = vpack.c.b16 %v146, %v145
    %v157 = vpack.c.b16 %v148, %v147
    %v158 = vpack.c.b16 %v150, %v149
    %167 = vmatprep.subr.bf16.mxu0 0
    %168 = vmatpush1.bf16.msra.mxu0 %v151
    %169 = vmatprep.subr.bf16.mxu0 0
    %170 = vmatpush1.bf16.msra.mxu0 %v152
    %171 = vmatprep.subr.bf16.mxu0 0
    %172 = vmatpush1.bf16.msra.mxu0 %v153
    %173 = vmatprep.subr.bf16.mxu0 0
    %174 = vmatpush1.bf16.msra.mxu0 %v154
    %175 = vmatprep.subr.bf16.mxu0 0
    %176 = vmatpush1.bf16.msra.mxu0 %v155
    %177 = vmatprep.subr.bf16.mxu0 0
    %178 = vmatpush1.bf16.msra.mxu0 %v156
    %179 = vmatprep.subr.bf16.mxu0 0
    %180 = vmatpush1.bf16.msra.mxu0 %v157
    %181 = vmatprep.subr.bf16.mxu0 0
    %182 = vmatpush1.bf16.msra.mxu0 %v158
    %183 = vmatprep.subr.bf16.mxu0 0
    %184 = vmatpush1.bf16.msra.mxu0 0
    %185 = vmatprep.subr.bf16.mxu0 0
    %186 = vmatpush1.bf16.msra.mxu0 0
    %187 = vmatprep.subr.bf16.mxu0 0
    %188 = vmatpush1.bf16.msra.mxu0 0
    %189 = vmatprep.subr.bf16.mxu0 0
    %190 = vmatpush1.bf16.msra.mxu0 0
    %191 = vmatprep.subr.bf16.mxu0 0
    %192 = vmatpush1.bf16.msra.mxu0 0
    %193 = vmatprep.subr.bf16.mxu0 0
    %194 = vmatpush1.bf16.msra.mxu0 0
    %195 = vmatprep.subr.bf16.mxu0 0
    %196 = vmatpush1.bf16.msra.mxu0 0
    %197 = vmatprep.subr.bf16.mxu0 0
    %198 = vmatpush1.bf16.msra.mxu0 0
    %199 = vmatprep.mubr.bf16.mxu0 0
    %200 = vmatmul.mubr.bf16.gmra.mrb[0].mxu0 %v115
    %v201 = vpop.f32.mrb[0].mxu0
    %v202 = vadd.f32 %v105, %v201
    %v203 = vpop.f32.mrb[0].mxu0
    %v204 = vpop.f32.mrb[0].mxu0
    %v205 = vadd.f32 %v105, %v204
    %v206 = vpop.f32.mrb[0].mxu0
    %207 = vmatprep.mubr.bf16.mxu0 0
    %208 = vmatmul.mubr.bf16.gmra.mrb[0].mxu0 %v116
    %v209 = vpop.f32.mrb[0].mxu0
    %v210 = vadd.f32 %v105, %v209
    %v211 = vpop.f32.mrb[0].mxu0
    %v212 = vpop.f32.mrb[0].mxu0
    %v213 = vadd.f32 %v105, %v212
    %v214 = vpop.f32.mrb[0].mxu0
    %215 = vdwg.mxu0
    %v216 = vpack.c.bf16 %v205, %v202
    %v217 = vpack.c.bf16 %v213, %v210
    %v218 = vld [vmem:[%s5] sm:$0xf]
    %v219 = vld [vmem:[%s5 + $0x4] sm:$0xf]
    %v220 = vld [vmem:[%s5 + $0x8] sm:$0xf]
    %v221 = vld [vmem:[%s5 + $0xc] sm:$0xf]
    %v222 = vld [vmem:[%s6] sm:$0x1]
    %v224 = vlaneseq
    %v225 = vshrl.u32 %v224, 7
    %v226 = vsub.s32 0, %v225
    %v227 = vrot.slane %v222, %v226
    %v233 = vunpack.c.l.b16 %v218
    %v234 = vunpack.c.l.b16 %v219
    %v235 = vunpack.c.l.b16 %v220
    %v236 = vunpack.c.l.b16 %v221
    %v237 = vpack.c.b16 %v234, %v233
    %v238 = vpack.c.b16 %v236, %v235
    %vm241 = vcmask 261120
    %v243 = vsel %vm241, %v216, 0
    %v246 = vsel %vm241, %v217, 0
    %248 = vmatprep.subr.bf16.mxu0 0
    %249 = vmatpush1.bf16.msra.mxu0 %v237
    %250 = vmatprep.subr.bf16.mxu0 0
    %251 = vmatpush1.bf16.msra.mxu0 %v238
    %252 = vmatprep.subr.bf16.mxu0 0
    %253 = vmatpush1.bf16.msra.mxu0 0
    %254 = vmatprep.subr.bf16.mxu0 0
    %255 = vmatpush1.bf16.msra.mxu0 0
    %256 = vmatprep.subr.bf16.mxu0 0
    %257 = vmatpush1.bf16.msra.mxu0 0
    %258 = vmatprep.subr.bf16.mxu0 0
    %259 = vmatpush1.bf16.msra.mxu0 0
    %260 = vmatprep.subr.bf16.mxu0 0
    %261 = vmatpush1.bf16.msra.mxu0 0
    %262 = vmatprep.subr.bf16.mxu0 0
    %263 = vmatpush1.bf16.msra.mxu0 0
    %264 = vmatprep.subr.bf16.mxu0 0
    %265 = vmatpush1.bf16.msra.mxu0 0
    %266 = vmatprep.subr.bf16.mxu0 0
    %267 = vmatpush1.bf16.msra.mxu0 0
    %268 = vmatprep.subr.bf16.mxu0 0
    %269 = vmatpush1.bf16.msra.mxu0 0
    %270 = vmatprep.subr.bf16.mxu0 0
    %271 = vmatpush1.bf16.msra.mxu0 0
    %272 = vmatprep.subr.bf16.mxu0 0
    %273 = vmatpush1.bf16.msra.mxu0 0
    %274 = vmatprep.subr.bf16.mxu0 0
    %275 = vmatpush1.bf16.msra.mxu0 0
    %276 = vmatprep.subr.bf16.mxu0 0
    %277 = vmatpush1.bf16.msra.mxu0 0
    %278 = vmatprep.subr.bf16.mxu0 0
    %279 = vmatpush1.bf16.msra.mxu0 0
    %280 = vmatprep.mubr.bf16.mxu0 0
    %281 = vmatmul.mubr.bf16.gmra.mrb[0].mxu0 %v243
    %v282 = vpop.f32.mrb[0].mxu0
    %v283 = vadd.f32 %v227, %v282
    %v284 = vpop.f32.mrb[0].mxu0
    %v285 = vpop.f32.mrb[0].mxu0
    %v286 = vadd.f32 %v227, %v285
    %v287 = vpop.f32.mrb[0].mxu0
    %288 = vmatprep.mubr.bf16.mxu0 0
    %289 = vmatmul.mubr.bf16.gmra.mrb[0].mxu0 %v246
    %v290 = vpop.f32.mrb[0].mxu0
    %v291 = vadd.f32 %v227, %v290
    %v292 = vpop.f32.mrb[0].mxu0
    %v293 = vpop.f32.mrb[0].mxu0
    %v294 = vadd.f32 %v227, %v293
    %v295 = vpop.f32.mrb[0].mxu0
    %296 = vdwg.mxu0
    %v297 = vld [vmem:[%s7] sm:$0xf]
    %v298 = vld [vmem:[%s7 + $0x4] sm:$0xf]
    %v299 = vld [vmem:[%s7 + $0x8] sm:$0xf]
    %v300 = vld [vmem:[%s7 + $0xc] sm:$0xf]
    %v301 = vld [vmem:[%s8] sm:$0x1]
    %v303 = vlaneseq
    %v304 = vshrl.u32 %v303, 7
    %v305 = vsub.s32 0, %v304
    %v306 = vrot.slane %v301, %v305
    %v312 = vunpack.c.l.b16 %v297
    %v313 = vunpack.c.l.b16 %v298
    %v314 = vunpack.c.l.b16 %v299
    %v315 = vunpack.c.l.b16 %v300
    %v316 = vpack.c.b16 %v313, %v312
    %v317 = vpack.c.b16 %v315, %v314
    %320 = vmatprep.subr.bf16.mxu0 0
    %321 = vmatpush1.bf16.msra.mxu0 %v316
    %322 = vmatprep.subr.bf16.mxu0 0
    %323 = vmatpush1.bf16.msra.mxu0 %v317
    %324 = vmatprep.subr.bf16.mxu0 0
    %325 = vmatpush1.bf16.msra.mxu0 0
    %326 = vmatprep.subr.bf16.mxu0 0
    %327 = vmatpush1.bf16.msra.mxu0 0
    %328 = vmatprep.subr.bf16.mxu0 0
    %329 = vmatpush1.bf16.msra.mxu0 0
    %330 = vmatprep.subr.bf16.mxu0 0
    %331 = vmatpush1.bf16.msra.mxu0 0
    %332 = vmatprep.subr.bf16.mxu0 0
    %333 = vmatpush1.bf16.msra.mxu0 0
    %334 = vmatprep.subr.bf16.mxu0 0
    %335 = vmatpush1.bf16.msra.mxu0 0
    %336 = vmatprep.subr.bf16.mxu0 0
    %337 = vmatpush1.bf16.msra.mxu0 0
    %338 = vmatprep.subr.bf16.mxu0 0
    %339 = vmatpush1.bf16.msra.mxu0 0
    %340 = vmatprep.subr.bf16.mxu0 0
    %341 = vmatpush1.bf16.msra.mxu0 0
    %342 = vmatprep.subr.bf16.mxu0 0
    %343 = vmatpush1.bf16.msra.mxu0 0
    %344 = vmatprep.subr.bf16.mxu0 0
    %345 = vmatpush1.bf16.msra.mxu0 0
    %346 = vmatprep.subr.bf16.mxu0 0
    %347 = vmatpush1.bf16.msra.mxu0 0
    %348 = vmatprep.subr.bf16.mxu0 0
    %349 = vmatpush1.bf16.msra.mxu0 0
    %350 = vmatprep.subr.bf16.mxu0 0
    %351 = vmatpush1.bf16.msra.mxu0 0
    %352 = vmatprep.mubr.bf16.mxu0 0
    %353 = vmatmul.mubr.bf16.gmra.mrb[0].mxu0 %v243
    %v354 = vpop.f32.mrb[0].mxu0
    %v355 = vadd.f32 %v306, %v354
    %v356 = vpop.f32.mrb[0].mxu0
    %v357 = vpop.f32.mrb[0].mxu0
    %v358 = vadd.f32 %v306, %v357
    %v359 = vpop.f32.mrb[0].mxu0
    %360 = vmatprep.mubr.bf16.mxu0 0
    %361 = vmatmul.mubr.bf16.gmra.mrb[0].mxu0 %v246
    %v362 = vpop.f32.mrb[0].mxu0
    %v363 = vadd.f32 %v306, %v362
    %v364 = vpop.f32.mrb[0].mxu0
    %v365 = vpop.f32.mrb[0].mxu0
    %v366 = vadd.f32 %v306, %v365
    %v367 = vpop.f32.mrb[0].mxu0
    %368 = vdwg.mxu0
    %v369 = vld [vmem:[%s9] sm:$0xf]
    %v370 = vld [vmem:[%s9 + $0x4] sm:$0xf]
    %v371 = vld [vmem:[%s9 + $0x8] sm:$0xf]
    %v372 = vld [vmem:[%s9 + $0xc] sm:$0xf]
    %v373 = vld [vmem:[%s10] sm:$0x1]
    %v375 = vlaneseq
    %v376 = vshrl.u32 %v375, 7
    %v377 = vsub.s32 0, %v376
    %v378 = vrot.slane %v373, %v377
    %v384 = vunpack.c.l.b16 %v369
    %v385 = vunpack.c.l.b16 %v370
    %v386 = vunpack.c.l.b16 %v371
    %v387 = vunpack.c.l.b16 %v372
    %v388 = vpack.c.b16 %v385, %v384
    %v389 = vpack.c.b16 %v387, %v386
    %392 = vmatprep.subr.bf16.mxu0 0
    %393 = vmatpush1.bf16.msra.mxu0 %v388
    %394 = vmatprep.subr.bf16.mxu0 0
    %395 = vmatpush1.bf16.msra.mxu0 %v389
    %396 = vmatprep.subr.bf16.mxu0 0
    %397 = vmatpush1.bf16.msra.mxu0 0
    %398 = vmatprep.subr.bf16.mxu0 0
    %399 = vmatpush1.bf16.msra.mxu0 0
    %400 = vmatprep.subr.bf16.mxu0 0
    %401 = vmatpush1.bf16.msra.mxu0 0
    %402 = vmatprep.subr.bf16.mxu0 0
    %403 = vmatpush1.bf16.msra.mxu0 0
    %404 = vmatprep.subr.bf16.mxu0 0
    %405 = vmatpush1.bf16.msra.mxu0 0
    %406 = vmatprep.subr.bf16.mxu0 0
    %407 = vmatpush1.bf16.msra.mxu0 0
    %408 = vmatprep.subr.bf16.mxu0 0
    %409 = vmatpush1.bf16.msra.mxu0 0
    %410 = vmatprep.subr.bf16.mxu0 0
    %411 = vmatpush1.bf16.msra.mxu0 0
    %412 = vmatprep.subr.bf16.mxu0 0
    %413 = vmatpush1.bf16.msra.mxu0 0
    %414 = vmatprep.subr.bf16.mxu0 0
    %415 = vmatpush1.bf16.msra.mxu0 0
    %416 = vmatprep.subr.bf16.mxu0 0
    %417 = vmatpush1.bf16.msra.mxu0 0
    %418 = vmatprep.subr.bf16.mxu0 0
    %419 = vmatpush1.bf16.msra.mxu0 0
    %420 = vmatprep.subr.bf16.mxu0 0
    %421 = vmatpush1.bf16.msra.mxu0 0
    %422 = vmatprep.subr.bf16.mxu0 0
    %423 = vmatpush1.bf16.msra.mxu0 0
    %424 = vmatprep.mubr.bf16.mxu0 0
    %425 = vmatmul.mubr.bf16.gmra.mrb[0].mxu0 %v243
    %v426 = vpop.f32.mrb[0].mxu0
    %v427 = vadd.f32 %v378, %v426
    %v428 = vpop.f32.mrb[0].mxu0
    %v429 = vpop.f32.mrb[0].mxu0
    %v430 = vadd.f32 %v378, %v429
    %v431 = vpop.f32.mrb[0].mxu0
    %432 = vmatprep.mubr.bf16.mxu0 0
    %433 = vmatmul.mubr.bf16.gmra.mrb[0].mxu0 %v246
    %v434 = vpop.f32.mrb[0].mxu0
    %v435 = vadd.f32 %v378, %v434
    %v436 = vpop.f32.mrb[0].mxu0
    %v437 = vpop.f32.mrb[0].mxu0
    %v438 = vadd.f32 %v378, %v437
    %v439 = vpop.f32.mrb[0].mxu0
    %440 = vdwg.mxu0
    %v441 = vpack.c.bf16 %v358, %v355
    %v442 = vpack.c.bf16 %v366, %v363
    %v443 = vpack.c.bf16 %v430, %v427
    %v444 = vpack.c.bf16 %v438, %v435
    %v445 = vld [vmem:[%s4] sm:$0x1]
    %v447 = vlaneseq
    %v448 = vshrl.u32 %v447, 7
    %v449 = vsub.s32 0, %v448
    %v450 = vrot.slane %v445, %v449
    %v452 = vmul.f32 %v283, %v450
    %v453 = vmul.f32 %v286, %v450
    %v454 = vmul.f32 %v291, %v450
    %v455 = vmul.f32 %v294, %v450
    %v456 = vpack.c.bf16 %v453, %v452
    %v457 = vpack.c.bf16 %v455, %v454
    %v459 = vsel %vm241, %v456, 0
    %v462 = vsel %vm241, %v457, 0
    %v465 = vsel %vm241, %v441, 0
    %v468 = vsel %vm241, %v442, 0
    %470 = vmatprep.subr.bf16.mxu0 0
    %471 = vmatpush1.bf16.xpose.msra.mxu0 %v465
    %472 = vmatprep.subr.bf16.mxu0 0
    %473 = vmatpush1.bf16.xpose.msra.mxu0 %v468
    %474 = vmatprep.subr.bf16.mxu0 0
    %475 = vmatpush1.bf16.xpose.msra.mxu0 0
    %476 = vmatprep.subr.bf16.mxu0 0
    %477 = vmatpush1.bf16.xpose.msra.mxu0 0
    %478 = vmatprep.subr.bf16.mxu0 0
    %479 = vmatpush1.bf16.xpose.msra.mxu0 0
    %480 = vmatprep.subr.bf16.mxu0 0
    %481 = vmatpush1.bf16.xpose.msra.mxu0 0
    %482 = vmatprep.subr.bf16.mxu0 0
    %483 = vmatpush1.bf16.xpose.msra.mxu0 0
    %484 = vmatprep.subr.bf16.mxu0 0
    %485 = vmatpush1.bf16.xpose.msra.mxu0 0
    %486 = vmatprep.subr.bf16.mxu0 0
    %487 = vmatpush1.bf16.xpose.msra.mxu0 0
    %488 = vmatprep.subr.bf16.mxu0 0
    %489 = vmatpush1.bf16.xpose.msra.mxu0 0
    %490 = vmatprep.subr.bf16.mxu0 0
    %491 = vmatpush1.bf16.xpose.msra.mxu0 0
    %492 = vmatprep.subr.bf16.mxu0 0
    %493 = vmatpush1.bf16.xpose.msra.mxu0 0
    %494 = vmatprep.subr.bf16.mxu0 0
    %495 = vmatpush1.bf16.xpose.msra.mxu0 0
    %496 = vmatprep.subr.bf16.mxu0 0
    %497 = vmatpush1.bf16.xpose.msra.mxu0 0
    %498 = vmatprep.subr.bf16.mxu0 0
    %499 = vmatpush1.bf16.xpose.msra.mxu0 0
    %500 = vmatprep.subr.bf16.mxu0 0
    %501 = vmatpush1.bf16.xpose.msra.mxu0 0
    %502 = vmatprep.mubr.bf16.mxu0 0
    %503 = vmatmul.mubr.bf16.gmra.mrb[0].mxu0 %v459
    %v504 = vpop.f32.mrb[0].mxu0
    %v505 = vadd.f32 0.0, %v504
    %v506 = vpop.f32.mrb[0].mxu0
    %v507 = vpop.f32.mrb[0].mxu0
    %v508 = vadd.f32 0.0, %v507
    %v509 = vpop.f32.mrb[0].mxu0
    %510 = vmatprep.mubr.bf16.mxu0 0
    %511 = vmatmul.mubr.bf16.gmra.mrb[0].mxu0 %v462
    %v512 = vpop.f32.mrb[0].mxu0
    %v513 = vadd.f32 0.0, %v512
    %v514 = vpop.f32.mrb[0].mxu0
    %v515 = vpop.f32.mrb[0].mxu0
    %v516 = vadd.f32 0.0, %v515
    %v517 = vpop.f32.mrb[0].mxu0
    %518 = vdwg.mxu0
    %v519 = vmul.f32 %v505, 0.35355338
    %v520 = vmul.f32 %v508, 0.35355338
    %v521 = vmul.f32 %v513, 0.35355338
    %v522 = vmul.f32 %v516, 0.35355338
    %v523 = vadd.f32 %v519, %v76
    %v524 = vadd.f32 %v520, %v77
    %v525 = vadd.f32 %v521, %v78
    %v526 = vadd.f32 %v522, %v79
    %v527 = vsel %vm241, %v523, -inf
    %528 = vmax.xlane.f32.xlu0 %v527
    %v529 = vpop.xlane.xlu0 %528
    %v530 = vsel %vm241, %v524, -inf
    %531 = vmax.xlane.f32.xlu0 %v530
    %v532 = vpop.xlane.xlu0 %531
    %v533 = vsel %vm241, %v525, -inf
    %534 = vmax.xlane.f32.xlu0 %v533
    %v535 = vpop.xlane.xlu0 %534
    %v536 = vsel %vm241, %v526, -inf
    %537 = vmax.xlane.f32.xlu0 %v536
    %v538 = vpop.xlane.xlu0 %537
    %v539 = vsub.f32 %v523, %v529
    %v540 = vsub.f32 %v524, %v532
    %v541 = vsub.f32 %v525, %v535
    %v542 = vsub.f32 %v526, %v538
    %v543 = vmul.f32 %v539, 1.442695
    %v544 = vpow.pop %v543
    %v545 = vmul.f32 %v540, 1.442695
    %v546 = vpow.pop %v545
    %v547 = vmul.f32 %v541, 1.442695
    %v548 = vpow.pop %v547
    %v549 = vmul.f32 %v542, 1.442695
    %v550 = vpow.pop %v549
    %v551 = vsel %vm241, %v544, 0.0
    %552 = vadd.xlane.f32.xlu0 %v551
    %v553 = vpop.xlane.xlu0 %552
    %v554 = vsel %vm241, %v546, 0.0
    %555 = vadd.xlane.f32.xlu0 %v554
    %v556 = vpop.xlane.xlu0 %555
    %v557 = vsel %vm241, %v548, 0.0
    %558 = vadd.xlane.f32.xlu0 %v557
    %v559 = vpop.xlane.xlu0 %558
    %v560 = vsel %vm241, %v550, 0.0
    %561 = vadd.xlane.f32.xlu0 %v560
    %v562 = vpop.xlane.xlu0 %561
    %v563 = vrcp.pop %v553
    %v564 = vmul.f32 %v544, %v563
    %v565 = vrcp.pop %v556
    %v566 = vmul.f32 %v546, %v565
    %v567 = vrcp.pop %v559
    %v568 = vmul.f32 %v548, %v567
    %v569 = vrcp.pop %v562
    %v570 = vmul.f32 %v550, %v569
    %v571 = vpack.c.bf16 %v566, %v564
    %v572 = vpack.c.bf16 %v570, %v568
    %v574 = vsel %vm241, %v571, 0
    %v577 = vsel %vm241, %v572, 0
    %579 = vmatprep.subr.bf16.mxu0 0
    %580 = vmatpush1.bf16.msra.mxu0 %v443
    %581 = vmatprep.subr.bf16.mxu0 0
    %582 = vmatpush1.bf16.msra.mxu0 %v444
    %583 = vmatprep.subr.bf16.mxu0 0
    %584 = vmatpush1.bf16.msra.mxu0 0
    %585 = vmatprep.subr.bf16.mxu0 0
    %586 = vmatpush1.bf16.msra.mxu0 0
    %587 = vmatprep.subr.bf16.mxu0 0
    %588 = vmatpush1.bf16.msra.mxu0 0
    %589 = vmatprep.subr.bf16.mxu0 0
    %590 = vmatpush1.bf16.msra.mxu0 0
    %591 = vmatprep.subr.bf16.mxu0 0
    %592 = vmatpush1.bf16.msra.mxu0 0
    %593 = vmatprep.subr.bf16.mxu0 0
    %594 = vmatpush1.bf16.msra.mxu0 0
    %595 = vmatprep.subr.bf16.mxu0 0
    %596 = vmatpush1.bf16.msra.mxu0 0
    %597 = vmatprep.subr.bf16.mxu0 0
    %598 = vmatpush1.bf16.msra.mxu0 0
    %599 = vmatprep.subr.bf16.mxu0 0
    %600 = vmatpush1.bf16.msra.mxu0 0
    %601 = vmatprep.subr.bf16.mxu0 0
    %602 = vmatpush1.bf16.msra.mxu0 0
    %603 = vmatprep.subr.bf16.mxu0 0
    %604 = vmatpush1.bf16.msra.mxu0 0
    %605 = vmatprep.subr.bf16.mxu0 0
    %606 = vmatpush1.bf16.msra.mxu0 0
    %607 = vmatprep.subr.bf16.mxu0 0
    %608 = vmatpush1.bf16.msra.mxu0 0
    %609 = vmatprep.subr.bf16.mxu0 0
    %610 = vmatpush1.bf16.msra.mxu0 0
    %611 = vmatprep.mubr.bf16.mxu0 0
    %612 = vmatmul.mubr.bf16.gmra.mrb[0].mxu0 %v574
    %v613 = vpop.f32.mrb[0].mxu0
    %v614 = vadd.f32 0.0, %v613
    %v615 = vpop.f32.mrb[0].mxu0
    %v616 = vpop.f32.mrb[0].mxu0
    %v617 = vadd.f32 0.0, %v616
    %v618 = vpop.f32.mrb[0].mxu0
    %619 = vmatprep.mubr.bf16.mxu0 0
    %620 = vmatmul.mubr.bf16.gmra.mrb[0].mxu0 %v577
    %v621 = vpop.f32.mrb[0].mxu0
    %v622 = vadd.f32 0.0, %v621
    %v623 = vpop.f32.mrb[0].mxu0
    %v624 = vpop.f32.mrb[0].mxu0
    %v625 = vadd.f32 0.0, %v624
    %v626 = vpop.f32.mrb[0].mxu0
    %627 = vdwg.mxu0
    %v628 = vmul.f32 %v614, %v450
    %v629 = vmul.f32 %v617, %v450
    %v630 = vmul.f32 %v622, %v450
    %v631 = vmul.f32 %v625, %v450
    %v632 = vadd.f32 %v628, 0.0
    %v633 = vadd.f32 %v629, 0.0
    %v634 = vadd.f32 %v630, 0.0
    %v635 = vadd.f32 %v631, 0.0
    %s636 = scalar_lea.vmem %s4, 1
    %v637 = vld [vmem:[%s636] sm:$0x1]
    %v639 = vlaneseq
    %v640 = vshrl.u32 %v639, 7
    %v641 = vsub.s32 0, %v640
    %v642 = vrot.slane %v637, %v641
    %v644 = vmul.f32 %v283, %v642
    %v645 = vmul.f32 %v286, %v642
    %v646 = vmul.f32 %v291, %v642
    %v647 = vmul.f32 %v294, %v642
    %v648 = vpack.c.bf16 %v645, %v644
    %v649 = vpack.c.bf16 %v647, %v646
    %v651 = vsel %vm241, %v648, 0
    %v654 = vsel %vm241, %v649, 0
    %656 = vmatprep.subr.bf16.mxu0 0
    %657 = vmatpush1.bf16.xpose.msra.mxu0 %v465
    %658 = vmatprep.subr.bf16.mxu0 0
    %659 = vmatpush1.bf16.xpose.msra.mxu0 %v468
    %660 = vmatprep.subr.bf16.mxu0 0
    %661 = vmatpush1.bf16.xpose.msra.mxu0 0
    %662 = vmatprep.subr.bf16.mxu0 0
    %663 = vmatpush1.bf16.xpose.msra.mxu0 0
    %664 = vmatprep.subr.bf16.mxu0 0
    %665 = vmatpush1.bf16.xpose.msra.mxu0 0
    %666 = vmatprep.subr.bf16.mxu0 0
    %667 = vmatpush1.bf16.xpose.msra.mxu0 0
    %668 = vmatprep.subr.bf16.mxu0 0
    %669 = vmatpush1.bf16.xpose.msra.mxu0 0
    %670 = vmatprep.subr.bf16.mxu0 0
    %671 = vmatpush1.bf16.xpose.msra.mxu0 0
    %672 = vmatprep.subr.bf16.mxu0 0
    %673 = vmatpush1.bf16.xpose.msra.mxu0 0
    %674 = vmatprep.subr.bf16.mxu0 0
    %675 = vmatpush1.bf16.xpose.msra.mxu0 0
    %676 = vmatprep.subr.bf16.mxu0 0
    %677 = vmatpush1.bf16.xpose.msra.mxu0 0
    %678 = vmatprep.subr.bf16.mxu0 0
    %679 = vmatpush1.bf16.xpose.msra.mxu0 0
    %680 = vmatprep.subr.bf16.mxu0 0
    %681 = vmatpush1.bf16.xpose.msra.mxu0 0
    %682 = vmatprep.subr.bf16.mxu0 0
    %683 = vmatpush1.bf16.xpose.msra.mxu0 0
    %684 = vmatprep.subr.bf16.mxu0 0
    %685 = vmatpush1.bf16.xpose.msra.mxu0 0
    %686 = vmatprep.subr.bf16.mxu0 0
    %687 = vmatpush1.bf16.xpose.msra.mxu0 0
    %688 = vmatprep.mubr.bf16.mxu0 0
    %689 = vmatmul.mubr.bf16.gmra.mrb[0].mxu0 %v651
    %v690 = vpop.f32.mrb[0].mxu0
    %v691 = vadd.f32 0.0, %v690
    %v692 = vpop.f32.mrb[0].mxu0
    %v693 = vpop.f32.mrb[0].mxu0
    %v694 = vadd.f32 0.0, %v693
    %v695 = vpop.f32.mrb[0].mxu0
    %696 = vmatprep.mubr.bf16.mxu0 0
    %697 = vmatmul.mubr.bf16.gmra.mrb[0].mxu0 %v654
    %v698 = vpop.f32.mrb[0].mxu0
    %v699 = vadd.f32 0.0, %v698
    %v700 = vpop.f32.mrb[0].mxu0
    %v701 = vpop.f32.mrb[0].mxu0
    %v702 = vadd.f32 0.0, %v701
    %v703 = vpop.f32.mrb[0].mxu0
    %704 = vdwg.mxu0
    %v705 = vmul.f32 %v691, 0.35355338
    %v706 = vmul.f32 %v694, 0.35355338
    %v707 = vmul.f32 %v699, 0.35355338
    %v708 = vmul.f32 %v702, 0.35355338
    %v709 = vadd.f32 %v705, %v76
    %v710 = vadd.f32 %v706, %v77
    %v711 = vadd.f32 %v707, %v78
    %v712 = vadd.f32 %v708, %v79
    %v713 = vsel %vm241, %v709, -inf
    %714 = vmax.xlane.f32.xlu0 %v713
    %v715 = vpop.xlane.xlu0 %714
    %v716 = vsel %vm241, %v710, -inf
    %717 = vmax.xlane.f32.xlu0 %v716
    %v718 = vpop.xlane.xlu0 %717
    %v719 = vsel %vm241, %v711, -inf
    %720 = vmax.xlane.f32.xlu0 %v719
    %v721 = vpop.xlane.xlu0 %720
    %v722 = vsel %vm241, %v712, -inf
    %723 = vmax.xlane.f32.xlu0 %v722
    %v724 = vpop.xlane.xlu0 %723
    %v725 = vsub.f32 %v709, %v715
    %v726 = vsub.f32 %v710, %v718
    %v727 = vsub.f32 %v711, %v721
    %v728 = vsub.f32 %v712, %v724
    %v729 = vmul.f32 %v725, 1.442695
    %v730 = vpow.pop %v729
    %v731 = vmul.f32 %v726, 1.442695
    %v732 = vpow.pop %v731
    %v733 = vmul.f32 %v727, 1.442695
    %v734 = vpow.pop %v733
    %v735 = vmul.f32 %v728, 1.442695
    %v736 = vpow.pop %v735
    %v737 = vsel %vm241, %v730, 0.0
    %738 = vadd.xlane.f32.xlu0 %v737
    %v739 = vpop.xlane.xlu0 %738
    %v740 = vsel %vm241, %v732, 0.0
    %741 = vadd.xlane.f32.xlu0 %v740
    %v742 = vpop.xlane.xlu0 %741
    %v743 = vsel %vm241, %v734, 0.0
    %744 = vadd.xlane.f32.xlu0 %v743
    %v745 = vpop.xlane.xlu0 %744
    %v746 = vsel %vm241, %v736, 0.0
    %747 = vadd.xlane.f32.xlu0 %v746
    %v748 = vpop.xlane.xlu0 %747
    %v749 = vrcp.pop %v739
    %v750 = vmul.f32 %v730, %v749
    %v751 = vrcp.pop %v742
    %v752 = vmul.f32 %v732, %v751
    %v753 = vrcp.pop %v745
    %v754 = vmul.f32 %v734, %v753
    %v755 = vrcp.pop %v748
    %v756 = vmul.f32 %v736, %v755
    %v757 = vpack.c.bf16 %v752, %v750
    %v758 = vpack.c.bf16 %v756, %v754
    %v760 = vsel %vm241, %v757, 0
    %v763 = vsel %vm241, %v758, 0
    %765 = vmatprep.subr.bf16.mxu0 0
    %766 = vmatpush1.bf16.msra.mxu0 %v443
    %767 = vmatprep.subr.bf16.mxu0 0
    %768 = vmatpush1.bf16.msra.mxu0 %v444
    %769 = vmatprep.subr.bf16.mxu0 0
    %770 = vmatpush1.bf16.msra.mxu0 0
    %771 = vmatprep.subr.bf16.mxu0 0
    %772 = vmatpush1.bf16.msra.mxu0 0
    %773 = vmatprep.subr.bf16.mxu0 0
    %774 = vmatpush1.bf16.msra.mxu0 0
    %775 = vmatprep.subr.bf16.mxu0 0
    %776 = vmatpush1.bf16.msra.mxu0 0
    %777 = vmatprep.subr.bf16.mxu0 0
    %778 = vmatpush1.bf16.msra.mxu0 0
    %779 = vmatprep.subr.bf16.mxu0 0
    %780 = vmatpush1.bf16.msra.mxu0 0
    %781 = vmatprep.subr.bf16.mxu0 0
    %782 = vmatpush1.bf16.msra.mxu0 0
    %783 = vmatprep.subr.bf16.mxu0 0
    %784 = vmatpush1.bf16.msra.mxu0 0
    %785 = vmatprep.subr.bf16.mxu0 0
    %786 = vmatpush1.bf16.msra.mxu0 0
    %787 = vmatprep.subr.bf16.mxu0 0
    %788 = vmatpush1.bf16.msra.mxu0 0
    %789 = vmatprep.subr.bf16.mxu0 0
    %790 = vmatpush1.bf16.msra.mxu0 0
    %791 = vmatprep.subr.bf16.mxu0 0
    %792 = vmatpush1.bf16.msra.mxu0 0
    %793 = vmatprep.subr.bf16.mxu0 0
    %794 = vmatpush1.bf16.msra.mxu0 0
    %795 = vmatprep.subr.bf16.mxu0 0
    %796 = vmatpush1.bf16.msra.mxu0 0
    %797 = vmatprep.mubr.bf16.mxu0 0
    %798 = vmatmul.mubr.bf16.gmra.mrb[0].mxu0 %v760
    %v799 = vpop.f32.mrb[0].mxu0
    %v800 = vadd.f32 0.0, %v799
    %v801 = vpop.f32.mrb[0].mxu0
    %v802 = vpop.f32.mrb[0].mxu0
    %v803 = vadd.f32 0.0, %v802
    %v804 = vpop.f32.mrb[0].mxu0
    %805 = vmatprep.mubr.bf16.mxu0 0
    %806 = vmatmul.mubr.bf16.gmra.mrb[0].mxu0 %v763
    %v807 = vpop.f32.mrb[0].mxu0
    %v808 = vadd.f32 0.0, %v807
    %v809 = vpop.f32.mrb[0].mxu0
    %v810 = vpop.f32.mrb[0].mxu0
    %v811 = vadd.f32 0.0, %v810
    %v812 = vpop.f32.mrb[0].mxu0
    %813 = vdwg.mxu0
    %v814 = vmul.f32 %v800, %v642
    %v815 = vmul.f32 %v803, %v642
    %v816 = vmul.f32 %v808, %v642
    %v817 = vmul.f32 %v811, %v642
    %v818 = vadd.f32 %v632, %v814
    %v819 = vadd.f32 %v633, %v815
    %v820 = vadd.f32 %v634, %v816
    %v821 = vadd.f32 %v635, %v817
    %s822 = scalar_lea.vmem %s4, 2
    %v823 = vld [vmem:[%s822] sm:$0x1]
    %v825 = vlaneseq
    %v826 = vshrl.u32 %v825, 7
    %v827 = vsub.s32 0, %v826
    %v828 = vrot.slane %v823, %v827
    %v830 = vmul.f32 %v283, %v828
    %v831 = vmul.f32 %v286, %v828
    %v832 = vmul.f32 %v291, %v828
    %v833 = vmul.f32 %v294, %v828
    %v834 = vpack.c.bf16 %v831, %v830
    %v835 = vpack.c.bf16 %v833, %v832
    %v837 = vsel %vm241, %v834, 0
    %v840 = vsel %vm241, %v835, 0
    %842 = vmatprep.subr.bf16.mxu0 0
    %843 = vmatpush1.bf16.xpose.msra.mxu0 %v465
    %844 = vmatprep.subr.bf16.mxu0 0
    %845 = vmatpush1.bf16.xpose.msra.mxu0 %v468
    %846 = vmatprep.subr.bf16.mxu0 0
    %847 = vmatpush1.bf16.xpose.msra.mxu0 0
    %848 = vmatprep.subr.bf16.mxu0 0
    %849 = vmatpush1.bf16.xpose.msra.mxu0 0
    %850 = vmatprep.subr.bf16.mxu0 0
    %851 = vmatpush1.bf16.xpose.msra.mxu0 0
    %852 = vmatprep.subr.bf16.mxu0 0
    %853 = vmatpush1.bf16.xpose.msra.mxu0 0
    %854 = vmatprep.subr.bf16.mxu0 0
    %855 = vmatpush1.bf16.xpose.msra.mxu0 0
    %856 = vmatprep.subr.bf16.mxu0 0
    %857 = vmatpush1.bf16.xpose.msra.mxu0 0
    %858 = vmatprep.subr.bf16.mxu0 0
    %859 = vmatpush1.bf16.xpose.msra.mxu0 0
    %860 = vmatprep.subr.bf16.mxu0 0
    %861 = vmatpush1.bf16.xpose.msra.mxu0 0
    %862 = vmatprep.subr.bf16.mxu0 0
    %863 = vmatpush1.bf16.xpose.msra.mxu0 0
    %864 = vmatprep.subr.bf16.mxu0 0
    %865 = vmatpush1.bf16.xpose.msra.mxu0 0
    %866 = vmatprep.subr.bf16.mxu0 0
    %867 = vmatpush1.bf16.xpose.msra.mxu0 0
    %868 = vmatprep.subr.bf16.mxu0 0
    %869 = vmatpush1.bf16.xpose.msra.mxu0 0
    %870 = vmatprep.subr.bf16.mxu0 0
    %871 = vmatpush1.bf16.xpose.msra.mxu0 0
    %872 = vmatprep.subr.bf16.mxu0 0
    %873 = vmatpush1.bf16.xpose.msra.mxu0 0
    %874 = vmatprep.mubr.bf16.mxu0 0
    %875 = vmatmul.mubr.bf16.gmra.mrb[0].mxu0 %v837
    %v876 = vpop.f32.mrb[0].mxu0
    %v877 = vadd.f32 0.0, %v876
    %v878 = vpop.f32.mrb[0].mxu0
    %v879 = vpop.f32.mrb[0].mxu0
    %v880 = vadd.f32 0.0, %v879
    %v881 = vpop.f32.mrb[0].mxu0
    %882 = vmatprep.mubr.bf16.mxu0 0
    %883 = vmatmul.mubr.bf16.gmra.mrb[0].mxu0 %v840
    %v884 = vpop.f32.mrb[0].mxu0
    %v885 = vadd.f32 0.0, %v884
    %v886 = vpop.f32.mrb[0].mxu0
    %v887 = vpop.f32.mrb[0].mxu0
    %v888 = vadd.f32 0.0, %v887
    %v889 = vpop.f32.mrb[0].mxu0
    %890 = vdwg.mxu0
    %v891 = vmul.f32 %v877, 0.35355338
    %v892 = vmul.f32 %v880, 0.35355338
    %v893 = vmul.f32 %v885, 0.35355338
    %v894 = vmul.f32 %v888, 0.35355338
    %v895 = vadd.f32 %v891, %v76
    %v896 = vadd.f32 %v892, %v77
    %v897 = vadd.f32 %v893, %v78
    %v898 = vadd.f32 %v894, %v79
    %v899 = vsel %vm241, %v895, -inf
    %900 = vmax.xlane.f32.xlu0 %v899
    %v901 = vpop.xlane.xlu0 %900
    %v902 = vsel %vm241, %v896, -inf
    %903 = vmax.xlane.f32.xlu0 %v902
    %v904 = vpop.xlane.xlu0 %903
    %v905 = vsel %vm241, %v897, -inf
    %906 = vmax.xlane.f32.xlu0 %v905
    %v907 = vpop.xlane.xlu0 %906
    %v908 = vsel %vm241, %v898, -inf
    %909 = vmax.xlane.f32.xlu0 %v908
    %v910 = vpop.xlane.xlu0 %909
    %v911 = vsub.f32 %v895, %v901
    %v912 = vsub.f32 %v896, %v904
    %v913 = vsub.f32 %v897, %v907
    %v914 = vsub.f32 %v898, %v910
    %v915 = vmul.f32 %v911, 1.442695
    %v916 = vpow.pop %v915
    %v917 = vmul.f32 %v912, 1.442695
    %v918 = vpow.pop %v917
    %v919 = vmul.f32 %v913, 1.442695
    %v920 = vpow.pop %v919
    %v921 = vmul.f32 %v914, 1.442695
    %v922 = vpow.pop %v921
    %v923 = vsel %vm241, %v916, 0.0
    %924 = vadd.xlane.f32.xlu0 %v923
    %v925 = vpop.xlane.xlu0 %924
    %v926 = vsel %vm241, %v918, 0.0
    %927 = vadd.xlane.f32.xlu0 %v926
    %v928 = vpop.xlane.xlu0 %927
    %v929 = vsel %vm241, %v920, 0.0
    %930 = vadd.xlane.f32.xlu0 %v929
    %v931 = vpop.xlane.xlu0 %930
    %v932 = vsel %vm241, %v922, 0.0
    %933 = vadd.xlane.f32.xlu0 %v932
    %v934 = vpop.xlane.xlu0 %933
    %v935 = vrcp.pop %v925
    %v936 = vmul.f32 %v916, %v935
    %v937 = vrcp.pop %v928
    %v938 = vmul.f32 %v918, %v937
    %v939 = vrcp.pop %v931
    %v940 = vmul.f32 %v920, %v939
    %v941 = vrcp.pop %v934
    %v942 = vmul.f32 %v922, %v941
    %v943 = vpack.c.bf16 %v938, %v936
    %v944 = vpack.c.bf16 %v942, %v940
    %v946 = vsel %vm241, %v943, 0
    %v949 = vsel %vm241, %v944, 0
    %951 = vmatprep.subr.bf16.mxu0 0
    %952 = vmatpush1.bf16.msra.mxu0 %v443
    %953 = vmatprep.subr.bf16.mxu0 0
    %954 = vmatpush1.bf16.msra.mxu0 %v444
    %955 = vmatprep.subr.bf16.mxu0 0
    %956 = vmatpush1.bf16.msra.mxu0 0
    %957 = vmatprep.subr.bf16.mxu0 0
    %958 = vmatpush1.bf16.msra.mxu0 0
    %959 = vmatprep.subr.bf16.mxu0 0
    %960 = vmatpush1.bf16.msra.mxu0 0
    %961 = vmatprep.subr.bf16.mxu0 0
    %962 = vmatpush1.bf16.msra.mxu0 0
    %963 = vmatprep.subr.bf16.mxu0 0
    %964 = vmatpush1.bf16.msra.mxu0 0
    %965 = vmatprep.subr.bf16.mxu0 0
    %966 = vmatpush1.bf16.msra.mxu0 0
    %967 = vmatprep.subr.bf16.mxu0 0
    %968 = vmatpush1.bf16.msra.mxu0 0
    %969 = vmatprep.subr.bf16.mxu0 0
    %970 = vmatpush1.bf16.msra.mxu0 0
    %971 = vmatprep.subr.bf16.mxu0 0
    %972 = vmatpush1.bf16.msra.mxu0 0
    %973 = vmatprep.subr.bf16.mxu0 0
    %974 = vmatpush1.bf16.msra.mxu0 0
    %975 = vmatprep.subr.bf16.mxu0 0
    %976 = vmatpush1.bf16.msra.mxu0 0
    %977 = vmatprep.subr.bf16.mxu0 0
    %978 = vmatpush1.bf16.msra.mxu0 0
    %979 = vmatprep.subr.bf16.mxu0 0
    %980 = vmatpush1.bf16.msra.mxu0 0
    %981 = vmatprep.subr.bf16.mxu0 0
    %982 = vmatpush1.bf16.msra.mxu0 0
    %983 = vmatprep.mubr.bf16.mxu0 0
    %984 = vmatmul.mubr.bf16.gmra.mrb[0].mxu0 %v946
    %v985 = vpop.f32.mrb[0].mxu0
    %v986 = vadd.f32 0.0, %v985
    %v987 = vpop.f32.mrb[0].mxu0
    %v988 = vpop.f32.mrb[0].mxu0
    %v989 = vadd.f32 0.0, %v988
    %v990 = vpop.f32.mrb[0].mxu0
    %991 = vmatprep.mubr.bf16.mxu0 0
    %992 = vmatmul.mubr.bf16.gmra.mrb[0].mxu0 %v949
    %v993 = vpop.f32.mrb[0].mxu0
    %v994 = vadd.f32 0.0, %v993
    %v995 = vpop.f32.mrb[0].mxu0
    %v996 = vpop.f32.mrb[0].mxu0
    %v997 = vadd.f32 0.0, %v996
    %v998 = vpop.f32.mrb[0].mxu0
    %999 = vdwg.mxu0
    %v1000 = vmul.f32 %v986, %v828
    %v1001 = vmul.f32 %v989, %v828
    %v1002 = vmul.f32 %v994, %v828
    %v1003 = vmul.f32 %v997, %v828
    %v1004 = vadd.f32 %v818, %v1000
    %v1005 = vadd.f32 %v819, %v1001
    %v1006 = vadd.f32 %v820, %v1002
    %v1007 = vadd.f32 %v821, %v1003
    %s1008 = scalar_lea.vmem %s4, 3
    %v1009 = vld [vmem:[%s1008] sm:$0x1]
    %v1011 = vlaneseq
    %v1012 = vshrl.u32 %v1011, 7
    %v1013 = vsub.s32 0, %v1012
    %v1014 = vrot.slane %v1009, %v1013
    %v1016 = vmul.f32 %v283, %v1014
    %v1017 = vmul.f32 %v286, %v1014
    %v1018 = vmul.f32 %v291, %v1014
    %v1019 = vmul.f32 %v294, %v1014
    %v1020 = vpack.c.bf16 %v1017, %v1016
    %v1021 = vpack.c.bf16 %v1019, %v1018
    %v1023 = vsel %vm241, %v1020, 0
    %v1026 = vsel %vm241, %v1021, 0
    %1028 = vmatprep.subr.bf16.mxu0 0
    %1029 = vmatpush1.bf16.xpose.msra.mxu0 %v465
    %1030 = vmatprep.subr.bf16.mxu0 0
    %1031 = vmatpush1.bf16.xpose.msra.mxu0 %v468
    %1032 = vmatprep.subr.bf16.mxu0 0
    %1033 = vmatpush1.bf16.xpose.msra.mxu0 0
    %1034 = vmatprep.subr.bf16.mxu0 0
    %1035 = vmatpush1.bf16.xpose.msra.mxu0 0
    %1036 = vmatprep.subr.bf16.mxu0 0
    %1037 = vmatpush1.bf16.xpose.msra.mxu0 0
    %1038 = vmatprep.subr.bf16.mxu0 0
    %1039 = vmatpush1.bf16.xpose.msra.mxu0 0
    %1040 = vmatprep.subr.bf16.mxu0 0
    %1041 = vmatpush1.bf16.xpose.msra.mxu0 0
    %1042 = vmatprep.subr.bf16.mxu0 0
    %1043 = vmatpush1.bf16.xpose.msra.mxu0 0
    %1044 = vmatprep.subr.bf16.mxu0 0
    %1045 = vmatpush1.bf16.xpose.msra.mxu0 0
    %1046 = vmatprep.subr.bf16.mxu0 0
    %1047 = vmatpush1.bf16.xpose.msra.mxu0 0
    %1048 = vmatprep.subr.bf16.mxu0 0
    %1049 = vmatpush1.bf16.xpose.msra.mxu0 0
    %1050 = vmatprep.subr.bf16.mxu0 0
    %1051 = vmatpush1.bf16.xpose.msra.mxu0 0
    %1052 = vmatprep.subr.bf16.mxu0 0
    %1053 = vmatpush1.bf16.xpose.msra.mxu0 0
    %1054 = vmatprep.subr.bf16.mxu0 0
    %1055 = vmatpush1.bf16.xpose.msra.mxu0 0
    %1056 = vmatprep.subr.bf16.mxu0 0
    %1057 = vmatpush1.bf16.xpose.msra.mxu0 0
    %1058 = vmatprep.subr.bf16.mxu0 0
    %1059 = vmatpush1.bf16.xpose.msra.mxu0 0
    %1060 = vmatprep.mubr.bf16.mxu0 0
    %1061 = vmatmul.mubr.bf16.gmra.mrb[0].mxu0 %v1023
    %v1062 = vpop.f32.mrb[0].mxu0
    %v1063 = vadd.f32 0.0, %v1062
    %v1064 = vpop.f32.mrb[0].mxu0
    %v1065 = vpop.f32.mrb[0].mxu0
    %v1066 = vadd.f32 0.0, %v1065
    %v1067 = vpop.f32.mrb[0].mxu0
    %1068 = vmatprep.mubr.bf16.mxu0 0
    %1069 = vmatmul.mubr.bf16.gmra.mrb[0].mxu0 %v1026
    %v1070 = vpop.f32.mrb[0].mxu0
    %v1071 = vadd.f32 0.0, %v1070
    %v1072 = vpop.f32.mrb[0].mxu0
    %v1073 = vpop.f32.mrb[0].mxu0
    %v1074 = vadd.f32 0.0, %v1073
    %v1075 = vpop.f32.mrb[0].mxu0
    %1076 = vdwg.mxu0
    %v1077 = vmul.f32 %v1063, 0.35355338
    %v1078 = vmul.f32 %v1066, 0.35355338
    %v1079 = vmul.f32 %v1071, 0.35355338
    %v1080 = vmul.f32 %v1074, 0.35355338
    %v1081 = vadd.f32 %v1077, %v76
    %v1082 = vadd.f32 %v1078, %v77
    %v1083 = vadd.f32 %v1079, %v78
    %v1084 = vadd.f32 %v1080, %v79
    %v1085 = vsel %vm241, %v1081, -inf
    %1086 = vmax.xlane.f32.xlu0 %v1085
    %v1087 = vpop.xlane.xlu0 %1086
    %v1088 = vsel %vm241, %v1082, -inf
    %1089 = vmax.xlane.f32.xlu0 %v1088
    %v1090 = vpop.xlane.xlu0 %1089
    %v1091 = vsel %vm241, %v1083, -inf
    %1092 = vmax.xlane.f32.xlu0 %v1091
    %v1093 = vpop.xlane.xlu0 %1092
    %v1094 = vsel %vm241, %v1084, -inf
    %1095 = vmax.xlane.f32.xlu0 %v1094
    %v1096 = vpop.xlane.xlu0 %1095
    %v1097 = vsub.f32 %v1081, %v1087
    %v1098 = vsub.f32 %v1082, %v1090
    %v1099 = vsub.f32 %v1083, %v1093
    %v1100 = vsub.f32 %v1084, %v1096
    %v1101 = vmul.f32 %v1097, 1.442695
    %v1102 = vpow.pop %v1101
    %v1103 = vmul.f32 %v1098, 1.442695
    %v1104 = vpow.pop %v1103
    %v1105 = vmul.f32 %v1099, 1.442695
    %v1106 = vpow.pop %v1105
    %v1107 = vmul.f32 %v1100, 1.442695
    %v1108 = vpow.pop %v1107
    %v1109 = vsel %vm241, %v1102, 0.0
    %1110 = vadd.xlane.f32.xlu0 %v1109
    %v1111 = vpop.xlane.xlu0 %1110
    %v1112 = vsel %vm241, %v1104, 0.0
    %1113 = vadd.xlane.f32.xlu0 %v1112
    %v1114 = vpop.xlane.xlu0 %1113
    %v1115 = vsel %vm241, %v1106, 0.0
    %1116 = vadd.xlane.f32.xlu0 %v1115
    %v1117 = vpop.xlane.xlu0 %1116
    %v1118 = vsel %vm241, %v1108, 0.0
    %1119 = vadd.xlane.f32.xlu0 %v1118
    %v1120 = vpop.xlane.xlu0 %1119
    %v1121 = vrcp.pop %v1111
    %v1122 = vmul.f32 %v1102, %v1121
    %v1123 = vrcp.pop %v1114
    %v1124 = vmul.f32 %v1104, %v1123
    %v1125 = vrcp.pop %v1117
    %v1126 = vmul.f32 %v1106, %v1125
    %v1127 = vrcp.pop %v1120
    %v1128 = vmul.f32 %v1108, %v1127
    %v1129 = vpack.c.bf16 %v1124, %v1122
    %v1130 = vpack.c.bf16 %v1128, %v1126
    %v1132 = vsel %vm241, %v1129, 0
    %v1135 = vsel %vm241, %v1130, 0
    %1137 = vmatprep.subr.bf16.mxu0 0
    %1138 = vmatpush1.bf16.msra.mxu0 %v443
    %1139 = vmatprep.subr.bf16.mxu0 0
    %1140 = vmatpush1.bf16.msra.mxu0 %v444
    %1141 = vmatprep.subr.bf16.mxu0 0
    %1142 = vmatpush1.bf16.msra.mxu0 0
    %1143 = vmatprep.subr.bf16.mxu0 0
    %1144 = vmatpush1.bf16.msra.mxu0 0
    %1145 = vmatprep.subr.bf16.mxu0 0
    %1146 = vmatpush1.bf16.msra.mxu0 0
    %1147 = vmatprep.subr.bf16.mxu0 0
    %1148 = vmatpush1.bf16.msra.mxu0 0
    %1149 = vmatprep.subr.bf16.mxu0 0
    %1150 = vmatpush1.bf16.msra.mxu0 0
    %1151 = vmatprep.subr.bf16.mxu0 0
    %1152 = vmatpush1.bf16.msra.mxu0 0
    %1153 = vmatprep.subr.bf16.mxu0 0
    %1154 = vmatpush1.bf16.msra.mxu0 0
    %1155 = vmatprep.subr.bf16.mxu0 0
    %1156 = vmatpush1.bf16.msra.mxu0 0
    %1157 = vmatprep.subr.bf16.mxu0 0
    %1158 = vmatpush1.bf16.msra.mxu0 0
    %1159 = vmatprep.subr.bf16.mxu0 0
    %1160 = vmatpush1.bf16.msra.mxu0 0
    %1161 = vmatprep.subr.bf16.mxu0 0
    %1162 = vmatpush1.bf16.msra.mxu0 0
    %1163 = vmatprep.subr.bf16.mxu0 0
    %1164 = vmatpush1.bf16.msra.mxu0 0
    %1165 = vmatprep.subr.bf16.mxu0 0
    %1166 = vmatpush1.bf16.msra.mxu0 0
    %1167 = vmatprep.subr.bf16.mxu0 0
    %1168 = vmatpush1.bf16.msra.mxu0 0
    %1169 = vmatprep.mubr.bf16.mxu0 0
    %1170 = vmatmul.mubr.bf16.gmra.mrb[0].mxu0 %v1132
    %v1171 = vpop.f32.mrb[0].mxu0
    %v1172 = vadd.f32 0.0, %v1171
    %v1173 = vpop.f32.mrb[0].mxu0
    %v1174 = vpop.f32.mrb[0].mxu0
    %v1175 = vadd.f32 0.0, %v1174
    %v1176 = vpop.f32.mrb[0].mxu0
    %1177 = vmatprep.mubr.bf16.mxu0 0
    %1178 = vmatmul.mubr.bf16.gmra.mrb[0].mxu0 %v1135
    %v1179 = vpop.f32.mrb[0].mxu0
    %v1180 = vadd.f32 0.0, %v1179
    %v1181 = vpop.f32.mrb[0].mxu0
    %v1182 = vpop.f32.mrb[0].mxu0
    %v1183 = vadd.f32 0.0, %v1182
    %v1184 = vpop.f32.mrb[0].mxu0
    %1185 = vdwg.mxu0
    %v1186 = vmul.f32 %v1172, %v1014
    %v1187 = vmul.f32 %v1175, %v1014
    %v1188 = vmul.f32 %v1180, %v1014
    %v1189 = vmul.f32 %v1183, %v1014
    %v1190 = vadd.f32 %v1004, %v1186
    %v1191 = vadd.f32 %v1005, %v1187
    %v1192 = vadd.f32 %v1006, %v1188
    %v1193 = vadd.f32 %v1007, %v1189
    %v1194 = vpack.c.bf16 %v1191, %v1190
    %v1195 = vpack.c.bf16 %v1193, %v1192
    %v1196 = vld [vmem:[%s11] sm:$0xf]
    %v1197 = vld [vmem:[%s11 + $0x4] sm:$0xf]
    %v1198 = vld [vmem:[%s11 + $0x8] sm:$0xf]
    %v1199 = vld [vmem:[%s11 + $0xc] sm:$0xf]
    %v1200 = vld [vmem:[%s12] sm:$0x1]
    %v1202 = vlaneseq
    %v1203 = vshrl.u32 %v1202, 7
    %v1204 = vsub.s32 0, %v1203
    %v1205 = vrot.slane %v1200, %v1204
    %v1211 = vunpack.c.l.b16 %v1196
    %v1212 = vunpack.c.l.b16 %v1197
    %v1213 = vunpack.c.l.b16 %v1198
    %v1214 = vunpack.c.l.b16 %v1199
    %v1215 = vpack.c.b16 %v1212, %v1211
    %v1216 = vpack.c.b16 %v1214, %v1213
    %v1220 = vsel %vm241, %v1194, 0
    %v1223 = vsel %vm241, %v1195, 0
    %1225 = vmatprep.subr.bf16.mxu0 0
    %1226 = vmatpush1.bf16.msra.mxu0 %v1215
    %1227 = vmatprep.subr.bf16.mxu0 0
    %1228 = vmatpush1.bf16.msra.mxu0 %v1216
    %1229 = vmatprep.subr.bf16.mxu0 0
    %1230 = vmatpush1.bf16.msra.mxu0 0
    %1231 = vmatprep.subr.bf16.mxu0 0
    %1232 = vmatpush1.bf16.msra.mxu0 0
    %1233 = vmatprep.subr.bf16.mxu0 0
    %1234 = vmatpush1.bf16.msra.mxu0 0
    %1235 = vmatprep.subr.bf16.mxu0 0
    %1236 = vmatpush1.bf16.msra.mxu0 0
    %1237 = vmatprep.subr.bf16.mxu0 0
    %1238 = vmatpush1.bf16.msra.mxu0 0
    %1239 = vmatprep.subr.bf16.mxu0 0
    %1240 = vmatpush1.bf16.msra.mxu0 0
    %1241 = vmatprep.subr.bf16.mxu0 0
    %1242 = vmatpush1.bf16.msra.mxu0 0
    %1243 = vmatprep.subr.bf16.mxu0 0
    %1244 = vmatpush1.bf16.msra.mxu0 0
    %1245 = vmatprep.subr.bf16.mxu0 0
    %1246 = vmatpush1.bf16.msra.mxu0 0
    %1247 = vmatprep.subr.bf16.mxu0 0
    %1248 = vmatpush1.bf16.msra.mxu0 0
    %1249 = vmatprep.subr.bf16.mxu0 0
    %1250 = vmatpush1.bf16.msra.mxu0 0
    %1251 = vmatprep.subr.bf16.mxu0 0
    %1252 = vmatpush1.bf16.msra.mxu0 0
    %1253 = vmatprep.subr.bf16.mxu0 0
    %1254 = vmatpush1.bf16.msra.mxu0 0
    %1255 = vmatprep.subr.bf16.mxu0 0
    %1256 = vmatpush1.bf16.msra.mxu0 0
    %1257 = vmatprep.mubr.bf16.mxu0 0
    %1258 = vmatmul.mubr.bf16.gmra.mrb[0].mxu0 %v1220
    %v1259 = vpop.f32.mrb[0].mxu0
    %v1260 = vadd.f32 %v1205, %v1259
    %v1261 = vpop.f32.mrb[0].mxu0
    %v1262 = vpop.f32.mrb[0].mxu0
    %v1263 = vadd.f32 %v1205, %v1262
    %v1264 = vpop.f32.mrb[0].mxu0
    %1265 = vmatprep.mubr.bf16.mxu0 0
    %1266 = vmatmul.mubr.bf16.gmra.mrb[0].mxu0 %v1223
    %v1267 = vpop.f32.mrb[0].mxu0
    %v1268 = vadd.f32 %v1205, %v1267
    %v1269 = vpop.f32.mrb[0].mxu0
    %v1270 = vpop.f32.mrb[0].mxu0
    %v1271 = vadd.f32 %v1205, %v1270
    %v1272 = vpop.f32.mrb[0].mxu0
    %1273 = vdwg.mxu0
    %v1274 = vadd.f32 %v202, %v1260
    %v1275 = vadd.f32 %v205, %v1263
    %v1276 = vadd.f32 %v210, %v1268
    %v1277 = vadd.f32 %v213, %v1271
    %v1278 = vld [vmem:[%s17] sm:$0x1]
    %v1279 = vld [vmem:[%s18] sm:$0x1]
    %v1280 = vsel %vm241, %v1274, 0.0
    %1281 = vadd.xlane.f32.xlu0 %v1280
    %v1282 = vpop.xlane.xlu0 %1281
    %v1283 = vsel %vm241, %v1275, 0.0
    %1284 = vadd.xlane.f32.xlu0 %v1283
    %v1285 = vpop.xlane.xlu0 %1284
    %v1286 = vsel %vm241, %v1276, 0.0
    %1287 = vadd.xlane.f32.xlu0 %v1286
    %v1288 = vpop.xlane.xlu0 %1287
    %v1289 = vsel %vm241, %v1277, 0.0
    %1290 = vadd.xlane.f32.xlu0 %v1289
    %v1291 = vpop.xlane.xlu0 %1290
    %v1292 = vrcp.pop 32.0
    %v1293 = vmul.f32 %v1282, %v1292
    %v1294 = vmul.f32 %v1285, %v1292
    %v1295 = vmul.f32 %v1288, %v1292
    %v1296 = vmul.f32 %v1291, %v1292
    %v1297 = vsub.f32 %v1274, %v1293
    %v1298 = vsub.f32 %v1275, %v1294
    %v1299 = vsub.f32 %v1276, %v1295
    %v1300 = vsub.f32 %v1277, %v1296
    %v1301 = vmul.f32 %v1297, %v1297
    %v1302 = vmul.f32 %v1298, %v1298
    %v1303 = vmul.f32 %v1299, %v1299
    %v1304 = vmul.f32 %v1300, %v1300
    %v1305 = vsel %vm241, %v1301, 0.0
    %1306 = vadd.xlane.f32.xlu0 %v1305
    %v1307 = vpop.xlane.xlu0 %1306
    %v1308 = vsel %vm241, %v1302, 0.0
    %1309 = vadd.xlane.f32.xlu0 %v1308
    %v1310 = vpop.xlane.xlu0 %1309
    %v1311 = vsel %vm241, %v1303, 0.0
    %1312 = vadd.xlane.f32.xlu0 %v1311
    %v1313 = vpop.xlane.xlu0 %1312
    %v1314 = vsel %vm241, %v1304, 0.0
    %1315 = vadd.xlane.f32.xlu0 %v1314
    %v1316 = vpop.xlane.xlu0 %1315
    %v1317 = vmul.f32 %v1307, %v1292
    %v1318 = vmul.f32 %v1310, %v1292
    %v1319 = vmul.f32 %v1313, %v1292
    %v1320 = vmul.f32 %v1316, %v1292
    %v1321 = vadd.f32 %v1317, 1e-05
    %v1322 = vadd.f32 %v1318, 1e-05
    %v1323 = vadd.f32 %v1319, 1e-05
    %v1324 = vadd.f32 %v1320, 1e-05
    %v1325 = vrsqrt.pop %v1321
    %v1326 = vrsqrt.pop %v1322
    %v1327 = vrsqrt.pop %v1323
    %v1328 = vrsqrt.pop %v1324
    %v1329 = vmul.f32 %v1297, %v1325
    %v1330 = vmul.f32 %v1298, %v1326
    %v1331 = vmul.f32 %v1299, %v1327
    %v1332 = vmul.f32 %v1300, %v1328
    %v1334 = vlaneseq
    %v1335 = vshrl.u32 %v1334, 7
    %v1336 = vsub.s32 0, %v1335
    %v1337 = vrot.slane %v1278, %v1336
    %v1339 = vmul.f32 %v1329, %v1337
    %v1340 = vmul.f32 %v1330, %v1337
    %v1341 = vmul.f32 %v1331, %v1337
    %v1342 = vmul.f32 %v1332, %v1337
    %v1344 = vlaneseq
    %v1345 = vshrl.u32 %v1344, 7
    %v1346 = vsub.s32 0, %v1345
    %v1347 = vrot.slane %v1279, %v1346
    %v1349 = vadd.f32 %v1339, %v1347
    %v1350 = vadd.f32 %v1340, %v1347
    %v1351 = vadd.f32 %v1341, %v1347
    %v1352 = vadd.f32 %v1342, %v1347
    %v1353 = vpack.c.bf16 %v1350, %v1349
    %v1354 = vpack.c.bf16 %v1352, %v1351
    %v1355 = vld [vmem:[%s13] sm:$0xff]
    %v1356 = vld [vmem:[%s13 + $0x8] sm:$0xff]
    %v1357 = vld [vmem:[%s13 + $0x40] sm:$0xff]
    %v1358 = vld [vmem:[%s13 + $0x48] sm:$0xff]
    %v1359 = vld [vmem:[%s13 + $0x80] sm:$0xff]
    %v1360 = vld [vmem:[%s13 + $0x88] sm:$0xff]
    %v1361 = vld [vmem:[%s13 + $0xc0] sm:$0xff]
    %v1362 = vld [vmem:[%s13 + $0xc8] sm:$0xff]
    %v1363 = vld [vmem:[%s14] sm:$0xf]
    %v1365 = vlaneseq
    %v1366 = vshrl.u32 %v1365, 7
    %v1367 = vsub.s32 0, %v1366
    %v1368 = vrot.slane %v1363, %v1367
    %v1369 = vlaneseq
    %v1370 = vshrl.u32 %v1369, 7
    %v1371 = vsub.s32 1, %v1370
    %v1372 = vrot.slane %v1363, %v1371
    %v1373 = vlaneseq
    %v1374 = vshrl.u32 %v1373, 7
    %v1375 = vsub.s32 2, %v1374
    %v1376 = vrot.slane %v1363, %v1375
    %v1377 = vlaneseq
    %v1378 = vshrl.u32 %v1377, 7
    %v1379 = vsub.s32 3, %v1378
    %v1380 = vrot.slane %v1363, %v1379
    %v1393 = vunpack.c.l.b16 %v1355
    %v1394 = vunpack.c.h.b16 %v1355
    %v1395 = vunpack.c.l.b16 %v1356
    %v1396 = vunpack.c.h.b16 %v1356
    %v1397 = vunpack.c.l.b16 %v1357
    %v1398 = vunpack.c.h.b16 %v1357
    %v1399 = vunpack.c.l.b16 %v1358
    %v1400 = vunpack.c.h.b16 %v1358
    %v1401 = vunpack.c.l.b16 %v1359
    %v1402 = vunpack.c.h.b16 %v1359
    %v1403 = vunpack.c.l.b16 %v1360
    %v1404 = vunpack.c.h.b16 %v1360
    %v1405 = vunpack.c.l.b16 %v1361
    %v1406 = vunpack.c.h.b16 %v1361
    %v1407 = vunpack.c.l.b16 %v1362
    %v1408 = vunpack.c.h.b16 %v1362
    %v1409 = vpack.c.b16 %v1397, %v1393
    %v1410 = vpack.c.b16 %v1398, %v1394
    %v1411 = vpack.c.b16 %v1399, %v1395
    %v1412 = vpack.c.b16 %v1400, %v1396
    %v1413 = vpack.c.b16 %v1405, %v1401
    %v1414 = vpack.c.b16 %v1406, %v1402
    %v1415 = vpack.c.b16 %v1407, %v1403
    %v1416 = vpack.c.b16 %v1408, %v1404
    %v1426 = vsel %vm241, %v1353, 0
    %v1429 = vsel %vm241, %v1354, 0
    %1431 = vmatprep.subr.bf16.mxu0 %v1410
    %1432 = vmatpush1.bf16.msra.mxu0 %v1409
    %1433 = vmatprep.subr.bf16.mxu0 %v1414
    %1434 = vmatpush1.bf16.msra.mxu0 %v1413
    %1435 = vmatprep.subr.bf16.mxu0 0
    %1436 = vmatpush1.bf16.msra.mxu0 0
    %1437 = vmatprep.subr.bf16.mxu0 0
    %1438 = vmatpush1.bf16.msra.mxu0 0
    %1439 = vmatprep.subr.bf16.mxu0 0
    %1440 = vmatpush1.bf16.msra.mxu0 0
    %1441 = vmatprep.subr.bf16.mxu0 0
    %1442 = vmatpush1.bf16.msra.mxu0 0
    %1443 = vmatprep.subr.bf16.mxu0 0
    %1444 = vmatpush1.bf16.msra.mxu0 0
    %1445 = vmatprep.subr.bf16.mxu0 0
    %1446 = vmatpush1.bf16.msra.mxu0 0
    %1447 = vmatprep.subr.bf16.mxu0 0
    %1448 = vmatpush1.bf16.msra.mxu0 0
    %1449 = vmatprep.subr.bf16.mxu0 0
    %1450 = vmatpush1.bf16.msra.mxu0 0
    %1451 = vmatprep.subr.bf16.mxu0 0
    %1452 = vmatpush1.bf16.msra.mxu0 0
    %1453 = vmatprep.subr.bf16.mxu0 0
    %1454 = vmatpush1.bf16.msra.mxu0 0
    %1455 = vmatprep.subr.bf16.mxu0 0
    %1456 = vmatpush1.bf16.msra.mxu0 0
    %1457 = vmatprep.subr.bf16.mxu0 0
    %1458 = vmatpush1.bf16.msra.mxu0 0
    %1459 = vmatprep.subr.bf16.mxu0 0
    %1460 = vmatpush1.bf16.msra.mxu0 0
    %1461 = vmatprep.subr.bf16.mxu0 0
    %1462 = vmatpush1.bf16.msra.mxu0 0
    %1463 = vmatprep.mubr.bf16.mxu0 0
    %1464 = vmatmul.mubr.bf16.gmra.mrb[0].mxu0 %v1426
    %v1465 = vpop.f32.mrb[0].mxu0
    %v1466 = vadd.f32 %v1368, %v1465
    %v1467 = vpop.f32.mrb[0].mxu0
    %v1468 = vadd.f32 %v1372, %v1467
    %v1469 = vpop.f32.mrb[0].mxu0
    %v1470 = vadd.f32 %v1368, %v1469
    %v1471 = vpop.f32.mrb[0].mxu0
    %v1472 = vadd.f32 %v1372, %v1471
    %1473 = vmatprep.mubr.bf16.mxu0 0
    %1474 = vmatmul.mubr.bf16.gmra.mrb[0].mxu0 %v1429
    %v1475 = vpop.f32.mrb[0].mxu0
    %v1476 = vadd.f32 %v1368, %v1475
    %v1477 = vpop.f32.mrb[0].mxu0
    %v1478 = vadd.f32 %v1372, %v1477
    %v1479 = vpop.f32.mrb[0].mxu0
    %v1480 = vadd.f32 %v1368, %v1479
    %v1481 = vpop.f32.mrb[0].mxu0
    %v1482 = vadd.f32 %v1372, %v1481
    %1483 = vdwg.mxu0
    %1484 = vmatprep.subr.bf16.mxu0 %v1412
    %1485 = vmatpush1.bf16.msra.mxu0 %v1411
    %1486 = vmatprep.subr.bf16.mxu0 %v1416
    %1487 = vmatpush1.bf16.msra.mxu0 %v1415
    %1488 = vmatprep.subr.bf16.mxu0 0
    %1489 = vmatpush1.bf16.msra.mxu0 0
    %1490 = vmatprep.subr.bf16.mxu0 0
    %1491 = vmatpush1.bf16.msra.mxu0 0
    %1492 = vmatprep.subr.bf16.mxu0 0
    %1493 = vmatpush1.bf16.msra.mxu0 0
    %1494 = vmatprep.subr.bf16.mxu0 0
    %1495 = vmatpush1.bf16.msra.mxu0 0
    %1496 = vmatprep.subr.bf16.mxu0 0
    %1497 = vmatpush1.bf16.msra.mxu0 0
    %1498 = vmatprep.subr.bf16.mxu0 0
    %1499 = vmatpush1.bf16.msra.mxu0 0
    %1500 = vmatprep.subr.bf16.mxu0 0
    %1501 = vmatpush1.bf16.msra.mxu0 0
    %1502 = vmatprep.subr.bf16.mxu0 0
    %1503 = vmatpush1.bf16.msra.mxu0 0
    %1504 = vmatprep.subr.bf16.mxu0 0
    %1505 = vmatpush1.bf16.msra.mxu0 0
    %1506 = vmatprep.subr.bf16.mxu0 0
    %1507 = vmatpush1.bf16.msra.mxu0 0
    %1508 = vmatprep.subr.bf16.mxu0 0
    %1509 = vmatpush1.bf16.msra.mxu0 0
    %1510 = vmatprep.subr.bf16.mxu0 0
    %1511 = vmatpush1.bf16.msra.mxu0 0
    %1512 = vmatprep.subr.bf16.mxu0 0
    %1513 = vmatpush1.bf16.msra.mxu0 0
    %1514 = vmatprep.subr.bf16.mxu0 0
    %1515 = vmatpush1.bf16.msra.mxu0 0
    %1516 = vmatprep.mubr.bf16.mxu0 0
    %1517 = vmatmul.mubr.bf16.gmra.mrb[0].mxu0 %v1426
    %v1518 = vpop.f32.mrb[0].mxu0
    %v1519 = vadd.f32 %v1376, %v1518
    %v1520 = vpop.f32.mrb[0].mxu0
    %v1521 = vadd.f32 %v1380, %v1520
    %v1522 = vpop.f32.mrb[0].mxu0
    %v1523 = vadd.f32 %v1376, %v1522
    %v1524 = vpop.f32.mrb[0].mxu0
    %v1525 = vadd.f32 %v1380, %v1524
    %1526 = vmatprep.mubr.bf16.mxu0 0
    %1527 = vmatmul.mubr.bf16.gmra.mrb[0].mxu0 %v1429
    %v1528 = vpop.f32.mrb[0].mxu0
    %v1529 = vadd.f32 %v1376, %v1528
    %v1530 = vpop.f32.mrb[0].mxu0
    %v1531 = vadd.f32 %v1380, %v1530
    %v1532 = vpop.f32.mrb[0].mxu0
    %v1533 = vadd.f32 %v1376, %v1532
    %v1534 = vpop.f32.mrb[0].mxu0
    %v1535 = vadd.f32 %v1380, %v1534
    %1536 = vdwg.mxu0
    %v1537 = vmax.f32 %v1466, 0.0
    %v1538 = vmax.f32 %v1468, 0.0
    %v1539 = vmax.f32 %v1519, 0.0
    %v1540 = vmax.f32 %v1521, 0.0
    %v1541 = vmax.f32 %v1470, 0.0
    %v1542 = vmax.f32 %v1472, 0.0
    %v1543 = vmax.f32 %v1523, 0.0
    %v1544 = vmax.f32 %v1525, 0.0
    %v1545 = vmax.f32 %v1476, 0.0
    %v1546 = vmax.f32 %v1478, 0.0
    %v1547 = vmax.f32 %v1529, 0.0
    %v1548 = vmax.f32 %v1531, 0.0
    %v1549 = vmax.f32 %v1480, 0.0
    %v1550 = vmax.f32 %v1482, 0.0
    %v1551 = vmax.f32 %v1533, 0.0
    %v1552 = vmax.f32 %v1535, 0.0
    %v1553 = vpack.c.bf16 %v1541, %v1537
    %v1554 = vpack.c.bf16 %v1542, %v1538
    %v1555 = vpack.c.bf16 %v1543, %v1539
    %v1556 = vpack.c.bf16 %v1544, %v1540
    %v1557 = vpack.c.bf16 %v1549, %v1545
    %v1558 = vpack.c.bf16 %v1550, %v1546
    %v1559 = vpack.c.bf16 %v1551, %v1547
    %v1560 = vpack.c.bf16 %v1552, %v1548
    %v1561 = vld [vmem:[%s15] sm:$0xf]
    %v1562 = vld [vmem:[%s15 + $0x4] sm:$0xf]
    %v1563 = vld [vmem:[%s15 + $0x8] sm:$0xf]
    %v1564 = vld [vmem:[%s15 + $0xc] sm:$0xf]
    %v1565 = vld [vmem:[%s15 + $0x10] sm:$0xf]
    %v1566 = vld [vmem:[%s15 + $0x14] sm:$0xf]
    %v1567 = vld [vmem:[%s15 + $0x18] sm:$0xf]
    %v1568 = vld [vmem:[%s15 + $0x1c] sm:$0xf]
    %v1569 = vld [vmem:[%s15 + $0x20] sm:$0xf]
    %v1570 = vld [vmem:[%s15 + $0x24] sm:$0xf]
    %v1571 = vld [vmem:[%s15 + $0x28] sm:$0xf]
    %v1572 = vld [vmem:[%s15 + $0x2c] sm:$0xf]
    %v1573 = vld [vmem:[%s15 + $0x30] sm:$0xf]
    %v1574 = vld [vmem:[%s15 + $0x34] sm:$0xf]
    %v1575 = vld [vmem:[%s15 + $0x38] sm:$0xf]
    %v1576 = vld [vmem:[%s15 + $0x3c] sm:$0xf]
    %v1577 = vld [vmem:[%s15 + $0x40] sm:$0xf]
    %v1578 = vld [vmem:[%s15 + $0x44] sm:$0xf]
    %v1579 = vld [vmem:[%s15 + $0x48] sm:$0xf]
    %v1580 = vld [vmem:[%s15 + $0x4c] sm:$0xf]
    %v1581 = vld [vmem:[%s15 + $0x50] sm:$0xf]
    %v1582 = vld [vmem:[%s15 + $0x54] sm:$0xf]
    %v1583 = vld [vmem:[%s15 + $0x58] sm:$0xf]
    %v1584 = vld [vmem:[%s15 + $0x5c] sm:$0xf]
    %v1585 = vld [vmem:[%s15 + $0x60] sm:$0xf]
    %v1586 = vld [vmem:[%s15 + $0x64] sm:$0xf]
    %v1587 = vld [vmem:[%s15 + $0x68] sm:$0xf]
    %v1588 = vld [vmem:[%s15 + $0x6c] sm:$0xf]
    %v1589 = vld [vmem:[%s15 + $0x70] sm:$0xf]
    %v1590 = vld [vmem:[%s15 + $0x74] sm:$0xf]
    %v1591 = vld [vmem:[%s15 + $0x78] sm:$0xf]
    %v1592 = vld [vmem:[%s15 + $0x7c] sm:$0xf]
    %v1593 = vld [vmem:[%s15 + $0x80] sm:$0xf]
    %v1594 = vld [vmem:[%s15 + $0x84] sm:$0xf]
    %v1595 = vld [vmem:[%s15 + $0x88] sm:$0xf]
    %v1596 = vld [vmem:[%s15 + $0x8c] sm:$0xf]
    %v1597 = vld [vmem:[%s15 + $0x90] sm:$0xf]
    %v1598 = vld [vmem:[%s15 + $0x94] sm:$0xf]
    %v1599 = vld [vmem:[%s15 + $0x98] sm:$0xf]
    %v1600 = vld [vmem:[%s15 + $0x9c] sm:$0xf]
    %v1601 = vld [vmem:[%s15 + $0xa0] sm:$0xf]
    %v1602 = vld [vmem:[%s15 + $0xa4] sm:$0xf]
    %v1603 = vld [vmem:[%s15 + $0xa8] sm:$0xf]
    %v1604 = vld [vmem:[%s15 + $0xac] sm:$0xf]
    %v1605 = vld [vmem:[%s15 + $0xb0] sm:$0xf]
    %v1606 = vld [vmem:[%s15 + $0xb4] sm:$0xf]
    %v1607 = vld [vmem:[%s15 + $0xb8] sm:$0xf]
    %v1608 = vld [vmem:[%s15 + $0xbc] sm:$0xf]
    %v1609 = vld [vmem:[%s15 + $0xc0] sm:$0xf]
    %v1610 = vld [vmem:[%s15 + $0xc4] sm:$0xf]
    %v1611 = vld [vmem:[%s15 + $0xc8] sm:$0xf]
    %v1612 = vld [vmem:[%s15 + $0xcc] sm:$0xf]
    %v1613 = vld [vmem:[%s15 + $0xd0] sm:$0xf]
    %v1614 = vld [vmem:[%s15 + $0xd4] sm:$0xf]
    %v1615 = vld [vmem:[%s15 + $0xd8] sm:$0xf]
    %v1616 = vld [vmem:[%s15 + $0xdc] sm:$0xf]
    %v1617 = vld [vmem:[%s15 + $0xe0] sm:$0xf]
    %v1618 = vld [vmem:[%s15 + $0xe4] sm:$0xf]
    %v1619 = vld [vmem:[%s15 + $0xe8] sm:$0xf]
    %v1620 = vld [vmem:[%s15 + $0xec] sm:$0xf]
    %v1621 = vld [vmem:[%s15 + $0xf0] sm:$0xf]
    %v1622 = vld [vmem:[%s15 + $0xf4] sm:$0xf]
    %v1623 = vld [vmem:[%s15 + $0xf8] sm:$0xf]
    %v1624 = vld [vmem:[%s15 + $0xfc] sm:$0xf]
    %v1625 = vld [vmem:[%s13 + $0x10] sm:$0xff]
    %v1626 = vld [vmem:[%s13 + $0x18] sm:$0xff]
    %v1627 = vld [vmem:[%s13 + $0x50] sm:$0xff]
    %v1628 = vld [vmem:[%s13 + $0x58] sm:$0xff]
    %v1629 = vld [vmem:[%s13 + $0x90] sm:$0xff]
    %v1630 = vld [vmem:[%s13 + $0x98] sm:$0xff]
    %v1631 = vld [vmem:[%s13 + $0xd0] sm:$0xff]
    %v1632 = vld [vmem:[%s13 + $0xd8] sm:$0xff]
    %v1633 = vld [vmem:[%s14 + $0x4] sm:$0xf]
    %v1635 = vlaneseq
    %v1636 = vshrl.u32 %v1635, 7
    %v1637 = vsub.s32 0, %v1636
    %v1638 = vrot.slane %v1633, %v1637
    %v1639 = vlaneseq
    %v1640 = vshrl.u32 %v1639, 7
    %v1641 = vsub.s32 1, %v1640
    %v1642 = vrot.slane %v1633, %v1641
    %v1643 = vlaneseq
    %v1644 = vshrl.u32 %v1643, 7
    %v1645 = vsub.s32 2, %v1644
    %v1646 = vrot.slane %v1633, %v1645
    %v1647 = vlaneseq
    %v1648 = vshrl.u32 %v1647, 7
    %v1649 = vsub.s32 3, %v1648
    %v1650 = vrot.slane %v1633, %v1649
    %v1663 = vunpack.c.l.b16 %v1625
    %v1664 = vunpack.c.h.b16 %v1625
    %v1665 = vunpack.c.l.b16 %v1626
    %v1666 = vunpack.c.h.b16 %v1626
    %v1667 = vunpack.c.l.b16 %v1627
    %v1668 = vunpack.c.h.b16 %v1627
    %v1669 = vunpack.c.l.b16 %v1628
    %v1670 = vunpack.c.h.b16 %v1628
    %v1671 = vunpack.c.l.b16 %v1629
    %v1672 = vunpack.c.h.b16 %v1629
    %v1673 = vunpack.c.l.b16 %v1630
    %v1674 = vunpack.c.h.b16 %v1630
    %v1675 = vunpack.c.l.b16 %v1631
    %v1676 = vunpack.c.h.b16 %v1631
    %v1677 = vunpack.c.l.b16 %v1632
    %v1678 = vunpack.c.h.b16 %v1632
    %v1679 = vpack.c.b16 %v1667, %v1663
    %v1680 = vpack.c.b16 %v1668, %v1664
    %v1681 = vpack.c.b16 %v1669, %v1665
    %v1682 = vpack.c.b16 %v1670, %v1666
    %v1683 = vpack.c.b16 %v1675, %v1671
    %v1684 = vpack.c.b16 %v1676, %v1672
    %v1685 = vpack.c.b16 %v1677, %v1673
    %v1686 = vpack.c.b16 %v1678, %v1674
    %1695 = vmatprep.subr.bf16.mxu0 %v1680
    %1696 = vmatpush1.bf16.msra.mxu0 %v1679
    %1697 = vmatprep.subr.bf16.mxu0 %v1684
    %1698 = vmatpush1.bf16.msra.mxu0 %v1683
    %1699 = vmatprep.subr.bf16.mxu0 0
    %1700 = vmatpush1.bf16.msra.mxu0 0
    %1701 = vmatprep.subr.bf16.mxu0 0
    %1702 = vmatpush1.bf16.msra.mxu0 0
    %1703 = vmatprep.subr.bf16.mxu0 0
    %1704 = vmatpush1.bf16.msra.mxu0 0
    %1705 = vmatprep.subr.bf16.mxu0 0
    %1706 = vmatpush1.bf16.msra.mxu0 0
    %1707 = vmatprep.subr.bf16.mxu0 0
    %1708 = vmatpush1.bf16.msra.mxu0 0
    %1709 = vmatprep.subr.bf16.mxu0 0
    %1710 = vmatpush1.bf16.msra.mxu0 0
    %1711 = vmatprep.subr.bf16.mxu0 0
    %1712 = vmatpush1.bf16.msra.mxu0 0
    %1713 = vmatprep.subr.bf16.mxu0 0
    %1714 = vmatpush1.bf16.msra.mxu0 0
    %1715 = vmatprep.subr.bf16.mxu0 0
    %1716 = vmatpush1.bf16.msra.mxu0 0
    %1717 = vmatprep.subr.bf16.mxu0 0
    %1718 = vmatpush1.bf16.msra.mxu0 0
    %1719 = vmatprep.subr.bf16.mxu0 0
    %1720 = vmatpush1.bf16.msra.mxu0 0
    %1721 = vmatprep.subr.bf16.mxu0 0
    %1722 = vmatpush1.bf16.msra.mxu0 0
    %1723 = vmatprep.subr.bf16.mxu0 0
    %1724 = vmatpush1.bf16.msra.mxu0 0
    %1725 = vmatprep.subr.bf16.mxu0 0
    %1726 = vmatpush1.bf16.msra.mxu0 0
    %1727 = vmatprep.mubr.bf16.mxu0 0
    %1728 = vmatmul.mubr.bf16.gmra.mrb[0].mxu0 %v1426
    %v1729 = vpop.f32.mrb[0].mxu0
    %v1730 = vadd.f32 %v1638, %v1729
    %v1731 = vpop.f32.mrb[0].mxu0
    %v1732 = vadd.f32 %v1642, %v1731
    %v1733 = vpop.f32.mrb[0].mxu0
    %v1734 = vadd.f32 %v1638, %v1733
    %v1735 = vpop.f32.mrb[0].mxu0
    %v1736 = vadd.f32 %v1642, %v1735
    %1737 = vmatprep.mubr.bf16.mxu0 0
    %1738 = vmatmul.mubr.bf16.gmra.mrb[0].mxu0 %v1429
    %v1739 = vpop.f32.mrb[0].mxu0
    %v1740 = vadd.f32 %v1638, %v1739
    %v1741 = vpop.f32.mrb[0].mxu0
    %v1742 = vadd.f32 %v1642, %v1741
    %v1743 = vpop.f32.mrb[0].mxu0
    %v1744 = vadd.f32 %v1638, %v1743
    %v1745 = vpop.f32.mrb[0].mxu0
    %v1746 = vadd.f32 %v1642, %v1745
    %1747 = vdwg.mxu0
    %1748 = vmatprep.subr.bf16.mxu0 %v1682
    %1749 = vmatpush1.bf16.msra.mxu0 %v1681
    %1750 = vmatprep.subr.bf16.mxu0 %v1686
    %1751 = vmatpush1.bf16.msra.mxu0 %v1685
    %1752 = vmatprep.subr.bf16.mxu0 0
    %1753 = vmatpush1.bf16.msra.mxu0 0
    %1754 = vmatprep.subr.bf16.mxu0 0
    %1755 = vmatpush1.bf16.msra.mxu0 0
    %1756 = vmatprep.subr.bf16.mxu0 0
    %1757 = vmatpush1.bf16.msra.mxu0 0
    %1758 = vmatprep.subr.bf16.mxu0 0
    %1759 = vmatpush1.bf16.msra.mxu0 0
    %1760 = vmatprep.subr.bf16.mxu0 0
    %1761 = vmatpush1.bf16.msra.mxu0 0
    %1762 = vmatprep.subr.bf16.mxu0 0
    %1763 = vmatpush1.bf16.msra.mxu0 0
    %1764 = vmatprep.subr.bf16.mxu0 0
    %1765 = vmatpush1.bf16.msra.mxu0 0
    %1766 = vmatprep.subr.bf16.mxu0 0
    %1767 = vmatpush1.bf16.msra.mxu0 0
    %1768 = vmatprep.subr.bf16.mxu0 0
    %1769 = vmatpush1.bf16.msra.mxu0 0
    %1770 = vmatprep.subr.bf16.mxu0 0
    %1771 = vmatpush1.bf16.msra.mxu0 0
    %1772 = vmatprep.subr.bf16.mxu0 0
    %1773 = vmatpush1.bf16.msra.mxu0 0
    %1774 = vmatprep.subr.bf16.mxu0 0
    %1775 = vmatpush1.bf16.msra.mxu0 0
    %1776 = vmatprep.subr.bf16.mxu0 0
    %1777 = vmatpush1.bf16.msra.mxu0 0
    %1778 = vmatprep.subr.bf16.mxu0 0
    %1779 = vmatpush1.bf16.msra.mxu0 0
    %1780 = vmatprep.mubr.bf16.mxu0 0
    %1781 = vmatmul.mubr.bf16.gmra.mrb[0].mxu0 %v1426
    %v1782 = vpop.f32.mrb[0].mxu0
    %v1783 = vadd.f32 %v1646, %v1782
    %v1784 = vpop.f32.mrb[0].mxu0
    %v1785 = vadd.f32 %v1650, %v1784
    %v1786 = vpop.f32.mrb[0].mxu0
    %v1787 = vadd.f32 %v1646, %v1786
    %v1788 = vpop.f32.mrb[0].mxu0
    %v1789 = vadd.f32 %v1650, %v1788
    %1790 = vmatprep.mubr.bf16.mxu0 0
    %1791 = vmatmul.mubr.bf16.gmra.mrb[0].mxu0 %v1429
    %v1792 = vpop.f32.mrb[0].mxu0
    %v1793 = vadd.f32 %v1646, %v1792
    %v1794 = vpop.f32.mrb[0].mxu0
    %v1795 = vadd.f32 %v1650, %v1794
    %v1796 = vpop.f32.mrb[0].mxu0
    %v1797 = vadd.f32 %v1646, %v1796
    %v1798 = vpop.f32.mrb[0].mxu0
    %v1799 = vadd.f32 %v1650, %v1798
    %1800 = vdwg.mxu0
    %v1801 = vmax.f32 %v1730, 0.0
    %v1802 = vmax.f32 %v1732, 0.0
    %v1803 = vmax.f32 %v1783, 0.0
    %v1804 = vmax.f32 %v1785, 0.0
    %v1805 = vmax.f32 %v1734, 0.0
    %v1806 = vmax.f32 %v1736, 0.0
    %v1807 = vmax.f32 %v1787, 0.0
    %v1808 = vmax.f32 %v1789, 0.0
    %v1809 = vmax.f32 %v1740, 0.0
    %v1810 = vmax.f32 %v1742, 0.0
    %v1811 = vmax.f32 %v1793, 0.0
    %v1812 = vmax.f32 %v1795, 0.0
    %v1813 = vmax.f32 %v1744, 0.0
    %v1814 = vmax.f32 %v1746, 0.0
    %v1815 = vmax.f32 %v1797, 0.0
    %v1816 = vmax.f32 %v1799, 0.0
    %v1817 = vpack.c.bf16 %v1805, %v1801
    %v1818 = vpack.c.bf16 %v1806, %v1802
    %v1819 = vpack.c.bf16 %v1807, %v1803
    %v1820 = vpack.c.bf16 %v1808, %v1804
    %v1821 = vpack.c.bf16 %v1813, %v1809
    %v1822 = vpack.c.bf16 %v1814, %v1810
    %v1823 = vpack.c.bf16 %v1815, %v1811
    %v1824 = vpack.c.bf16 %v1816, %v1812
    %v1825 = vld [vmem:[%s15 + $0x100] sm:$0xf]
    %v1826 = vld [vmem:[%s15 + $0x104] sm:$0xf]
    %v1827 = vld [vmem:[%s15 + $0x108] sm:$0xf]
    %v1828 = vld [vmem:[%s15 + $0x10c] sm:$0xf]
    %v1829 = vld [vmem:[%s15 + $0x110] sm:$0xf]
    %v1830 = vld [vmem:[%s15 + $0x114] sm:$0xf]
    %v1831 = vld [vmem:[%s15 + $0x118] sm:$0xf]
    %v1832 = vld [vmem:[%s15 + $0x11c] sm:$0xf]
    %v1833 = vld [vmem:[%s15 + $0x120] sm:$0xf]
    %v1834 = vld [vmem:[%s15 + $0x124] sm:$0xf]
    %v1835 = vld [vmem:[%s15 + $0x128] sm:$0xf]
    %v1836 = vld [vmem:[%s15 + $0x12c] sm:$0xf]
    %v1837 = vld [vmem:[%s15 + $0x130] sm:$0xf]
    %v1838 = vld [vmem:[%s15 + $0x134] sm:$0xf]
    %v1839 = vld [vmem:[%s15 + $0x138] sm:$0xf]
    %v1840 = vld [vmem:[%s15 + $0x13c] sm:$0xf]
    %v1841 = vld [vmem:[%s15 + $0x140] sm:$0xf]
    %v1842 = vld [vmem:[%s15 + $0x144] sm:$0xf]
    %v1843 = vld [vmem:[%s15 + $0x148] sm:$0xf]
    %v1844 = vld [vmem:[%s15 + $0x14c] sm:$0xf]
    %v1845 = vld [vmem:[%s15 + $0x150] sm:$0xf]
    %v1846 = vld [vmem:[%s15 + $0x154] sm:$0xf]
    %v1847 = vld [vmem:[%s15 + $0x158] sm:$0xf]
    %v1848 = vld [vmem:[%s15 + $0x15c] sm:$0xf]
    %v1849 = vld [vmem:[%s15 + $0x160] sm:$0xf]
    %v1850 = vld [vmem:[%s15 + $0x164] sm:$0xf]
    %v1851 = vld [vmem:[%s15 + $0x168] sm:$0xf]
    %v1852 = vld [vmem:[%s15 + $0x16c] sm:$0xf]
    %v1853 = vld [vmem:[%s15 + $0x170] sm:$0xf]
    %v1854 = vld [vmem:[%s15 + $0x174] sm:$0xf]
    %v1855 = vld [vmem:[%s15 + $0x178] sm:$0xf]
    %v1856 = vld [vmem:[%s15 + $0x17c] sm:$0xf]
    %v1857 = vld [vmem:[%s15 + $0x180] sm:$0xf]
    %v1858 = vld [vmem:[%s15 + $0x184] sm:$0xf]
    %v1859 = vld [vmem:[%s15 + $0x188] sm:$0xf]
    %v1860 = vld [vmem:[%s15 + $0x18c] sm:$0xf]
    %v1861 = vld [vmem:[%s15 + $0x190] sm:$0xf]
    %v1862 = vld [vmem:[%s15 + $0x194] sm:$0xf]
    %v1863 = vld [vmem:[%s15 + $0x198] sm:$0xf]
    %v1864 = vld [vmem:[%s15 + $0x19c] sm:$0xf]
    %v1865 = vld [vmem:[%s15 + $0x1a0] sm:$0xf]
    %v1866 = vld [vmem:[%s15 + $0x1a4] sm:$0xf]
    %v1867 = vld [vmem:[%s15 + $0x1a8] sm:$0xf]
    %v1868 = vld [vmem:[%s15 + $0x1ac] sm:$0xf]
    %v1869 = vld [vmem:[%s15 + $0x1b0] sm:$0xf]
    %v1870 = vld [vmem:[%s15 + $0x1b4] sm:$0xf]
    %v1871 = vld [vmem:[%s15 + $0x1b8] sm:$0xf]
    %v1872 = vld [vmem:[%s15 + $0x1bc] sm:$0xf]
    %v1873 = vld [vmem:[%s15 + $0x1c0] sm:$0xf]
    %v1874 = vld [vmem:[%s15 + $0x1c4] sm:$0xf]
    %v1875 = vld [vmem:[%s15 + $0x1c8] sm:$0xf]
    %v1876 = vld [vmem:[%s15 + $0x1cc] sm:$0xf]
    %v1877 = vld [vmem:[%s15 + $0x1d0] sm:$0xf]
    %v1878 = vld [vmem:[%s15 + $0x1d4] sm:$0xf]
    %v1879 = vld [vmem:[%s15 + $0x1d8] sm:$0xf]
    %v1880 = vld [vmem:[%s15 + $0x1dc] sm:$0xf]
    %v1881 = vld [vmem:[%s15 + $0x1e0] sm:$0xf]
    %v1882 = vld [vmem:[%s15 + $0x1e4] sm:$0xf]
    %v1883 = vld [vmem:[%s15 + $0x1e8] sm:$0xf]
    %v1884 = vld [vmem:[%s15 + $0x1ec] sm:$0xf]
    %v1885 = vld [vmem:[%s15 + $0x1f0] sm:$0xf]
    %v1886 = vld [vmem:[%s15 + $0x1f4] sm:$0xf]
    %v1887 = vld [vmem:[%s15 + $0x1f8] sm:$0xf]
    %v1888 = vld [vmem:[%s15 + $0x1fc] sm:$0xf]
    %v1953 = vunpack.c.l.b16 %v1825
    %v1954 = vunpack.c.l.b16 %v1826
    %v1955 = vunpack.c.l.b16 %v1827
    %v1956 = vunpack.c.l.b16 %v1828
    %v1957 = vunpack.c.l.b16 %v1829
    %v1958 = vunpack.c.l.b16 %v1830
    %v1959 = vunpack.c.l.b16 %v1831
    %v1960 = vunpack.c.l.b16 %v1832
    %v1961 = vunpack.c.l.b16 %v1833
    %v1962 = vunpack.c.l.b16 %v1834
    %v1963 = vunpack.c.l.b16 %v1835
    %v1964 = vunpack.c.l.b16 %v1836
    %v1965 = vunpack.c.l.b16 %v1837
    %v1966 = vunpack.c.l.b16 %v1838
    %v1967 = vunpack.c.l.b16 %v1839
    %v1968 = vunpack.c.l.b16 %v1840
    %v1969 = vunpack.c.l.b16 %v1841
    %v1970 = vunpack.c.l.b16 %v1842
    %v1971 = vunpack.c.l.b16 %v1843
    %v1972 = vunpack.c.l.b16 %v1844
    %v1973 = vunpack.c.l.b16 %v1845
    %v1974 = vunpack.c.l.b16 %v1846
    %v1975 = vunpack.c.l.b16 %v1847
    %v1976 = vunpack.c.l.b16 %v1848
    %v1977 = vunpack.c.l.b16 %v1849
    %v1978 = vunpack.c.l.b16 %v1850
    %v1979 = vunpack.c.l.b16 %v1851
    %v1980 = vunpack.c.l.b16 %v1852
    %v1981 = vunpack.c.l.b16 %v1853
    %v1982 = vunpack.c.l.b16 %v1854
    %v1983 = vunpack.c.l.b16 %v1855
    %v1984 = vunpack.c.l.b16 %v1856
    %v1985 = vunpack.c.l.b16 %v1857
    %v1986 = vunpack.c.l.b16 %v1858
    %v1987 = vunpack.c.l.b16 %v1859
    %v1988 = vunpack.c.l.b16 %v1860
    %v1989 = vunpack.c.l.b16 %v1861
    %v1990 = vunpack.c.l.b16 %v1862
    %v1991 = vunpack.c.l.b16 %v1863
    %v1992 = vunpack.c.l.b16 %v1864
    %v1993 = vunpack.c.l.b16 %v1865
    %v1994 = vunpack.c.l.b16 %v1866
    %v1995 = vunpack.c.l.b16 %v1867
    %v1996 = vunpack.c.l.b16 %v1868
    %v1997 = vunpack.c.l.b16 %v1869
    %v1998 = vunpack.c.l.b16 %v1870
    %v1999 = vunpack.c.l.b16 %v1871
    %v2000 = vunpack.c.l.b16 %v1872
    %v2001 = vunpack.c.l.b16 %v1873
    %v2002 = vunpack.c.l.b16 %v1874
    %v2003 = vunpack.c.l.b16 %v1875
    %v2004 = vunpack.c.l.b16 %v1876
    %v2005 = vunpack.c.l.b16 %v1877
    %v2006 = vunpack.c.l.b16 %v1878
    %v2007 = vunpack.c.l.b16 %v1879
    %v2008 = vunpack.c.l.b16 %v1880
    %v2009 = vunpack.c.l.b16 %v1881
    %v2010 = vunpack.c.l.b16 %v1882
    %v2011 = vunpack.c.l.b16 %v1883
    %v2012 = vunpack.c.l.b16 %v1884
    %v2013 = vunpack.c.l.b16 %v1885
    %v2014 = vunpack.c.l.b16 %v1886
    %v2015 = vunpack.c.l.b16 %v1887
    %v2016 = vunpack.c.l.b16 %v1888
    %v2017 = vpack.c.b16 %v1954, %v1953
    %v2018 = vpack.c.b16 %v1956, %v1955
    %v2019 = vpack.c.b16 %v1958, %v1957
    %v2020 = vpack.c.b16 %v1960, %v1959
    %v2021 = vpack.c.b16 %v1962, %v1961
    %v2022 = vpack.c.b16 %v1964, %v1963
    %v2023 = vpack.c.b16 %v1966, %v1965
    %v2024 = vpack.c.b16 %v1968, %v1967
    %v2025 = vpack.c.b16 %v1970, %v1969
    %v2026 = vpack.c.b16 %v1972, %v1971
    %v2027 = vpack.c.b16 %v1974, %v1973
    %v2028 = vpack.c.b16 %v1976, %v1975
    %v2029 = vpack.c.b16 %v1978, %v1977
    %v2030 = vpack.c.b16 %v1980, %v1979
    %v2031 = vpack.c.b16 %v1982, %v1981
    %v2032 = vpack.c.b16 %v1984, %v1983
    %v2033 = vpack.c.b16 %v1986, %v1985
    %v2034 = vpack.c.b16 %v1988, %v1987
    %v2035 = vpack.c.b16 %v1990, %v1989
    %v2036 = vpack.c.b16 %v1992, %v1991
    %v2037 = vpack.c.b16 %v1994, %v1993
    %v2038 = vpack.c.b16 %v1996, %v1995
    %v2039 = vpack.c.b16 %v1998, %v1997
    %v2040 = vpack.c.b16 %v2000, %v1999
    %v2041 = vpack.c.b16 %v2002, %v2001
    %v2042 = vpack.c.b16 %v2004, %v2003
    %v2043 = vpack.c.b16 %v2006, %v2005
    %v2044 = vpack.c.b16 %v2008, %v2007
    %v2045 = vpack.c.b16 %v2010, %v2009
    %v2046 = vpack.c.b16 %v2012, %v2011
    %v2047 = vpack.c.b16 %v2014, %v2013
    %v2048 = vpack.c.b16 %v2016, %v2015
    %2081 = vmatprep.subr.bf16.mxu0 0
    %2082 = vmatpush1.bf16.msra.mxu0 %v2017
    %2083 = vmatprep.subr.bf16.mxu0 0
    %2084 = vmatpush1.bf16.msra.mxu0 %v2018
    %2085 = vmatprep.subr.bf16.mxu0 0
    %2086 = vmatpush1.bf16.msra.mxu0 %v2019
    %2087 = vmatprep.subr.bf16.mxu0 0
    %2088 = vmatpush1.bf16.msra.mxu0 %v2020
    %2089 = vmatprep.subr.bf16.mxu0 0
    %2090 = vmatpush1.bf16.msra.mxu0 %v2021
    %2091 = vmatprep.subr.bf16.mxu0 0
    %2092 = vmatpush1.bf16.msra.mxu0 %v2022
    %2093 = vmatprep.subr.bf16.mxu0 0
    %2094 = vmatpush1.bf16.msra.mxu0 %v2023
    %2095 = vmatprep.subr.bf16.mxu0 0
    %2096 = vmatpush1.bf16.msra.mxu0 %v2024
    %2097 = vmatprep.subr.bf16.mxu0 0
    %2098 = vmatpush1.bf16.msra.mxu0 %v2025
    %2099 = vmatprep.subr.bf16.mxu0 0
    %2100 = vmatpush1.bf16.msra.mxu0 %v2026
    %2101 = vmatprep.subr.bf16.mxu0 0
    %2102 = vmatpush1.bf16.msra.mxu0 %v2027
    %2103 = vmatprep.subr.bf16.mxu0 0
    %2104 = vmatpush1.bf16.msra.mxu0 %v2028
    %2105 = vmatprep.subr.bf16.mxu0 0
    %2106 = vmatpush1.bf16.msra.mxu0 %v2029
    %2107 = vmatprep.subr.bf16.mxu0 0
    %2108 = vmatpush1.bf16.msra.mxu0 %v2030
    %2109 = vmatprep.subr.bf16.mxu0 0
    %2110 = vmatpush1.bf16.msra.mxu0 %v2031
    %2111 = vmatprep.subr.bf16.mxu0 0
    %2112 = vmatpush1.bf16.msra.mxu0 %v2032
    %2113 = vmatprep.mubr.bf16.mxu0 %v1818
    %2114 = vmatmul.mubr.bf16.gmra.mrb[0].mxu0 %v1817
    %v2115 = vpop.f32.mrb[0].mxu0
    %v2116 = vadd.f32 0.0, %v2115
    %v2117 = vpop.f32.mrb[0].mxu0
    %v2118 = vpop.f32.mrb[0].mxu0
    %v2119 = vadd.f32 0.0, %v2118
    %v2120 = vpop.f32.mrb[0].mxu0
    %2121 = vmatprep.mubr.bf16.mxu0 %v1822
    %2122 = vmatmul.mubr.bf16.gmra.mrb[0].mxu0 %v1821
    %v2123 = vpop.f32.mrb[0].mxu0
    %v2124 = vadd.f32 0.0, %v2123
    %v2125 = vpop.f32.mrb[0].mxu0
    %v2126 = vpop.f32.mrb[0].mxu0
    %v2127 = vadd.f32 0.0, %v2126
    %v2128 = vpop.f32.mrb[0].mxu0
    %2129 = vdwg.mxu0
    %2130 = vmatprep.subr.bf16.mxu0 0
    %2131 = vmatpush1.bf16.msra.mxu0 %v2033
    %2132 = vmatprep.subr.bf16.mxu0 0
    %2133 = vmatpush1.bf16.msra.mxu0 %v2034
    %2134 = vmatprep.subr.bf16.mxu0 0
    %2135 = vmatpush1.bf16.msra.mxu0 %v2035
    %2136 = vmatprep.subr.bf16.mxu0 0
    %2137 = vmatpush1.bf16.msra.mxu0 %v2036
    %2138 = vmatprep.subr.bf16.mxu0 0
    %2139 = vmatpush1.bf16.msra.mxu0 %v2037
    %2140 = vmatprep.subr.bf16.mxu0 0
    %2141 = vmatpush1.bf16.msra.mxu0 %v2038
    %2142 = vmatprep.subr.bf16.mxu0 0
    %2143 = vmatpush1.bf16.msra.mxu0 %v2039
    %2144 = vmatprep.subr.bf16.mxu0 0
    %2145 = vmatpush1.bf16.msra.mxu0 %v2040
    %2146 = vmatprep.subr.bf16.mxu0 0
    %2147 = vmatpush1.bf16.msra.mxu0 %v2041
    %2148 = vmatprep.subr.bf16.mxu0 0
    %2149 = vmatpush1.bf16.msra.mxu0 %v2042
    %2150 = vmatprep.subr.bf16.mxu0 0
    %2151 = vmatpush1.bf16.msra.mxu0 %v2043
    %2152 = vmatprep.subr.bf16.mxu0 0
    %2153 = vmatpush1.bf16.msra.mxu0 %v2044
    %2154 = vmatprep.subr.bf16.mxu0 0
    %2155 = vmatpush1.bf16.msra.mxu0 %v2045
    %2156 = vmatprep.subr.bf16.mxu0 0
    %2157 = vmatpush1.bf16.msra.mxu0 %v2046
    %2158 = vmatprep.subr.bf16.mxu0 0
    %2159 = vmatpush1.bf16.msra.mxu0 %v2047
    %2160 = vmatprep.subr.bf16.mxu0 0
    %2161 = vmatpush1.bf16.msra.mxu0 %v2048
    %2162 = vmatprep.mubr.bf16.mxu0 %v1820
    %2163 = vmatmul.mubr.bf16.gmra.mrb[0].mxu0 %v1819
    %v2164 = vpop.f32.mrb[0].mxu0
    %v2165 = vadd.f32 %v2116, %v2164
    %v2166 = vpop.f32.mrb[0].mxu0
    %v2167 = vpop.f32.mrb[0].mxu0
    %v2168 = vadd.f32 %v2119, %v2167
    %v2169 = vpop.f32.mrb[0].mxu0
    %2170 = vmatprep.mubr.bf16.mxu0 %v1824
    %2171 = vmatmul.mubr.bf16.gmra.mrb[0].mxu0 %v1823
    %v2172 = vpop.f32.mrb[0].mxu0
    %v2173 = vadd.f32 %v2124, %v2172
    %v2174 = vpop.f32.mrb[0].mxu0
    %v2175 = vpop.f32.mrb[0].mxu0
    %v2176 = vadd.f32 %v2127, %v2175
    %v2177 = vpop.f32.mrb[0].mxu0
    %2178 = vdwg.mxu0
    %v2243 = vunpack.c.l.b16 %v1561
    %v2244 = vunpack.c.l.b16 %v1562
    %v2245 = vunpack.c.l.b16 %v1563
    %v2246 = vunpack.c.l.b16 %v1564
    %v2247 = vunpack.c.l.b16 %v1565
    %v2248 = vunpack.c.l.b16 %v1566
    %v2249 = vunpack.c.l.b16 %v1567
    %v2250 = vunpack.c.l.b16 %v1568
    %v2251 = vunpack.c.l.b16 %v1569
    %v2252 = vunpack.c.l.b16 %v1570
    %v2253 = vunpack.c.l.b16 %v1571
    %v2254 = vunpack.c.l.b16 %v1572
    %v2255 = vunpack.c.l.b16 %v1573
    %v2256 = vunpack.c.l.b16 %v1574
    %v2257 = vunpack.c.l.b16 %v1575
    %v2258 = vunpack.c.l.b16 %v1576
    %v2259 = vunpack.c.l.b16 %v1577
    %v2260 = vunpack.c.l.b16 %v1578
    %v2261 = vunpack.c.l.b16 %v1579
    %v2262 = vunpack.c.l.b16 %v1580
    %v2263 = vunpack.c.l.b16 %v1581
    %v2264 = vunpack.c.l.b16 %v1582
    %v2265 = vunpack.c.l.b16 %v1583
    %v2266 = vunpack.c.l.b16 %v1584
    %v2267 = vunpack.c.l.b16 %v1585
    %v2268 = vunpack.c.l.b16 %v1586
    %v2269 = vunpack.c.l.b16 %v1587
    %v2270 = vunpack.c.l.b16 %v1588
    %v2271 = vunpack.c.l.b16 %v1589
    %v2272 = vunpack.c.l.b16 %v1590
    %v2273 = vunpack.c.l.b16 %v1591
    %v2274 = vunpack.c.l.b16 %v1592
    %v2275 = vunpack.c.l.b16 %v1593
    %v2276 = vunpack.c.l.b16 %v1594
    %v2277 = vunpack.c.l.b16 %v1595
    %v2278 = vunpack.c.l.b16 %v1596
    %v2279 = vunpack.c.l.b16 %v1597
    %v2280 = vunpack.c.l.b16 %v1598
    %v2281 = vunpack.c.l.b16 %v1599
    %v2282 = vunpack.c.l.b16 %v1600
    %v2283 = vunpack.c.l.b16 %v1601
    %v2284 = vunpack.c.l.b16 %v1602
    %v2285 = vunpack.c.l.b16 %v1603
    %v2286 = vunpack.c.l.b16 %v1604
    %v2287 = vunpack.c.l.b16 %v1605
    %v2288 = vunpack.c.l.b16 %v1606
    %v2289 = vunpack.c.l.b16 %v1607
    %v2290 = vunpack.c.l.b16 %v1608
    %v2291 = vunpack.c.l.b16 %v1609
    %v2292 = vunpack.c.l.b16 %v1610
    %v2293 = vunpack.c.l.b16 %v1611
    %v2294 = vunpack.c.l.b16 %v1612
    %v2295 = vunpack.c.l.b16 %v1613
    %v2296 = vunpack.c.l.b16 %v1614
    %v2297 = vunpack.c.l.b16 %v1615
    %v2298 = vunpack.c.l.b16 %v1616
    %v2299 = vunpack.c.l.b16 %v1617
    %v2300 = vunpack.c.l.b16 %v1618
    %v2301 = vunpack.c.l.b16 %v1619
    %v2302 = vunpack.c.l.b16 %v1620
    %v2303 = vunpack.c.l.b16 %v1621
    %v2304 = vunpack.c.l.b16 %v1622
    %v2305 = vunpack.c.l.b16 %v1623
    %v2306 = vunpack.c.l.b16 %v1624
    %v2307 = vpack.c.b16 %v2244, %v2243
    %v2308 = vpack.c.b16 %v2246, %v2245
    %v2309 = vpack.c.b16 %v2248, %v2247
    %v2310 = vpack.c.b16 %v2250, %v2249
    %v2311 = vpack.c.b16 %v2252, %v2251
    %v2312 = vpack.c.b16 %v2254, %v2253
    %v2313 = vpack.c.b16 %v2256, %v2255
    %v2314 = vpack.c.b16 %v2258, %v2257
    %v2315 = vpack.c.b16 %v2260, %v2259
    %v2316 = vpack.c.b16 %v2262, %v2261
    %v2317 = vpack.c.b16 %v2264, %v2263
    %v2318 = vpack.c.b16 %v2266, %v2265
    %v2319 = vpack.c.b16 %v2268, %v2267
    %v2320 = vpack.c.b16 %v2270, %v2269
    %v2321 = vpack.c.b16 %v2272, %v2271
    %v2322 = vpack.c.b16 %v2274, %v2273
    %v2323 = vpack.c.b16 %v2276, %v2275
    %v2324 = vpack.c.b16 %v2278, %v2277
    %v2325 = vpack.c.b16 %v2280, %v2279
    %v2326 = vpack.c.b16 %v2282, %v2281
    %v2327 = vpack.c.b16 %v2284, %v2283
    %v2328 = vpack.c.b16 %v2286, %v2285
    %v2329 = vpack.c.b16 %v2288, %v2287
    %v2330 = vpack.c.b16 %v2290, %v2289
    %v2331 = vpack.c.b16 %v2292, %v2291
    %v2332 = vpack.c.b16 %v2294, %v2293
    %v2333 = vpack.c.b16 %v2296, %v2295
    %v2334 = vpack.c.b16 %v2298, %v2297
    %v2335 = vpack.c.b16 %v2300, %v2299
    %v2336 = vpack.c.b16 %v2302, %v2301
    %v2337 = vpack.c.b16 %v2304, %v2303
    %v2338 = vpack.c.b16 %v2306, %v2305
    %2371 = vmatprep.subr.bf16.mxu0 0
    %2372 = vmatpush1.bf16.msra.mxu0 %v2307
    %2373 = vmatprep.subr.bf16.mxu0 0
    %2374 = vmatpush1.bf16.msra.mxu0 %v2308
    %2375 = vmatprep.subr.bf16.mxu0 0
    %2376 = vmatpush1.bf16.msra.mxu0 %v2309
    %2377 = vmatprep.subr.bf16.mxu0 0
    %2378 = vmatpush1.bf16.msra.mxu0 %v2310
    %2379 = vmatprep.subr.bf16.mxu0 0
    %2380 = vmatpush1.bf16.msra.mxu0 %v2311
    %2381 = vmatprep.subr.bf16.mxu0 0
    %2382 = vmatpush1.bf16.msra.mxu0 %v2312
    %2383 = vmatprep.subr.bf16.mxu0 0
    %2384 = vmatpush1.bf16.msra.mxu0 %v2313
    %2385 = vmatprep.subr.bf16.mxu0 0
    %2386 = vmatpush1.bf16.msra.mxu0 %v2314
    %2387 = vmatprep.subr.bf16.mxu0 0
    %2388 = vmatpush1.bf16.msra.mxu0 %v2315
    %2389 = vmatprep.subr.bf16.mxu0 0
    %2390 = vmatpush1.bf16.msra.mxu0 %v2316
    %2391 = vmatprep.subr.bf16.mxu0 0
    %2392 = vmatpush1.bf16.msra.mxu0 %v2317
    %2393 = vmatprep.subr.bf16.mxu0 0
    %2394 = vmatpush1.bf16.msra.mxu0 %v2318
    %2395 = vmatprep.subr.bf16.mxu0 0
    %2396 = vmatpush1.bf16.msra.mxu0 %v2319
    %2397 = vmatprep.subr.bf16.mxu0 0
    %2398 = vmatpush1.bf16.msra.mxu0 %v2320
    %2399 = vmatprep.subr.bf16.mxu0 0
    %2400 = vmatpush1.bf16.msra.mxu0 %v2321
    %2401 = vmatprep.subr.bf16.mxu0 0
    %2402 = vmatpush1.bf16.msra.mxu0 %v2322
    %2403 = vmatprep.mubr.bf16.mxu0 %v1554
    %2404 = vmatmul.mubr.bf16.gmra.mrb[0].mxu0 %v1553
    %v2405 = vpop.f32.mrb[0].mxu0
    %v2406 = vadd.f32 %v2165, %v2405
    %v2407 = vpop.f32.mrb[0].mxu0
    %v2408 = vpop.f32.mrb[0].mxu0
    %v2409 = vadd.f32 %v2168, %v2408
    %v2410 = vpop.f32.mrb[0].mxu0
    %2411 = vmatprep.mubr.bf16.mxu0 %v1558
    %2412 = vmatmul.mubr.bf16.gmra.mrb[0].mxu0 %v1557
    %v2413 = vpop.f32.mrb[0].mxu0
    %v2414 = vadd.f32 %v2173, %v2413
    %v2415 = vpop.f32.mrb[0].mxu0
    %v2416 = vpop.f32.mrb[0].mxu0
    %v2417 = vadd.f32 %v2176, %v2416
    %v2418 = vpop.f32.mrb[0].mxu0
    %2419 = vdwg.mxu0
    %2420 = vmatprep.subr.bf16.mxu0 0
    %2421 = vmatpush1.bf16.msra.mxu0 %v2323
    %2422 = vmatprep.subr.bf16.mxu0 0
    %2423 = vmatpush1.bf16.msra.mxu0 %v2324
    %2424 = vmatprep.subr.bf16.mxu0 0
    %2425 = vmatpush1.bf16.msra.mxu0 %v2325
    %2426 = vmatprep.subr.bf16.mxu0 0
    %2427 = vmatpush1.bf16.msra.mxu0 %v2326
    %2428 = vmatprep.subr.bf16.mxu0 0
    %2429 = vmatpush1.bf16.msra.mxu0 %v2327
    %2430 = vmatprep.subr.bf16.mxu0 0
    %2431 = vmatpush1.bf16.msra.mxu0 %v2328
    %2432 = vmatprep.subr.bf16.mxu0 0
    %2433 = vmatpush1.bf16.msra.mxu0 %v2329
    %2434 = vmatprep.subr.bf16.mxu0 0
    %2435 = vmatpush1.bf16.msra.mxu0 %v2330
    %2436 = vmatprep.subr.bf16.mxu0 0
    %2437 = vmatpush1.bf16.msra.mxu0 %v2331
    %2438 = vmatprep.subr.bf16.mxu0 0
    %2439 = vmatpush1.bf16.msra.mxu0 %v2332
    %2440 = vmatprep.subr.bf16.mxu0 0
    %2441 = vmatpush1.bf16.msra.mxu0 %v2333
    %2442 = vmatprep.subr.bf16.mxu0 0
    %2443 = vmatpush1.bf16.msra.mxu0 %v2334
    %2444 = vmatprep.subr.bf16.mxu0 0
    %2445 = vmatpush1.bf16.msra.mxu0 %v2335
    %2446 = vmatprep.subr.bf16.mxu0 0
    %2447 = vmatpush1.bf16.msra.mxu0 %v2336
    %2448 = vmatprep.subr.bf16.mxu0 0
    %2449 = vmatpush1.bf16.msra.mxu0 %v2337
    %2450 = vmatprep.subr.bf16.mxu0 0
    %2451 = vmatpush1.bf16.msra.mxu0 %v2338
    %2452 = vmatprep.mubr.bf16.mxu0 %v1556
    %2453 = vmatmul.mubr.bf16.gmra.mrb[0].mxu0 %v1555
    %v2454 = vpop.f32.mrb[0].mxu0
    %v2455 = vadd.f32 %v2406, %v2454
    %v2456 = vpop.f32.mrb[0].mxu0
    %v2457 = vpop.f32.mrb[0].mxu0
    %v2458 = vadd.f32 %v2409, %v2457
    %v2459 = vpop.f32.mrb[0].mxu0
    %2460 = vmatprep.mubr.bf16.mxu0 %v1560
    %2461 = vmatmul.mubr.bf16.gmra.mrb[0].mxu0 %v1559
    %v2462 = vpop.f32.mrb[0].mxu0
    %v2463 = vadd.f32 %v2414, %v2462
    %v2464 = vpop.f32.mrb[0].mxu0
    %v2465 = vpop.f32.mrb[0].mxu0
    %v2466 = vadd.f32 %v2417, %v2465
    %v2467 = vpop.f32.mrb[0].mxu0
    %2468 = vdwg.mxu0
    %v2469 = vld [vmem:[%s13 + $0x20] sm:$0xff]
    %v2470 = vld [vmem:[%s13 + $0x28] sm:$0xff]
    %v2471 = vld [vmem:[%s13 + $0x60] sm:$0xff]
    %v2472 = vld [vmem:[%s13 + $0x68] sm:$0xff]
    %v2473 = vld [vmem:[%s13 + $0xa0] sm:$0xff]
    %v2474 = vld [vmem:[%s13 + $0xa8] sm:$0xff]
    %v2475 = vld [vmem:[%s13 + $0xe0] sm:$0xff]
    %v2476 = vld [vmem:[%s13 + $0xe8] sm:$0xff]
    %v2477 = vld [vmem:[%s14 + $0x8] sm:$0xf]
    %v2479 = vlaneseq
    %v2480 = vshrl.u32 %v2479, 7
    %v2481 = vsub.s32 0, %v2480
    %v2482 = vrot.slane %v2477, %v2481
    %v2483 = vlaneseq
    %v2484 = vshrl.u32 %v2483, 7
    %v2485 = vsub.s32 1, %v2484
    %v2486 = vrot.slane %v2477, %v2485
    %v2487 = vlaneseq
    %v2488 = vshrl.u32 %v2487, 7
    %v2489 = vsub.s32 2, %v2488
    %v2490 = vrot.slane %v2477, %v2489
    %v2491 = vlaneseq
    %v2492 = vshrl.u32 %v2491, 7
    %v2493 = vsub.s32 3, %v2492
    %v2494 = vrot.slane %v2477, %v2493
    %v2507 = vunpack.c.l.b16 %v2469
    %v2508 = vunpack.c.h.b16 %v2469
    %v2509 = vunpack.c.l.b16 %v2470
    %v2510 = vunpack.c.h.b16 %v2470
    %v2511 = vunpack.c.l.b16 %v2471
    %v2512 = vunpack.c.h.b16 %v2471
    %v2513 = vunpack.c.l.b16 %v2472
    %v2514 = vunpack.c.h.b16 %v2472
    %v2515 = vunpack.c.l.b16 %v2473
    %v2516 = vunpack.c.h.b16 %v2473
    %v2517 = vunpack.c.l.b16 %v2474
    %v2518 = vunpack.c.h.b16 %v2474
    %v2519 = vunpack.c.l.b16 %v2475
    %v2520 = vunpack.c.h.b16 %v2475
    %v2521 = vunpack.c.l.b16 %v2476
    %v2522 = vunpack.c.h.b16 %v2476
    %v2523 = vpack.c.b16 %v2511, %v2507
    %v2524 = vpack.c.b16 %v2512, %v2508
    %v2525 = vpack.c.b16 %v2513, %v2509
    %v2526 = vpack.c.b16 %v2514, %v2510
    %v2527 = vpack.c.b16 %v2519, %v2515
    %v2528 = vpack.c.b16 %v2520, %v2516
    %v2529 = vpack.c.b16 %v2521, %v2517
    %v2530 = vpack.c.b16 %v2522, %v2518
    %2539 = vmatprep.subr.bf16.mxu0 %v2524
    %2540 = vmatpush1.bf16.msra.mxu0 %v2523
    %2541 = vmatprep.subr.bf16.mxu0 %v2528
    %2542 = vmatpush1.bf16.msra.mxu0 %v2527
    %2543 = vmatprep.subr.bf16.mxu0 0
    %2544 = vmatpush1.bf16.msra.mxu0 0
    %2545 = vmatprep.subr.bf16.mxu0 0
    %2546 = vmatpush1.bf16.msra.mxu0 0
    %2547 = vmatprep.subr.bf16.mxu0 0
    %2548 = vmatpush1.bf16.msra.mxu0 0
    %2549 = vmatprep.subr.bf16.mxu0 0
    %2550 = vmatpush1.bf16.msra.mxu0 0
    %2551 = vmatprep.subr.bf16.mxu0 0
    %2552 = vmatpush1.bf16.msra.mxu0 0
    %2553 = vmatprep.subr.bf16.mxu0 0
    %2554 = vmatpush1.bf16.msra.mxu0 0
    %2555 = vmatprep.subr.bf16.mxu0 0
    %2556 = vmatpush1.bf16.msra.mxu0 0
    %2557 = vmatprep.subr.bf16.mxu0 0
    %2558 = vmatpush1.bf16.msra.mxu0 0
    %2559 = vmatprep.subr.bf16.mxu0 0
    %2560 = vmatpush1.bf16.msra.mxu0 0
    %2561 = vmatprep.subr.bf16.mxu0 0
    %2562 = vmatpush1.bf16.msra.mxu0 0
    %2563 = vmatprep.subr.bf16.mxu0 0
    %2564 = vmatpush1.bf16.msra.mxu0 0
    %2565 = vmatprep.subr.bf16.mxu0 0
    %2566 = vmatpush1.bf16.msra.mxu0 0
    %2567 = vmatprep.subr.bf16.mxu0 0
    %2568 = vmatpush1.bf16.msra.mxu0 0
    %2569 = vmatprep.subr.bf16.mxu0 0
    %2570 = vmatpush1.bf16.msra.mxu0 0
    %2571 = vmatprep.mubr.bf16.mxu0 0
    %2572 = vmatmul.mubr.bf16.gmra.mrb[0].mxu0 %v1426
    %v2573 = vpop.f32.mrb[0].mxu0
    %v2574 = vadd.f32 %v2482, %v2573
    %v2575 = vpop.f32.mrb[0].mxu0
    %v2576 = vadd.f32 %v2486, %v2575
    %v2577 = vpop.f32.mrb[0].mxu0
    %v2578 = vadd.f32 %v2482, %v2577
    %v2579 = vpop.f32.mrb[0].mxu0
    %v2580 = vadd.f32 %v2486, %v2579
    %2581 = vmatprep.mubr.bf16.mxu0 0
    %2582 = vmatmul.mubr.bf16.gmra.mrb[0].mxu0 %v1429
    %v2583 = vpop.f32.mrb[0].mxu0
    %v2584 = vadd.f32 %v2482, %v2583
    %v2585 = vpop.f32.mrb[0].mxu0
    %v2586 = vadd.f32 %v2486, %v2585
    %v2587 = vpop.f32.mrb[0].mxu0
    %v2588 = vadd.f32 %v2482, %v2587
    %v2589 = vpop.f32.mrb[0].mxu0
    %v2590 = vadd.f32 %v2486, %v2589
    %2591 = vdwg.mxu0
    %2592 = vmatprep.subr.bf16.mxu0 %v2526
    %2593 = vmatpush1.bf16.msra.mxu0 %v2525
    %2594 = vmatprep.subr.bf16.mxu0 %v2530
    %2595 = vmatpush1.bf16.msra.mxu0 %v2529
    %2596 = vmatprep.subr.bf16.mxu0 0
    %2597 = vmatpush1.bf16.msra.mxu0 0
    %2598 = vmatprep.subr.bf16.mxu0 0
    %2599 = vmatpush1.bf16.msra.mxu0 0
    %2600 = vmatprep.subr.bf16.mxu0 0
    %2601 = vmatpush1.bf16.msra.mxu0 0
    %2602 = vmatprep.subr.bf16.mxu0 0
    %2603 = vmatpush1.bf16.msra.mxu0 0
    %2604 = vmatprep.subr.bf16.mxu0 0
    %2605 = vmatpush1.bf16.msra.mxu0 0
    %2606 = vmatprep.subr.bf16.mxu0 0
    %2607 = vmatpush1.bf16.msra.mxu0 0
    %2608 = vmatprep.subr.bf16.mxu0 0
    %2609 = vmatpush1.bf16.msra.mxu0 0
    %2610 = vmatprep.subr.bf16.mxu0 0
    %2611 = vmatpush1.bf16.msra.mxu0 0
    %2612 = vmatprep.subr.bf16.mxu0 0
    %2613 = vmatpush1.bf16.msra.mxu0 0
    %2614 = vmatprep.subr.bf16.mxu0 0
    %2615 = vmatpush1.bf16.msra.mxu0 0
    %2616 = vmatprep.subr.bf16.mxu0 0
    %2617 = vmatpush1.bf16.msra.mxu0 0
    %2618 = vmatprep.subr.bf16.mxu0 0
    %2619 = vmatpush1.bf16.msra.mxu0 0
    %2620 = vmatprep.subr.bf16.mxu0 0
    %2621 = vmatpush1.bf16.msra.mxu0 0
    %2622 = vmatprep.subr.bf16.mxu0 0
    %2623 = vmatpush1.bf16.msra.mxu0 0
    %2624 = vmatprep.mubr.bf16.mxu0 0
    %2625 = vmatmul.mubr.bf16.gmra.mrb[0].mxu0 %v1426
    %v2626 = vpop.f32.mrb[0].mxu0
    %v2627 = vadd.f32 %v2490, %v2626
    %v2628 = vpop.f32.mrb[0].mxu0
    %v2629 = vadd.f32 %v2494, %v2628
    %v2630 = vpop.f32.mrb[0].mxu0
    %v2631 = vadd.f32 %v2490, %v2630
    %v2632 = vpop.f32.mrb[0].mxu0
    %v2633 = vadd.f32 %v2494, %v2632
    %2634 = vmatprep.mubr.bf16.mxu0 0
    %2635 = vmatmul.mubr.bf16.gmra.mrb[0].mxu0 %v1429
    %v2636 = vpop.f32.mrb[0].mxu0
    %v2637 = vadd.f32 %v2490, %v2636
    %v2638 = vpop.f32.mrb[0].mxu0
    %v2639 = vadd.f32 %v2494, %v2638
    %v2640 = vpop.f32.mrb[0].mxu0
    %v2641 = vadd.f32 %v2490, %v2640
    %v2642 = vpop.f32.mrb[0].mxu0
    %v2643 = vadd.f32 %v2494, %v2642
    %2644 = vdwg.mxu0
    %v2645 = vmax.f32 %v2574, 0.0
    %v2646 = vmax.f32 %v2576, 0.0
    %v2647 = vmax.f32 %v2627, 0.0
    %v2648 = vmax.f32 %v2629, 0.0
    %v2649 = vmax.f32 %v2578, 0.0
    %v2650 = vmax.f32 %v2580, 0.0
    %v2651 = vmax.f32 %v2631, 0.0
    %v2652 = vmax.f32 %v2633, 0.0
    %v2653 = vmax.f32 %v2584, 0.0
    %v2654 = vmax.f32 %v2586, 0.0
    %v2655 = vmax.f32 %v2637, 0.0
    %v2656 = vmax.f32 %v2639, 0.0
    %v2657 = vmax.f32 %v2588, 0.0
    %v2658 = vmax.f32 %v2590, 0.0
    %v2659 = vmax.f32 %v2641, 0.0
    %v2660 = vmax.f32 %v2643, 0.0
    %v2661 = vpack.c.bf16 %v2649, %v2645
    %v2662 = vpack.c.bf16 %v2650, %v2646
    %v2663 = vpack.c.bf16 %v2651, %v2647
    %v2664 = vpack.c.bf16 %v2652, %v2648
    %v2665 = vpack.c.bf16 %v2657, %v2653
    %v2666 = vpack.c.bf16 %v2658, %v2654
    %v2667 = vpack.c.bf16 %v2659, %v2655
    %v2668 = vpack.c.bf16 %v2660, %v2656
    %v2669 = vld [vmem:[%s15 + $0x200] sm:$0xf]
    %v2670 = vld [vmem:[%s15 + $0x204] sm:$0xf]
    %v2671 = vld [vmem:[%s15 + $0x208] sm:$0xf]
    %v2672 = vld [vmem:[%s15 + $0x20c] sm:$0xf]
    %v2673 = vld [vmem:[%s15 + $0x210] sm:$0xf]
    %v2674 = vld [vmem:[%s15 + $0x214] sm:$0xf]
    %v2675 = vld [vmem:[%s15 + $0x218] sm:$0xf]
    %v2676 = vld [vmem:[%s15 + $0x21c] sm:$0xf]
    %v2677 = vld [vmem:[%s15 + $0x220] sm:$0xf]
    %v2678 = vld [vmem:[%s15 + $0x224] sm:$0xf]
    %v2679 = vld [vmem:[%s15 + $0x228] sm:$0xf]
    %v2680 = vld [vmem:[%s15 + $0x22c] sm:$0xf]
    %v2681 = vld [vmem:[%s15 + $0x230] sm:$0xf]
    %v2682 = vld [vmem:[%s15 + $0x234] sm:$0xf]
    %v2683 = vld [vmem:[%s15 + $0x238] sm:$0xf]
    %v2684 = vld [vmem:[%s15 + $0x23c] sm:$0xf]
    %v2685 = vld [vmem:[%s15 + $0x240] sm:$0xf]
    %v2686 = vld [vmem:[%s15 + $0x244] sm:$0xf]
    %v2687 = vld [vmem:[%s15 + $0x248] sm:$0xf]
    %v2688 = vld [vmem:[%s15 + $0x24c] sm:$0xf]
    %v2689 = vld [vmem:[%s15 + $0x250] sm:$0xf]
    %v2690 = vld [vmem:[%s15 + $0x254] sm:$0xf]
    %v2691 = vld [vmem:[%s15 + $0x258] sm:$0xf]
    %v2692 = vld [vmem:[%s15 + $0x25c] sm:$0xf]
    %v2693 = vld [vmem:[%s15 + $0x260] sm:$0xf]
    %v2694 = vld [vmem:[%s15 + $0x264] sm:$0xf]
    %v2695 = vld [vmem:[%s15 + $0x268] sm:$0xf]
    %v2696 = vld [vmem:[%s15 + $0x26c] sm:$0xf]
    %v2697 = vld [vmem:[%s15 + $0x270] sm:$0xf]
    %v2698 = vld [vmem:[%s15 + $0x274] sm:$0xf]
    %v2699 = vld [vmem:[%s15 + $0x278] sm:$0xf]
    %v2700 = vld [vmem:[%s15 + $0x27c] sm:$0xf]
    %v2701 = vld [vmem:[%s15 + $0x280] sm:$0xf]
    %v2702 = vld [vmem:[%s15 + $0x284] sm:$0xf]
    %v2703 = vld [vmem:[%s15 + $0x288] sm:$0xf]
    %v2704 = vld [vmem:[%s15 + $0x28c] sm:$0xf]
    %v2705 = vld [vmem:[%s15 + $0x290] sm:$0xf]
    %v2706 = vld [vmem:[%s15 + $0x294] sm:$0xf]
    %v2707 = vld [vmem:[%s15 + $0x298] sm:$0xf]
    %v2708 = vld [vmem:[%s15 + $0x29c] sm:$0xf]
    %v2709 = vld [vmem:[%s15 + $0x2a0] sm:$0xf]
    %v2710 = vld [vmem:[%s15 + $0x2a4] sm:$0xf]
    %v2711 = vld [vmem:[%s15 + $0x2a8] sm:$0xf]
    %v2712 = vld [vmem:[%s15 + $0x2ac] sm:$0xf]
    %v2713 = vld [vmem:[%s15 + $0x2b0] sm:$0xf]
    %v2714 = vld [vmem:[%s15 + $0x2b4] sm:$0xf]
    %v2715 = vld [vmem:[%s15 + $0x2b8] sm:$0xf]
    %v2716 = vld [vmem:[%s15 + $0x2bc] sm:$0xf]
    %v2717 = vld [vmem:[%s15 + $0x2c0] sm:$0xf]
    %v2718 = vld [vmem:[%s15 + $0x2c4] sm:$0xf]
    %v2719 = vld [vmem:[%s15 + $0x2c8] sm:$0xf]
    %v2720 = vld [vmem:[%s15 + $0x2cc] sm:$0xf]
    %v2721 = vld [vmem:[%s15 + $0x2d0] sm:$0xf]
    %v2722 = vld [vmem:[%s15 + $0x2d4] sm:$0xf]
    %v2723 = vld [vmem:[%s15 + $0x2d8] sm:$0xf]
    %v2724 = vld [vmem:[%s15 + $0x2dc] sm:$0xf]
    %v2725 = vld [vmem:[%s15 + $0x2e0] sm:$0xf]
    %v2726 = vld [vmem:[%s15 + $0x2e4] sm:$0xf]
    %v2727 = vld [vmem:[%s15 + $0x2e8] sm:$0xf]
    %v2728 = vld [vmem:[%s15 + $0x2ec] sm:$0xf]
    %v2729 = vld [vmem:[%s15 + $0x2f0] sm:$0xf]
    %v2730 = vld [vmem:[%s15 + $0x2f4] sm:$0xf]
    %v2731 = vld [vmem:[%s15 + $0x2f8] sm:$0xf]
    %v2732 = vld [vmem:[%s15 + $0x2fc] sm:$0xf]
    %v2797 = vunpack.c.l.b16 %v2669
    %v2798 = vunpack.c.l.b16 %v2670
    %v2799 = vunpack.c.l.b16 %v2671
    %v2800 = vunpack.c.l.b16 %v2672
    %v2801 = vunpack.c.l.b16 %v2673
    %v2802 = vunpack.c.l.b16 %v2674
    %v2803 = vunpack.c.l.b16 %v2675
    %v2804 = vunpack.c.l.b16 %v2676
    %v2805 = vunpack.c.l.b16 %v2677
    %v2806 = vunpack.c.l.b16 %v2678
    %v2807 = vunpack.c.l.b16 %v2679
    %v2808 = vunpack.c.l.b16 %v2680
    %v2809 = vunpack.c.l.b16 %v2681
    %v2810 = vunpack.c.l.b16 %v2682
    %v2811 = vunpack.c.l.b16 %v2683
    %v2812 = vunpack.c.l.b16 %v2684
    %v2813 = vunpack.c.l.b16 %v2685
    %v2814 = vunpack.c.l.b16 %v2686
    %v2815 = vunpack.c.l.b16 %v2687
    %v2816 = vunpack.c.l.b16 %v2688
    %v2817 = vunpack.c.l.b16 %v2689
    %v2818 = vunpack.c.l.b16 %v2690
    %v2819 = vunpack.c.l.b16 %v2691
    %v2820 = vunpack.c.l.b16 %v2692
    %v2821 = vunpack.c.l.b16 %v2693
    %v2822 = vunpack.c.l.b16 %v2694
    %v2823 = vunpack.c.l.b16 %v2695
    %v2824 = vunpack.c.l.b16 %v2696
    %v2825 = vunpack.c.l.b16 %v2697
    %v2826 = vunpack.c.l.b16 %v2698
    %v2827 = vunpack.c.l.b16 %v2699
    %v2828 = vunpack.c.l.b16 %v2700
    %v2829 = vunpack.c.l.b16 %v2701
    %v2830 = vunpack.c.l.b16 %v2702
    %v2831 = vunpack.c.l.b16 %v2703
    %v2832 = vunpack.c.l.b16 %v2704
    %v2833 = vunpack.c.l.b16 %v2705
    %v2834 = vunpack.c.l.b16 %v2706
    %v2835 = vunpack.c.l.b16 %v2707
    %v2836 = vunpack.c.l.b16 %v2708
    %v2837 = vunpack.c.l.b16 %v2709
    %v2838 = vunpack.c.l.b16 %v2710
    %v2839 = vunpack.c.l.b16 %v2711
    %v2840 = vunpack.c.l.b16 %v2712
    %v2841 = vunpack.c.l.b16 %v2713
    %v2842 = vunpack.c.l.b16 %v2714
    %v2843 = vunpack.c.l.b16 %v2715
    %v2844 = vunpack.c.l.b16 %v2716
    %v2845 = vunpack.c.l.b16 %v2717
    %v2846 = vunpack.c.l.b16 %v2718
    %v2847 = vunpack.c.l.b16 %v2719
    %v2848 = vunpack.c.l.b16 %v2720
    %v2849 = vunpack.c.l.b16 %v2721
    %v2850 = vunpack.c.l.b16 %v2722
    %v2851 = vunpack.c.l.b16 %v2723
    %v2852 = vunpack.c.l.b16 %v2724
    %v2853 = vunpack.c.l.b16 %v2725
    %v2854 = vunpack.c.l.b16 %v2726
    %v2855 = vunpack.c.l.b16 %v2727
    %v2856 = vunpack.c.l.b16 %v2728
    %v2857 = vunpack.c.l.b16 %v2729
    %v2858 = vunpack.c.l.b16 %v2730
    %v2859 = vunpack.c.l.b16 %v2731
    %v2860 = vunpack.c.l.b16 %v2732
    %v2861 = vpack.c.b16 %v2798, %v2797
    %v2862 = vpack.c.b16 %v2800, %v2799
    %v2863 = vpack.c.b16 %v2802, %v2801
    %v2864 = vpack.c.b16 %v2804, %v2803
    %v2865 = vpack.c.b16 %v2806, %v2805
    %v2866 = vpack.c.b16 %v2808, %v2807
    %v2867 = vpack.c.b16 %v2810, %v2809
    %v2868 = vpack.c.b16 %v2812, %v2811
    %v2869 = vpack.c.b16 %v2814, %v2813
    %v2870 = vpack.c.b16 %v2816, %v2815
    %v2871 = vpack.c.b16 %v2818, %v2817
    %v2872 = vpack.c.b16 %v2820, %v2819
    %v2873 = vpack.c.b16 %v2822, %v2821
    %v2874 = vpack.c.b16 %v2824, %v2823
    %v2875 = vpack.c.b16 %v2826, %v2825
    %v2876 = vpack.c.b16 %v2828, %v2827
    %v2877 = vpack.c.b16 %v2830, %v2829
    %v2878 = vpack.c.b16 %v2832, %v2831
    %v2879 = vpack.c.b16 %v2834, %v2833
    %v2880 = vpack.c.b16 %v2836, %v2835
    %v2881 = vpack.c.b16 %v2838, %v2837
    %v2882 = vpack.c.b16 %v2840, %v2839
    %v2883 = vpack.c.b16 %v2842, %v2841
    %v2884 = vpack.c.b16 %v2844, %v2843
    %v2885 = vpack.c.b16 %v2846, %v2845
    %v2886 = vpack.c.b16 %v2848, %v2847
    %v2887 = vpack.c.b16 %v2850, %v2849
    %v2888 = vpack.c.b16 %v2852, %v2851
    %v2889 = vpack.c.b16 %v2854, %v2853
    %v2890 = vpack.c.b16 %v2856, %v2855
    %v2891 = vpack.c.b16 %v2858, %v2857
    %v2892 = vpack.c.b16 %v2860, %v2859
    %2925 = vmatprep.subr.bf16.mxu0 0
    %2926 = vmatpush1.bf16.msra.mxu0 %v2861
    %2927 = vmatprep.subr.bf16.mxu0 0
    %2928 = vmatpush1.bf16.msra.mxu0 %v2862
    %2929 = vmatprep.subr.bf16.mxu0 0
    %2930 = vmatpush1.bf16.msra.mxu0 %v2863
    %2931 = vmatprep.subr.bf16.mxu0 0
    %2932 = vmatpush1.bf16.msra.mxu0 %v2864
    %2933 = vmatprep.subr.bf16.mxu0 0
    %2934 = vmatpush1.bf16.msra.mxu0 %v2865
    %2935 = vmatprep.subr.bf16.mxu0 0
    %2936 = vmatpush1.bf16.msra.mxu0 %v2866
    %2937 = vmatprep.subr.bf16.mxu0 0
    %2938 = vmatpush1.bf16.msra.mxu0 %v2867
    %2939 = vmatprep.subr.bf16.mxu0 0
    %2940 = vmatpush1.bf16.msra.mxu0 %v2868
    %2941 = vmatprep.subr.bf16.mxu0 0
    %2942 = vmatpush1.bf16.msra.mxu0 %v2869
    %2943 = vmatprep.subr.bf16.mxu0 0
    %2944 = vmatpush1.bf16.msra.mxu0 %v2870
    %2945 = vmatprep.subr.bf16.mxu0 0
    %2946 = vmatpush1.bf16.msra.mxu0 %v2871
    %2947 = vmatprep.subr.bf16.mxu0 0
    %2948 = vmatpush1.bf16.msra.mxu0 %v2872
    %2949 = vmatprep.subr.bf16.mxu0 0
    %2950 = vmatpush1.bf16.msra.mxu0 %v2873
    %2951 = vmatprep.subr.bf16.mxu0 0
    %2952 = vmatpush1.bf16.msra.mxu0 %v2874
    %2953 = vmatprep.subr.bf16.mxu0 0
    %2954 = vmatpush1.bf16.msra.mxu0 %v2875
    %2955 = vmatprep.subr.bf16.mxu0 0
    %2956 = vmatpush1.bf16.msra.mxu0 %v2876
    %2957 = vmatprep.mubr.bf16.mxu0 %v2662
    %2958 = vmatmul.mubr.bf16.gmra.mrb[0].mxu0 %v2661
    %v2959 = vpop.f32.mrb[0].mxu0
    %v2960 = vadd.f32 0.0, %v2959
    %v2961 = vpop.f32.mrb[0].mxu0
    %v2962 = vpop.f32.mrb[0].mxu0
    %v2963 = vadd.f32 0.0, %v2962
    %v2964 = vpop.f32.mrb[0].mxu0
    %2965 = vmatprep.mubr.bf16.mxu0 %v2666
    %2966 = vmatmul.mubr.bf16.gmra.mrb[0].mxu0 %v2665
    %v2967 = vpop.f32.mrb[0].mxu0
    %v2968 = vadd.f32 0.0, %v2967
    %v2969 = vpop.f32.mrb[0].mxu0
    %v2970 = vpop.f32.mrb[0].mxu0
    %v2971 = vadd.f32 0.0, %v2970
    %v2972 = vpop.f32.mrb[0].mxu0
    %2973 = vdwg.mxu0
    %2974 = vmatprep.subr.bf16.mxu0 0
    %2975 = vmatpush1.bf16.msra.mxu0 %v2877
    %2976 = vmatprep.subr.bf16.mxu0 0
    %2977 = vmatpush1.bf16.msra.mxu0 %v2878
    %2978 = vmatprep.subr.bf16.mxu0 0
    %2979 = vmatpush1.bf16.msra.mxu0 %v2879
    %2980 = vmatprep.subr.bf16.mxu0 0
    %2981 = vmatpush1.bf16.msra.mxu0 %v2880
    %2982 = vmatprep.subr.bf16.mxu0 0
    %2983 = vmatpush1.bf16.msra.mxu0 %v2881
    %2984 = vmatprep.subr.bf16.mxu0 0
    %2985 = vmatpush1.bf16.msra.mxu0 %v2882
    %2986 = vmatprep.subr.bf16.mxu0 0
    %2987 = vmatpush1.bf16.msra.mxu0 %v2883
    %2988 = vmatprep.subr.bf16.mxu0 0
    %2989 = vmatpush1.bf16.msra.mxu0 %v2884
    %2990 = vmatprep.subr.bf16.mxu0 0
    %2991 = vmatpush1.bf16.msra.mxu0 %v2885
    %2992 = vmatprep.subr.bf16.mxu0 0
    %2993 = vmatpush1.bf16.msra.mxu0 %v2886
    %2994 = vmatprep.subr.bf16.mxu0 0
    %2995 = vmatpush1.bf16.msra.mxu0 %v2887
    %2996 = vmatprep.subr.bf16.mxu0 0
    %2997 = vmatpush1.bf16.msra.mxu0 %v2888
    %2998 = vmatprep.subr.bf16.mxu0 0
    %2999 = vmatpush1.bf16.msra.mxu0 %v2889
    %3000 = vmatprep.subr.bf16.mxu0 0
    %3001 = vmatpush1.bf16.msra.mxu0 %v2890
    %3002 = vmatprep.subr.bf16.mxu0 0
    %3003 = vmatpush1.bf16.msra.mxu0 %v2891
    %3004 = vmatprep.subr.bf16.mxu0 0
    %3005 = vmatpush1.bf16.msra.mxu0 %v2892
    %3006 = vmatprep.mubr.bf16.mxu0 %v2664
    %3007 = vmatmul.mubr.bf16.gmra.mrb[0].mxu0 %v2663
    %v3008 = vpop.f32.mrb[0].mxu0
    %v3009 = vadd.f32 %v2960, %v3008
    %v3010 = vpop.f32.mrb[0].mxu0
    %v3011 = vpop.f32.mrb[0].mxu0
    %v3012 = vadd.f32 %v2963, %v3011
    %v3013 = vpop.f32.mrb[0].mxu0
    %3014 = vmatprep.mubr.bf16.mxu0 %v2668
    %3015 = vmatmul.mubr.bf16.gmra.mrb[0].mxu0 %v2667
    %v3016 = vpop.f32.mrb[0].mxu0
    %v3017 = vadd.f32 %v2968, %v3016
    %v3018 = vpop.f32.mrb[0].mxu0
    %v3019 = vpop.f32.mrb[0].mxu0
    %v3020 = vadd.f32 %v2971, %v3019
    %v3021 = vpop.f32.mrb[0].mxu0
    %3022 = vdwg.mxu0
    %v3023 = vadd.f32 %v2455, %v3009
    %v3024 = vadd.f32 %v2458, %v3012
    %v3025 = vadd.f32 %v2463, %v3017
    %v3026 = vadd.f32 %v2466, %v3020
    %v3027 = vld [vmem:[%s13 + $0x30] sm:$0xff]
    %v3028 = vld [vmem:[%s13 + $0x38] sm:$0xff]
    %v3029 = vld [vmem:[%s13 + $0x70] sm:$0xff]
    %v3030 = vld [vmem:[%s13 + $0x78] sm:$0xff]
    %v3031 = vld [vmem:[%s13 + $0xb0] sm:$0xff]
    %v3032 = vld [vmem:[%s13 + $0xb8] sm:$0xff]
    %v3033 = vld [vmem:[%s13 + $0xf0] sm:$0xff]
    %v3034 = vld [vmem:[%s13 + $0xf8] sm:$0xff]
    %v3035 = vld [vmem:[%s14 + $0xc] sm:$0xf]
    %v3037 = vlaneseq
    %v3038 = vshrl.u32 %v3037, 7
    %v3039 = vsub.s32 0, %v3038
    %v3040 = vrot.slane %v3035, %v3039
    %v3041 = vlaneseq
    %v3042 = vshrl.u32 %v3041, 7
    %v3043 = vsub.s32 1, %v3042
    %v3044 = vrot.slane %v3035, %v3043
    %v3045 = vlaneseq
    %v3046 = vshrl.u32 %v3045, 7
    %v3047 = vsub.s32 2, %v3046
    %v3048 = vrot.slane %v3035, %v3047
    %v3049 = vlaneseq
    %v3050 = vshrl.u32 %v3049, 7
    %v3051 = vsub.s32 3, %v3050
    %v3052 = vrot.slane %v3035, %v3051
    %v3065 = vunpack.c.l.b16 %v3027
    %v3066 = vunpack.c.h.b16 %v3027
    %v3067 = vunpack.c.l.b16 %v3028
    %v3068 = vunpack.c.h.b16 %v3028
    %v3069 = vunpack.c.l.b16 %v3029
    %v3070 = vunpack.c.h.b16 %v3029
    %v3071 = vunpack.c.l.b16 %v3030
    %v3072 = vunpack.c.h.b16 %v3030
    %v3073 = vunpack.c.l.b16 %v3031
    %v3074 = vunpack.c.h.b16 %v3031
    %v3075 = vunpack.c.l.b16 %v3032
    %v3076 = vunpack.c.h.b16 %v3032
    %v3077 = vunpack.c.l.b16 %v3033
    %v3078 = vunpack.c.h.b16 %v3033
    %v3079 = vunpack.c.l.b16 %v3034
    %v3080 = vunpack.c.h.b16 %v3034
    %v3081 = vpack.c.b16 %v3069, %v3065
    %v3082 = vpack.c.b16 %v3070, %v3066
    %v3083 = vpack.c.b16 %v3071, %v3067
    %v3084 = vpack.c.b16 %v3072, %v3068
    %v3085 = vpack.c.b16 %v3077, %v3073
    %v3086 = vpack.c.b16 %v3078, %v3074
    %v3087 = vpack.c.b16 %v3079, %v3075
    %v3088 = vpack.c.b16 %v3080, %v3076
    %3097 = vmatprep.subr.bf16.mxu0 %v3082
    %3098 = vmatpush1.bf16.msra.mxu0 %v3081
    %3099 = vmatprep.subr.bf16.mxu0 %v3086
    %3100 = vmatpush1.bf16.msra.mxu0 %v3085
    %3101 = vmatprep.subr.bf16.mxu0 0
    %3102 = vmatpush1.bf16.msra.mxu0 0
    %3103 = vmatprep.subr.bf16.mxu0 0
    %3104 = vmatpush1.bf16.msra.mxu0 0
    %3105 = vmatprep.subr.bf16.mxu0 0
    %3106 = vmatpush1.bf16.msra.mxu0 0
    %3107 = vmatprep.subr.bf16.mxu0 0
    %3108 = vmatpush1.bf16.msra.mxu0 0
    %3109 = vmatprep.subr.bf16.mxu0 0
    %3110 = vmatpush1.bf16.msra.mxu0 0
    %3111 = vmatprep.subr.bf16.mxu0 0
    %3112 = vmatpush1.bf16.msra.mxu0 0
    %3113 = vmatprep.subr.bf16.mxu0 0
    %3114 = vmatpush1.bf16.msra.mxu0 0
    %3115 = vmatprep.subr.bf16.mxu0 0
    %3116 = vmatpush1.bf16.msra.mxu0 0
    %3117 = vmatprep.subr.bf16.mxu0 0
    %3118 = vmatpush1.bf16.msra.mxu0 0
    %3119 = vmatprep.subr.bf16.mxu0 0
    %3120 = vmatpush1.bf16.msra.mxu0 0
    %3121 = vmatprep.subr.bf16.mxu0 0
    %3122 = vmatpush1.bf16.msra.mxu0 0
    %3123 = vmatprep.subr.bf16.mxu0 0
    %3124 = vmatpush1.bf16.msra.mxu0 0
    %3125 = vmatprep.subr.bf16.mxu0 0
    %3126 = vmatpush1.bf16.msra.mxu0 0
    %3127 = vmatprep.subr.bf16.mxu0 0
    %3128 = vmatpush1.bf16.msra.mxu0 0
    %3129 = vmatprep.mubr.bf16.mxu0 0
    %3130 = vmatmul.mubr.bf16.gmra.mrb[0].mxu0 %v1426
    %v3131 = vpop.f32.mrb[0].mxu0
    %v3132 = vadd.f32 %v3040, %v3131
    %v3133 = vpop.f32.mrb[0].mxu0
    %v3134 = vadd.f32 %v3044, %v3133
    %v3135 = vpop.f32.mrb[0].mxu0
    %v3136 = vadd.f32 %v3040, %v3135
    %v3137 = vpop.f32.mrb[0].mxu0
    %v3138 = vadd.f32 %v3044, %v3137
    %3139 = vmatprep.mubr.bf16.mxu0 0
    %3140 = vmatmul.mubr.bf16.gmra.mrb[0].mxu0 %v1429
    %v3141 = vpop.f32.mrb[0].mxu0
    %v3142 = vadd.f32 %v3040, %v3141
    %v3143 = vpop.f32.mrb[0].mxu0
    %v3144 = vadd.f32 %v3044, %v3143
    %v3145 = vpop.f32.mrb[0].mxu0
    %v3146 = vadd.f32 %v3040, %v3145
    %v3147 = vpop.f32.mrb[0].mxu0
    %v3148 = vadd.f32 %v3044, %v3147
    %3149 = vdwg.mxu0
    %3150 = vmatprep.subr.bf16.mxu0 %v3084
    %3151 = vmatpush1.bf16.msra.mxu0 %v3083
    %3152 = vmatprep.subr.bf16.mxu0 %v3088
    %3153 = vmatpush1.bf16.msra.mxu0 %v3087
    %3154 = vmatprep.subr.bf16.mxu0 0
    %3155 = vmatpush1.bf16.msra.mxu0 0
    %3156 = vmatprep.subr.bf16.mxu0 0
    %3157 = vmatpush1.bf16.msra.mxu0 0
    %3158 = vmatprep.subr.bf16.mxu0 0
    %3159 = vmatpush1.bf16.msra.mxu0 0
    %3160 = vmatprep.subr.bf16.mxu0 0
    %3161 = vmatpush1.bf16.msra.mxu0 0
    %3162 = vmatprep.subr.bf16.mxu0 0
    %3163 = vmatpush1.bf16.msra.mxu0 0
    %3164 = vmatprep.subr.bf16.mxu0 0
    %3165 = vmatpush1.bf16.msra.mxu0 0
    %3166 = vmatprep.subr.bf16.mxu0 0
    %3167 = vmatpush1.bf16.msra.mxu0 0
    %3168 = vmatprep.subr.bf16.mxu0 0
    %3169 = vmatpush1.bf16.msra.mxu0 0
    %3170 = vmatprep.subr.bf16.mxu0 0
    %3171 = vmatpush1.bf16.msra.mxu0 0
    %3172 = vmatprep.subr.bf16.mxu0 0
    %3173 = vmatpush1.bf16.msra.mxu0 0
    %3174 = vmatprep.subr.bf16.mxu0 0
    %3175 = vmatpush1.bf16.msra.mxu0 0
    %3176 = vmatprep.subr.bf16.mxu0 0
    %3177 = vmatpush1.bf16.msra.mxu0 0
    %3178 = vmatprep.subr.bf16.mxu0 0
    %3179 = vmatpush1.bf16.msra.mxu0 0
    %3180 = vmatprep.subr.bf16.mxu0 0
    %3181 = vmatpush1.bf16.msra.mxu0 0
    %3182 = vmatprep.mubr.bf16.mxu0 0
    %3183 = vmatmul.mubr.bf16.gmra.mrb[0].mxu0 %v1426
    %v3184 = vpop.f32.mrb[0].mxu0
    %v3185 = vadd.f32 %v3048, %v3184
    %v3186 = vpop.f32.mrb[0].mxu0
    %v3187 = vadd.f32 %v3052, %v3186
    %v3188 = vpop.f32.mrb[0].mxu0
    %v3189 = vadd.f32 %v3048, %v3188
    %v3190 = vpop.f32.mrb[0].mxu0
    %v3191 = vadd.f32 %v3052, %v3190
    %3192 = vmatprep.mubr.bf16.mxu0 0
    %3193 = vmatmul.mubr.bf16.gmra.mrb[0].mxu0 %v1429
    %v3194 = vpop.f32.mrb[0].mxu0
    %v3195 = vadd.f32 %v3048, %v3194
    %v3196 = vpop.f32.mrb[0].mxu0
    %v3197 = vadd.f32 %v3052, %v3196
    %v3198 = vpop.f32.mrb[0].mxu0
    %v3199 = vadd.f32 %v3048, %v3198
    %v3200 = vpop.f32.mrb[0].mxu0
    %v3201 = vadd.f32 %v3052, %v3200
    %3202 = vdwg.mxu0
    %v3203 = vmax.f32 %v3132, 0.0
    %v3204 = vmax.f32 %v3134, 0.0
    %v3205 = vmax.f32 %v3185, 0.0
    %v3206 = vmax.f32 %v3187, 0.0
    %v3207 = vmax.f32 %v3136, 0.0
    %v3208 = vmax.f32 %v3138, 0.0
    %v3209 = vmax.f32 %v3189, 0.0
    %v3210 = vmax.f32 %v3191, 0.0
    %v3211 = vmax.f32 %v3142, 0.0
    %v3212 = vmax.f32 %v3144, 0.0
    %v3213 = vmax.f32 %v3195, 0.0
    %v3214 = vmax.f32 %v3197, 0.0
    %v3215 = vmax.f32 %v3146, 0.0
    %v3216 = vmax.f32 %v3148, 0.0
    %v3217 = vmax.f32 %v3199, 0.0
    %v3218 = vmax.f32 %v3201, 0.0
    %v3219 = vpack.c.bf16 %v3207, %v3203
    %v3220 = vpack.c.bf16 %v3208, %v3204
    %v3221 = vpack.c.bf16 %v3209, %v3205
    %v3222 = vpack.c.bf16 %v3210, %v3206
    %v3223 = vpack.c.bf16 %v3215, %v3211
    %v3224 = vpack.c.bf16 %v3216, %v3212
    %v3225 = vpack.c.bf16 %v3217, %v3213
    %v3226 = vpack.c.bf16 %v3218, %v3214
    %v3227 = vld [vmem:[%s15 + $0x300] sm:$0xf]
    %v3228 = vld [vmem:[%s15 + $0x304] sm:$0xf]
    %v3229 = vld [vmem:[%s15 + $0x308] sm:$0xf]
    %v3230 = vld [vmem:[%s15 + $0x30c] sm:$0xf]
    %v3231 = vld [vmem:[%s15 + $0x310] sm:$0xf]
    %v3232 = vld [vmem:[%s15 + $0x314] sm:$0xf]
    %v3233 = vld [vmem:[%s15 + $0x318] sm:$0xf]
    %v3234 = vld [vmem:[%s15 + $0x31c] sm:$0xf]
    %v3235 = vld [vmem:[%s15 + $0x320] sm:$0xf]
    %v3236 = vld [vmem:[%s15 + $0x324] sm:$0xf]
    %v3237 = vld [vmem:[%s15 + $0x328] sm:$0xf]
    %v3238 = vld [vmem:[%s15 + $0x32c] sm:$0xf]
    %v3239 = vld [vmem:[%s15 + $0x330] sm:$0xf]
    %v3240 = vld [vmem:[%s15 + $0x334] sm:$0xf]
    %v3241 = vld [vmem:[%s15 + $0x338] sm:$0xf]
    %v3242 = vld [vmem:[%s15 + $0x33c] sm:$0xf]
    %v3243 = vld [vmem:[%s15 + $0x340] sm:$0xf]
    %v3244 = vld [vmem:[%s15 + $0x344] sm:$0xf]
    %v3245 = vld [vmem:[%s15 + $0x348] sm:$0xf]
    %v3246 = vld [vmem:[%s15 + $0x34c] sm:$0xf]
    %v3247 = vld [vmem:[%s15 + $0x350] sm:$0xf]
    %v3248 = vld [vmem:[%s15 + $0x354] sm:$0xf]
    %v3249 = vld [vmem:[%s15 + $0x358] sm:$0xf]
    %v3250 = vld [vmem:[%s15 + $0x35c] sm:$0xf]
    %v3251 = vld [vmem:[%s15 + $0x360] sm:$0xf]
    %v3252 = vld [vmem:[%s15 + $0x364] sm:$0xf]
    %v3253 = vld [vmem:[%s15 + $0x368] sm:$0xf]
    %v3254 = vld [vmem:[%s15 + $0x36c] sm:$0xf]
    %v3255 = vld [vmem:[%s15 + $0x370] sm:$0xf]
    %v3256 = vld [vmem:[%s15 + $0x374] sm:$0xf]
    %v3257 = vld [vmem:[%s15 + $0x378] sm:$0xf]
    %v3258 = vld [vmem:[%s15 + $0x37c] sm:$0xf]
    %v3259 = vld [vmem:[%s15 + $0x380] sm:$0xf]
    %v3260 = vld [vmem:[%s15 + $0x384] sm:$0xf]
    %v3261 = vld [vmem:[%s15 + $0x388] sm:$0xf]
    %v3262 = vld [vmem:[%s15 + $0x38c] sm:$0xf]
    %v3263 = vld [vmem:[%s15 + $0x390] sm:$0xf]
    %v3264 = vld [vmem:[%s15 + $0x394] sm:$0xf]
    %v3265 = vld [vmem:[%s15 + $0x398] sm:$0xf]
    %v3266 = vld [vmem:[%s15 + $0x39c] sm:$0xf]
    %v3267 = vld [vmem:[%s15 + $0x3a0] sm:$0xf]
    %v3268 = vld [vmem:[%s15 + $0x3a4] sm:$0xf]
    %v3269 = vld [vmem:[%s15 + $0x3a8] sm:$0xf]
    %v3270 = vld [vmem:[%s15 + $0x3ac] sm:$0xf]
    %v3271 = vld [vmem:[%s15 + $0x3b0] sm:$0xf]
    %v3272 = vld [vmem:[%s15 + $0x3b4] sm:$0xf]
    %v3273 = vld [vmem:[%s15 + $0x3b8] sm:$0xf]
    %v3274 = vld [vmem:[%s15 + $0x3bc] sm:$0xf]
    %v3275 = vld [vmem:[%s15 + $0x3c0] sm:$0xf]
    %v3276 = vld [vmem:[%s15 + $0x3c4] sm:$0xf]
    %v3277 = vld [vmem:[%s15 + $0x3c8] sm:$0xf]
    %v3278 = vld [vmem:[%s15 + $0x3cc] sm:$0xf]
    %v3279 = vld [vmem:[%s15 + $0x3d0] sm:$0xf]
    %v3280 = vld [vmem:[%s15 + $0x3d4] sm:$0xf]
    %v3281 = vld [vmem:[%s15 + $0x3d8] sm:$0xf]
    %v3282 = vld [vmem:[%s15 + $0x3dc] sm:$0xf]
    %v3283 = vld [vmem:[%s15 + $0x3e0] sm:$0xf]
    %v3284 = vld [vmem:[%s15 + $0x3e4] sm:$0xf]
    %v3285 = vld [vmem:[%s15 + $0x3e8] sm:$0xf]
    %v3286 = vld [vmem:[%s15 + $0x3ec] sm:$0xf]
    %v3287 = vld [vmem:[%s15 + $0x3f0] sm:$0xf]
    %v3288 = vld [vmem:[%s15 + $0x3f4] sm:$0xf]
    %v3289 = vld [vmem:[%s15 + $0x3f8] sm:$0xf]
    %v3290 = vld [vmem:[%s15 + $0x3fc] sm:$0xf]
    %v3355 = vunpack.c.l.b16 %v3227
    %v3356 = vunpack.c.l.b16 %v3228
    %v3357 = vunpack.c.l.b16 %v3229
    %v3358 = vunpack.c.l.b16 %v3230
    %v3359 = vunpack.c.l.b16 %v3231
    %v3360 = vunpack.c.l.b16 %v3232
    %v3361 = vunpack.c.l.b16 %v3233
    %v3362 = vunpack.c.l.b16 %v3234
    %v3363 = vunpack.c.l.b16 %v3235
    %v3364 = vunpack.c.l.b16 %v3236
    %v3365 = vunpack.c.l.b16 %v3237
    %v3366 = vunpack.c.l.b16 %v3238
    %v3367 = vunpack.c.l.b16 %v3239
    %v3368 = vunpack.c.l.b16 %v3240
    %v3369 = vunpack.c.l.b16 %v3241
    %v3370 = vunpack.c.l.b16 %v3242
    %v3371 = vunpack.c.l.b16 %v3243
    %v3372 = vunpack.c.l.b16 %v3244
    %v3373 = vunpack.c.l.b16 %v3245
    %v3374 = vunpack.c.l.b16 %v3246
    %v3375 = vunpack.c.l.b16 %v3247
    %v3376 = vunpack.c.l.b16 %v3248
    %v3377 = vunpack.c.l.b16 %v3249
    %v3378 = vunpack.c.l.b16 %v3250
    %v3379 = vunpack.c.l.b16 %v3251
    %v3380 = vunpack.c.l.b16 %v3252
    %v3381 = vunpack.c.l.b16 %v3253
    %v3382 = vunpack.c.l.b16 %v3254
    %v3383 = vunpack.c.l.b16 %v3255
    %v3384 = vunpack.c.l.b16 %v3256
    %v3385 = vunpack.c.l.b16 %v3257
    %v3386 = vunpack.c.l.b16 %v3258
    %v3387 = vunpack.c.l.b16 %v3259
    %v3388 = vunpack.c.l.b16 %v3260
    %v3389 = vunpack.c.l.b16 %v3261
    %v3390 = vunpack.c.l.b16 %v3262
    %v3391 = vunpack.c.l.b16 %v3263
    %v3392 = vunpack.c.l.b16 %v3264
    %v3393 = vunpack.c.l.b16 %v3265
    %v3394 = vunpack.c.l.b16 %v3266
    %v3395 = vunpack.c.l.b16 %v3267
    %v3396 = vunpack.c.l.b16 %v3268
    %v3397 = vunpack.c.l.b16 %v3269
    %v3398 = vunpack.c.l.b16 %v3270
    %v3399 = vunpack.c.l.b16 %v3271
    %v3400 = vunpack.c.l.b16 %v3272
    %v3401 = vunpack.c.l.b16 %v3273
    %v3402 = vunpack.c.l.b16 %v3274
    %v3403 = vunpack.c.l.b16 %v3275
    %v3404 = vunpack.c.l.b16 %v3276
    %v3405 = vunpack.c.l.b16 %v3277
    %v3406 = vunpack.c.l.b16 %v3278
    %v3407 = vunpack.c.l.b16 %v3279
    %v3408 = vunpack.c.l.b16 %v3280
    %v3409 = vunpack.c.l.b16 %v3281
    %v3410 = vunpack.c.l.b16 %v3282
    %v3411 = vunpack.c.l.b16 %v3283
    %v3412 = vunpack.c.l.b16 %v3284
    %v3413 = vunpack.c.l.b16 %v3285
    %v3414 = vunpack.c.l.b16 %v3286
    %v3415 = vunpack.c.l.b16 %v3287
    %v3416 = vunpack.c.l.b16 %v3288
    %v3417 = vunpack.c.l.b16 %v3289
    %v3418 = vunpack.c.l.b16 %v3290
    %v3419 = vpack.c.b16 %v3356, %v3355
    %v3420 = vpack.c.b16 %v3358, %v3357
    %v3421 = vpack.c.b16 %v3360, %v3359
    %v3422 = vpack.c.b16 %v3362, %v3361
    %v3423 = vpack.c.b16 %v3364, %v3363
    %v3424 = vpack.c.b16 %v3366, %v3365
    %v3425 = vpack.c.b16 %v3368, %v3367
    %v3426 = vpack.c.b16 %v3370, %v3369
    %v3427 = vpack.c.b16 %v3372, %v3371
    %v3428 = vpack.c.b16 %v3374, %v3373
    %v3429 = vpack.c.b16 %v3376, %v3375
    %v3430 = vpack.c.b16 %v3378, %v3377
    %v3431 = vpack.c.b16 %v3380, %v3379
    %v3432 = vpack.c.b16 %v3382, %v3381
    %v3433 = vpack.c.b16 %v3384, %v3383
    %v3434 = vpack.c.b16 %v3386, %v3385
    %v3435 = vpack.c.b16 %v3388, %v3387
    %v3436 = vpack.c.b16 %v3390, %v3389
    %v3437 = vpack.c.b16 %v3392, %v3391
    %v3438 = vpack.c.b16 %v3394, %v3393
    %v3439 = vpack.c.b16 %v3396, %v3395
    %v3440 = vpack.c.b16 %v3398, %v3397
    %v3441 = vpack.c.b16 %v3400, %v3399
    %v3442 = vpack.c.b16 %v3402, %v3401
    %v3443 = vpack.c.b16 %v3404, %v3403
    %v3444 = vpack.c.b16 %v3406, %v3405
    %v3445 = vpack.c.b16 %v3408, %v3407
    %v3446 = vpack.c.b16 %v3410, %v3409
    %v3447 = vpack.c.b16 %v3412, %v3411
    %v3448 = vpack.c.b16 %v3414, %v3413
    %v3449 = vpack.c.b16 %v3416, %v3415
    %v3450 = vpack.c.b16 %v3418, %v3417
    %3483 = vmatprep.subr.bf16.mxu0 0
    %3484 = vmatpush1.bf16.msra.mxu0 %v3419
    %3485 = vmatprep.subr.bf16.mxu0 0
    %3486 = vmatpush1.bf16.msra.mxu0 %v3420
    %3487 = vmatprep.subr.bf16.mxu0 0
    %3488 = vmatpush1.bf16.msra.mxu0 %v3421
    %3489 = vmatprep.subr.bf16.mxu0 0
    %3490 = vmatpush1.bf16.msra.mxu0 %v3422
    %3491 = vmatprep.subr.bf16.mxu0 0
    %3492 = vmatpush1.bf16.msra.mxu0 %v3423
    %3493 = vmatprep.subr.bf16.mxu0 0
    %3494 = vmatpush1.bf16.msra.mxu0 %v3424
    %3495 = vmatprep.subr.bf16.mxu0 0
    %3496 = vmatpush1.bf16.msra.mxu0 %v3425
    %3497 = vmatprep.subr.bf16.mxu0 0
    %3498 = vmatpush1.bf16.msra.mxu0 %v3426
    %3499 = vmatprep.subr.bf16.mxu0 0
    %3500 = vmatpush1.bf16.msra.mxu0 %v3427
    %3501 = vmatprep.subr.bf16.mxu0 0
    %3502 = vmatpush1.bf16.msra.mxu0 %v3428
    %3503 = vmatprep.subr.bf16.mxu0 0
    %3504 = vmatpush1.bf16.msra.mxu0 %v3429
    %3505 = vmatprep.subr.bf16.mxu0 0
    %3506 = vmatpush1.bf16.msra.mxu0 %v3430
    %3507 = vmatprep.subr.bf16.mxu0 0
    %3508 = vmatpush1.bf16.msra.mxu0 %v3431
    %3509 = vmatprep.subr.bf16.mxu0 0
    %3510 = vmatpush1.bf16.msra.mxu0 %v3432
    %3511 = vmatprep.subr.bf16.mxu0 0
    %3512 = vmatpush1.bf16.msra.mxu0 %v3433
    %3513 = vmatprep.subr.bf16.mxu0 0
    %3514 = vmatpush1.bf16.msra.mxu0 %v3434
    %3515 = vmatprep.mubr.bf16.mxu0 %v3220
    %3516 = vmatmul.mubr.bf16.gmra.mrb[0].mxu0 %v3219
    %v3517 = vpop.f32.mrb[0].mxu0
    %v3518 = vadd.f32 0.0, %v3517
    %v3519 = vpop.f32.mrb[0].mxu0
    %v3520 = vpop.f32.mrb[0].mxu0
    %v3521 = vadd.f32 0.0, %v3520
    %v3522 = vpop.f32.mrb[0].mxu0
    %3523 = vmatprep.mubr.bf16.mxu0 %v3224
    %3524 = vmatmul.mubr.bf16.gmra.mrb[0].mxu0 %v3223
    %v3525 = vpop.f32.mrb[0].mxu0
    %v3526 = vadd.f32 0.0, %v3525
    %v3527 = vpop.f32.mrb[0].mxu0
    %v3528 = vpop.f32.mrb[0].mxu0
    %v3529 = vadd.f32 0.0, %v3528
    %v3530 = vpop.f32.mrb[0].mxu0
    %3531 = vdwg.mxu0
    %3532 = vmatprep.subr.bf16.mxu0 0
    %3533 = vmatpush1.bf16.msra.mxu0 %v3435
    %3534 = vmatprep.subr.bf16.mxu0 0
    %3535 = vmatpush1.bf16.msra.mxu0 %v3436
    %3536 = vmatprep.subr.bf16.mxu0 0
    %3537 = vmatpush1.bf16.msra.mxu0 %v3437
    %3538 = vmatprep.subr.bf16.mxu0 0
    %3539 = vmatpush1.bf16.msra.mxu0 %v3438
    %3540 = vmatprep.subr.bf16.mxu0 0
    %3541 = vmatpush1.bf16.msra.mxu0 %v3439
    %3542 = vmatprep.subr.bf16.mxu0 0
    %3543 = vmatpush1.bf16.msra.mxu0 %v3440
    %3544 = vmatprep.subr.bf16.mxu0 0
    %3545 = vmatpush1.bf16.msra.mxu0 %v3441
    %3546 = vmatprep.subr.bf16.mxu0 0
    %3547 = vmatpush1.bf16.msra.mxu0 %v3442
    %3548 = vmatprep.subr.bf16.mxu0 0
    %3549 = vmatpush1.bf16.msra.mxu0 %v3443
    %3550 = vmatprep.subr.bf16.mxu0 0
    %3551 = vmatpush1.bf16.msra.mxu0 %v3444
    %3552 = vmatprep.subr.bf16.mxu0 0
    %3553 = vmatpush1.bf16.msra.mxu0 %v3445
    %3554 = vmatprep.subr.bf16.mxu0 0
    %3555 = vmatpush1.bf16.msra.mxu0 %v3446
    %3556 = vmatprep.subr.bf16.mxu0 0
    %3557 = vmatpush1.bf16.msra.mxu0 %v3447
    %3558 = vmatprep.subr.bf16.mxu0 0
    %3559 = vmatpush1.bf16.msra.mxu0 %v3448
    %3560 = vmatprep.subr.bf16.mxu0 0
    %3561 = vmatpush1.bf16.msra.mxu0 %v3449
    %3562 = vmatprep.subr.bf16.mxu0 0
    %3563 = vmatpush1.bf16.msra.mxu0 %v3450
    %3564 = vmatprep.mubr.bf16.mxu0 %v3222
    %3565 = vmatmul.mubr.bf16.gmra.mrb[0].mxu0 %v3221
    %v3566 = vpop.f32.mrb[0].mxu0
    %v3567 = vadd.f32 %v3518, %v3566
    %v3568 = vpop.f32.mrb[0].mxu0
    %v3569 = vpop.f32.mrb[0].mxu0
    %v3570 = vadd.f32 %v3521, %v3569
    %v3571 = vpop.f32.mrb[0].mxu0
    %3572 = vmatprep.mubr.bf16.mxu0 %v3226
    %3573 = vmatmul.mubr.bf16.gmra.mrb[0].mxu0 %v3225
    %v3574 = vpop.f32.mrb[0].mxu0
    %v3575 = vadd.f32 %v3526, %v3574
    %v3576 = vpop.f32.mrb[0].mxu0
    %v3577 = vpop.f32.mrb[0].mxu0
    %v3578 = vadd.f32 %v3529, %v3577
    %v3579 = vpop.f32.mrb[0].mxu0
    %3580 = vdwg.mxu0
    %v3581 = vadd.f32 %v3023, %v3567
    %v3582 = vadd.f32 %v3024, %v3570
    %v3583 = vadd.f32 %v3025, %v3575
    %v3584 = vadd.f32 %v3026, %v3578
    %v3585 = vld [vmem:[%s16] sm:$0x1]
    %v3587 = vlaneseq
    %v3588 = vshrl.u32 %v3587, 7
    %v3589 = vsub.s32 0, %v3588
    %v3590 = vrot.slane %v3585, %v3589
    %v3592 = vadd.f32 %v3581, %v3590
    %v3593 = vadd.f32 %v3582, %v3590
    %v3594 = vadd.f32 %v3583, %v3590
    %v3595 = vadd.f32 %v3584, %v3590
    %v3596 = vadd.f32 %v1349, %v3592
    %v3597 = vadd.f32 %v1350, %v3593
    %v3598 = vadd.f32 %v1351, %v3594
    %v3599 = vadd.f32 %v1352, %v3595
    %v3600 = vld [vmem:[%s19] sm:$0x1]
    %v3601 = vld [vmem:[%s20] sm:$0x1]
    %v3602 = vsel %vm241, %v3596, 0.0
    %3603 = vadd.xlane.f32.xlu0 %v3602
    %v3604 = vpop.xlane.xlu0 %3603
    %v3605 = vsel %vm241, %v3597, 0.0
    %3606 = vadd.xlane.f32.xlu0 %v3605
    %v3607 = vpop.xlane.xlu0 %3606
    %v3608 = vsel %vm241, %v3598, 0.0
    %3609 = vadd.xlane.f32.xlu0 %v3608
    %v3610 = vpop.xlane.xlu0 %3609
    %v3611 = vsel %vm241, %v3599, 0.0
    %3612 = vadd.xlane.f32.xlu0 %v3611
    %v3613 = vpop.xlane.xlu0 %3612
    %v3614 = vmul.f32 %v3604, %v1292
    %v3615 = vmul.f32 %v3607, %v1292
    %v3616 = vmul.f32 %v3610, %v1292
    %v3617 = vmul.f32 %v3613, %v1292
    %v3618 = vsub.f32 %v3596, %v3614
    %v3619 = vsub.f32 %v3597, %v3615
    %v3620 = vsub.f32 %v3598, %v3616
    %v3621 = vsub.f32 %v3599, %v3617
    %v3622 = vmul.f32 %v3618, %v3618
    %v3623 = vmul.f32 %v3619, %v3619
    %v3624 = vmul.f32 %v3620, %v3620
    %v3625 = vmul.f32 %v3621, %v3621
    %v3626 = vsel %vm241, %v3622, 0.0
    %3627 = vadd.xlane.f32.xlu0 %v3626
    %v3628 = vpop.xlane.xlu0 %3627
    %v3629 = vsel %vm241, %v3623, 0.0
    %3630 = vadd.xlane.f32.xlu0 %v3629
    %v3631 = vpop.xlane.xlu0 %3630
    %v3632 = vsel %vm241, %v3624, 0.0
    %3633 = vadd.xlane.f32.xlu0 %v3632
    %v3634 = vpop.xlane.xlu0 %3633
    %v3635 = vsel %vm241, %v3625, 0.0
    %3636 = vadd.xlane.f32.xlu0 %v3635
    %v3637 = vpop.xlane.xlu0 %3636
    %v3638 = vmul.f32 %v3628, %v1292
    %v3639 = vmul.f32 %v3631, %v1292
    %v3640 = vmul.f32 %v3634, %v1292
    %v3641 = vmul.f32 %v3637, %v1292
    %v3642 = vadd.f32 %v3638, 1e-05
    %v3643 = vadd.f32 %v3639, 1e-05
    %v3644 = vadd.f32 %v3640, 1e-05
    %v3645 = vadd.f32 %v3641, 1e-05
    %v3646 = vrsqrt.pop %v3642
    %v3647 = vrsqrt.pop %v3643
    %v3648 = vrsqrt.pop %v3644
    %v3649 = vrsqrt.pop %v3645
    %v3650 = vmul.f32 %v3618, %v3646
    %v3651 = vmul.f32 %v3619, %v3647
    %v3652 = vmul.f32 %v3620, %v3648
    %v3653 = vmul.f32 %v3621, %v3649
    %v3655 = vlaneseq
    %v3656 = vshrl.u32 %v3655, 7
    %v3657 = vsub.s32 0, %v3656
    %v3658 = vrot.slane %v3600, %v3657
    %v3660 = vmul.f32 %v3650, %v3658
    %v3661 = vmul.f32 %v3651, %v3658
    %v3662 = vmul.f32 %v3652, %v3658
    %v3663 = vmul.f32 %v3653, %v3658
    %v3665 = vlaneseq
    %v3666 = vshrl.u32 %v3665, 7
    %v3667 = vsub.s32 0, %v3666
    %v3668 = vrot.slane %v3601, %v3667
    %v3670 = vadd.f32 %v3660, %v3668
    %v3671 = vadd.f32 %v3661, %v3668
    %v3672 = vadd.f32 %v3662, %v3668
    %v3673 = vadd.f32 %v3663, %v3668
    %v3674 = vpack.c.bf16 %v3671, %v3670
    %v3675 = vpack.c.bf16 %v3673, %v3672
    %s3676 = scalar_lea.vmem %s5, 16
    %v3677 = vld [vmem:[%s3676] sm:$0xf]
    %v3678 = vld [vmem:[%s3676 + $0x4] sm:$0xf]
    %v3679 = vld [vmem:[%s3676 + $0x8] sm:$0xf]
    %v3680 = vld [vmem:[%s3676 + $0xc] sm:$0xf]
    %s3681 = scalar_lea.vmem %s6, 1
    %v3682 = vld [vmem:[%s3681] sm:$0x1]
    %v3684 = vlaneseq
    %v3685 = vshrl.u32 %v3684, 7
    %v3686 = vsub.s32 0, %v3685
    %v3687 = vrot.slane %v3682, %v3686
    %v3693 = vunpack.c.l.b16 %v3677
    %v3694 = vunpack.c.l.b16 %v3678
    %v3695 = vunpack.c.l.b16 %v3679
    %v3696 = vunpack.c.l.b16 %v3680
    %v3697 = vpack.c.b16 %v3694, %v3693
    %v3698 = vpack.c.b16 %v3696, %v3695
    %v3702 = vsel %vm241, %v3674, 0
    %v3705 = vsel %vm241, %v3675, 0
    %3707 = vmatprep.subr.bf16.mxu0 0
    %3708 = vmatpush1.bf16.msra.mxu0 %v3697
    %3709 = vmatprep.subr.bf16.mxu0 0
    %3710 = vmatpush1.bf16.msra.mxu0 %v3698
    %3711 = vmatprep.subr.bf16.mxu0 0
    %3712 = vmatpush1.bf16.msra.mxu0 0
    %3713 = vmatprep.subr.bf16.mxu0 0
    %3714 = vmatpush1.bf16.msra.mxu0 0
    %3715 = vmatprep.subr.bf16.mxu0 0
    %3716 = vmatpush1.bf16.msra.mxu0 0
    %3717 = vmatprep.subr.bf16.mxu0 0
    %3718 = vmatpush1.bf16.msra.mxu0 0
    %3719 = vmatprep.subr.bf16.mxu0 0
    %3720 = vmatpush1.bf16.msra.mxu0 0
    %3721 = vmatprep.subr.bf16.mxu0 0
    %3722 = vmatpush1.bf16.msra.mxu0 0
    %3723 = vmatprep.subr.bf16.mxu0 0
    %3724 = vmatpush1.bf16.msra.mxu0 0
    %3725 = vmatprep.subr.bf16.mxu0 0
    %3726 = vmatpush1.bf16.msra.mxu0 0
    %3727 = vmatprep.subr.bf16.mxu0 0
    %3728 = vmatpush1.bf16.msra.mxu0 0
    %3729 = vmatprep.subr.bf16.mxu0 0
    %3730 = vmatpush1.bf16.msra.mxu0 0
    %3731 = vmatprep.subr.bf16.mxu0 0
    %3732 = vmatpush1.bf16.msra.mxu0 0
    %3733 = vmatprep.subr.bf16.mxu0 0
    %3734 = vmatpush1.bf16.msra.mxu0 0
    %3735 = vmatprep.subr.bf16.mxu0 0
    %3736 = vmatpush1.bf16.msra.mxu0 0
    %3737 = vmatprep.subr.bf16.mxu0 0
    %3738 = vmatpush1.bf16.msra.mxu0 0
    %3739 = vmatprep.mubr.bf16.mxu0 0
    %3740 = vmatmul.mubr.bf16.gmra.mrb[0].mxu0 %v3702
    %v3741 = vpop.f32.mrb[0].mxu0
    %v3742 = vadd.f32 %v3687, %v3741
    %v3743 = vpop.f32.mrb[0].mxu0
    %v3744 = vpop.f32.mrb[0].mxu0
    %v3745 = vadd.f32 %v3687, %v3744
    %v3746 = vpop.f32.mrb[0].mxu0
    %3747 = vmatprep.mubr.bf16.mxu0 0
    %3748 = vmatmul.mubr.bf16.gmra.mrb[0].mxu0 %v3705
    %v3749 = vpop.f32.mrb[0].mxu0
    %v3750 = vadd.f32 %v3687, %v3749
    %v3751 = vpop.f32.mrb[0].mxu0
    %v3752 = vpop.f32.mrb[0].mxu0
    %v3753 = vadd.f32 %v3687, %v3752
    %v3754 = vpop.f32.mrb[0].mxu0
    %3755 = vdwg.mxu0
    %s3756 = scalar_lea.vmem %s7, 16
    %v3757 = vld [vmem:[%s3756] sm:$0xf]
    %v3758 = vld [vmem:[%s3756 + $0x4] sm:$0xf]
    %v3759 = vld [vmem:[%s3756 + $0x8] sm:$0xf]
    %v3760 = vld [vmem:[%s3756 + $0xc] sm:$0xf]
    %s3761 = scalar_lea.vmem %s8, 1
    %v3762 = vld [vmem:[%s3761] sm:$0x1]
    %v3764 = vlaneseq
    %v3765 = vshrl.u32 %v3764, 7
    %v3766 = vsub.s32 0, %v3765
    %v3767 = vrot.slane %v3762, %v3766
    %v3773 = vunpack.c.l.b16 %v3757
    %v3774 = vunpack.c.l.b16 %v3758
    %v3775 = vunpack.c.l.b16 %v3759
    %v3776 = vunpack.c.l.b16 %v3760
    %v3777 = vpack.c.b16 %v3774, %v3773
    %v3778 = vpack.c.b16 %v3776, %v3775
    %3781 = vmatprep.subr.bf16.mxu0 0
    %3782 = vmatpush1.bf16.msra.mxu0 %v3777
    %3783 = vmatprep.subr.bf16.mxu0 0
    %3784 = vmatpush1.bf16.msra.mxu0 %v3778
    %3785 = vmatprep.subr.bf16.mxu0 0
    %3786 = vmatpush1.bf16.msra.mxu0 0
    %3787 = vmatprep.subr.bf16.mxu0 0
    %3788 = vmatpush1.bf16.msra.mxu0 0
    %3789 = vmatprep.subr.bf16.mxu0 0
    %3790 = vmatpush1.bf16.msra.mxu0 0
    %3791 = vmatprep.subr.bf16.mxu0 0
    %3792 = vmatpush1.bf16.msra.mxu0 0
    %3793 = vmatprep.subr.bf16.mxu0 0
    %3794 = vmatpush1.bf16.msra.mxu0 0
    %3795 = vmatprep.subr.bf16.mxu0 0
    %3796 = vmatpush1.bf16.msra.mxu0 0
    %3797 = vmatprep.subr.bf16.mxu0 0
    %3798 = vmatpush1.bf16.msra.mxu0 0
    %3799 = vmatprep.subr.bf16.mxu0 0
    %3800 = vmatpush1.bf16.msra.mxu0 0
    %3801 = vmatprep.subr.bf16.mxu0 0
    %3802 = vmatpush1.bf16.msra.mxu0 0
    %3803 = vmatprep.subr.bf16.mxu0 0
    %3804 = vmatpush1.bf16.msra.mxu0 0
    %3805 = vmatprep.subr.bf16.mxu0 0
    %3806 = vmatpush1.bf16.msra.mxu0 0
    %3807 = vmatprep.subr.bf16.mxu0 0
    %3808 = vmatpush1.bf16.msra.mxu0 0
    %3809 = vmatprep.subr.bf16.mxu0 0
    %3810 = vmatpush1.bf16.msra.mxu0 0
    %3811 = vmatprep.subr.bf16.mxu0 0
    %3812 = vmatpush1.bf16.msra.mxu0 0
    %3813 = vmatprep.mubr.bf16.mxu0 0
    %3814 = vmatmul.mubr.bf16.gmra.mrb[0].mxu0 %v3702
    %v3815 = vpop.f32.mrb[0].mxu0
    %v3816 = vadd.f32 %v3767, %v3815
    %v3817 = vpop.f32.mrb[0].mxu0
    %v3818 = vpop.f32.mrb[0].mxu0
    %v3819 = vadd.f32 %v3767, %v3818
    %v3820 = vpop.f32.mrb[0].mxu0
    %3821 = vmatprep.mubr.bf16.mxu0 0
    %3822 = vmatmul.mubr.bf16.gmra.mrb[0].mxu0 %v3705
    %v3823 = vpop.f32.mrb[0].mxu0
    %v3824 = vadd.f32 %v3767, %v3823
    %v3825 = vpop.f32.mrb[0].mxu0
    %v3826 = vpop.f32.mrb[0].mxu0
    %v3827 = vadd.f32 %v3767, %v3826
    %v3828 = vpop.f32.mrb[0].mxu0
    %3829 = vdwg.mxu0
    %s3830 = scalar_lea.vmem %s9, 16
    %v3831 = vld [vmem:[%s3830] sm:$0xf]
    %v3832 = vld [vmem:[%s3830 + $0x4] sm:$0xf]
    %v3833 = vld [vmem:[%s3830 + $0x8] sm:$0xf]
    %v3834 = vld [vmem:[%s3830 + $0xc] sm:$0xf]
    %s3835 = scalar_lea.vmem %s10, 1
    %v3836 = vld [vmem:[%s3835] sm:$0x1]
    %v3838 = vlaneseq
    %v3839 = vshrl.u32 %v3838, 7
    %v3840 = vsub.s32 0, %v3839
    %v3841 = vrot.slane %v3836, %v3840
    %v3847 = vunpack.c.l.b16 %v3831
    %v3848 = vunpack.c.l.b16 %v3832
    %v3849 = vunpack.c.l.b16 %v3833
    %v3850 = vunpack.c.l.b16 %v3834
    %v3851 = vpack.c.b16 %v3848, %v3847
    %v3852 = vpack.c.b16 %v3850, %v3849
    %3855 = vmatprep.subr.bf16.mxu0 0
    %3856 = vmatpush1.bf16.msra.mxu0 %v3851
    %3857 = vmatprep.subr.bf16.mxu0 0
    %3858 = vmatpush1.bf16.msra.mxu0 %v3852
    %3859 = vmatprep.subr.bf16.mxu0 0
    %3860 = vmatpush1.bf16.msra.mxu0 0
    %3861 = vmatprep.subr.bf16.mxu0 0
    %3862 = vmatpush1.bf16.msra.mxu0 0
    %3863 = vmatprep.subr.bf16.mxu0 0
    %3864 = vmatpush1.bf16.msra.mxu0 0
    %3865 = vmatprep.subr.bf16.mxu0 0
    %3866 = vmatpush1.bf16.msra.mxu0 0
    %3867 = vmatprep.subr.bf16.mxu0 0
    %3868 = vmatpush1.bf16.msra.mxu0 0
    %3869 = vmatprep.subr.bf16.mxu0 0
    %3870 = vmatpush1.bf16.msra.mxu0 0
    %3871 = vmatprep.subr.bf16.mxu0 0
    %3872 = vmatpush1.bf16.msra.mxu0 0
    %3873 = vmatprep.subr.bf16.mxu0 0
    %3874 = vmatpush1.bf16.msra.mxu0 0
    %3875 = vmatprep.subr.bf16.mxu0 0
    %3876 = vmatpush1.bf16.msra.mxu0 0
    %3877 = vmatprep.subr.bf16.mxu0 0
    %3878 = vmatpush1.bf16.msra.mxu0 0
    %3879 = vmatprep.subr.bf16.mxu0 0
    %3880 = vmatpush1.bf16.msra.mxu0 0
    %3881 = vmatprep.subr.bf16.mxu0 0
    %3882 = vmatpush1.bf16.msra.mxu0 0
    %3883 = vmatprep.subr.bf16.mxu0 0
    %3884 = vmatpush1.bf16.msra.mxu0 0
    %3885 = vmatprep.subr.bf16.mxu0 0
    %3886 = vmatpush1.bf16.msra.mxu0 0
    %3887 = vmatprep.mubr.bf16.mxu0 0
    %3888 = vmatmul.mubr.bf16.gmra.mrb[0].mxu0 %v3702
    %v3889 = vpop.f32.mrb[0].mxu0
    %v3890 = vadd.f32 %v3841, %v3889
    %v3891 = vpop.f32.mrb[0].mxu0
    %v3892 = vpop.f32.mrb[0].mxu0
    %v3893 = vadd.f32 %v3841, %v3892
    %v3894 = vpop.f32.mrb[0].mxu0
    %3895 = vmatprep.mubr.bf16.mxu0 0
    %3896 = vmatmul.mubr.bf16.gmra.mrb[0].mxu0 %v3705
    %v3897 = vpop.f32.mrb[0].mxu0
    %v3898 = vadd.f32 %v3841, %v3897
    %v3899 = vpop.f32.mrb[0].mxu0
    %v3900 = vpop.f32.mrb[0].mxu0
    %v3901 = vadd.f32 %v3841, %v3900
    %v3902 = vpop.f32.mrb[0].mxu0
    %3903 = vdwg.mxu0
    %v3904 = vpack.c.bf16 %v3819, %v3816
    %v3905 = vpack.c.bf16 %v3827, %v3824
    %v3906 = vpack.c.bf16 %v3893, %v3890
    %v3907 = vpack.c.bf16 %v3901, %v3898
    %v3908 = vld [vmem:[%s4] sm:$0x1]
    %v3910 = vlaneseq
    %v3911 = vshrl.u32 %v3910, 7
    %v3912 = vsub.s32 0, %v3911
    %v3913 = vrot.slane %v3908, %v3912
    %v3915 = vmul.f32 %v3742, %v3913
    %v3916 = vmul.f32 %v3745, %v3913
    %v3917 = vmul.f32 %v3750, %v3913
    %v3918 = vmul.f32 %v3753, %v3913
    %v3919 = vpack.c.bf16 %v3916, %v3915
    %v3920 = vpack.c.bf16 %v3918, %v3917
    %v3922 = vsel %vm241, %v3919, 0
    %v3925 = vsel %vm241, %v3920, 0
    %v3928 = vsel %vm241, %v3904, 0
    %v3931 = vsel %vm241, %v3905, 0
    %3933 = vmatprep.subr.bf16.mxu0 0
    %3934 = vmatpush1.bf16.xpose.msra.mxu0 %v3928
    %3935 = vmatprep.subr.bf16.mxu0 0
    %3936 = vmatpush1.bf16.xpose.msra.mxu0 %v3931
    %3937 = vmatprep.subr.bf16.mxu0 0
    %3938 = vmatpush1.bf16.xpose.msra.mxu0 0
    %3939 = vmatprep.subr.bf16.mxu0 0
    %3940 = vmatpush1.bf16.xpose.msra.mxu0 0
    %3941 = vmatprep.subr.bf16.mxu0 0
    %3942 = vmatpush1.bf16.xpose.msra.mxu0 0
    %3943 = vmatprep.subr.bf16.mxu0 0
    %3944 = vmatpush1.bf16.xpose.msra.mxu0 0
    %3945 = vmatprep.subr.bf16.mxu0 0
    %3946 = vmatpush1.bf16.xpose.msra.mxu0 0
    %3947 = vmatprep.subr.bf16.mxu0 0
    %3948 = vmatpush1.bf16.xpose.msra.mxu0 0
    %3949 = vmatprep.subr.bf16.mxu0 0
    %3950 = vmatpush1.bf16.xpose.msra.mxu0 0
    %3951 = vmatprep.subr.bf16.mxu0 0
    %3952 = vmatpush1.bf16.xpose.msra.mxu0 0
    %3953 = vmatprep.subr.bf16.mxu0 0
    %3954 = vmatpush1.bf16.xpose.msra.mxu0 0
    %3955 = vmatprep.subr.bf16.mxu0 0
    %3956 = vmatpush1.bf16.xpose.msra.mxu0 0
    %3957 = vmatprep.subr.bf16.mxu0 0
    %3958 = vmatpush1.bf16.xpose.msra.mxu0 0
    %3959 = vmatprep.subr.bf16.mxu0 0
    %3960 = vmatpush1.bf16.xpose.msra.mxu0 0
    %3961 = vmatprep.subr.bf16.mxu0 0
    %3962 = vmatpush1.bf16.xpose.msra.mxu0 0
    %3963 = vmatprep.subr.bf16.mxu0 0
    %3964 = vmatpush1.bf16.xpose.msra.mxu0 0
    %3965 = vmatprep.mubr.bf16.mxu0 0
    %3966 = vmatmul.mubr.bf16.gmra.mrb[0].mxu0 %v3922
    %v3967 = vpop.f32.mrb[0].mxu0
    %v3968 = vadd.f32 0.0, %v3967
    %v3969 = vpop.f32.mrb[0].mxu0
    %v3970 = vpop.f32.mrb[0].mxu0
    %v3971 = vadd.f32 0.0, %v3970
    %v3972 = vpop.f32.mrb[0].mxu0
    %3973 = vmatprep.mubr.bf16.mxu0 0
    %3974 = vmatmul.mubr.bf16.gmra.mrb[0].mxu0 %v3925
    %v3975 = vpop.f32.mrb[0].mxu0
    %v3976 = vadd.f32 0.0, %v3975
    %v3977 = vpop.f32.mrb[0].mxu0
    %v3978 = vpop.f32.mrb[0].mxu0
    %v3979 = vadd.f32 0.0, %v3978
    %v3980 = vpop.f32.mrb[0].mxu0
    %3981 = vdwg.mxu0
    %v3982 = vmul.f32 %v3968, 0.35355338
    %v3983 = vmul.f32 %v3971, 0.35355338
    %v3984 = vmul.f32 %v3976, 0.35355338
    %v3985 = vmul.f32 %v3979, 0.35355338
    %v3986 = vadd.f32 %v3982, %v76
    %v3987 = vadd.f32 %v3983, %v77
    %v3988 = vadd.f32 %v3984, %v78
    %v3989 = vadd.f32 %v3985, %v79
    %v3990 = vsel %vm241, %v3986, -inf
    %3991 = vmax.xlane.f32.xlu0 %v3990
    %v3992 = vpop.xlane.xlu0 %3991
    %v3993 = vsel %vm241, %v3987, -inf
    %3994 = vmax.xlane.f32.xlu0 %v3993
    %v3995 = vpop.xlane.xlu0 %3994
    %v3996 = vsel %vm241, %v3988, -inf
    %3997 = vmax.xlane.f32.xlu0 %v3996
    %v3998 = vpop.xlane.xlu0 %3997
    %v3999 = vsel %vm241, %v3989, -inf
    %4000 = vmax.xlane.f32.xlu0 %v3999
    %v4001 = vpop.xlane.xlu0 %4000
    %v4002 = vsub.f32 %v3986, %v3992
    %v4003 = vsub.f32 %v3987, %v3995
    %v4004 = vsub.f32 %v3988, %v3998
    %v4005 = vsub.f32 %v3989, %v4001
    %v4006 = vmul.f32 %v4002, 1.442695
    %v4007 = vpow.pop %v4006
    %v4008 = vmul.f32 %v4003, 1.442695
    %v4009 = vpow.pop %v4008
    %v4010 = vmul.f32 %v4004, 1.442695
    %v4011 = vpow.pop %v4010
    %v4012 = vmul.f32 %v4005, 1.442695
    %v4013 = vpow.pop %v4012
    %v4014 = vsel %vm241, %v4007, 0.0
    %4015 = vadd.xlane.f32.xlu0 %v4014
    %v4016 = vpop.xlane.xlu0 %4015
    %v4017 = vsel %vm241, %v4009, 0.0
    %4018 = vadd.xlane.f32.xlu0 %v4017
    %v4019 = vpop.xlane.xlu0 %4018
    %v4020 = vsel %vm241, %v4011, 0.0
    %4021 = vadd.xlane.f32.xlu0 %v4020
    %v4022 = vpop.xlane.xlu0 %4021
    %v4023 = vsel %vm241, %v4013, 0.0
    %4024 = vadd.xlane.f32.xlu0 %v4023
    %v4025 = vpop.xlane.xlu0 %4024
    %v4026 = vrcp.pop %v4016
    %v4027 = vmul.f32 %v4007, %v4026
    %v4028 = vrcp.pop %v4019
    %v4029 = vmul.f32 %v4009, %v4028
    %v4030 = vrcp.pop %v4022
    %v4031 = vmul.f32 %v4011, %v4030
    %v4032 = vrcp.pop %v4025
    %v4033 = vmul.f32 %v4013, %v4032
    %v4034 = vpack.c.bf16 %v4029, %v4027
    %v4035 = vpack.c.bf16 %v4033, %v4031
    %v4037 = vsel %vm241, %v4034, 0
    %v4040 = vsel %vm241, %v4035, 0
    %4042 = vmatprep.subr.bf16.mxu0 0
    %4043 = vmatpush1.bf16.msra.mxu0 %v3906
    %4044 = vmatprep.subr.bf16.mxu0 0
    %4045 = vmatpush1.bf16.msra.mxu0 %v3907
    %4046 = vmatprep.subr.bf16.mxu0 0
    %4047 = vmatpush1.bf16.msra.mxu0 0
    %4048 = vmatprep.subr.bf16.mxu0 0
    %4049 = vmatpush1.bf16.msra.mxu0 0
    %4050 = vmatprep.subr.bf16.mxu0 0
    %4051 = vmatpush1.bf16.msra.mxu0 0
    %4052 = vmatprep.subr.bf16.mxu0 0
    %4053 = vmatpush1.bf16.msra.mxu0 0
    %4054 = vmatprep.subr.bf16.mxu0 0
    %4055 = vmatpush1.bf16.msra.mxu0 0
    %4056 = vmatprep.subr.bf16.mxu0 0
    %4057 = vmatpush1.bf16.msra.mxu0 0
    %4058 = vmatprep.subr.bf16.mxu0 0
    %4059 = vmatpush1.bf16.msra.mxu0 0
    %4060 = vmatprep.subr.bf16.mxu0 0
    %4061 = vmatpush1.bf16.msra.mxu0 0
    %4062 = vmatprep.subr.bf16.mxu0 0
    %4063 = vmatpush1.bf16.msra.mxu0 0
    %4064 = vmatprep.subr.bf16.mxu0 0
    %4065 = vmatpush1.bf16.msra.mxu0 0
    %4066 = vmatprep.subr.bf16.mxu0 0
    %4067 = vmatpush1.bf16.msra.mxu0 0
    %4068 = vmatprep.subr.bf16.mxu0 0
    %4069 = vmatpush1.bf16.msra.mxu0 0
    %4070 = vmatprep.subr.bf16.mxu0 0
    %4071 = vmatpush1.bf16.msra.mxu0 0
    %4072 = vmatprep.subr.bf16.mxu0 0
    %4073 = vmatpush1.bf16.msra.mxu0 0
    %4074 = vmatprep.mubr.bf16.mxu0 0
    %4075 = vmatmul.mubr.bf16.gmra.mrb[0].mxu0 %v4037
    %v4076 = vpop.f32.mrb[0].mxu0
    %v4077 = vadd.f32 0.0, %v4076
    %v4078 = vpop.f32.mrb[0].mxu0
    %v4079 = vpop.f32.mrb[0].mxu0
    %v4080 = vadd.f32 0.0, %v4079
    %v4081 = vpop.f32.mrb[0].mxu0
    %4082 = vmatprep.mubr.bf16.mxu0 0
    %4083 = vmatmul.mubr.bf16.gmra.mrb[0].mxu0 %v4040
    %v4084 = vpop.f32.mrb[0].mxu0
    %v4085 = vadd.f32 0.0, %v4084
    %v4086 = vpop.f32.mrb[0].mxu0
    %v4087 = vpop.f32.mrb[0].mxu0
    %v4088 = vadd.f32 0.0, %v4087
    %v4089 = vpop.f32.mrb[0].mxu0
    %4090 = vdwg.mxu0
    %v4091 = vmul.f32 %v4077, %v3913
    %v4092 = vmul.f32 %v4080, %v3913
    %v4093 = vmul.f32 %v4085, %v3913
    %v4094 = vmul.f32 %v4088, %v3913
    %v4095 = vadd.f32 %v4091, 0.0
    %v4096 = vadd.f32 %v4092, 0.0
    %v4097 = vadd.f32 %v4093, 0.0
    %v4098 = vadd.f32 %v4094, 0.0
    %v4099 = vld [vmem:[%s636] sm:$0x1]
    %v4101 = vlaneseq
    %v4102 = vshrl.u32 %v4101, 7
    %v4103 = vsub.s32 0, %v4102
    %v4104 = vrot.slane %v4099, %v4103
    %v4106 = vmul.f32 %v3742, %v4104
    %v4107 = vmul.f32 %v3745, %v4104
    %v4108 = vmul.f32 %v3750, %v4104
    %v4109 = vmul.f32 %v3753, %v4104
    %v4110 = vpack.c.bf16 %v4107, %v4106
    %v4111 = vpack.c.bf16 %v4109, %v4108
    %v4113 = vsel %vm241, %v4110, 0
    %v4116 = vsel %vm241, %v4111, 0
    %4118 = vmatprep.subr.bf16.mxu0 0
    %4119 = vmatpush1.bf16.xpose.msra.mxu0 %v3928
    %4120 = vmatprep.subr.bf16.mxu0 0
    %4121 = vmatpush1.bf16.xpose.msra.mxu0 %v3931
    %4122 = vmatprep.subr.bf16.mxu0 0
    %4123 = vmatpush1.bf16.xpose.msra.mxu0 0
    %4124 = vmatprep.subr.bf16.mxu0 0
    %4125 = vmatpush1.bf16.xpose.msra.mxu0 0
    %4126 = vmatprep.subr.bf16.mxu0 0
    %4127 = vmatpush1.bf16.xpose.msra.mxu0 0
    %4128 = vmatprep.subr.bf16.mxu0 0
    %4129 = vmatpush1.bf16.xpose.msra.mxu0 0
    %4130 = vmatprep.subr.bf16.mxu0 0
    %4131 = vmatpush1.bf16.xpose.msra.mxu0 0
    %4132 = vmatprep.subr.bf16.mxu0 0
    %4133 = vmatpush1.bf16.xpose.msra.mxu0 0
    %4134 = vmatprep.subr.bf16.mxu0 0
    %4135 = vmatpush1.bf16.xpose.msra.mxu0 0
    %4136 = vmatprep.subr.bf16.mxu0 0
    %4137 = vmatpush1.bf16.xpose.msra.mxu0 0
    %4138 = vmatprep.subr.bf16.mxu0 0
    %4139 = vmatpush1.bf16.xpose.msra.mxu0 0
    %4140 = vmatprep.subr.bf16.mxu0 0
    %4141 = vmatpush1.bf16.xpose.msra.mxu0 0
    %4142 = vmatprep.subr.bf16.mxu0 0
    %4143 = vmatpush1.bf16.xpose.msra.mxu0 0
    %4144 = vmatprep.subr.bf16.mxu0 0
    %4145 = vmatpush1.bf16.xpose.msra.mxu0 0
    %4146 = vmatprep.subr.bf16.mxu0 0
    %4147 = vmatpush1.bf16.xpose.msra.mxu0 0
    %4148 = vmatprep.subr.bf16.mxu0 0
    %4149 = vmatpush1.bf16.xpose.msra.mxu0 0
    %4150 = vmatprep.mubr.bf16.mxu0 0
    %4151 = vmatmul.mubr.bf16.gmra.mrb[0].mxu0 %v4113
    %v4152 = vpop.f32.mrb[0].mxu0
    %v4153 = vadd.f32 0.0, %v4152
    %v4154 = vpop.f32.mrb[0].mxu0
    %v4155 = vpop.f32.mrb[0].mxu0
    %v4156 = vadd.f32 0.0, %v4155
    %v4157 = vpop.f32.mrb[0].mxu0
    %4158 = vmatprep.mubr.bf16.mxu0 0
    %4159 = vmatmul.mubr.bf16.gmra.mrb[0].mxu0 %v4116
    %v4160 = vpop.f32.mrb[0].mxu0
    %v4161 = vadd.f32 0.0, %v4160
    %v4162 = vpop.f32.mrb[0].mxu0
    %v4163 = vpop.f32.mrb[0].mxu0
    %v4164 = vadd.f32 0.0, %v4163
    %v4165 = vpop.f32.mrb[0].mxu0
    %4166 = vdwg.mxu0
    %v4167 = vmul.f32 %v4153, 0.35355338
    %v4168 = vmul.f32 %v4156, 0.35355338
    %v4169 = vmul.f32 %v4161, 0.35355338
    %v4170 = vmul.f32 %v4164, 0.35355338
    %v4171 = vadd.f32 %v4167, %v76
    %v4172 = vadd.f32 %v4168, %v77
    %v4173 = vadd.f32 %v4169, %v78
    %v4174 = vadd.f32 %v4170, %v79
    %v4175 = vsel %vm241, %v4171, -inf
    %4176 = vmax.xlane.f32.xlu0 %v4175
    %v4177 = vpop.xlane.xlu0 %4176
    %v4178 = vsel %vm241, %v4172, -inf
    %4179 = vmax.xlane.f32.xlu0 %v4178
    %v4180 = vpop.xlane.xlu0 %4179
    %v4181 = vsel %vm241, %v4173, -inf
    %4182 = vmax.xlane.f32.xlu0 %v4181
    %v4183 = vpop.xlane.xlu0 %4182
    %v4184 = vsel %vm241, %v4174, -inf
    %4185 = vmax.xlane.f32.xlu0 %v4184
    %v4186 = vpop.xlane.xlu0 %4185
    %v4187 = vsub.f32 %v4171, %v4177
    %v4188 = vsub.f32 %v4172, %v4180
    %v4189 = vsub.f32 %v4173, %v4183
    %v4190 = vsub.f32 %v4174, %v4186
    %v4191 = vmul.f32 %v4187, 1.442695
    %v4192 = vpow.pop %v4191
    %v4193 = vmul.f32 %v4188, 1.442695
    %v4194 = vpow.pop %v4193
    %v4195 = vmul.f32 %v4189, 1.442695
    %v4196 = vpow.pop %v4195
    %v4197 = vmul.f32 %v4190, 1.442695
    %v4198 = vpow.pop %v4197
    %v4199 = vsel %vm241, %v4192, 0.0
    %4200 = vadd.xlane.f32.xlu0 %v4199
    %v4201 = vpop.xlane.xlu0 %4200
    %v4202 = vsel %vm241, %v4194, 0.0
    %4203 = vadd.xlane.f32.xlu0 %v4202
    %v4204 = vpop.xlane.xlu0 %4203
    %v4205 = vsel %vm241, %v4196, 0.0
    %4206 = vadd.xlane.f32.xlu0 %v4205
    %v4207 = vpop.xlane.xlu0 %4206
    %v4208 = vsel %vm241, %v4198, 0.0
    %4209 = vadd.xlane.f32.xlu0 %v4208
    %v4210 = vpop.xlane.xlu0 %4209
    %v4211 = vrcp.pop %v4201
    %v4212 = vmul.f32 %v4192, %v4211
    %v4213 = vrcp.pop %v4204
    %v4214 = vmul.f32 %v4194, %v4213
    %v4215 = vrcp.pop %v4207
    %v4216 = vmul.f32 %v4196, %v4215
    %v4217 = vrcp.pop %v4210
    %v4218 = vmul.f32 %v4198, %v4217
    %v4219 = vpack.c.bf16 %v4214, %v4212
    %v4220 = vpack.c.bf16 %v4218, %v4216
    %v4222 = vsel %vm241, %v4219, 0
    %v4225 = vsel %vm241, %v4220, 0
    %4227 = vmatprep.subr.bf16.mxu0 0
    %4228 = vmatpush1.bf16.msra.mxu0 %v3906
    %4229 = vmatprep.subr.bf16.mxu0 0
    %4230 = vmatpush1.bf16.msra.mxu0 %v3907
    %4231 = vmatprep.subr.bf16.mxu0 0
    %4232 = vmatpush1.bf16.msra.mxu0 0
    %4233 = vmatprep.subr.bf16.mxu0 0
    %4234 = vmatpush1.bf16.msra.mxu0 0
    %4235 = vmatprep.subr.bf16.mxu0 0
    %4236 = vmatpush1.bf16.msra.mxu0 0
    %4237 = vmatprep.subr.bf16.mxu0 0
    %4238 = vmatpush1.bf16.msra.mxu0 0
    %4239 = vmatprep.subr.bf16.mxu0 0
    %4240 = vmatpush1.bf16.msra.mxu0 0
    %4241 = vmatprep.subr.bf16.mxu0 0
    %4242 = vmatpush1.bf16.msra.mxu0 0
    %4243 = vmatprep.subr.bf16.mxu0 0
    %4244 = vmatpush1.bf16.msra.mxu0 0
    %4245 = vmatprep.subr.bf16.mxu0 0
    %4246 = vmatpush1.bf16.msra.mxu0 0
    %4247 = vmatprep.subr.bf16.mxu0 0
    %4248 = vmatpush1.bf16.msra.mxu0 0
    %4249 = vmatprep.subr.bf16.mxu0 0
    %4250 = vmatpush1.bf16.msra.mxu0 0
    %4251 = vmatprep.subr.bf16.mxu0 0
    %4252 = vmatpush1.bf16.msra.mxu0 0
    %4253 = vmatprep.subr.bf16.mxu0 0
    %4254 = vmatpush1.bf16.msra.mxu0 0
    %4255 = vmatprep.subr.bf16.mxu0 0
    %4256 = vmatpush1.bf16.msra.mxu0 0
    %4257 = vmatprep.subr.bf16.mxu0 0
    %4258 = vmatpush1.bf16.msra.mxu0 0
    %4259 = vmatprep.mubr.bf16.mxu0 0
    %4260 = vmatmul.mubr.bf16.gmra.mrb[0].mxu0 %v4222
    %v4261 = vpop.f32.mrb[0].mxu0
    %v4262 = vadd.f32 0.0, %v4261
    %v4263 = vpop.f32.mrb[0].mxu0
    %v4264 = vpop.f32.mrb[0].mxu0
    %v4265 = vadd.f32 0.0, %v4264
    %v4266 = vpop.f32.mrb[0].mxu0
    %4267 = vmatprep.mubr.bf16.mxu0 0
    %4268 = vmatmul.mubr.bf16.gmra.mrb[0].mxu0 %v4225
    %v4269 = vpop.f32.mrb[0].mxu0
    %v4270 = vadd.f32 0.0, %v4269
    %v4271 = vpop.f32.mrb[0].mxu0
    %v4272 = vpop.f32.mrb[0].mxu0
    %v4273 = vadd.f32 0.0, %v4272
    %v4274 = vpop.f32.mrb[0].mxu0
    %4275 = vdwg.mxu0
    %v4276 = vmul.f32 %v4262, %v4104
    %v4277 = vmul.f32 %v4265, %v4104
    %v4278 = vmul.f32 %v4270, %v4104
    %v4279 = vmul.f32 %v4273, %v4104
    %v4280 = vadd.f32 %v4095, %v4276
    %v4281 = vadd.f32 %v4096, %v4277
    %v4282 = vadd.f32 %v4097, %v4278
    %v4283 = vadd.f32 %v4098, %v4279
    %v4284 = vld [vmem:[%s822] sm:$0x1]
    %v4286 = vlaneseq
    %v4287 = vshrl.u32 %v4286, 7
    %v4288 = vsub.s32 0, %v4287
    %v4289 = vrot.slane %v4284, %v4288
    %v4291 = vmul.f32 %v3742, %v4289
    %v4292 = vmul.f32 %v3745, %v4289
    %v4293 = vmul.f32 %v3750, %v4289
    %v4294 = vmul.f32 %v3753, %v4289
    %v4295 = vpack.c.bf16 %v4292, %v4291
    %v4296 = vpack.c.bf16 %v4294, %v4293
    %v4298 = vsel %vm241, %v4295, 0
    %v4301 = vsel %vm241, %v4296, 0
    %4303 = vmatprep.subr.bf16.mxu0 0
    %4304 = vmatpush1.bf16.xpose.msra.mxu0 %v3928
    %4305 = vmatprep.subr.bf16.mxu0 0
    %4306 = vmatpush1.bf16.xpose.msra.mxu0 %v3931
    %4307 = vmatprep.subr.bf16.mxu0 0
    %4308 = vmatpush1.bf16.xpose.msra.mxu0 0
    %4309 = vmatprep.subr.bf16.mxu0 0
    %4310 = vmatpush1.bf16.xpose.msra.mxu0 0
    %4311 = vmatprep.subr.bf16.mxu0 0
    %4312 = vmatpush1.bf16.xpose.msra.mxu0 0
    %4313 = vmatprep.subr.bf16.mxu0 0
    %4314 = vmatpush1.bf16.xpose.msra.mxu0 0
    %4315 = vmatprep.subr.bf16.mxu0 0
    %4316 = vmatpush1.bf16.xpose.msra.mxu0 0
    %4317 = vmatprep.subr.bf16.mxu0 0
    %4318 = vmatpush1.bf16.xpose.msra.mxu0 0
    %4319 = vmatprep.subr.bf16.mxu0 0
    %4320 = vmatpush1.bf16.xpose.msra.mxu0 0
    %4321 = vmatprep.subr.bf16.mxu0 0
    %4322 = vmatpush1.bf16.xpose.msra.mxu0 0
    %4323 = vmatprep.subr.bf16.mxu0 0
    %4324 = vmatpush1.bf16.xpose.msra.mxu0 0
    %4325 = vmatprep.subr.bf16.mxu0 0
    %4326 = vmatpush1.bf16.xpose.msra.mxu0 0
    %4327 = vmatprep.subr.bf16.mxu0 0
    %4328 = vmatpush1.bf16.xpose.msra.mxu0 0
    %4329 = vmatprep.subr.bf16.mxu0 0
    %4330 = vmatpush1.bf16.xpose.msra.mxu0 0
    %4331 = vmatprep.subr.bf16.mxu0 0
    %4332 = vmatpush1.bf16.xpose.msra.mxu0 0
    %4333 = vmatprep.subr.bf16.mxu0 0
    %4334 = vmatpush1.bf16.xpose.msra.mxu0 0
    %4335 = vmatprep.mubr.bf16.mxu0 0
    %4336 = vmatmul.mubr.bf16.gmra.mrb[0].mxu0 %v4298
    %v4337 = vpop.f32.mrb[0].mxu0
    %v4338 = vadd.f32 0.0, %v4337
    %v4339 = vpop.f32.mrb[0].mxu0
    %v4340 = vpop.f32.mrb[0].mxu0
    %v4341 = vadd.f32 0.0, %v4340
    %v4342 = vpop.f32.mrb[0].mxu0
    %4343 = vmatprep.mubr.bf16.mxu0 0
    %4344 = vmatmul.mubr.bf16.gmra.mrb[0].mxu0 %v4301
    %v4345 = vpop.f32.mrb[0].mxu0
    %v4346 = vadd.f32 0.0, %v4345
    %v4347 = vpop.f32.mrb[0].mxu0
    %v4348 = vpop.f32.mrb[0].mxu0
    %v4349 = vadd.f32 0.0, %v4348
    %v4350 = vpop.f32.mrb[0].mxu0
    %4351 = vdwg.mxu0
    %v4352 = vmul.f32 %v4338, 0.35355338
    %v4353 = vmul.f32 %v4341, 0.35355338
    %v4354 = vmul.f32 %v4346, 0.35355338
    %v4355 = vmul.f32 %v4349, 0.35355338
    %v4356 = vadd.f32 %v4352, %v76
    %v4357 = vadd.f32 %v4353, %v77
    %v4358 = vadd.f32 %v4354, %v78
    %v4359 = vadd.f32 %v4355, %v79
    %v4360 = vsel %vm241, %v4356, -inf
    %4361 = vmax.xlane.f32.xlu0 %v4360
    %v4362 = vpop.xlane.xlu0 %4361
    %v4363 = vsel %vm241, %v4357, -inf
    %4364 = vmax.xlane.f32.xlu0 %v4363
    %v4365 = vpop.xlane.xlu0 %4364
    %v4366 = vsel %vm241, %v4358, -inf
    %4367 = vmax.xlane.f32.xlu0 %v4366
    %v4368 = vpop.xlane.xlu0 %4367
    %v4369 = vsel %vm241, %v4359, -inf
    %4370 = vmax.xlane.f32.xlu0 %v4369
    %v4371 = vpop.xlane.xlu0 %4370
    %v4372 = vsub.f32 %v4356, %v4362
    %v4373 = vsub.f32 %v4357, %v4365
    %v4374 = vsub.f32 %v4358, %v4368
    %v4375 = vsub.f32 %v4359, %v4371
    %v4376 = vmul.f32 %v4372, 1.442695
    %v4377 = vpow.pop %v4376
    %v4378 = vmul.f32 %v4373, 1.442695
    %v4379 = vpow.pop %v4378
    %v4380 = vmul.f32 %v4374, 1.442695
    %v4381 = vpow.pop %v4380
    %v4382 = vmul.f32 %v4375, 1.442695
    %v4383 = vpow.pop %v4382
    %v4384 = vsel %vm241, %v4377, 0.0
    %4385 = vadd.xlane.f32.xlu0 %v4384
    %v4386 = vpop.xlane.xlu0 %4385
    %v4387 = vsel %vm241, %v4379, 0.0
    %4388 = vadd.xlane.f32.xlu0 %v4387
    %v4389 = vpop.xlane.xlu0 %4388
    %v4390 = vsel %vm241, %v4381, 0.0
    %4391 = vadd.xlane.f32.xlu0 %v4390
    %v4392 = vpop.xlane.xlu0 %4391
    %v4393 = vsel %vm241, %v4383, 0.0
    %4394 = vadd.xlane.f32.xlu0 %v4393
    %v4395 = vpop.xlane.xlu0 %4394
    %v4396 = vrcp.pop %v4386
    %v4397 = vmul.f32 %v4377, %v4396
    %v4398 = vrcp.pop %v4389
    %v4399 = vmul.f32 %v4379, %v4398
    %v4400 = vrcp.pop %v4392
    %v4401 = vmul.f32 %v4381, %v4400
    %v4402 = vrcp.pop %v4395
    %v4403 = vmul.f32 %v4383, %v4402
    %v4404 = vpack.c.bf16 %v4399, %v4397
    %v4405 = vpack.c.bf16 %v4403, %v4401
    %v4407 = vsel %vm241, %v4404, 0
    %v4410 = vsel %vm241, %v4405, 0
    %4412 = vmatprep.subr.bf16.mxu0 0
    %4413 = vmatpush1.bf16.msra.mxu0 %v3906
    %4414 = vmatprep.subr.bf16.mxu0 0
    %4415 = vmatpush1.bf16.msra.mxu0 %v3907
    %4416 = vmatprep.subr.bf16.mxu0 0
    %4417 = vmatpush1.bf16.msra.mxu0 0
    %4418 = vmatprep.subr.bf16.mxu0 0
    %4419 = vmatpush1.bf16.msra.mxu0 0
    %4420 = vmatprep.subr.bf16.mxu0 0
    %4421 = vmatpush1.bf16.msra.mxu0 0
    %4422 = vmatprep.subr.bf16.mxu0 0
    %4423 = vmatpush1.bf16.msra.mxu0 0
    %4424 = vmatprep.subr.bf16.mxu0 0
    %4425 = vmatpush1.bf16.msra.mxu0 0
    %4426 = vmatprep.subr.bf16.mxu0 0
    %4427 = vmatpush1.bf16.msra.mxu0 0
    %4428 = vmatprep.subr.bf16.mxu0 0
    %4429 = vmatpush1.bf16.msra.mxu0 0
    %4430 = vmatprep.subr.bf16.mxu0 0
    %4431 = vmatpush1.bf16.msra.mxu0 0
    %4432 = vmatprep.subr.bf16.mxu0 0
    %4433 = vmatpush1.bf16.msra.mxu0 0
    %4434 = vmatprep.subr.bf16.mxu0 0
    %4435 = vmatpush1.bf16.msra.mxu0 0
    %4436 = vmatprep.subr.bf16.mxu0 0
    %4437 = vmatpush1.bf16.msra.mxu0 0
    %4438 = vmatprep.subr.bf16.mxu0 0
    %4439 = vmatpush1.bf16.msra.mxu0 0
    %4440 = vmatprep.subr.bf16.mxu0 0
    %4441 = vmatpush1.bf16.msra.mxu0 0
    %4442 = vmatprep.subr.bf16.mxu0 0
    %4443 = vmatpush1.bf16.msra.mxu0 0
    %4444 = vmatprep.mubr.bf16.mxu0 0
    %4445 = vmatmul.mubr.bf16.gmra.mrb[0].mxu0 %v4407
    %v4446 = vpop.f32.mrb[0].mxu0
    %v4447 = vadd.f32 0.0, %v4446
    %v4448 = vpop.f32.mrb[0].mxu0
    %v4449 = vpop.f32.mrb[0].mxu0
    %v4450 = vadd.f32 0.0, %v4449
    %v4451 = vpop.f32.mrb[0].mxu0
    %4452 = vmatprep.mubr.bf16.mxu0 0
    %4453 = vmatmul.mubr.bf16.gmra.mrb[0].mxu0 %v4410
    %v4454 = vpop.f32.mrb[0].mxu0
    %v4455 = vadd.f32 0.0, %v4454
    %v4456 = vpop.f32.mrb[0].mxu0
    %v4457 = vpop.f32.mrb[0].mxu0
    %v4458 = vadd.f32 0.0, %v4457
    %v4459 = vpop.f32.mrb[0].mxu0
    %4460 = vdwg.mxu0
    %v4461 = vmul.f32 %v4447, %v4289
    %v4462 = vmul.f32 %v4450, %v4289
    %v4463 = vmul.f32 %v4455, %v4289
    %v4464 = vmul.f32 %v4458, %v4289
    %v4465 = vadd.f32 %v4280, %v4461
    %v4466 = vadd.f32 %v4281, %v4462
    %v4467 = vadd.f32 %v4282, %v4463
    %v4468 = vadd.f32 %v4283, %v4464
    %v4469 = vld [vmem:[%s1008] sm:$0x1]
    %v4471 = vlaneseq
    %v4472 = vshrl.u32 %v4471, 7
    %v4473 = vsub.s32 0, %v4472
    %v4474 = vrot.slane %v4469, %v4473
    %v4476 = vmul.f32 %v3742, %v4474
    %v4477 = vmul.f32 %v3745, %v4474
    %v4478 = vmul.f32 %v3750, %v4474
    %v4479 = vmul.f32 %v3753, %v4474
    %v4480 = vpack.c.bf16 %v4477, %v4476
    %v4481 = vpack.c.bf16 %v4479, %v4478
    %v4483 = vsel %vm241, %v4480, 0
    %v4486 = vsel %vm241, %v4481, 0
    %4488 = vmatprep.subr.bf16.mxu0 0
    %4489 = vmatpush1.bf16.xpose.msra.mxu0 %v3928
    %4490 = vmatprep.subr.bf16.mxu0 0
    %4491 = vmatpush1.bf16.xpose.msra.mxu0 %v3931
    %4492 = vmatprep.subr.bf16.mxu0 0
    %4493 = vmatpush1.bf16.xpose.msra.mxu0 0
    %4494 = vmatprep.subr.bf16.mxu0 0
    %4495 = vmatpush1.bf16.xpose.msra.mxu0 0
    %4496 = vmatprep.subr.bf16.mxu0 0
    %4497 = vmatpush1.bf16.xpose.msra.mxu0 0
    %4498 = vmatprep.subr.bf16.mxu0 0
    %4499 = vmatpush1.bf16.xpose.msra.mxu0 0
    %4500 = vmatprep.subr.bf16.mxu0 0
    %4501 = vmatpush1.bf16.xpose.msra.mxu0 0
    %4502 = vmatprep.subr.bf16.mxu0 0
    %4503 = vmatpush1.bf16.xpose.msra.mxu0 0
    %4504 = vmatprep.subr.bf16.mxu0 0
    %4505 = vmatpush1.bf16.xpose.msra.mxu0 0
    %4506 = vmatprep.subr.bf16.mxu0 0
    %4507 = vmatpush1.bf16.xpose.msra.mxu0 0
    %4508 = vmatprep.subr.bf16.mxu0 0
    %4509 = vmatpush1.bf16.xpose.msra.mxu0 0
    %4510 = vmatprep.subr.bf16.mxu0 0
    %4511 = vmatpush1.bf16.xpose.msra.mxu0 0
    %4512 = vmatprep.subr.bf16.mxu0 0
    %4513 = vmatpush1.bf16.xpose.msra.mxu0 0
    %4514 = vmatprep.subr.bf16.mxu0 0
    %4515 = vmatpush1.bf16.xpose.msra.mxu0 0
    %4516 = vmatprep.subr.bf16.mxu0 0
    %4517 = vmatpush1.bf16.xpose.msra.mxu0 0
    %4518 = vmatprep.subr.bf16.mxu0 0
    %4519 = vmatpush1.bf16.xpose.msra.mxu0 0
    %4520 = vmatprep.mubr.bf16.mxu0 0
    %4521 = vmatmul.mubr.bf16.gmra.mrb[0].mxu0 %v4483
    %v4522 = vpop.f32.mrb[0].mxu0
    %v4523 = vadd.f32 0.0, %v4522
    %v4524 = vpop.f32.mrb[0].mxu0
    %v4525 = vpop.f32.mrb[0].mxu0
    %v4526 = vadd.f32 0.0, %v4525
    %v4527 = vpop.f32.mrb[0].mxu0
    %4528 = vmatprep.mubr.bf16.mxu0 0
    %4529 = vmatmul.mubr.bf16.gmra.mrb[0].mxu0 %v4486
    %v4530 = vpop.f32.mrb[0].mxu0
    %v4531 = vadd.f32 0.0, %v4530
    %v4532 = vpop.f32.mrb[0].mxu0
    %v4533 = vpop.f32.mrb[0].mxu0
    %v4534 = vadd.f32 0.0, %v4533
    %v4535 = vpop.f32.mrb[0].mxu0
    %4536 = vdwg.mxu0
    %v4537 = vmul.f32 %v4523, 0.35355338
    %v4538 = vmul.f32 %v4526, 0.35355338
    %v4539 = vmul.f32 %v4531, 0.35355338
    %v4540 = vmul.f32 %v4534, 0.35355338
    %v4541 = vadd.f32 %v4537, %v76
    %v4542 = vadd.f32 %v4538, %v77
    %v4543 = vadd.f32 %v4539, %v78
    %v4544 = vadd.f32 %v4540, %v79
    %v4545 = vsel %vm241, %v4541, -inf
    %4546 = vmax.xlane.f32.xlu0 %v4545
    %v4547 = vpop.xlane.xlu0 %4546
    %v4548 = vsel %vm241, %v4542, -inf
    %4549 = vmax.xlane.f32.xlu0 %v4548
    %v4550 = vpop.xlane.xlu0 %4549
    %v4551 = vsel %vm241, %v4543, -inf
    %4552 = vmax.xlane.f32.xlu0 %v4551
    %v4553 = vpop.xlane.xlu0 %4552
    %v4554 = vsel %vm241, %v4544, -inf
    %4555 = vmax.xlane.f32.xlu0 %v4554
    %v4556 = vpop.xlane.xlu0 %4555
    %v4557 = vsub.f32 %v4541, %v4547
    %v4558 = vsub.f32 %v4542, %v4550
    %v4559 = vsub.f32 %v4543, %v4553
    %v4560 = vsub.f32 %v4544, %v4556
    %v4561 = vmul.f32 %v4557, 1.442695
    %v4562 = vpow.pop %v4561
    %v4563 = vmul.f32 %v4558, 1.442695
    %v4564 = vpow.pop %v4563
    %v4565 = vmul.f32 %v4559, 1.442695
    %v4566 = vpow.pop %v4565
    %v4567 = vmul.f32 %v4560, 1.442695
    %v4568 = vpow.pop %v4567
    %v4569 = vsel %vm241, %v4562, 0.0
    %4570 = vadd.xlane.f32.xlu0 %v4569
    %v4571 = vpop.xlane.xlu0 %4570
    %v4572 = vsel %vm241, %v4564, 0.0
    %4573 = vadd.xlane.f32.xlu0 %v4572
    %v4574 = vpop.xlane.xlu0 %4573
    %v4575 = vsel %vm241, %v4566, 0.0
    %4576 = vadd.xlane.f32.xlu0 %v4575
    %v4577 = vpop.xlane.xlu0 %4576
    %v4578 = vsel %vm241, %v4568, 0.0
    %4579 = vadd.xlane.f32.xlu0 %v4578
    %v4580 = vpop.xlane.xlu0 %4579
    %v4581 = vrcp.pop %v4571
    %v4582 = vmul.f32 %v4562, %v4581
    %v4583 = vrcp.pop %v4574
    %v4584 = vmul.f32 %v4564, %v4583
    %v4585 = vrcp.pop %v4577
    %v4586 = vmul.f32 %v4566, %v4585
    %v4587 = vrcp.pop %v4580
    %v4588 = vmul.f32 %v4568, %v4587
    %v4589 = vpack.c.bf16 %v4584, %v4582
    %v4590 = vpack.c.bf16 %v4588, %v4586
    %v4592 = vsel %vm241, %v4589, 0
    %v4595 = vsel %vm241, %v4590, 0
    %4597 = vmatprep.subr.bf16.mxu0 0
    %4598 = vmatpush1.bf16.msra.mxu0 %v3906
    %4599 = vmatprep.subr.bf16.mxu0 0
    %4600 = vmatpush1.bf16.msra.mxu0 %v3907
    %4601 = vmatprep.subr.bf16.mxu0 0
    %4602 = vmatpush1.bf16.msra.mxu0 0
    %4603 = vmatprep.subr.bf16.mxu0 0
    %4604 = vmatpush1.bf16.msra.mxu0 0
    %4605 = vmatprep.subr.bf16.mxu0 0
    %4606 = vmatpush1.bf16.msra.mxu0 0
    %4607 = vmatprep.subr.bf16.mxu0 0
    %4608 = vmatpush1.bf16.msra.mxu0 0
    %4609 = vmatprep.subr.bf16.mxu0 0
    %4610 = vmatpush1.bf16.msra.mxu0 0
    %4611 = vmatprep.subr.bf16.mxu0 0
    %4612 = vmatpush1.bf16.msra.mxu0 0
    %4613 = vmatprep.subr.bf16.mxu0 0
    %4614 = vmatpush1.bf16.msra.mxu0 0
    %4615 = vmatprep.subr.bf16.mxu0 0
    %4616 = vmatpush1.bf16.msra.mxu0 0
    %4617 = vmatprep.subr.bf16.mxu0 0
    %4618 = vmatpush1.bf16.msra.mxu0 0
    %4619 = vmatprep.subr.bf16.mxu0 0
    %4620 = vmatpush1.bf16.msra.mxu0 0
    %4621 = vmatprep.subr.bf16.mxu0 0
    %4622 = vmatpush1.bf16.msra.mxu0 0
    %4623 = vmatprep.subr.bf16.mxu0 0
    %4624 = vmatpush1.bf16.msra.mxu0 0
    %4625 = vmatprep.subr.bf16.mxu0 0
    %4626 = vmatpush1.bf16.msra.mxu0 0
    %4627 = vmatprep.subr.bf16.mxu0 0
    %4628 = vmatpush1.bf16.msra.mxu0 0
    %4629 = vmatprep.mubr.bf16.mxu0 0
    %4630 = vmatmul.mubr.bf16.gmra.mrb[0].mxu0 %v4592
    %v4631 = vpop.f32.mrb[0].mxu0
    %v4632 = vadd.f32 0.0, %v4631
    %v4633 = vpop.f32.mrb[0].mxu0
    %v4634 = vpop.f32.mrb[0].mxu0
    %v4635 = vadd.f32 0.0, %v4634
    %v4636 = vpop.f32.mrb[0].mxu0
    %4637 = vmatprep.mubr.bf16.mxu0 0
    %4638 = vmatmul.mubr.bf16.gmra.mrb[0].mxu0 %v4595
    %v4639 = vpop.f32.mrb[0].mxu0
    %v4640 = vadd.f32 0.0, %v4639
    %v4641 = vpop.f32.mrb[0].mxu0
    %v4642 = vpop.f32.mrb[0].mxu0
    %v4643 = vadd.f32 0.0, %v4642
    %v4644 = vpop.f32.mrb[0].mxu0
    %4645 = vdwg.mxu0
    %v4646 = vmul.f32 %v4632, %v4474
    %v4647 = vmul.f32 %v4635, %v4474
    %v4648 = vmul.f32 %v4640, %v4474
    %v4649 = vmul.f32 %v4643, %v4474
    %v4650 = vadd.f32 %v4465, %v4646
    %v4651 = vadd.f32 %v4466, %v4647
    %v4652 = vadd.f32 %v4467, %v4648
    %v4653 = vadd.f32 %v4468, %v4649
    %v4654 = vpack.c.bf16 %v4651, %v4650
    %v4655 = vpack.c.bf16 %v4653, %v4652
    %s4656 = scalar_lea.vmem %s11, 16
    %v4657 = vld [vmem:[%s4656] sm:$0xf]
    %v4658 = vld [vmem:[%s4656 + $0x4] sm:$0xf]
    %v4659 = vld [vmem:[%s4656 + $0x8] sm:$0xf]
    %v4660 = vld [vmem:[%s4656 + $0xc] sm:$0xf]
    %s4661 = scalar_lea.vmem %s12, 1
    %v4662 = vld [vmem:[%s4661] sm:$0x1]
    %v4664 = vlaneseq
    %v4665 = vshrl.u32 %v4664, 7
    %v4666 = vsub.s32 0, %v4665
    %v4667 = vrot.slane %v4662, %v4666
    %v4673 = vunpack.c.l.b16 %v4657
    %v4674 = vunpack.c.l.b16 %v4658
    %v4675 = vunpack.c.l.b16 %v4659
    %v4676 = vunpack.c.l.b16 %v4660
    %v4677 = vpack.c.b16 %v4674, %v4673
    %v4678 = vpack.c.b16 %v4676, %v4675
    %v4682 = vsel %vm241, %v4654, 0
    %v4685 = vsel %vm241, %v4655, 0
    %4687 = vmatprep.subr.bf16.mxu0 0
    %4688 = vmatpush1.bf16.msra.mxu0 %v4677
    %4689 = vmatprep.subr.bf16.mxu0 0
    %4690 = vmatpush1.bf16.msra.mxu0 %v4678
    %4691 = vmatprep.subr.bf16.mxu0 0
    %4692 = vmatpush1.bf16.msra.mxu0 0
    %4693 = vmatprep.subr.bf16.mxu0 0
    %4694 = vmatpush1.bf16.msra.mxu0 0
    %4695 = vmatprep.subr.bf16.mxu0 0
    %4696 = vmatpush1.bf16.msra.mxu0 0
    %4697 = vmatprep.subr.bf16.mxu0 0
    %4698 = vmatpush1.bf16.msra.mxu0 0
    %4699 = vmatprep.subr.bf16.mxu0 0
    %4700 = vmatpush1.bf16.msra.mxu0 0
    %4701 = vmatprep.subr.bf16.mxu0 0
    %4702 = vmatpush1.bf16.msra.mxu0 0
    %4703 = vmatprep.subr.bf16.mxu0 0
    %4704 = vmatpush1.bf16.msra.mxu0 0
    %4705 = vmatprep.subr.bf16.mxu0 0
    %4706 = vmatpush1.bf16.msra.mxu0 0
    %4707 = vmatprep.subr.bf16.mxu0 0
    %4708 = vmatpush1.bf16.msra.mxu0 0
    %4709 = vmatprep.subr.bf16.mxu0 0
    %4710 = vmatpush1.bf16.msra.mxu0 0
    %4711 = vmatprep.subr.bf16.mxu0 0
    %4712 = vmatpush1.bf16.msra.mxu0 0
    %4713 = vmatprep.subr.bf16.mxu0 0
    %4714 = vmatpush1.bf16.msra.mxu0 0
    %4715 = vmatprep.subr.bf16.mxu0 0
    %4716 = vmatpush1.bf16.msra.mxu0 0
    %4717 = vmatprep.subr.bf16.mxu0 0
    %4718 = vmatpush1.bf16.msra.mxu0 0
    %4719 = vmatprep.mubr.bf16.mxu0 0
    %4720 = vmatmul.mubr.bf16.gmra.mrb[0].mxu0 %v4682
    %v4721 = vpop.f32.mrb[0].mxu0
    %v4722 = vadd.f32 %v4667, %v4721
    %v4723 = vpop.f32.mrb[0].mxu0
    %v4724 = vpop.f32.mrb[0].mxu0
    %v4725 = vadd.f32 %v4667, %v4724
    %v4726 = vpop.f32.mrb[0].mxu0
    %4727 = vmatprep.mubr.bf16.mxu0 0
    %4728 = vmatmul.mubr.bf16.gmra.mrb[0].mxu0 %v4685
    %v4729 = vpop.f32.mrb[0].mxu0
    %v4730 = vadd.f32 %v4667, %v4729
    %v4731 = vpop.f32.mrb[0].mxu0
    %v4732 = vpop.f32.mrb[0].mxu0
    %v4733 = vadd.f32 %v4667, %v4732
    %v4734 = vpop.f32.mrb[0].mxu0
    %4735 = vdwg.mxu0
    %v4736 = vadd.f32 %v3670, %v4722
    %v4737 = vadd.f32 %v3671, %v4725
    %v4738 = vadd.f32 %v3672, %v4730
    %v4739 = vadd.f32 %v3673, %v4733
    %s4740 = scalar_lea.vmem %s17, 1
    %v4741 = vld [vmem:[%s4740] sm:$0x1]
    %s4742 = scalar_lea.vmem %s18, 1
    %v4743 = vld [vmem:[%s4742] sm:$0x1]
    %v4744 = vsel %vm241, %v4736, 0.0
    %4745 = vadd.xlane.f32.xlu0 %v4744
    %v4746 = vpop.xlane.xlu0 %4745
    %v4747 = vsel %vm241, %v4737, 0.0
    %4748 = vadd.xlane.f32.xlu0 %v4747
    %v4749 = vpop.xlane.xlu0 %4748
    %v4750 = vsel %vm241, %v4738, 0.0
    %4751 = vadd.xlane.f32.xlu0 %v4750
    %v4752 = vpop.xlane.xlu0 %4751
    %v4753 = vsel %vm241, %v4739, 0.0
    %4754 = vadd.xlane.f32.xlu0 %v4753
    %v4755 = vpop.xlane.xlu0 %4754
    %v4756 = vmul.f32 %v4746, %v1292
    %v4757 = vmul.f32 %v4749, %v1292
    %v4758 = vmul.f32 %v4752, %v1292
    %v4759 = vmul.f32 %v4755, %v1292
    %v4760 = vsub.f32 %v4736, %v4756
    %v4761 = vsub.f32 %v4737, %v4757
    %v4762 = vsub.f32 %v4738, %v4758
    %v4763 = vsub.f32 %v4739, %v4759
    %v4764 = vmul.f32 %v4760, %v4760
    %v4765 = vmul.f32 %v4761, %v4761
    %v4766 = vmul.f32 %v4762, %v4762
    %v4767 = vmul.f32 %v4763, %v4763
    %v4768 = vsel %vm241, %v4764, 0.0
    %4769 = vadd.xlane.f32.xlu0 %v4768
    %v4770 = vpop.xlane.xlu0 %4769
    %v4771 = vsel %vm241, %v4765, 0.0
    %4772 = vadd.xlane.f32.xlu0 %v4771
    %v4773 = vpop.xlane.xlu0 %4772
    %v4774 = vsel %vm241, %v4766, 0.0
    %4775 = vadd.xlane.f32.xlu0 %v4774
    %v4776 = vpop.xlane.xlu0 %4775
    %v4777 = vsel %vm241, %v4767, 0.0
    %4778 = vadd.xlane.f32.xlu0 %v4777
    %v4779 = vpop.xlane.xlu0 %4778
    %v4780 = vmul.f32 %v4770, %v1292
    %v4781 = vmul.f32 %v4773, %v1292
    %v4782 = vmul.f32 %v4776, %v1292
    %v4783 = vmul.f32 %v4779, %v1292
    %v4784 = vadd.f32 %v4780, 1e-05
    %v4785 = vadd.f32 %v4781, 1e-05
    %v4786 = vadd.f32 %v4782, 1e-05
    %v4787 = vadd.f32 %v4783, 1e-05
    %v4788 = vrsqrt.pop %v4784
    %v4789 = vrsqrt.pop %v4785
    %v4790 = vrsqrt.pop %v4786
    %v4791 = vrsqrt.pop %v4787
    %v4792 = vmul.f32 %v4760, %v4788
    %v4793 = vmul.f32 %v4761, %v4789
    %v4794 = vmul.f32 %v4762, %v4790
    %v4795 = vmul.f32 %v4763, %v4791
    %v4797 = vlaneseq
    %v4798 = vshrl.u32 %v4797, 7
    %v4799 = vsub.s32 0, %v4798
    %v4800 = vrot.slane %v4741, %v4799
    %v4802 = vmul.f32 %v4792, %v4800
    %v4803 = vmul.f32 %v4793, %v4800
    %v4804 = vmul.f32 %v4794, %v4800
    %v4805 = vmul.f32 %v4795, %v4800
    %v4807 = vlaneseq
    %v4808 = vshrl.u32 %v4807, 7
    %v4809 = vsub.s32 0, %v4808
    %v4810 = vrot.slane %v4743, %v4809
    %v4812 = vadd.f32 %v4802, %v4810
    %v4813 = vadd.f32 %v4803, %v4810
    %v4814 = vadd.f32 %v4804, %v4810
    %v4815 = vadd.f32 %v4805, %v4810
    %v4816 = vpack.c.bf16 %v4813, %v4812
    %v4817 = vpack.c.bf16 %v4815, %v4814
    %s4818 = scalar_lea.vmem %s13, 256
    %v4819 = vld [vmem:[%s4818] sm:$0xff]
    %v4820 = vld [vmem:[%s4818 + $0x8] sm:$0xff]
    %v4821 = vld [vmem:[%s4818 + $0x40] sm:$0xff]
    %v4822 = vld [vmem:[%s4818 + $0x48] sm:$0xff]
    %v4823 = vld [vmem:[%s4818 + $0x80] sm:$0xff]
    %v4824 = vld [vmem:[%s4818 + $0x88] sm:$0xff]
    %v4825 = vld [vmem:[%s4818 + $0xc0] sm:$0xff]
    %v4826 = vld [vmem:[%s4818 + $0xc8] sm:$0xff]
    %s4827 = scalar_lea.vmem %s14, 16
    %v4828 = vld [vmem:[%s4827] sm:$0xf]
    %v4830 = vlaneseq
    %v4831 = vshrl.u32 %v4830, 7
    %v4832 = vsub.s32 0, %v4831
    %v4833 = vrot.slane %v4828, %v4832
    %v4834 = vlaneseq
    %v4835 = vshrl.u32 %v4834, 7
    %v4836 = vsub.s32 1, %v4835
    %v4837 = vrot.slane %v4828, %v4836
    %v4838 = vlaneseq
    %v4839 = vshrl.u32 %v4838, 7
    %v4840 = vsub.s32 2, %v4839
    %v4841 = vrot.slane %v4828, %v4840
    %v4842 = vlaneseq
    %v4843 = vshrl.u32 %v4842, 7
    %v4844 = vsub.s32 3, %v4843
    %v4845 = vrot.slane %v4828, %v4844
    %v4858 = vunpack.c.l.b16 %v4819
    %v4859 = vunpack.c.h.b16 %v4819
    %v4860 = vunpack.c.l.b16 %v4820
    %v4861 = vunpack.c.h.b16 %v4820
    %v4862 = vunpack.c.l.b16 %v4821
    %v4863 = vunpack.c.h.b16 %v4821
    %v4864 = vunpack.c.l.b16 %v4822
    %v4865 = vunpack.c.h.b16 %v4822
    %v4866 = vunpack.c.l.b16 %v4823
    %v4867 = vunpack.c.h.b16 %v4823
    %v4868 = vunpack.c.l.b16 %v4824
    %v4869 = vunpack.c.h.b16 %v4824
    %v4870 = vunpack.c.l.b16 %v4825
    %v4871 = vunpack.c.h.b16 %v4825
    %v4872 = vunpack.c.l.b16 %v4826
    %v4873 = vunpack.c.h.b16 %v4826
    %v4874 = vpack.c.b16 %v4862, %v4858
    %v4875 = vpack.c.b16 %v4863, %v4859
    %v4876 = vpack.c.b16 %v4864, %v4860
    %v4877 = vpack.c.b16 %v4865, %v4861
    %v4878 = vpack.c.b16 %v4870, %v4866
    %v4879 = vpack.c.b16 %v4871, %v4867
    %v4880 = vpack.c.b16 %v4872, %v4868
    %v4881 = vpack.c.b16 %v4873, %v4869
    %v4891 = vsel %vm241, %v4816, 0
    %v4894 = vsel %vm241, %v4817, 0
    %4896 = vmatprep.subr.bf16.mxu0 %v4875
    %4897 = vmatpush1.bf16.msra.mxu0 %v4874
    %4898 = vmatprep.subr.bf16.mxu0 %v4879
    %4899 = vmatpush1.bf16.msra.mxu0 %v4878
    %4900 = vmatprep.subr.bf16.mxu0 0
    %4901 = vmatpush1.bf16.msra.mxu0 0
    %4902 = vmatprep.subr.bf16.mxu0 0
    %4903 = vmatpush1.bf16.msra.mxu0 0
    %4904 = vmatprep.subr.bf16.mxu0 0
    %4905 = vmatpush1.bf16.msra.mxu0 0
    %4906 = vmatprep.subr.bf16.mxu0 0
    %4907 = vmatpush1.bf16.msra.mxu0 0
    %4908 = vmatprep.subr.bf16.mxu0 0
    %4909 = vmatpush1.bf16.msra.mxu0 0
    %4910 = vmatprep.subr.bf16.mxu0 0
    %4911 = vmatpush1.bf16.msra.mxu0 0
    %4912 = vmatprep.subr.bf16.mxu0 0
    %4913 = vmatpush1.bf16.msra.mxu0 0
    %4914 = vmatprep.subr.bf16.mxu0 0
    %4915 = vmatpush1.bf16.msra.mxu0 0
    %4916 = vmatprep.subr.bf16.mxu0 0
    %4917 = vmatpush1.bf16.msra.mxu0 0
    %4918 = vmatprep.subr.bf16.mxu0 0
    %4919 = vmatpush1.bf16.msra.mxu0 0
    %4920 = vmatprep.subr.bf16.mxu0 0
    %4921 = vmatpush1.bf16.msra.mxu0 0
    %4922 = vmatprep.subr.bf16.mxu0 0
    %4923 = vmatpush1.bf16.msra.mxu0 0
    %4924 = vmatprep.subr.bf16.mxu0 0
    %4925 = vmatpush1.bf16.msra.mxu0 0
    %4926 = vmatprep.subr.bf16.mxu0 0
    %4927 = vmatpush1.bf16.msra.mxu0 0
    %4928 = vmatprep.mubr.bf16.mxu0 0
    %4929 = vmatmul.mubr.bf16.gmra.mrb[0].mxu0 %v4891
    %v4930 = vpop.f32.mrb[0].mxu0
    %v4931 = vadd.f32 %v4833, %v4930
    %v4932 = vpop.f32.mrb[0].mxu0
    %v4933 = vadd.f32 %v4837, %v4932
    %v4934 = vpop.f32.mrb[0].mxu0
    %v4935 = vadd.f32 %v4833, %v4934
    %v4936 = vpop.f32.mrb[0].mxu0
    %v4937 = vadd.f32 %v4837, %v4936
    %4938 = vmatprep.mubr.bf16.mxu0 0
    %4939 = vmatmul.mubr.bf16.gmra.mrb[0].mxu0 %v4894
    %v4940 = vpop.f32.mrb[0].mxu0
    %v4941 = vadd.f32 %v4833, %v4940
    %v4942 = vpop.f32.mrb[0].mxu0
    %v4943 = vadd.f32 %v4837, %v4942
    %v4944 = vpop.f32.mrb[0].mxu0
    %v4945 = vadd.f32 %v4833, %v4944
    %v4946 = vpop.f32.mrb[0].mxu0
    %v4947 = vadd.f32 %v4837, %v4946
    %4948 = vdwg.mxu0
    %4949 = vmatprep.subr.bf16.mxu0 %v4877
    %4950 = vmatpush1.bf16.msra.mxu0 %v4876
    %4951 = vmatprep.subr.bf16.mxu0 %v4881
    %4952 = vmatpush1.bf16.msra.mxu0 %v4880
    %4953 = vmatprep.subr.bf16.mxu0 0
    %4954 = vmatpush1.bf16.msra.mxu0 0
    %4955 = vmatprep.subr.bf16.mxu0 0
    %4956 = vmatpush1.bf16.msra.mxu0 0
    %4957 = vmatprep.subr.bf16.mxu0 0
    %4958 = vmatpush1.bf16.msra.mxu0 0
    %4959 = vmatprep.subr.bf16.mxu0 0
    %4960 = vmatpush1.bf16.msra.mxu0 0
    %4961 = vmatprep.subr.bf16.mxu0 0
    %4962 = vmatpush1.bf16.msra.mxu0 0
    %4963 = vmatprep.subr.bf16.mxu0 0
    %4964 = vmatpush1.bf16.msra.mxu0 0
    %4965 = vmatprep.subr.bf16.mxu0 0
    %4966 = vmatpush1.bf16.msra.mxu0 0
    %4967 = vmatprep.subr.bf16.mxu0 0
    %4968 = vmatpush1.bf16.msra.mxu0 0
    %4969 = vmatprep.subr.bf16.mxu0 0
    %4970 = vmatpush1.bf16.msra.mxu0 0
    %4971 = vmatprep.subr.bf16.mxu0 0
    %4972 = vmatpush1.bf16.msra.mxu0 0
    %4973 = vmatprep.subr.bf16.mxu0 0
    %4974 = vmatpush1.bf16.msra.mxu0 0
    %4975 = vmatprep.subr.bf16.mxu0 0
    %4976 = vmatpush1.bf16.msra.mxu0 0
    %4977 = vmatprep.subr.bf16.mxu0 0
    %4978 = vmatpush1.bf16.msra.mxu0 0
    %4979 = vmatprep.subr.bf16.mxu0 0
    %4980 = vmatpush1.bf16.msra.mxu0 0
    %4981 = vmatprep.mubr.bf16.mxu0 0
    %4982 = vmatmul.mubr.bf16.gmra.mrb[0].mxu0 %v4891
    %v4983 = vpop.f32.mrb[0].mxu0
    %v4984 = vadd.f32 %v4841, %v4983
    %v4985 = vpop.f32.mrb[0].mxu0
    %v4986 = vadd.f32 %v4845, %v4985
    %v4987 = vpop.f32.mrb[0].mxu0
    %v4988 = vadd.f32 %v4841, %v4987
    %v4989 = vpop.f32.mrb[0].mxu0
    %v4990 = vadd.f32 %v4845, %v4989
    %4991 = vmatprep.mubr.bf16.mxu0 0
    %4992 = vmatmul.mubr.bf16.gmra.mrb[0].mxu0 %v4894
    %v4993 = vpop.f32.mrb[0].mxu0
    %v4994 = vadd.f32 %v4841, %v4993
    %v4995 = vpop.f32.mrb[0].mxu0
    %v4996 = vadd.f32 %v4845, %v4995
    %v4997 = vpop.f32.mrb[0].mxu0
    %v4998 = vadd.f32 %v4841, %v4997
    %v4999 = vpop.f32.mrb[0].mxu0
    %v5000 = vadd.f32 %v4845, %v4999
    %5001 = vdwg.mxu0
    %v5002 = vmax.f32 %v4931, 0.0
    %v5003 = vmax.f32 %v4933, 0.0
    %v5004 = vmax.f32 %v4984, 0.0
    %v5005 = vmax.f32 %v4986, 0.0
    %v5006 = vmax.f32 %v4935, 0.0
    %v5007 = vmax.f32 %v4937, 0.0
    %v5008 = vmax.f32 %v4988, 0.0
    %v5009 = vmax.f32 %v4990, 0.0
    %v5010 = vmax.f32 %v4941, 0.0
    %v5011 = vmax.f32 %v4943, 0.0
    %v5012 = vmax.f32 %v4994, 0.0
    %v5013 = vmax.f32 %v4996, 0.0
    %v5014 = vmax.f32 %v4945, 0.0
    %v5015 = vmax.f32 %v4947, 0.0
    %v5016 = vmax.f32 %v4998, 0.0
    %v5017 = vmax.f32 %v5000, 0.0
    %v5018 = vpack.c.bf16 %v5006, %v5002
    %v5019 = vpack.c.bf16 %v5007, %v5003
    %v5020 = vpack.c.bf16 %v5008, %v5004
    %v5021 = vpack.c.bf16 %v5009, %v5005
    %v5022 = vpack.c.bf16 %v5014, %v5010
    %v5023 = vpack.c.bf16 %v5015, %v5011
    %v5024 = vpack.c.bf16 %v5016, %v5012
    %v5025 = vpack.c.bf16 %v5017, %v5013
    %s5026 = scalar_lea.vmem %s15, 1024
    %v5027 = vld [vmem:[%s5026] sm:$0xf]
    %v5028 = vld [vmem:[%s5026 + $0x4] sm:$0xf]
    %v5029 = vld [vmem:[%s5026 + $0x8] sm:$0xf]
    %v5030 = vld [vmem:[%s5026 + $0xc] sm:$0xf]
    %v5031 = vld [vmem:[%s5026 + $0x10] sm:$0xf]
    %v5032 = vld [vmem:[%s5026 + $0x14] sm:$0xf]
    %v5033 = vld [vmem:[%s5026 + $0x18] sm:$0xf]
    %v5034 = vld [vmem:[%s5026 + $0x1c] sm:$0xf]
    %v5035 = vld [vmem:[%s5026 + $0x20] sm:$0xf]
    %v5036 = vld [vmem:[%s5026 + $0x24] sm:$0xf]
    %v5037 = vld [vmem:[%s5026 + $0x28] sm:$0xf]
    %v5038 = vld [vmem:[%s5026 + $0x2c] sm:$0xf]
    %v5039 = vld [vmem:[%s5026 + $0x30] sm:$0xf]
    %v5040 = vld [vmem:[%s5026 + $0x34] sm:$0xf]
    %v5041 = vld [vmem:[%s5026 + $0x38] sm:$0xf]
    %v5042 = vld [vmem:[%s5026 + $0x3c] sm:$0xf]
    %v5043 = vld [vmem:[%s5026 + $0x40] sm:$0xf]
    %v5044 = vld [vmem:[%s5026 + $0x44] sm:$0xf]
    %v5045 = vld [vmem:[%s5026 + $0x48] sm:$0xf]
    %v5046 = vld [vmem:[%s5026 + $0x4c] sm:$0xf]
    %v5047 = vld [vmem:[%s5026 + $0x50] sm:$0xf]
    %v5048 = vld [vmem:[%s5026 + $0x54] sm:$0xf]
    %v5049 = vld [vmem:[%s5026 + $0x58] sm:$0xf]
    %v5050 = vld [vmem:[%s5026 + $0x5c] sm:$0xf]
    %v5051 = vld [vmem:[%s5026 + $0x60] sm:$0xf]
    %v5052 = vld [vmem:[%s5026 + $0x64] sm:$0xf]
    %v5053 = vld [vmem:[%s5026 + $0x68] sm:$0xf]
    %v5054 = vld [vmem:[%s5026 + $0x6c] sm:$0xf]
    %v5055 = vld [vmem:[%s5026 + $0x70] sm:$0xf]
    %v5056 = vld [vmem:[%s5026 + $0x74] sm:$0xf]
    %v5057 = vld [vmem:[%s5026 + $0x78] sm:$0xf]
    %v5058 = vld [vmem:[%s5026 + $0x7c] sm:$0xf]
    %v5059 = vld [vmem:[%s5026 + $0x80] sm:$0xf]
    %v5060 = vld [vmem:[%s5026 + $0x84] sm:$0xf]
    %v5061 = vld [vmem:[%s5026 + $0x88] sm:$0xf]
    %v5062 = vld [vmem:[%s5026 + $0x8c] sm:$0xf]
    %v5063 = vld [vmem:[%s5026 + $0x90] sm:$0xf]
    %v5064 = vld [vmem:[%s5026 + $0x94] sm:$0xf]
    %v5065 = vld [vmem:[%s5026 + $0x98] sm:$0xf]
    %v5066 = vld [vmem:[%s5026 + $0x9c] sm:$0xf]
    %v5067 = vld [vmem:[%s5026 + $0xa0] sm:$0xf]
    %v5068 = vld [vmem:[%s5026 + $0xa4] sm:$0xf]
    %v5069 = vld [vmem:[%s5026 + $0xa8] sm:$0xf]
    %v5070 = vld [vmem:[%s5026 + $0xac] sm:$0xf]
    %v5071 = vld [vmem:[%s5026 + $0xb0] sm:$0xf]
    %v5072 = vld [vmem:[%s5026 + $0xb4] sm:$0xf]
    %v5073 = vld [vmem:[%s5026 + $0xb8] sm:$0xf]
    %v5074 = vld [vmem:[%s5026 + $0xbc] sm:$0xf]
    %v5075 = vld [vmem:[%s5026 + $0xc0] sm:$0xf]
    %v5076 = vld [vmem:[%s5026 + $0xc4] sm:$0xf]
    %v5077 = vld [vmem:[%s5026 + $0xc8] sm:$0xf]
    %v5078 = vld [vmem:[%s5026 + $0xcc] sm:$0xf]
    %v5079 = vld [vmem:[%s5026 + $0xd0] sm:$0xf]
    %v5080 = vld [vmem:[%s5026 + $0xd4] sm:$0xf]
    %v5081 = vld [vmem:[%s5026 + $0xd8] sm:$0xf]
    %v5082 = vld [vmem:[%s5026 + $0xdc] sm:$0xf]
    %v5083 = vld [vmem:[%s5026 + $0xe0] sm:$0xf]
    %v5084 = vld [vmem:[%s5026 + $0xe4] sm:$0xf]
    %v5085 = vld [vmem:[%s5026 + $0xe8] sm:$0xf]
    %v5086 = vld [vmem:[%s5026 + $0xec] sm:$0xf]
    %v5087 = vld [vmem:[%s5026 + $0xf0] sm:$0xf]
    %v5088 = vld [vmem:[%s5026 + $0xf4] sm:$0xf]
    %v5089 = vld [vmem:[%s5026 + $0xf8] sm:$0xf]
    %v5090 = vld [vmem:[%s5026 + $0xfc] sm:$0xf]
    %v5091 = vld [vmem:[%s4818 + $0x10] sm:$0xff]
    %v5092 = vld [vmem:[%s4818 + $0x18] sm:$0xff]
    %v5093 = vld [vmem:[%s4818 + $0x50] sm:$0xff]
    %v5094 = vld [vmem:[%s4818 + $0x58] sm:$0xff]
    %v5095 = vld [vmem:[%s4818 + $0x90] sm:$0xff]
    %v5096 = vld [vmem:[%s4818 + $0x98] sm:$0xff]
    %v5097 = vld [vmem:[%s4818 + $0xd0] sm:$0xff]
    %v5098 = vld [vmem:[%s4818 + $0xd8] sm:$0xff]
    %v5099 = vld [vmem:[%s4827 + $0x4] sm:$0xf]
    %v5101 = vlaneseq
    %v5102 = vshrl.u32 %v5101, 7
    %v5103 = vsub.s32 0, %v5102
    %v5104 = vrot.slane %v5099, %v5103
    %v5105 = vlaneseq
    %v5106 = vshrl.u32 %v5105, 7
    %v5107 = vsub.s32 1, %v5106
    %v5108 = vrot.slane %v5099, %v5107
    %v5109 = vlaneseq
    %v5110 = vshrl.u32 %v5109, 7
    %v5111 = vsub.s32 2, %v5110
    %v5112 = vrot.slane %v5099, %v5111
    %v5113 = vlaneseq
    %v5114 = vshrl.u32 %v5113, 7
    %v5115 = vsub.s32 3, %v5114
    %v5116 = vrot.slane %v5099, %v5115
    %v5129 = vunpack.c.l.b16 %v5091
    %v5130 = vunpack.c.h.b16 %v5091
    %v5131 = vunpack.c.l.b16 %v5092
    %v5132 = vunpack.c.h.b16 %v5092
    %v5133 = vunpack.c.l.b16 %v5093
    %v5134 = vunpack.c.h.b16 %v5093
    %v5135 = vunpack.c.l.b16 %v5094
    %v5136 = vunpack.c.h.b16 %v5094
    %v5137 = vunpack.c.l.b16 %v5095
    %v5138 = vunpack.c.h.b16 %v5095
    %v5139 = vunpack.c.l.b16 %v5096
    %v5140 = vunpack.c.h.b16 %v5096
    %v5141 = vunpack.c.l.b16 %v5097
    %v5142 = vunpack.c.h.b16 %v5097
    %v5143 = vunpack.c.l.b16 %v5098
    %v5144 = vunpack.c.h.b16 %v5098
    %v5145 = vpack.c.b16 %v5133, %v5129
    %v5146 = vpack.c.b16 %v5134, %v5130
    %v5147 = vpack.c.b16 %v5135, %v5131
    %v5148 = vpack.c.b16 %v5136, %v5132
    %v5149 = vpack.c.b16 %v5141, %v5137
    %v5150 = vpack.c.b16 %v5142, %v5138
    %v5151 = vpack.c.b16 %v5143, %v5139
    %v5152 = vpack.c.b16 %v5144, %v5140
    %5161 = vmatprep.subr.bf16.mxu0 %v5146
    %5162 = vmatpush1.bf16.msra.mxu0 %v5145
    %5163 = vmatprep.subr.bf16.mxu0 %v5150
    %5164 = vmatpush1.bf16.msra.mxu0 %v5149
    %5165 = vmatprep.subr.bf16.mxu0 0
    %5166 = vmatpush1.bf16.msra.mxu0 0
    %5167 = vmatprep.subr.bf16.mxu0 0
    %5168 = vmatpush1.bf16.msra.mxu0 0
    %5169 = vmatprep.subr.bf16.mxu0 0
    %5170 = vmatpush1.bf16.msra.mxu0 0
    %5171 = vmatprep.subr.bf16.mxu0 0
    %5172 = vmatpush1.bf16.msra.mxu0 0
    %5173 = vmatprep.subr.bf16.mxu0 0
    %5174 = vmatpush1.bf16.msra.mxu0 0
    %5175 = vmatprep.subr.bf16.mxu0 0
    %5176 = vmatpush1.bf16.msra.mxu0 0
    %5177 = vmatprep.subr.bf16.mxu0 0
    %5178 = vmatpush1.bf16.msra.mxu0 0
    %5179 = vmatprep.subr.bf16.mxu0 0
    %5180 = vmatpush1.bf16.msra.mxu0 0
    %5181 = vmatprep.subr.bf16.mxu0 0
    %5182 = vmatpush1.bf16.msra.mxu0 0
    %5183 = vmatprep.subr.bf16.mxu0 0
    %5184 = vmatpush1.bf16.msra.mxu0 0
    %5185 = vmatprep.subr.bf16.mxu0 0
    %5186 = vmatpush1.bf16.msra.mxu0 0
    %5187 = vmatprep.subr.bf16.mxu0 0
    %5188 = vmatpush1.bf16.msra.mxu0 0
    %5189 = vmatprep.subr.bf16.mxu0 0
    %5190 = vmatpush1.bf16.msra.mxu0 0
    %5191 = vmatprep.subr.bf16.mxu0 0
    %5192 = vmatpush1.bf16.msra.mxu0 0
    %5193 = vmatprep.mubr.bf16.mxu0 0
    %5194 = vmatmul.mubr.bf16.gmra.mrb[0].mxu0 %v4891
    %v5195 = vpop.f32.mrb[0].mxu0
    %v5196 = vadd.f32 %v5104, %v5195
    %v5197 = vpop.f32.mrb[0].mxu0
    %v5198 = vadd.f32 %v5108, %v5197
    %v5199 = vpop.f32.mrb[0].mxu0
    %v5200 = vadd.f32 %v5104, %v5199
    %v5201 = vpop.f32.mrb[0].mxu0
    %v5202 = vadd.f32 %v5108, %v5201
    %5203 = vmatprep.mubr.bf16.mxu0 0
    %5204 = vmatmul.mubr.bf16.gmra.mrb[0].mxu0 %v4894
    %v5205 = vpop.f32.mrb[0].mxu0
    %v5206 = vadd.f32 %v5104, %v5205
    %v5207 = vpop.f32.mrb[0].mxu0
    %v5208 = vadd.f32 %v5108, %v5207
    %v5209 = vpop.f32.mrb[0].mxu0
    %v5210 = vadd.f32 %v5104, %v5209
    %v5211 = vpop.f32.mrb[0].mxu0
    %v5212 = vadd.f32 %v5108, %v5211
    %5213 = vdwg.mxu0
    %5214 = vmatprep.subr.bf16.mxu0 %v5148
    %5215 = vmatpush1.bf16.msra.mxu0 %v5147
    %5216 = vmatprep.subr.bf16.mxu0 %v5152
    %5217 = vmatpush1.bf16.msra.mxu0 %v5151
    %5218 = vmatprep.subr.bf16.mxu0 0
    %5219 = vmatpush1.bf16.msra.mxu0 0
    %5220 = vmatprep.subr.bf16.mxu0 0
    %5221 = vmatpush1.bf16.msra.mxu0 0
    %5222 = vmatprep.subr.bf16.mxu0 0
    %5223 = vmatpush1.bf16.msra.mxu0 0
    %5224 = vmatprep.subr.bf16.mxu0 0
    %5225 = vmatpush1.bf16.msra.mxu0 0
    %5226 = vmatprep.subr.bf16.mxu0 0
    %5227 = vmatpush1.bf16.msra.mxu0 0
    %5228 = vmatprep.subr.bf16.mxu0 0
    %5229 = vmatpush1.bf16.msra.mxu0 0
    %5230 = vmatprep.subr.bf16.mxu0 0
    %5231 = vmatpush1.bf16.msra.mxu0 0
    %5232 = vmatprep.subr.bf16.mxu0 0
    %5233 = vmatpush1.bf16.msra.mxu0 0
    %5234 = vmatprep.subr.bf16.mxu0 0
    %5235 = vmatpush1.bf16.msra.mxu0 0
    %5236 = vmatprep.subr.bf16.mxu0 0
    %5237 = vmatpush1.bf16.msra.mxu0 0
    %5238 = vmatprep.subr.bf16.mxu0 0
    %5239 = vmatpush1.bf16.msra.mxu0 0
    %5240 = vmatprep.subr.bf16.mxu0 0
    %5241 = vmatpush1.bf16.msra.mxu0 0
    %5242 = vmatprep.subr.bf16.mxu0 0
    %5243 = vmatpush1.bf16.msra.mxu0 0
    %5244 = vmatprep.subr.bf16.mxu0 0
    %5245 = vmatpush1.bf16.msra.mxu0 0
    %5246 = vmatprep.mubr.bf16.mxu0 0
    %5247 = vmatmul.mubr.bf16.gmra.mrb[0].mxu0 %v4891
    %v5248 = vpop.f32.mrb[0].mxu0
    %v5249 = vadd.f32 %v5112, %v5248
    %v5250 = vpop.f32.mrb[0].mxu0
    %v5251 = vadd.f32 %v5116, %v5250
    %v5252 = vpop.f32.mrb[0].mxu0
    %v5253 = vadd.f32 %v5112, %v5252
    %v5254 = vpop.f32.mrb[0].mxu0
    %v5255 = vadd.f32 %v5116, %v5254
    %5256 = vmatprep.mubr.bf16.mxu0 0
    %5257 = vmatmul.mubr.bf16.gmra.mrb[0].mxu0 %v4894
    %v5258 = vpop.f32.mrb[0].mxu0
    %v5259 = vadd.f32 %v5112, %v5258
    %v5260 = vpop.f32.mrb[0].mxu0
    %v5261 = vadd.f32 %v5116, %v5260
    %v5262 = vpop.f32.mrb[0].mxu0
    %v5263 = vadd.f32 %v5112, %v5262
    %v5264 = vpop.f32.mrb[0].mxu0
    %v5265 = vadd.f32 %v5116, %v5264
    %5266 = vdwg.mxu0
    %v5267 = vmax.f32 %v5196, 0.0
    %v5268 = vmax.f32 %v5198, 0.0
    %v5269 = vmax.f32 %v5249, 0.0
    %v5270 = vmax.f32 %v5251, 0.0
    %v5271 = vmax.f32 %v5200, 0.0
    %v5272 = vmax.f32 %v5202, 0.0
    %v5273 = vmax.f32 %v5253, 0.0
    %v5274 = vmax.f32 %v5255, 0.0
    %v5275 = vmax.f32 %v5206, 0.0
    %v5276 = vmax.f32 %v5208, 0.0
    %v5277 = vmax.f32 %v5259, 0.0
    %v5278 = vmax.f32 %v5261, 0.0
    %v5279 = vmax.f32 %v5210, 0.0
    %v5280 = vmax.f32 %v5212, 0.0
    %v5281 = vmax.f32 %v5263, 0.0
    %v5282 = vmax.f32 %v5265, 0.0
    %v5283 = vpack.c.bf16 %v5271, %v5267
    %v5284 = vpack.c.bf16 %v5272, %v5268
    %v5285 = vpack.c.bf16 %v5273, %v5269
    %v5286 = vpack.c.bf16 %v5274, %v5270
    %v5287 = vpack.c.bf16 %v5279, %v5275
    %v5288 = vpack.c.bf16 %v5280, %v5276
    %v5289 = vpack.c.bf16 %v5281, %v5277
    %v5290 = vpack.c.bf16 %v5282, %v5278
    %v5291 = vld [vmem:[%s5026 + $0x100] sm:$0xf]
    %v5292 = vld [vmem:[%s5026 + $0x104] sm:$0xf]
    %v5293 = vld [vmem:[%s5026 + $0x108] sm:$0xf]
    %v5294 = vld [vmem:[%s5026 + $0x10c] sm:$0xf]
    %v5295 = vld [vmem:[%s5026 + $0x110] sm:$0xf]
    %v5296 = vld [vmem:[%s5026 + $0x114] sm:$0xf]
    %v5297 = vld [vmem:[%s5026 + $0x118] sm:$0xf]
    %v5298 = vld [vmem:[%s5026 + $0x11c] sm:$0xf]
    %v5299 = vld [vmem:[%s5026 + $0x120] sm:$0xf]
    %v5300 = vld [vmem:[%s5026 + $0x124] sm:$0xf]
    %v5301 = vld [vmem:[%s5026 + $0x128] sm:$0xf]
    %v5302 = vld [vmem:[%s5026 + $0x12c] sm:$0xf]
    %v5303 = vld [vmem:[%s5026 + $0x130] sm:$0xf]
    %v5304 = vld [vmem:[%s5026 + $0x134] sm:$0xf]
    %v5305 = vld [vmem:[%s5026 + $0x138] sm:$0xf]
    %v5306 = vld [vmem:[%s5026 + $0x13c] sm:$0xf]
    %v5307 = vld [vmem:[%s5026 + $0x140] sm:$0xf]
    %v5308 = vld [vmem:[%s5026 + $0x144] sm:$0xf]
    %v5309 = vld [vmem:[%s5026 + $0x148] sm:$0xf]
    %v5310 = vld [vmem:[%s5026 + $0x14c] sm:$0xf]
    %v5311 = vld [vmem:[%s5026 + $0x150] sm:$0xf]
    %v5312 = vld [vmem:[%s5026 + $0x154] sm:$0xf]
    %v5313 = vld [vmem:[%s5026 + $0x158] sm:$0xf]
    %v5314 = vld [vmem:[%s5026 + $0x15c] sm:$0xf]
    %v5315 = vld [vmem:[%s5026 + $0x160] sm:$0xf]
    %v5316 = vld [vmem:[%s5026 + $0x164] sm:$0xf]
    %v5317 = vld [vmem:[%s5026 + $0x168] sm:$0xf]
    %v5318 = vld [vmem:[%s5026 + $0x16c] sm:$0xf]
    %v5319 = vld [vmem:[%s5026 + $0x170] sm:$0xf]
    %v5320 = vld [vmem:[%s5026 + $0x174] sm:$0xf]
    %v5321 = vld [vmem:[%s5026 + $0x178] sm:$0xf]
    %v5322 = vld [vmem:[%s5026 + $0x17c] sm:$0xf]
    %v5323 = vld [vmem:[%s5026 + $0x180] sm:$0xf]
    %v5324 = vld [vmem:[%s5026 + $0x184] sm:$0xf]
    %v5325 = vld [vmem:[%s5026 + $0x188] sm:$0xf]
    %v5326 = vld [vmem:[%s5026 + $0x18c] sm:$0xf]
    %v5327 = vld [vmem:[%s5026 + $0x190] sm:$0xf]
    %v5328 = vld [vmem:[%s5026 + $0x194] sm:$0xf]
    %v5329 = vld [vmem:[%s5026 + $0x198] sm:$0xf]
    %v5330 = vld [vmem:[%s5026 + $0x19c] sm:$0xf]
    %v5331 = vld [vmem:[%s5026 + $0x1a0] sm:$0xf]
    %v5332 = vld [vmem:[%s5026 + $0x1a4] sm:$0xf]
    %v5333 = vld [vmem:[%s5026 + $0x1a8] sm:$0xf]
    %v5334 = vld [vmem:[%s5026 + $0x1ac] sm:$0xf]
    %v5335 = vld [vmem:[%s5026 + $0x1b0] sm:$0xf]
    %v5336 = vld [vmem:[%s5026 + $0x1b4] sm:$0xf]
    %v5337 = vld [vmem:[%s5026 + $0x1b8] sm:$0xf]
    %v5338 = vld [vmem:[%s5026 + $0x1bc] sm:$0xf]
    %v5339 = vld [vmem:[%s5026 + $0x1c0] sm:$0xf]
    %v5340 = vld [vmem:[%s5026 + $0x1c4] sm:$0xf]
    %v5341 = vld [vmem:[%s5026 + $0x1c8] sm:$0xf]
    %v5342 = vld [vmem:[%s5026 + $0x1cc] sm:$0xf]
    %v5343 = vld [vmem:[%s5026 + $0x1d0] sm:$0xf]
    %v5344 = vld [vmem:[%s5026 + $0x1d4] sm:$0xf]
    %v5345 = vld [vmem:[%s5026 + $0x1d8] sm:$0xf]
    %v5346 = vld [vmem:[%s5026 + $0x1dc] sm:$0xf]
    %v5347 = vld [vmem:[%s5026 + $0x1e0] sm:$0xf]
    %v5348 = vld [vmem:[%s5026 + $0x1e4] sm:$0xf]
    %v5349 = vld [vmem:[%s5026 + $0x1e8] sm:$0xf]
    %v5350 = vld [vmem:[%s5026 + $0x1ec] sm:$0xf]
    %v5351 = vld [vmem:[%s5026 + $0x1f0] sm:$0xf]
    %v5352 = vld [vmem:[%s5026 + $0x1f4] sm:$0xf]
    %v5353 = vld [vmem:[%s5026 + $0x1f8] sm:$0xf]
    %v5354 = vld [vmem:[%s5026 + $0x1fc] sm:$0xf]
    %v5419 = vunpack.c.l.b16 %v5291
    %v5420 = vunpack.c.l.b16 %v5292
    %v5421 = vunpack.c.l.b16 %v5293
    %v5422 = vunpack.c.l.b16 %v5294
    %v5423 = vunpack.c.l.b16 %v5295
    %v5424 = vunpack.c.l.b16 %v5296
    %v5425 = vunpack.c.l.b16 %v5297
    %v5426 = vunpack.c.l.b16 %v5298
    %v5427 = vunpack.c.l.b16 %v5299
    %v5428 = vunpack.c.l.b16 %v5300
    %v5429 = vunpack.c.l.b16 %v5301
    %v5430 = vunpack.c.l.b16 %v5302
    %v5431 = vunpack.c.l.b16 %v5303
    %v5432 = vunpack.c.l.b16 %v5304
    %v5433 = vunpack.c.l.b16 %v5305
    %v5434 = vunpack.c.l.b16 %v5306
    %v5435 = vunpack.c.l.b16 %v5307
    %v5436 = vunpack.c.l.b16 %v5308
    %v5437 = vunpack.c.l.b16 %v5309
    %v5438 = vunpack.c.l.b16 %v5310
    %v5439 = vunpack.c.l.b16 %v5311
    %v5440 = vunpack.c.l.b16 %v5312
    %v5441 = vunpack.c.l.b16 %v5313
    %v5442 = vunpack.c.l.b16 %v5314
    %v5443 = vunpack.c.l.b16 %v5315
    %v5444 = vunpack.c.l.b16 %v5316
    %v5445 = vunpack.c.l.b16 %v5317
    %v5446 = vunpack.c.l.b16 %v5318
    %v5447 = vunpack.c.l.b16 %v5319
    %v5448 = vunpack.c.l.b16 %v5320
    %v5449 = vunpack.c.l.b16 %v5321
    %v5450 = vunpack.c.l.b16 %v5322
    %v5451 = vunpack.c.l.b16 %v5323
    %v5452 = vunpack.c.l.b16 %v5324
    %v5453 = vunpack.c.l.b16 %v5325
    %v5454 = vunpack.c.l.b16 %v5326
    %v5455 = vunpack.c.l.b16 %v5327
    %v5456 = vunpack.c.l.b16 %v5328
    %v5457 = vunpack.c.l.b16 %v5329
    %v5458 = vunpack.c.l.b16 %v5330
    %v5459 = vunpack.c.l.b16 %v5331
    %v5460 = vunpack.c.l.b16 %v5332
    %v5461 = vunpack.c.l.b16 %v5333
    %v5462 = vunpack.c.l.b16 %v5334
    %v5463 = vunpack.c.l.b16 %v5335
    %v5464 = vunpack.c.l.b16 %v5336
    %v5465 = vunpack.c.l.b16 %v5337
    %v5466 = vunpack.c.l.b16 %v5338
    %v5467 = vunpack.c.l.b16 %v5339
    %v5468 = vunpack.c.l.b16 %v5340
    %v5469 = vunpack.c.l.b16 %v5341
    %v5470 = vunpack.c.l.b16 %v5342
    %v5471 = vunpack.c.l.b16 %v5343
    %v5472 = vunpack.c.l.b16 %v5344
    %v5473 = vunpack.c.l.b16 %v5345
    %v5474 = vunpack.c.l.b16 %v5346
    %v5475 = vunpack.c.l.b16 %v5347
    %v5476 = vunpack.c.l.b16 %v5348
    %v5477 = vunpack.c.l.b16 %v5349
    %v5478 = vunpack.c.l.b16 %v5350
    %v5479 = vunpack.c.l.b16 %v5351
    %v5480 = vunpack.c.l.b16 %v5352
    %v5481 = vunpack.c.l.b16 %v5353
    %v5482 = vunpack.c.l.b16 %v5354
    %v5483 = vpack.c.b16 %v5420, %v5419
    %v5484 = vpack.c.b16 %v5422, %v5421
    %v5485 = vpack.c.b16 %v5424, %v5423
    %v5486 = vpack.c.b16 %v5426, %v5425
    %v5487 = vpack.c.b16 %v5428, %v5427
    %v5488 = vpack.c.b16 %v5430, %v5429
    %v5489 = vpack.c.b16 %v5432, %v5431
    %v5490 = vpack.c.b16 %v5434, %v5433
    %v5491 = vpack.c.b16 %v5436, %v5435
    %v5492 = vpack.c.b16 %v5438, %v5437
    %v5493 = vpack.c.b16 %v5440, %v5439
    %v5494 = vpack.c.b16 %v5442, %v5441
    %v5495 = vpack.c.b16 %v5444, %v5443
    %v5496 = vpack.c.b16 %v5446, %v5445
    %v5497 = vpack.c.b16 %v5448, %v5447
    %v5498 = vpack.c.b16 %v5450, %v5449
    %v5499 = vpack.c.b16 %v5452, %v5451
    %v5500 = vpack.c.b16 %v5454, %v5453
    %v5501 = vpack.c.b16 %v5456, %v5455
    %v5502 = vpack.c.b16 %v5458, %v5457
    %v5503 = vpack.c.b16 %v5460, %v5459
    %v5504 = vpack.c.b16 %v5462, %v5461
    %v5505 = vpack.c.b16 %v5464, %v5463
    %v5506 = vpack.c.b16 %v5466, %v5465
    %v5507 = vpack.c.b16 %v5468, %v5467
    %v5508 = vpack.c.b16 %v5470, %v5469
    %v5509 = vpack.c.b16 %v5472, %v5471
    %v5510 = vpack.c.b16 %v5474, %v5473
    %v5511 = vpack.c.b16 %v5476, %v5475
    %v5512 = vpack.c.b16 %v5478, %v5477
    %v5513 = vpack.c.b16 %v5480, %v5479
    %v5514 = vpack.c.b16 %v5482, %v5481
    %5547 = vmatprep.subr.bf16.mxu0 0
    %5548 = vmatpush1.bf16.msra.mxu0 %v5483
    %5549 = vmatprep.subr.bf16.mxu0 0
    %5550 = vmatpush1.bf16.msra.mxu0 %v5484
    %5551 = vmatprep.subr.bf16.mxu0 0
    %5552 = vmatpush1.bf16.msra.mxu0 %v5485
    %5553 = vmatprep.subr.bf16.mxu0 0
    %5554 = vmatpush1.bf16.msra.mxu0 %v5486
    %5555 = vmatprep.subr.bf16.mxu0 0
    %5556 = vmatpush1.bf16.msra.mxu0 %v5487
    %5557 = vmatprep.subr.bf16.mxu0 0
    %5558 = vmatpush1.bf16.msra.mxu0 %v5488
    %5559 = vmatprep.subr.bf16.mxu0 0
    %5560 = vmatpush1.bf16.msra.mxu0 %v5489
    %5561 = vmatprep.subr.bf16.mxu0 0
    %5562 = vmatpush1.bf16.msra.mxu0 %v5490
    %5563 = vmatprep.subr.bf16.mxu0 0
    %5564 = vmatpush1.bf16.msra.mxu0 %v5491
    %5565 = vmatprep.subr.bf16.mxu0 0
    %5566 = vmatpush1.bf16.msra.mxu0 %v5492
    %5567 = vmatprep.subr.bf16.mxu0 0
    %5568 = vmatpush1.bf16.msra.mxu0 %v5493
    %5569 = vmatprep.subr.bf16.mxu0 0
    %5570 = vmatpush1.bf16.msra.mxu0 %v5494
    %5571 = vmatprep.subr.bf16.mxu0 0
    %5572 = vmatpush1.bf16.msra.mxu0 %v5495
    %5573 = vmatprep.subr.bf16.mxu0 0
    %5574 = vmatpush1.bf16.msra.mxu0 %v5496
    %5575 = vmatprep.subr.bf16.mxu0 0
    %5576 = vmatpush1.bf16.msra.mxu0 %v5497
    %5577 = vmatprep.subr.bf16.mxu0 0
    %5578 = vmatpush1.bf16.msra.mxu0 %v5498
    %5579 = vmatprep.mubr.bf16.mxu0 %v5284
    %5580 = vmatmul.mubr.bf16.gmra.mrb[0].mxu0 %v5283
    %v5581 = vpop.f32.mrb[0].mxu0
    %v5582 = vpop.f32.mrb[0].mxu0
    %v5583 = vpop.f32.mrb[0].mxu0
    %v5584 = vpop.f32.mrb[0].mxu0
    %5585 = vmatprep.mubr.bf16.mxu0 %v5288
    %5586 = vmatmul.mubr.bf16.gmra.mrb[0].mxu0 %v5287
    %v5587 = vpop.f32.mrb[0].mxu0
    %v5588 = vpop.f32.mrb[0].mxu0
    %v5589 = vpop.f32.mrb[0].mxu0
    %v5590 = vadd.f32 0.0, %v5589
    %v5591 = vpop.f32.mrb[0].mxu0
    %5592 = vdwg.mxu0
    %5593 = vmatprep.subr.bf16.mxu0 0
    %5594 = vmatpush1.bf16.msra.mxu0 %v5499
    %5595 = vmatprep.subr.bf16.mxu0 0
    %5596 = vmatpush1.bf16.msra.mxu0 %v5500
    %5597 = vmatprep.subr.bf16.mxu0 0
    %5598 = vmatpush1.bf16.msra.mxu0 %v5501
    %5599 = vmatprep.subr.bf16.mxu0 0
    %5600 = vmatpush1.bf16.msra.mxu0 %v5502
    %5601 = vmatprep.subr.bf16.mxu0 0
    %5602 = vmatpush1.bf16.msra.mxu0 %v5503
    %5603 = vmatprep.subr.bf16.mxu0 0
    %5604 = vmatpush1.bf16.msra.mxu0 %v5504
    %5605 = vmatprep.subr.bf16.mxu0 0
    %5606 = vmatpush1.bf16.msra.mxu0 %v5505
    %5607 = vmatprep.subr.bf16.mxu0 0
    %5608 = vmatpush1.bf16.msra.mxu0 %v5506
    %5609 = vmatprep.subr.bf16.mxu0 0
    %5610 = vmatpush1.bf16.msra.mxu0 %v5507
    %5611 = vmatprep.subr.bf16.mxu0 0
    %5612 = vmatpush1.bf16.msra.mxu0 %v5508
    %5613 = vmatprep.subr.bf16.mxu0 0
    %5614 = vmatpush1.bf16.msra.mxu0 %v5509
    %5615 = vmatprep.subr.bf16.mxu0 0
    %5616 = vmatpush1.bf16.msra.mxu0 %v5510
    %5617 = vmatprep.subr.bf16.mxu0 0
    %5618 = vmatpush1.bf16.msra.mxu0 %v5511
    %5619 = vmatprep.subr.bf16.mxu0 0
    %5620 = vmatpush1.bf16.msra.mxu0 %v5512
    %5621 = vmatprep.subr.bf16.mxu0 0
    %5622 = vmatpush1.bf16.msra.mxu0 %v5513
    %5623 = vmatprep.subr.bf16.mxu0 0
    %5624 = vmatpush1.bf16.msra.mxu0 %v5514
    %5625 = vmatprep.mubr.bf16.mxu0 %v5286
    %5626 = vmatmul.mubr.bf16.gmra.mrb[0].mxu0 %v5285
    %v5627 = vpop.f32.mrb[0].mxu0
    %v5628 = vpop.f32.mrb[0].mxu0
    %v5629 = vpop.f32.mrb[0].mxu0
    %v5630 = vpop.f32.mrb[0].mxu0
    %5631 = vmatprep.mubr.bf16.mxu0 %v5290
    %5632 = vmatmul.mubr.bf16.gmra.mrb[0].mxu0 %v5289
    %v5633 = vpop.f32.mrb[0].mxu0
    %v5634 = vpop.f32.mrb[0].mxu0
    %v5635 = vpop.f32.mrb[0].mxu0
    %v5636 = vadd.f32 %v5590, %v5635
    %v5637 = vpop.f32.mrb[0].mxu0
    %5638 = vdwg.mxu0
    %v5703 = vunpack.c.l.b16 %v5027
    %v5704 = vunpack.c.l.b16 %v5028
    %v5705 = vunpack.c.l.b16 %v5029
    %v5706 = vunpack.c.l.b16 %v5030
    %v5707 = vunpack.c.l.b16 %v5031
    %v5708 = vunpack.c.l.b16 %v5032
    %v5709 = vunpack.c.l.b16 %v5033
    %v5710 = vunpack.c.l.b16 %v5034
    %v5711 = vunpack.c.l.b16 %v5035
    %v5712 = vunpack.c.l.b16 %v5036
    %v5713 = vunpack.c.l.b16 %v5037
    %v5714 = vunpack.c.l.b16 %v5038
    %v5715 = vunpack.c.l.b16 %v5039
    %v5716 = vunpack.c.l.b16 %v5040
    %v5717 = vunpack.c.l.b16 %v5041
    %v5718 = vunpack.c.l.b16 %v5042
    %v5719 = vunpack.c.l.b16 %v5043
    %v5720 = vunpack.c.l.b16 %v5044
    %v5721 = vunpack.c.l.b16 %v5045
    %v5722 = vunpack.c.l.b16 %v5046
    %v5723 = vunpack.c.l.b16 %v5047
    %v5724 = vunpack.c.l.b16 %v5048
    %v5725 = vunpack.c.l.b16 %v5049
    %v5726 = vunpack.c.l.b16 %v5050
    %v5727 = vunpack.c.l.b16 %v5051
    %v5728 = vunpack.c.l.b16 %v5052
    %v5729 = vunpack.c.l.b16 %v5053
    %v5730 = vunpack.c.l.b16 %v5054
    %v5731 = vunpack.c.l.b16 %v5055
    %v5732 = vunpack.c.l.b16 %v5056
    %v5733 = vunpack.c.l.b16 %v5057
    %v5734 = vunpack.c.l.b16 %v5058
    %v5735 = vunpack.c.l.b16 %v5059
    %v5736 = vunpack.c.l.b16 %v5060
    %v5737 = vunpack.c.l.b16 %v5061
    %v5738 = vunpack.c.l.b16 %v5062
    %v5739 = vunpack.c.l.b16 %v5063
    %v5740 = vunpack.c.l.b16 %v5064
    %v5741 = vunpack.c.l.b16 %v5065
    %v5742 = vunpack.c.l.b16 %v5066
    %v5743 = vunpack.c.l.b16 %v5067
    %v5744 = vunpack.c.l.b16 %v5068
    %v5745 = vunpack.c.l.b16 %v5069
    %v5746 = vunpack.c.l.b16 %v5070
    %v5747 = vunpack.c.l.b16 %v5071
    %v5748 = vunpack.c.l.b16 %v5072
    %v5749 = vunpack.c.l.b16 %v5073
    %v5750 = vunpack.c.l.b16 %v5074
    %v5751 = vunpack.c.l.b16 %v5075
    %v5752 = vunpack.c.l.b16 %v5076
    %v5753 = vunpack.c.l.b16 %v5077
    %v5754 = vunpack.c.l.b16 %v5078
    %v5755 = vunpack.c.l.b16 %v5079
    %v5756 = vunpack.c.l.b16 %v5080
    %v5757 = vunpack.c.l.b16 %v5081
    %v5758 = vunpack.c.l.b16 %v5082
    %v5759 = vunpack.c.l.b16 %v5083
    %v5760 = vunpack.c.l.b16 %v5084
    %v5761 = vunpack.c.l.b16 %v5085
    %v5762 = vunpack.c.l.b16 %v5086
    %v5763 = vunpack.c.l.b16 %v5087
    %v5764 = vunpack.c.l.b16 %v5088
    %v5765 = vunpack.c.l.b16 %v5089
    %v5766 = vunpack.c.l.b16 %v5090
    %v5767 = vpack.c.b16 %v5704, %v5703
    %v5768 = vpack.c.b16 %v5706, %v5705
    %v5769 = vpack.c.b16 %v5708, %v5707
    %v5770 = vpack.c.b16 %v5710, %v5709
    %v5771 = vpack.c.b16 %v5712, %v5711
    %v5772 = vpack.c.b16 %v5714, %v5713
    %v5773 = vpack.c.b16 %v5716, %v5715
    %v5774 = vpack.c.b16 %v5718, %v5717
    %v5775 = vpack.c.b16 %v5720, %v5719
    %v5776 = vpack.c.b16 %v5722, %v5721
    %v5777 = vpack.c.b16 %v5724, %v5723
    %v5778 = vpack.c.b16 %v5726, %v5725
    %v5779 = vpack.c.b16 %v5728, %v5727
    %v5780 = vpack.c.b16 %v5730, %v5729
    %v5781 = vpack.c.b16 %v5732, %v5731
    %v5782 = vpack.c.b16 %v5734, %v5733
    %v5783 = vpack.c.b16 %v5736, %v5735
    %v5784 = vpack.c.b16 %v5738, %v5737
    %v5785 = vpack.c.b16 %v5740, %v5739
    %v5786 = vpack.c.b16 %v5742, %v5741
    %v5787 = vpack.c.b16 %v5744, %v5743
    %v5788 = vpack.c.b16 %v5746, %v5745
    %v5789 = vpack.c.b16 %v5748, %v5747
    %v5790 = vpack.c.b16 %v5750, %v5749
    %v5791 = vpack.c.b16 %v5752, %v5751
    %v5792 = vpack.c.b16 %v5754, %v5753
    %v5793 = vpack.c.b16 %v5756, %v5755
    %v5794 = vpack.c.b16 %v5758, %v5757
    %v5795 = vpack.c.b16 %v5760, %v5759
    %v5796 = vpack.c.b16 %v5762, %v5761
    %v5797 = vpack.c.b16 %v5764, %v5763
    %v5798 = vpack.c.b16 %v5766, %v5765
    %5831 = vmatprep.subr.bf16.mxu0 0
    %5832 = vmatpush1.bf16.msra.mxu0 %v5767
    %5833 = vmatprep.subr.bf16.mxu0 0
    %5834 = vmatpush1.bf16.msra.mxu0 %v5768
    %5835 = vmatprep.subr.bf16.mxu0 0
    %5836 = vmatpush1.bf16.msra.mxu0 %v5769
    %5837 = vmatprep.subr.bf16.mxu0 0
    %5838 = vmatpush1.bf16.msra.mxu0 %v5770
    %5839 = vmatprep.subr.bf16.mxu0 0
    %5840 = vmatpush1.bf16.msra.mxu0 %v5771
    %5841 = vmatprep.subr.bf16.mxu0 0
    %5842 = vmatpush1.bf16.msra.mxu0 %v5772
    %5843 = vmatprep.subr.bf16.mxu0 0
    %5844 = vmatpush1.bf16.msra.mxu0 %v5773
    %5845 = vmatprep.subr.bf16.mxu0 0
    %5846 = vmatpush1.bf16.msra.mxu0 %v5774
    %5847 = vmatprep.subr.bf16.mxu0 0
    %5848 = vmatpush1.bf16.msra.mxu0 %v5775
    %5849 = vmatprep.subr.bf16.mxu0 0
    %5850 = vmatpush1.bf16.msra.mxu0 %v5776
    %5851 = vmatprep.subr.bf16.mxu0 0
    %5852 = vmatpush1.bf16.msra.mxu0 %v5777
    %5853 = vmatprep.subr.bf16.mxu0 0
    %5854 = vmatpush1.bf16.msra.mxu0 %v5778
    %5855 = vmatprep.subr.bf16.mxu0 0
    %5856 = vmatpush1.bf16.msra.mxu0 %v5779
    %5857 = vmatprep.subr.bf16.mxu0 0
    %5858 = vmatpush1.bf16.msra.mxu0 %v5780
    %5859 = vmatprep.subr.bf16.mxu0 0
    %5860 = vmatpush1.bf16.msra.mxu0 %v5781
    %5861 = vmatprep.subr.bf16.mxu0 0
    %5862 = vmatpush1.bf16.msra.mxu0 %v5782
    %5863 = vmatprep.mubr.bf16.mxu0 %v5019
    %5864 = vmatmul.mubr.bf16.gmra.mrb[0].mxu0 %v5018
    %v5865 = vpop.f32.mrb[0].mxu0
    %v5866 = vpop.f32.mrb[0].mxu0
    %v5867 = vpop.f32.mrb[0].mxu0
    %v5868 = vpop.f32.mrb[0].mxu0
    %5869 = vmatprep.mubr.bf16.mxu0 %v5023
    %5870 = vmatmul.mubr.bf16.gmra.mrb[0].mxu0 %v5022
    %v5871 = vpop.f32.mrb[0].mxu0
    %v5872 = vpop.f32.mrb[0].mxu0
    %v5873 = vpop.f32.mrb[0].mxu0
    %v5874 = vadd.f32 %v5636, %v5873
    %v5875 = vpop.f32.mrb[0].mxu0
    %5876 = vdwg.mxu0
    %5877 = vmatprep.subr.bf16.mxu0 0
    %5878 = vmatpush1.bf16.msra.mxu0 %v5783
    %5879 = vmatprep.subr.bf16.mxu0 0
    %5880 = vmatpush1.bf16.msra.mxu0 %v5784
    %5881 = vmatprep.subr.bf16.mxu0 0
    %5882 = vmatpush1.bf16.msra.mxu0 %v5785
    %5883 = vmatprep.subr.bf16.mxu0 0
    %5884 = vmatpush1.bf16.msra.mxu0 %v5786
    %5885 = vmatprep.subr.bf16.mxu0 0
    %5886 = vmatpush1.bf16.msra.mxu0 %v5787
    %5887 = vmatprep.subr.bf16.mxu0 0
    %5888 = vmatpush1.bf16.msra.mxu0 %v5788
    %5889 = vmatprep.subr.bf16.mxu0 0
    %5890 = vmatpush1.bf16.msra.mxu0 %v5789
    %5891 = vmatprep.subr.bf16.mxu0 0
    %5892 = vmatpush1.bf16.msra.mxu0 %v5790
    %5893 = vmatprep.subr.bf16.mxu0 0
    %5894 = vmatpush1.bf16.msra.mxu0 %v5791
    %5895 = vmatprep.subr.bf16.mxu0 0
    %5896 = vmatpush1.bf16.msra.mxu0 %v5792
    %5897 = vmatprep.subr.bf16.mxu0 0
    %5898 = vmatpush1.bf16.msra.mxu0 %v5793
    %5899 = vmatprep.subr.bf16.mxu0 0
    %5900 = vmatpush1.bf16.msra.mxu0 %v5794
    %5901 = vmatprep.subr.bf16.mxu0 0
    %5902 = vmatpush1.bf16.msra.mxu0 %v5795
    %5903 = vmatprep.subr.bf16.mxu0 0
    %5904 = vmatpush1.bf16.msra.mxu0 %v5796
    %5905 = vmatprep.subr.bf16.mxu0 0
    %5906 = vmatpush1.bf16.msra.mxu0 %v5797
    %5907 = vmatprep.subr.bf16.mxu0 0
    %5908 = vmatpush1.bf16.msra.mxu0 %v5798
    %5909 = vmatprep.mubr.bf16.mxu0 %v5021
    %5910 = vmatmul.mubr.bf16.gmra.mrb[0].mxu0 %v5020
    %v5911 = vpop.f32.mrb[0].mxu0
    %v5912 = vpop.f32.mrb[0].mxu0
    %v5913 = vpop.f32.mrb[0].mxu0
    %v5914 = vpop.f32.mrb[0].mxu0
    %5915 = vmatprep.mubr.bf16.mxu0 %v5025
    %5916 = vmatmul.mubr.bf16.gmra.mrb[0].mxu0 %v5024
    %v5917 = vpop.f32.mrb[0].mxu0
    %v5918 = vpop.f32.mrb[0].mxu0
    %v5919 = vpop.f32.mrb[0].mxu0
    %v5920 = vadd.f32 %v5874, %v5919
    %v5921 = vpop.f32.mrb[0].mxu0
    %5922 = vdwg.mxu0
    %v5923 = vld [vmem:[%s4818 + $0x20] sm:$0xff]
    %v5924 = vld [vmem:[%s4818 + $0x28] sm:$0xff]
    %v5925 = vld [vmem:[%s4818 + $0x60] sm:$0xff]
    %v5926 = vld [vmem:[%s4818 + $0x68] sm:$0xff]
    %v5927 = vld [vmem:[%s4818 + $0xa0] sm:$0xff]
    %v5928 = vld [vmem:[%s4818 + $0xa8] sm:$0xff]
    %v5929 = vld [vmem:[%s4818 + $0xe0] sm:$0xff]
    %v5930 = vld [vmem:[%s4818 + $0xe8] sm:$0xff]
    %v5931 = vld [vmem:[%s4827 + $0x8] sm:$0xf]
    %v5933 = vlaneseq
    %v5934 = vshrl.u32 %v5933, 7
    %v5935 = vsub.s32 0, %v5934
    %v5936 = vrot.slane %v5931, %v5935
    %v5937 = vlaneseq
    %v5938 = vshrl.u32 %v5937, 7
    %v5939 = vsub.s32 1, %v5938
    %v5940 = vrot.slane %v5931, %v5939
    %v5941 = vlaneseq
    %v5942 = vshrl.u32 %v5941, 7
    %v5943 = vsub.s32 2, %v5942
    %v5944 = vrot.slane %v5931, %v5943
    %v5945 = vlaneseq
    %v5946 = vshrl.u32 %v5945, 7
    %v5947 = vsub.s32 3, %v5946
    %v5948 = vrot.slane %v5931, %v5947
    %v5961 = vunpack.c.l.b16 %v5923
    %v5962 = vunpack.c.h.b16 %v5923
    %v5963 = vunpack.c.l.b16 %v5924
    %v5964 = vunpack.c.h.b16 %v5924
    %v5965 = vunpack.c.l.b16 %v5925
    %v5966 = vunpack.c.h.b16 %v5925
    %v5967 = vunpack.c.l.b16 %v5926
    %v5968 = vunpack.c.h.b16 %v5926
    %v5969 = vunpack.c.l.b16 %v5927
    %v5970 = vunpack.c.h.b16 %v5927
    %v5971 = vunpack.c.l.b16 %v5928
    %v5972 = vunpack.c.h.b16 %v5928
    %v5973 = vunpack.c.l.b16 %v5929
    %v5974 = vunpack.c.h.b16 %v5929
    %v5975 = vunpack.c.l.b16 %v5930
    %v5976 = vunpack.c.h.b16 %v5930
    %v5977 = vpack.c.b16 %v5965, %v5961
    %v5978 = vpack.c.b16 %v5966, %v5962
    %v5979 = vpack.c.b16 %v5967, %v5963
    %v5980 = vpack.c.b16 %v5968, %v5964
    %v5981 = vpack.c.b16 %v5973, %v5969
    %v5982 = vpack.c.b16 %v5974, %v5970
    %v5983 = vpack.c.b16 %v5975, %v5971
    %v5984 = vpack.c.b16 %v5976, %v5972
    %5993 = vmatprep.subr.bf16.mxu0 %v5978
    %5994 = vmatpush1.bf16.msra.mxu0 %v5977
    %5995 = vmatprep.subr.bf16.mxu0 %v5982
    %5996 = vmatpush1.bf16.msra.mxu0 %v5981
    %5997 = vmatprep.subr.bf16.mxu0 0
    %5998 = vmatpush1.bf16.msra.mxu0 0
    %5999 = vmatprep.subr.bf16.mxu0 0
    %6000 = vmatpush1.bf16.msra.mxu0 0
    %6001 = vmatprep.subr.bf16.mxu0 0
    %6002 = vmatpush1.bf16.msra.mxu0 0
    %6003 = vmatprep.subr.bf16.mxu0 0
    %6004 = vmatpush1.bf16.msra.mxu0 0
    %6005 = vmatprep.subr.bf16.mxu0 0
    %6006 = vmatpush1.bf16.msra.mxu0 0
    %6007 = vmatprep.subr.bf16.mxu0 0
    %6008 = vmatpush1.bf16.msra.mxu0 0
    %6009 = vmatprep.subr.bf16.mxu0 0
    %6010 = vmatpush1.bf16.msra.mxu0 0
    %6011 = vmatprep.subr.bf16.mxu0 0
    %6012 = vmatpush1.bf16.msra.mxu0 0
    %6013 = vmatprep.subr.bf16.mxu0 0
    %6014 = vmatpush1.bf16.msra.mxu0 0
    %6015 = vmatprep.subr.bf16.mxu0 0
    %6016 = vmatpush1.bf16.msra.mxu0 0
    %6017 = vmatprep.subr.bf16.mxu0 0
    %6018 = vmatpush1.bf16.msra.mxu0 0
    %6019 = vmatprep.subr.bf16.mxu0 0
    %6020 = vmatpush1.bf16.msra.mxu0 0
    %6021 = vmatprep.subr.bf16.mxu0 0
    %6022 = vmatpush1.bf16.msra.mxu0 0
    %6023 = vmatprep.subr.bf16.mxu0 0
    %6024 = vmatpush1.bf16.msra.mxu0 0
    %6025 = vmatprep.mubr.bf16.mxu0 0
    %6026 = vmatmul.mubr.bf16.gmra.mrb[0].mxu0 %v4891
    %v6027 = vpop.f32.mrb[0].mxu0
    %v6028 = vadd.f32 %v5936, %v6027
    %v6029 = vpop.f32.mrb[0].mxu0
    %v6030 = vadd.f32 %v5940, %v6029
    %v6031 = vpop.f32.mrb[0].mxu0
    %v6032 = vadd.f32 %v5936, %v6031
    %v6033 = vpop.f32.mrb[0].mxu0
    %v6034 = vadd.f32 %v5940, %v6033
    %6035 = vmatprep.mubr.bf16.mxu0 0
    %6036 = vmatmul.mubr.bf16.gmra.mrb[0].mxu0 %v4894
    %v6037 = vpop.f32.mrb[0].mxu0
    %v6038 = vadd.f32 %v5936, %v6037
    %v6039 = vpop.f32.mrb[0].mxu0
    %v6040 = vadd.f32 %v5940, %v6039
    %v6041 = vpop.f32.mrb[0].mxu0
    %v6042 = vadd.f32 %v5936, %v6041
    %v6043 = vpop.f32.mrb[0].mxu0
    %v6044 = vadd.f32 %v5940, %v6043
    %6045 = vdwg.mxu0
    %6046 = vmatprep.subr.bf16.mxu0 %v5980
    %6047 = vmatpush1.bf16.msra.mxu0 %v5979
    %6048 = vmatprep.subr.bf16.mxu0 %v5984
    %6049 = vmatpush1.bf16.msra.mxu0 %v5983
    %6050 = vmatprep.subr.bf16.mxu0 0
    %6051 = vmatpush1.bf16.msra.mxu0 0
    %6052 = vmatprep.subr.bf16.mxu0 0
    %6053 = vmatpush1.bf16.msra.mxu0 0
    %6054 = vmatprep.subr.bf16.mxu0 0
    %6055 = vmatpush1.bf16.msra.mxu0 0
    %6056 = vmatprep.subr.bf16.mxu0 0
    %6057 = vmatpush1.bf16.msra.mxu0 0
    %6058 = vmatprep.subr.bf16.mxu0 0
    %6059 = vmatpush1.bf16.msra.mxu0 0
    %6060 = vmatprep.subr.bf16.mxu0 0
    %6061 = vmatpush1.bf16.msra.mxu0 0
    %6062 = vmatprep.subr.bf16.mxu0 0
    %6063 = vmatpush1.bf16.msra.mxu0 0
    %6064 = vmatprep.subr.bf16.mxu0 0
    %6065 = vmatpush1.bf16.msra.mxu0 0
    %6066 = vmatprep.subr.bf16.mxu0 0
    %6067 = vmatpush1.bf16.msra.mxu0 0
    %6068 = vmatprep.subr.bf16.mxu0 0
    %6069 = vmatpush1.bf16.msra.mxu0 0
    %6070 = vmatprep.subr.bf16.mxu0 0
    %6071 = vmatpush1.bf16.msra.mxu0 0
    %6072 = vmatprep.subr.bf16.mxu0 0
    %6073 = vmatpush1.bf16.msra.mxu0 0
    %6074 = vmatprep.subr.bf16.mxu0 0
    %6075 = vmatpush1.bf16.msra.mxu0 0
    %6076 = vmatprep.subr.bf16.mxu0 0
    %6077 = vmatpush1.bf16.msra.mxu0 0
    %6078 = vmatprep.mubr.bf16.mxu0 0
    %6079 = vmatmul.mubr.bf16.gmra.mrb[0].mxu0 %v4891
    %v6080 = vpop.f32.mrb[0].mxu0
    %v6081 = vadd.f32 %v5944, %v6080
    %v6082 = vpop.f32.mrb[0].mxu0
    %v6083 = vadd.f32 %v5948, %v6082
    %v6084 = vpop.f32.mrb[0].mxu0
    %v6085 = vadd.f32 %v5944, %v6084
    %v6086 = vpop.f32.mrb[0].mxu0
    %v6087 = vadd.f32 %v5948, %v6086
    %6088 = vmatprep.mubr.bf16.mxu0 0
    %6089 = vmatmul.mubr.bf16.gmra.mrb[0].mxu0 %v4894
    %v6090 = vpop.f32.mrb[0].mxu0
    %v6091 = vadd.f32 %v5944, %v6090
    %v6092 = vpop.f32.mrb[0].mxu0
    %v6093 = vadd.f32 %v5948, %v6092
    %v6094 = vpop.f32.mrb[0].mxu0
    %v6095 = vadd.f32 %v5944, %v6094
    %v6096 = vpop.f32.mrb[0].mxu0
    %v6097 = vadd.f32 %v5948, %v6096
    %6098 = vdwg.mxu0
    %v6099 = vmax.f32 %v6028, 0.0
    %v6100 = vmax.f32 %v6030, 0.0
    %v6101 = vmax.f32 %v6081, 0.0
    %v6102 = vmax.f32 %v6083, 0.0
    %v6103 = vmax.f32 %v6032, 0.0
    %v6104 = vmax.f32 %v6034, 0.0
    %v6105 = vmax.f32 %v6085, 0.0
    %v6106 = vmax.f32 %v6087, 0.0
    %v6107 = vmax.f32 %v6038, 0.0
    %v6108 = vmax.f32 %v6040, 0.0
    %v6109 = vmax.f32 %v6091, 0.0
    %v6110 = vmax.f32 %v6093, 0.0
    %v6111 = vmax.f32 %v6042, 0.0
    %v6112 = vmax.f32 %v6044, 0.0
    %v6113 = vmax.f32 %v6095, 0.0
    %v6114 = vmax.f32 %v6097, 0.0
    %v6115 = vpack.c.bf16 %v6103, %v6099
    %v6116 = vpack.c.bf16 %v6104, %v6100
    %v6117 = vpack.c.bf16 %v6105, %v6101
    %v6118 = vpack.c.bf16 %v6106, %v6102
    %v6119 = vpack.c.bf16 %v6111, %v6107
    %v6120 = vpack.c.bf16 %v6112, %v6108
    %v6121 = vpack.c.bf16 %v6113, %v6109
    %v6122 = vpack.c.bf16 %v6114, %v6110
    %v6123 = vld [vmem:[%s5026 + $0x200] sm:$0xf]
    %v6124 = vld [vmem:[%s5026 + $0x204] sm:$0xf]
    %v6125 = vld [vmem:[%s5026 + $0x208] sm:$0xf]
    %v6126 = vld [vmem:[%s5026 + $0x20c] sm:$0xf]
    %v6127 = vld [vmem:[%s5026 + $0x210] sm:$0xf]
    %v6128 = vld [vmem:[%s5026 + $0x214] sm:$0xf]
    %v6129 = vld [vmem:[%s5026 + $0x218] sm:$0xf]
    %v6130 = vld [vmem:[%s5026 + $0x21c] sm:$0xf]
    %v6131 = vld [vmem:[%s5026 + $0x220] sm:$0xf]
    %v6132 = vld [vmem:[%s5026 + $0x224] sm:$0xf]
    %v6133 = vld [vmem:[%s5026 + $0x228] sm:$0xf]
    %v6134 = vld [vmem:[%s5026 + $0x22c] sm:$0xf]
    %v6135 = vld [vmem:[%s5026 + $0x230] sm:$0xf]
    %v6136 = vld [vmem:[%s5026 + $0x234] sm:$0xf]
    %v6137 = vld [vmem:[%s5026 + $0x238] sm:$0xf]
    %v6138 = vld [vmem:[%s5026 + $0x23c] sm:$0xf]
    %v6139 = vld [vmem:[%s5026 + $0x240] sm:$0xf]
    %v6140 = vld [vmem:[%s5026 + $0x244] sm:$0xf]
    %v6141 = vld [vmem:[%s5026 + $0x248] sm:$0xf]
    %v6142 = vld [vmem:[%s5026 + $0x24c] sm:$0xf]
    %v6143 = vld [vmem:[%s5026 + $0x250] sm:$0xf]
    %v6144 = vld [vmem:[%s5026 + $0x254] sm:$0xf]
    %v6145 = vld [vmem:[%s5026 + $0x258] sm:$0xf]
    %v6146 = vld [vmem:[%s5026 + $0x25c] sm:$0xf]
    %v6147 = vld [vmem:[%s5026 + $0x260] sm:$0xf]
    %v6148 = vld [vmem:[%s5026 + $0x264] sm:$0xf]
    %v6149 = vld [vmem:[%s5026 + $0x268] sm:$0xf]
    %v6150 = vld [vmem:[%s5026 + $0x26c] sm:$0xf]
    %v6151 = vld [vmem:[%s5026 + $0x270] sm:$0xf]
    %v6152 = vld [vmem:[%s5026 + $0x274] sm:$0xf]
    %v6153 = vld [vmem:[%s5026 + $0x278] sm:$0xf]
    %v6154 = vld [vmem:[%s5026 + $0x27c] sm:$0xf]
    %v6155 = vld [vmem:[%s5026 + $0x280] sm:$0xf]
    %v6156 = vld [vmem:[%s5026 + $0x284] sm:$0xf]
    %v6157 = vld [vmem:[%s5026 + $0x288] sm:$0xf]
    %v6158 = vld [vmem:[%s5026 + $0x28c] sm:$0xf]
    %v6159 = vld [vmem:[%s5026 + $0x290] sm:$0xf]
    %v6160 = vld [vmem:[%s5026 + $0x294] sm:$0xf]
    %v6161 = vld [vmem:[%s5026 + $0x298] sm:$0xf]
    %v6162 = vld [vmem:[%s5026 + $0x29c] sm:$0xf]
    %v6163 = vld [vmem:[%s5026 + $0x2a0] sm:$0xf]
    %v6164 = vld [vmem:[%s5026 + $0x2a4] sm:$0xf]
    %v6165 = vld [vmem:[%s5026 + $0x2a8] sm:$0xf]
    %v6166 = vld [vmem:[%s5026 + $0x2ac] sm:$0xf]
    %v6167 = vld [vmem:[%s5026 + $0x2b0] sm:$0xf]
    %v6168 = vld [vmem:[%s5026 + $0x2b4] sm:$0xf]
    %v6169 = vld [vmem:[%s5026 + $0x2b8] sm:$0xf]
    %v6170 = vld [vmem:[%s5026 + $0x2bc] sm:$0xf]
    %v6171 = vld [vmem:[%s5026 + $0x2c0] sm:$0xf]
    %v6172 = vld [vmem:[%s5026 + $0x2c4] sm:$0xf]
    %v6173 = vld [vmem:[%s5026 + $0x2c8] sm:$0xf]
    %v6174 = vld [vmem:[%s5026 + $0x2cc] sm:$0xf]
    %v6175 = vld [vmem:[%s5026 + $0x2d0] sm:$0xf]
    %v6176 = vld [vmem:[%s5026 + $0x2d4] sm:$0xf]
    %v6177 = vld [vmem:[%s5026 + $0x2d8] sm:$0xf]
    %v6178 = vld [vmem:[%s5026 + $0x2dc] sm:$0xf]
    %v6179 = vld [vmem:[%s5026 + $0x2e0] sm:$0xf]
    %v6180 = vld [vmem:[%s5026 + $0x2e4] sm:$0xf]
    %v6181 = vld [vmem:[%s5026 + $0x2e8] sm:$0xf]
    %v6182 = vld [vmem:[%s5026 + $0x2ec] sm:$0xf]
    %v6183 = vld [vmem:[%s5026 + $0x2f0] sm:$0xf]
    %v6184 = vld [vmem:[%s5026 + $0x2f4] sm:$0xf]
    %v6185 = vld [vmem:[%s5026 + $0x2f8] sm:$0xf]
    %v6186 = vld [vmem:[%s5026 + $0x2fc] sm:$0xf]
    %v6251 = vunpack.c.l.b16 %v6123
    %v6252 = vunpack.c.l.b16 %v6124
    %v6253 = vunpack.c.l.b16 %v6125
    %v6254 = vunpack.c.l.b16 %v6126
    %v6255 = vunpack.c.l.b16 %v6127
    %v6256 = vunpack.c.l.b16 %v6128
    %v6257 = vunpack.c.l.b16 %v6129
    %v6258 = vunpack.c.l.b16 %v6130
    %v6259 = vunpack.c.l.b16 %v6131
    %v6260 = vunpack.c.l.b16 %v6132
    %v6261 = vunpack.c.l.b16 %v6133
    %v6262 = vunpack.c.l.b16 %v6134
    %v6263 = vunpack.c.l.b16 %v6135
    %v6264 = vunpack.c.l.b16 %v6136
    %v6265 = vunpack.c.l.b16 %v6137
    %v6266 = vunpack.c.l.b16 %v6138
    %v6267 = vunpack.c.l.b16 %v6139
    %v6268 = vunpack.c.l.b16 %v6140
    %v6269 = vunpack.c.l.b16 %v6141
    %v6270 = vunpack.c.l.b16 %v6142
    %v6271 = vunpack.c.l.b16 %v6143
    %v6272 = vunpack.c.l.b16 %v6144
    %v6273 = vunpack.c.l.b16 %v6145
    %v6274 = vunpack.c.l.b16 %v6146
    %v6275 = vunpack.c.l.b16 %v6147
    %v6276 = vunpack.c.l.b16 %v6148
    %v6277 = vunpack.c.l.b16 %v6149
    %v6278 = vunpack.c.l.b16 %v6150
    %v6279 = vunpack.c.l.b16 %v6151
    %v6280 = vunpack.c.l.b16 %v6152
    %v6281 = vunpack.c.l.b16 %v6153
    %v6282 = vunpack.c.l.b16 %v6154
    %v6283 = vunpack.c.l.b16 %v6155
    %v6284 = vunpack.c.l.b16 %v6156
    %v6285 = vunpack.c.l.b16 %v6157
    %v6286 = vunpack.c.l.b16 %v6158
    %v6287 = vunpack.c.l.b16 %v6159
    %v6288 = vunpack.c.l.b16 %v6160
    %v6289 = vunpack.c.l.b16 %v6161
    %v6290 = vunpack.c.l.b16 %v6162
    %v6291 = vunpack.c.l.b16 %v6163
    %v6292 = vunpack.c.l.b16 %v6164
    %v6293 = vunpack.c.l.b16 %v6165
    %v6294 = vunpack.c.l.b16 %v6166
    %v6295 = vunpack.c.l.b16 %v6167
    %v6296 = vunpack.c.l.b16 %v6168
    %v6297 = vunpack.c.l.b16 %v6169
    %v6298 = vunpack.c.l.b16 %v6170
    %v6299 = vunpack.c.l.b16 %v6171
    %v6300 = vunpack.c.l.b16 %v6172
    %v6301 = vunpack.c.l.b16 %v6173
    %v6302 = vunpack.c.l.b16 %v6174
    %v6303 = vunpack.c.l.b16 %v6175
    %v6304 = vunpack.c.l.b16 %v6176
    %v6305 = vunpack.c.l.b16 %v6177
    %v6306 = vunpack.c.l.b16 %v6178
    %v6307 = vunpack.c.l.b16 %v6179
    %v6308 = vunpack.c.l.b16 %v6180
    %v6309 = vunpack.c.l.b16 %v6181
    %v6310 = vunpack.c.l.b16 %v6182
    %v6311 = vunpack.c.l.b16 %v6183
    %v6312 = vunpack.c.l.b16 %v6184
    %v6313 = vunpack.c.l.b16 %v6185
    %v6314 = vunpack.c.l.b16 %v6186
    %v6315 = vpack.c.b16 %v6252, %v6251
    %v6316 = vpack.c.b16 %v6254, %v6253
    %v6317 = vpack.c.b16 %v6256, %v6255
    %v6318 = vpack.c.b16 %v6258, %v6257
    %v6319 = vpack.c.b16 %v6260, %v6259
    %v6320 = vpack.c.b16 %v6262, %v6261
    %v6321 = vpack.c.b16 %v6264, %v6263
    %v6322 = vpack.c.b16 %v6266, %v6265
    %v6323 = vpack.c.b16 %v6268, %v6267
    %v6324 = vpack.c.b16 %v6270, %v6269
    %v6325 = vpack.c.b16 %v6272, %v6271
    %v6326 = vpack.c.b16 %v6274, %v6273
    %v6327 = vpack.c.b16 %v6276, %v6275
    %v6328 = vpack.c.b16 %v6278, %v6277
    %v6329 = vpack.c.b16 %v6280, %v6279
    %v6330 = vpack.c.b16 %v6282, %v6281
    %v6331 = vpack.c.b16 %v6284, %v6283
    %v6332 = vpack.c.b16 %v6286, %v6285
    %v6333 = vpack.c.b16 %v6288, %v6287
    %v6334 = vpack.c.b16 %v6290, %v6289
    %v6335 = vpack.c.b16 %v6292, %v6291
    %v6336 = vpack.c.b16 %v6294, %v6293
    %v6337 = vpack.c.b16 %v6296, %v6295
    %v6338 = vpack.c.b16 %v6298, %v6297
    %v6339 = vpack.c.b16 %v6300, %v6299
    %v6340 = vpack.c.b16 %v6302, %v6301
    %v6341 = vpack.c.b16 %v6304, %v6303
    %v6342 = vpack.c.b16 %v6306, %v6305
    %v6343 = vpack.c.b16 %v6308, %v6307
    %v6344 = vpack.c.b16 %v6310, %v6309
    %v6345 = vpack.c.b16 %v6312, %v6311
    %v6346 = vpack.c.b16 %v6314, %v6313
    %6379 = vmatprep.subr.bf16.mxu0 0
    %6380 = vmatpush1.bf16.msra.mxu0 %v6315
    %6381 = vmatprep.subr.bf16.mxu0 0
    %6382 = vmatpush1.bf16.msra.mxu0 %v6316
    %6383 = vmatprep.subr.bf16.mxu0 0
    %6384 = vmatpush1.bf16.msra.mxu0 %v6317
    %6385 = vmatprep.subr.bf16.mxu0 0
    %6386 = vmatpush1.bf16.msra.mxu0 %v6318
    %6387 = vmatprep.subr.bf16.mxu0 0
    %6388 = vmatpush1.bf16.msra.mxu0 %v6319
    %6389 = vmatprep.subr.bf16.mxu0 0
    %6390 = vmatpush1.bf16.msra.mxu0 %v6320
    %6391 = vmatprep.subr.bf16.mxu0 0
    %6392 = vmatpush1.bf16.msra.mxu0 %v6321
    %6393 = vmatprep.subr.bf16.mxu0 0
    %6394 = vmatpush1.bf16.msra.mxu0 %v6322
    %6395 = vmatprep.subr.bf16.mxu0 0
    %6396 = vmatpush1.bf16.msra.mxu0 %v6323
    %6397 = vmatprep.subr.bf16.mxu0 0
    %6398 = vmatpush1.bf16.msra.mxu0 %v6324
    %6399 = vmatprep.subr.bf16.mxu0 0
    %6400 = vmatpush1.bf16.msra.mxu0 %v6325
    %6401 = vmatprep.subr.bf16.mxu0 0
    %6402 = vmatpush1.bf16.msra.mxu0 %v6326
    %6403 = vmatprep.subr.bf16.mxu0 0
    %6404 = vmatpush1.bf16.msra.mxu0 %v6327
    %6405 = vmatprep.subr.bf16.mxu0 0
    %6406 = vmatpush1.bf16.msra.mxu0 %v6328
    %6407 = vmatprep.subr.bf16.mxu0 0
    %6408 = vmatpush1.bf16.msra.mxu0 %v6329
    %6409 = vmatprep.subr.bf16.mxu0 0
    %6410 = vmatpush1.bf16.msra.mxu0 %v6330
    %6411 = vmatprep.mubr.bf16.mxu0 %v6116
    %6412 = vmatmul.mubr.bf16.gmra.mrb[0].mxu0 %v6115
    %v6413 = vpop.f32.mrb[0].mxu0
    %v6414 = vpop.f32.mrb[0].mxu0
    %v6415 = vpop.f32.mrb[0].mxu0
    %v6416 = vpop.f32.mrb[0].mxu0
    %6417 = vmatprep.mubr.bf16.mxu0 %v6120
    %6418 = vmatmul.mubr.bf16.gmra.mrb[0].mxu0 %v6119
    %v6419 = vpop.f32.mrb[0].mxu0
    %v6420 = vpop.f32.mrb[0].mxu0
    %v6421 = vpop.f32.mrb[0].mxu0
    %v6422 = vadd.f32 0.0, %v6421
    %v6423 = vpop.f32.mrb[0].mxu0
    %6424 = vdwg.mxu0
    %6425 = vmatprep.subr.bf16.mxu0 0
    %6426 = vmatpush1.bf16.msra.mxu0 %v6331
    %6427 = vmatprep.subr.bf16.mxu0 0
    %6428 = vmatpush1.bf16.msra.mxu0 %v6332
    %6429 = vmatprep.subr.bf16.mxu0 0
    %6430 = vmatpush1.bf16.msra.mxu0 %v6333
    %6431 = vmatprep.subr.bf16.mxu0 0
    %6432 = vmatpush1.bf16.msra.mxu0 %v6334
    %6433 = vmatprep.subr.bf16.mxu0 0
    %6434 = vmatpush1.bf16.msra.mxu0 %v6335
    %6435 = vmatprep.subr.bf16.mxu0 0
    %6436 = vmatpush1.bf16.msra.mxu0 %v6336
    %6437 = vmatprep.subr.bf16.mxu0 0
    %6438 = vmatpush1.bf16.msra.mxu0 %v6337
    %6439 = vmatprep.subr.bf16.mxu0 0
    %6440 = vmatpush1.bf16.msra.mxu0 %v6338
    %6441 = vmatprep.subr.bf16.mxu0 0
    %6442 = vmatpush1.bf16.msra.mxu0 %v6339
    %6443 = vmatprep.subr.bf16.mxu0 0
    %6444 = vmatpush1.bf16.msra.mxu0 %v6340
    %6445 = vmatprep.subr.bf16.mxu0 0
    %6446 = vmatpush1.bf16.msra.mxu0 %v6341
    %6447 = vmatprep.subr.bf16.mxu0 0
    %6448 = vmatpush1.bf16.msra.mxu0 %v6342
    %6449 = vmatprep.subr.bf16.mxu0 0
    %6450 = vmatpush1.bf16.msra.mxu0 %v6343
    %6451 = vmatprep.subr.bf16.mxu0 0
    %6452 = vmatpush1.bf16.msra.mxu0 %v6344
    %6453 = vmatprep.subr.bf16.mxu0 0
    %6454 = vmatpush1.bf16.msra.mxu0 %v6345
    %6455 = vmatprep.subr.bf16.mxu0 0
    %6456 = vmatpush1.bf16.msra.mxu0 %v6346
    %6457 = vmatprep.mubr.bf16.mxu0 %v6118
    %6458 = vmatmul.mubr.bf16.gmra.mrb[0].mxu0 %v6117
    %v6459 = vpop.f32.mrb[0].mxu0
    %v6460 = vpop.f32.mrb[0].mxu0
    %v6461 = vpop.f32.mrb[0].mxu0
    %v6462 = vpop.f32.mrb[0].mxu0
    %6463 = vmatprep.mubr.bf16.mxu0 %v6122
    %6464 = vmatmul.mubr.bf16.gmra.mrb[0].mxu0 %v6121
    %v6465 = vpop.f32.mrb[0].mxu0
    %v6466 = vpop.f32.mrb[0].mxu0
    %v6467 = vpop.f32.mrb[0].mxu0
    %v6468 = vadd.f32 %v6422, %v6467
    %v6469 = vpop.f32.mrb[0].mxu0
    %6470 = vdwg.mxu0
    %v6471 = vadd.f32 %v5920, %v6468
    %v6472 = vld [vmem:[%s4818 + $0x30] sm:$0xff]
    %v6473 = vld [vmem:[%s4818 + $0x38] sm:$0xff]
    %v6474 = vld [vmem:[%s4818 + $0x70] sm:$0xff]
    %v6475 = vld [vmem:[%s4818 + $0x78] sm:$0xff]
    %v6476 = vld [vmem:[%s4818 + $0xb0] sm:$0xff]
    %v6477 = vld [vmem:[%s4818 + $0xb8] sm:$0xff]
    %v6478 = vld [vmem:[%s4818 + $0xf0] sm:$0xff]
    %v6479 = vld [vmem:[%s4818 + $0xf8] sm:$0xff]
    %v6480 = vld [vmem:[%s4827 + $0xc] sm:$0xf]
    %v6482 = vlaneseq
    %v6483 = vshrl.u32 %v6482, 7
    %v6484 = vsub.s32 0, %v6483
    %v6485 = vrot.slane %v6480, %v6484
    %v6486 = vlaneseq
    %v6487 = vshrl.u32 %v6486, 7
    %v6488 = vsub.s32 1, %v6487
    %v6489 = vrot.slane %v6480, %v6488
    %v6490 = vlaneseq
    %v6491 = vshrl.u32 %v6490, 7
    %v6492 = vsub.s32 2, %v6491
    %v6493 = vrot.slane %v6480, %v6492
    %v6494 = vlaneseq
    %v6495 = vshrl.u32 %v6494, 7
    %v6496 = vsub.s32 3, %v6495
    %v6497 = vrot.slane %v6480, %v6496
    %v6510 = vunpack.c.l.b16 %v6472
    %v6511 = vunpack.c.h.b16 %v6472
    %v6512 = vunpack.c.l.b16 %v6473
    %v6513 = vunpack.c.h.b16 %v6473
    %v6514 = vunpack.c.l.b16 %v6474
    %v6515 = vunpack.c.h.b16 %v6474
    %v6516 = vunpack.c.l.b16 %v6475
    %v6517 = vunpack.c.h.b16 %v6475
    %v6518 = vunpack.c.l.b16 %v6476
    %v6519 = vunpack.c.h.b16 %v6476
    %v6520 = vunpack.c.l.b16 %v6477
    %v6521 = vunpack.c.h.b16 %v6477
    %v6522 = vunpack.c.l.b16 %v6478
    %v6523 = vunpack.c.h.b16 %v6478
    %v6524 = vunpack.c.l.b16 %v6479
    %v6525 = vunpack.c.h.b16 %v6479
    %v6526 = vpack.c.b16 %v6514, %v6510
    %v6527 = vpack.c.b16 %v6515, %v6511
    %v6528 = vpack.c.b16 %v6516, %v6512
    %v6529 = vpack.c.b16 %v6517, %v6513
    %v6530 = vpack.c.b16 %v6522, %v6518
    %v6531 = vpack.c.b16 %v6523, %v6519
    %v6532 = vpack.c.b16 %v6524, %v6520
    %v6533 = vpack.c.b16 %v6525, %v6521
    %6542 = vmatprep.subr.bf16.mxu0 %v6527
    %6543 = vmatpush1.bf16.msra.mxu0 %v6526
    %6544 = vmatprep.subr.bf16.mxu0 %v6531
    %6545 = vmatpush1.bf16.msra.mxu0 %v6530
    %6546 = vmatprep.subr.bf16.mxu0 0
    %6547 = vmatpush1.bf16.msra.mxu0 0
    %6548 = vmatprep.subr.bf16.mxu0 0
    %6549 = vmatpush1.bf16.msra.mxu0 0
    %6550 = vmatprep.subr.bf16.mxu0 0
    %6551 = vmatpush1.bf16.msra.mxu0 0
    %6552 = vmatprep.subr.bf16.mxu0 0
    %6553 = vmatpush1.bf16.msra.mxu0 0
    %6554 = vmatprep.subr.bf16.mxu0 0
    %6555 = vmatpush1.bf16.msra.mxu0 0
    %6556 = vmatprep.subr.bf16.mxu0 0
    %6557 = vmatpush1.bf16.msra.mxu0 0
    %6558 = vmatprep.subr.bf16.mxu0 0
    %6559 = vmatpush1.bf16.msra.mxu0 0
    %6560 = vmatprep.subr.bf16.mxu0 0
    %6561 = vmatpush1.bf16.msra.mxu0 0
    %6562 = vmatprep.subr.bf16.mxu0 0
    %6563 = vmatpush1.bf16.msra.mxu0 0
    %6564 = vmatprep.subr.bf16.mxu0 0
    %6565 = vmatpush1.bf16.msra.mxu0 0
    %6566 = vmatprep.subr.bf16.mxu0 0
    %6567 = vmatpush1.bf16.msra.mxu0 0
    %6568 = vmatprep.subr.bf16.mxu0 0
    %6569 = vmatpush1.bf16.msra.mxu0 0
    %6570 = vmatprep.subr.bf16.mxu0 0
    %6571 = vmatpush1.bf16.msra.mxu0 0
    %6572 = vmatprep.subr.bf16.mxu0 0
    %6573 = vmatpush1.bf16.msra.mxu0 0
    %6574 = vmatprep.mubr.bf16.mxu0 0
    %6575 = vmatmul.mubr.bf16.gmra.mrb[0].mxu0 %v4891
    %v6576 = vpop.f32.mrb[0].mxu0
    %v6577 = vadd.f32 %v6485, %v6576
    %v6578 = vpop.f32.mrb[0].mxu0
    %v6579 = vadd.f32 %v6489, %v6578
    %v6580 = vpop.f32.mrb[0].mxu0
    %v6581 = vadd.f32 %v6485, %v6580
    %v6582 = vpop.f32.mrb[0].mxu0
    %v6583 = vadd.f32 %v6489, %v6582
    %6584 = vmatprep.mubr.bf16.mxu0 0
    %6585 = vmatmul.mubr.bf16.gmra.mrb[0].mxu0 %v4894
    %v6586 = vpop.f32.mrb[0].mxu0
    %v6587 = vadd.f32 %v6485, %v6586
    %v6588 = vpop.f32.mrb[0].mxu0
    %v6589 = vadd.f32 %v6489, %v6588
    %v6590 = vpop.f32.mrb[0].mxu0
    %v6591 = vadd.f32 %v6485, %v6590
    %v6592 = vpop.f32.mrb[0].mxu0
    %v6593 = vadd.f32 %v6489, %v6592
    %6594 = vdwg.mxu0
    %6595 = vmatprep.subr.bf16.mxu0 %v6529
    %6596 = vmatpush1.bf16.msra.mxu0 %v6528
    %6597 = vmatprep.subr.bf16.mxu0 %v6533
    %6598 = vmatpush1.bf16.msra.mxu0 %v6532
    %6599 = vmatprep.subr.bf16.mxu0 0
    %6600 = vmatpush1.bf16.msra.mxu0 0
    %6601 = vmatprep.subr.bf16.mxu0 0
    %6602 = vmatpush1.bf16.msra.mxu0 0
    %6603 = vmatprep.subr.bf16.mxu0 0
    %6604 = vmatpush1.bf16.msra.mxu0 0
    %6605 = vmatprep.subr.bf16.mxu0 0
    %6606 = vmatpush1.bf16.msra.mxu0 0
    %6607 = vmatprep.subr.bf16.mxu0 0
    %6608 = vmatpush1.bf16.msra.mxu0 0
    %6609 = vmatprep.subr.bf16.mxu0 0
    %6610 = vmatpush1.bf16.msra.mxu0 0
    %6611 = vmatprep.subr.bf16.mxu0 0
    %6612 = vmatpush1.bf16.msra.mxu0 0
    %6613 = vmatprep.subr.bf16.mxu0 0
    %6614 = vmatpush1.bf16.msra.mxu0 0
    %6615 = vmatprep.subr.bf16.mxu0 0
    %6616 = vmatpush1.bf16.msra.mxu0 0
    %6617 = vmatprep.subr.bf16.mxu0 0
    %6618 = vmatpush1.bf16.msra.mxu0 0
    %6619 = vmatprep.subr.bf16.mxu0 0
    %6620 = vmatpush1.bf16.msra.mxu0 0
    %6621 = vmatprep.subr.bf16.mxu0 0
    %6622 = vmatpush1.bf16.msra.mxu0 0
    %6623 = vmatprep.subr.bf16.mxu0 0
    %6624 = vmatpush1.bf16.msra.mxu0 0
    %6625 = vmatprep.subr.bf16.mxu0 0
    %6626 = vmatpush1.bf16.msra.mxu0 0
    %6627 = vmatprep.mubr.bf16.mxu0 0
    %6628 = vmatmul.mubr.bf16.gmra.mrb[0].mxu0 %v4891
    %v6629 = vpop.f32.mrb[0].mxu0
    %v6630 = vadd.f32 %v6493, %v6629
    %v6631 = vpop.f32.mrb[0].mxu0
    %v6632 = vadd.f32 %v6497, %v6631
    %v6633 = vpop.f32.mrb[0].mxu0
    %v6634 = vadd.f32 %v6493, %v6633
    %v6635 = vpop.f32.mrb[0].mxu0
    %v6636 = vadd.f32 %v6497, %v6635
    %6637 = vmatprep.mubr.bf16.mxu0 0
    %6638 = vmatmul.mubr.bf16.gmra.mrb[0].mxu0 %v4894
    %v6639 = vpop.f32.mrb[0].mxu0
    %v6640 = vadd.f32 %v6493, %v6639
    %v6641 = vpop.f32.mrb[0].mxu0
    %v6642 = vadd.f32 %v6497, %v6641
    %v6643 = vpop.f32.mrb[0].mxu0
    %v6644 = vadd.f32 %v6493, %v6643
    %v6645 = vpop.f32.mrb[0].mxu0
    %v6646 = vadd.f32 %v6497, %v6645
    %6647 = vdwg.mxu0
    %v6648 = vmax.f32 %v6577, 0.0
    %v6649 = vmax.f32 %v6579, 0.0
    %v6650 = vmax.f32 %v6630, 0.0
    %v6651 = vmax.f32 %v6632, 0.0
    %v6652 = vmax.f32 %v6581, 0.0
    %v6653 = vmax.f32 %v6583, 0.0
    %v6654 = vmax.f32 %v6634, 0.0
    %v6655 = vmax.f32 %v6636, 0.0
    %v6656 = vmax.f32 %v6587, 0.0
    %v6657 = vmax.f32 %v6589, 0.0
    %v6658 = vmax.f32 %v6640, 0.0
    %v6659 = vmax.f32 %v6642, 0.0
    %v6660 = vmax.f32 %v6591, 0.0
    %v6661 = vmax.f32 %v6593, 0.0
    %v6662 = vmax.f32 %v6644, 0.0
    %v6663 = vmax.f32 %v6646, 0.0
    %v6664 = vpack.c.bf16 %v6652, %v6648
    %v6665 = vpack.c.bf16 %v6653, %v6649
    %v6666 = vpack.c.bf16 %v6654, %v6650
    %v6667 = vpack.c.bf16 %v6655, %v6651
    %v6668 = vpack.c.bf16 %v6660, %v6656
    %v6669 = vpack.c.bf16 %v6661, %v6657
    %v6670 = vpack.c.bf16 %v6662, %v6658
    %v6671 = vpack.c.bf16 %v6663, %v6659
    %v6672 = vld [vmem:[%s5026 + $0x300] sm:$0xf]
    %v6673 = vld [vmem:[%s5026 + $0x304] sm:$0xf]
    %v6674 = vld [vmem:[%s5026 + $0x308] sm:$0xf]
    %v6675 = vld [vmem:[%s5026 + $0x30c] sm:$0xf]
    %v6676 = vld [vmem:[%s5026 + $0x310] sm:$0xf]
    %v6677 = vld [vmem:[%s5026 + $0x314] sm:$0xf]
    %v6678 = vld [vmem:[%s5026 + $0x318] sm:$0xf]
    %v6679 = vld [vmem:[%s5026 + $0x31c] sm:$0xf]
    %v6680 = vld [vmem:[%s5026 + $0x320] sm:$0xf]
    %v6681 = vld [vmem:[%s5026 + $0x324] sm:$0xf]
    %v6682 = vld [vmem:[%s5026 + $0x328] sm:$0xf]
    %v6683 = vld [vmem:[%s5026 + $0x32c] sm:$0xf]
    %v6684 = vld [vmem:[%s5026 + $0x330] sm:$0xf]
    %v6685 = vld [vmem:[%s5026 + $0x334] sm:$0xf]
    %v6686 = vld [vmem:[%s5026 + $0x338] sm:$0xf]
    %v6687 = vld [vmem:[%s5026 + $0x33c] sm:$0xf]
    %v6688 = vld [vmem:[%s5026 + $0x340] sm:$0xf]
    %v6689 = vld [vmem:[%s5026 + $0x344] sm:$0xf]
    %v6690 = vld [vmem:[%s5026 + $0x348] sm:$0xf]
    %v6691 = vld [vmem:[%s5026 + $0x34c] sm:$0xf]
    %v6692 = vld [vmem:[%s5026 + $0x350] sm:$0xf]
    %v6693 = vld [vmem:[%s5026 + $0x354] sm:$0xf]
    %v6694 = vld [vmem:[%s5026 + $0x358] sm:$0xf]
    %v6695 = vld [vmem:[%s5026 + $0x35c] sm:$0xf]
    %v6696 = vld [vmem:[%s5026 + $0x360] sm:$0xf]
    %v6697 = vld [vmem:[%s5026 + $0x364] sm:$0xf]
    %v6698 = vld [vmem:[%s5026 + $0x368] sm:$0xf]
    %v6699 = vld [vmem:[%s5026 + $0x36c] sm:$0xf]
    %v6700 = vld [vmem:[%s5026 + $0x370] sm:$0xf]
    %v6701 = vld [vmem:[%s5026 + $0x374] sm:$0xf]
    %v6702 = vld [vmem:[%s5026 + $0x378] sm:$0xf]
    %v6703 = vld [vmem:[%s5026 + $0x37c] sm:$0xf]
    %v6704 = vld [vmem:[%s5026 + $0x380] sm:$0xf]
    %v6705 = vld [vmem:[%s5026 + $0x384] sm:$0xf]
    %v6706 = vld [vmem:[%s5026 + $0x388] sm:$0xf]
    %v6707 = vld [vmem:[%s5026 + $0x38c] sm:$0xf]
    %v6708 = vld [vmem:[%s5026 + $0x390] sm:$0xf]
    %v6709 = vld [vmem:[%s5026 + $0x394] sm:$0xf]
    %v6710 = vld [vmem:[%s5026 + $0x398] sm:$0xf]
    %v6711 = vld [vmem:[%s5026 + $0x39c] sm:$0xf]
    %v6712 = vld [vmem:[%s5026 + $0x3a0] sm:$0xf]
    %v6713 = vld [vmem:[%s5026 + $0x3a4] sm:$0xf]
    %v6714 = vld [vmem:[%s5026 + $0x3a8] sm:$0xf]
    %v6715 = vld [vmem:[%s5026 + $0x3ac] sm:$0xf]
    %v6716 = vld [vmem:[%s5026 + $0x3b0] sm:$0xf]
    %v6717 = vld [vmem:[%s5026 + $0x3b4] sm:$0xf]
    %v6718 = vld [vmem:[%s5026 + $0x3b8] sm:$0xf]
    %v6719 = vld [vmem:[%s5026 + $0x3bc] sm:$0xf]
    %v6720 = vld [vmem:[%s5026 + $0x3c0] sm:$0xf]
    %v6721 = vld [vmem:[%s5026 + $0x3c4] sm:$0xf]
    %v6722 = vld [vmem:[%s5026 + $0x3c8] sm:$0xf]
    %v6723 = vld [vmem:[%s5026 + $0x3cc] sm:$0xf]
    %v6724 = vld [vmem:[%s5026 + $0x3d0] sm:$0xf]
    %v6725 = vld [vmem:[%s5026 + $0x3d4] sm:$0xf]
    %v6726 = vld [vmem:[%s5026 + $0x3d8] sm:$0xf]
    %v6727 = vld [vmem:[%s5026 + $0x3dc] sm:$0xf]
    %v6728 = vld [vmem:[%s5026 + $0x3e0] sm:$0xf]
    %v6729 = vld [vmem:[%s5026 + $0x3e4] sm:$0xf]
    %v6730 = vld [vmem:[%s5026 + $0x3e8] sm:$0xf]
    %v6731 = vld [vmem:[%s5026 + $0x3ec] sm:$0xf]
    %v6732 = vld [vmem:[%s5026 + $0x3f0] sm:$0xf]
    %v6733 = vld [vmem:[%s5026 + $0x3f4] sm:$0xf]
    %v6734 = vld [vmem:[%s5026 + $0x3f8] sm:$0xf]
    %v6735 = vld [vmem:[%s5026 + $0x3fc] sm:$0xf]
    %v6800 = vunpack.c.l.b16 %v6672
    %v6801 = vunpack.c.l.b16 %v6673
    %v6802 = vunpack.c.l.b16 %v6674
    %v6803 = vunpack.c.l.b16 %v6675
    %v6804 = vunpack.c.l.b16 %v6676
    %v6805 = vunpack.c.l.b16 %v6677
    %v6806 = vunpack.c.l.b16 %v6678
    %v6807 = vunpack.c.l.b16 %v6679
    %v6808 = vunpack.c.l.b16 %v6680
    %v6809 = vunpack.c.l.b16 %v6681
    %v6810 = vunpack.c.l.b16 %v6682
    %v6811 = vunpack.c.l.b16 %v6683
    %v6812 = vunpack.c.l.b16 %v6684
    %v6813 = vunpack.c.l.b16 %v6685
    %v6814 = vunpack.c.l.b16 %v6686
    %v6815 = vunpack.c.l.b16 %v6687
    %v6816 = vunpack.c.l.b16 %v6688
    %v6817 = vunpack.c.l.b16 %v6689
    %v6818 = vunpack.c.l.b16 %v6690
    %v6819 = vunpack.c.l.b16 %v6691
    %v6820 = vunpack.c.l.b16 %v6692
    %v6821 = vunpack.c.l.b16 %v6693
    %v6822 = vunpack.c.l.b16 %v6694
    %v6823 = vunpack.c.l.b16 %v6695
    %v6824 = vunpack.c.l.b16 %v6696
    %v6825 = vunpack.c.l.b16 %v6697
    %v6826 = vunpack.c.l.b16 %v6698
    %v6827 = vunpack.c.l.b16 %v6699
    %v6828 = vunpack.c.l.b16 %v6700
    %v6829 = vunpack.c.l.b16 %v6701
    %v6830 = vunpack.c.l.b16 %v6702
    %v6831 = vunpack.c.l.b16 %v6703
    %v6832 = vunpack.c.l.b16 %v6704
    %v6833 = vunpack.c.l.b16 %v6705
    %v6834 = vunpack.c.l.b16 %v6706
    %v6835 = vunpack.c.l.b16 %v6707
    %v6836 = vunpack.c.l.b16 %v6708
    %v6837 = vunpack.c.l.b16 %v6709
    %v6838 = vunpack.c.l.b16 %v6710
    %v6839 = vunpack.c.l.b16 %v6711
    %v6840 = vunpack.c.l.b16 %v6712
    %v6841 = vunpack.c.l.b16 %v6713
    %v6842 = vunpack.c.l.b16 %v6714
    %v6843 = vunpack.c.l.b16 %v6715
    %v6844 = vunpack.c.l.b16 %v6716
    %v6845 = vunpack.c.l.b16 %v6717
    %v6846 = vunpack.c.l.b16 %v6718
    %v6847 = vunpack.c.l.b16 %v6719
    %v6848 = vunpack.c.l.b16 %v6720
    %v6849 = vunpack.c.l.b16 %v6721
    %v6850 = vunpack.c.l.b16 %v6722
    %v6851 = vunpack.c.l.b16 %v6723
    %v6852 = vunpack.c.l.b16 %v6724
    %v6853 = vunpack.c.l.b16 %v6725
    %v6854 = vunpack.c.l.b16 %v6726
    %v6855 = vunpack.c.l.b16 %v6727
    %v6856 = vunpack.c.l.b16 %v6728
    %v6857 = vunpack.c.l.b16 %v6729
    %v6858 = vunpack.c.l.b16 %v6730
    %v6859 = vunpack.c.l.b16 %v6731
    %v6860 = vunpack.c.l.b16 %v6732
    %v6861 = vunpack.c.l.b16 %v6733
    %v6862 = vunpack.c.l.b16 %v6734
    %v6863 = vunpack.c.l.b16 %v6735
    %v6864 = vpack.c.b16 %v6801, %v6800
    %v6865 = vpack.c.b16 %v6803, %v6802
    %v6866 = vpack.c.b16 %v6805, %v6804
    %v6867 = vpack.c.b16 %v6807, %v6806
    %v6868 = vpack.c.b16 %v6809, %v6808
    %v6869 = vpack.c.b16 %v6811, %v6810
    %v6870 = vpack.c.b16 %v6813, %v6812
    %v6871 = vpack.c.b16 %v6815, %v6814
    %v6872 = vpack.c.b16 %v6817, %v6816
    %v6873 = vpack.c.b16 %v6819, %v6818
    %v6874 = vpack.c.b16 %v6821, %v6820
    %v6875 = vpack.c.b16 %v6823, %v6822
    %v6876 = vpack.c.b16 %v6825, %v6824
    %v6877 = vpack.c.b16 %v6827, %v6826
    %v6878 = vpack.c.b16 %v6829, %v6828
    %v6879 = vpack.c.b16 %v6831, %v6830
    %v6880 = vpack.c.b16 %v6833, %v6832
    %v6881 = vpack.c.b16 %v6835, %v6834
    %v6882 = vpack.c.b16 %v6837, %v6836
    %v6883 = vpack.c.b16 %v6839, %v6838
    %v6884 = vpack.c.b16 %v6841, %v6840
    %v6885 = vpack.c.b16 %v6843, %v6842
    %v6886 = vpack.c.b16 %v6845, %v6844
    %v6887 = vpack.c.b16 %v6847, %v6846
    %v6888 = vpack.c.b16 %v6849, %v6848
    %v6889 = vpack.c.b16 %v6851, %v6850
    %v6890 = vpack.c.b16 %v6853, %v6852
    %v6891 = vpack.c.b16 %v6855, %v6854
    %v6892 = vpack.c.b16 %v6857, %v6856
    %v6893 = vpack.c.b16 %v6859, %v6858
    %v6894 = vpack.c.b16 %v6861, %v6860
    %v6895 = vpack.c.b16 %v6863, %v6862
    %6928 = vmatprep.subr.bf16.mxu0 0
    %6929 = vmatpush1.bf16.msra.mxu0 %v6864
    %6930 = vmatprep.subr.bf16.mxu0 0
    %6931 = vmatpush1.bf16.msra.mxu0 %v6865
    %6932 = vmatprep.subr.bf16.mxu0 0
    %6933 = vmatpush1.bf16.msra.mxu0 %v6866
    %6934 = vmatprep.subr.bf16.mxu0 0
    %6935 = vmatpush1.bf16.msra.mxu0 %v6867
    %6936 = vmatprep.subr.bf16.mxu0 0
    %6937 = vmatpush1.bf16.msra.mxu0 %v6868
    %6938 = vmatprep.subr.bf16.mxu0 0
    %6939 = vmatpush1.bf16.msra.mxu0 %v6869
    %6940 = vmatprep.subr.bf16.mxu0 0
    %6941 = vmatpush1.bf16.msra.mxu0 %v6870
    %6942 = vmatprep.subr.bf16.mxu0 0
    %6943 = vmatpush1.bf16.msra.mxu0 %v6871
    %6944 = vmatprep.subr.bf16.mxu0 0
    %6945 = vmatpush1.bf16.msra.mxu0 %v6872
    %6946 = vmatprep.subr.bf16.mxu0 0
    %6947 = vmatpush1.bf16.msra.mxu0 %v6873
    %6948 = vmatprep.subr.bf16.mxu0 0
    %6949 = vmatpush1.bf16.msra.mxu0 %v6874
    %6950 = vmatprep.subr.bf16.mxu0 0
    %6951 = vmatpush1.bf16.msra.mxu0 %v6875
    %6952 = vmatprep.subr.bf16.mxu0 0
    %6953 = vmatpush1.bf16.msra.mxu0 %v6876
    %6954 = vmatprep.subr.bf16.mxu0 0
    %6955 = vmatpush1.bf16.msra.mxu0 %v6877
    %6956 = vmatprep.subr.bf16.mxu0 0
    %6957 = vmatpush1.bf16.msra.mxu0 %v6878
    %6958 = vmatprep.subr.bf16.mxu0 0
    %6959 = vmatpush1.bf16.msra.mxu0 %v6879
    %6960 = vmatprep.mubr.bf16.mxu0 %v6665
    %6961 = vmatmul.mubr.bf16.gmra.mrb[0].mxu0 %v6664
    %v6962 = vpop.f32.mrb[0].mxu0
    %v6963 = vpop.f32.mrb[0].mxu0
    %v6964 = vpop.f32.mrb[0].mxu0
    %v6965 = vpop.f32.mrb[0].mxu0
    %6966 = vmatprep.mubr.bf16.mxu0 %v6669
    %6967 = vmatmul.mubr.bf16.gmra.mrb[0].mxu0 %v6668
    %v6968 = vpop.f32.mrb[0].mxu0
    %v6969 = vpop.f32.mrb[0].mxu0
    %v6970 = vpop.f32.mrb[0].mxu0
    %v6971 = vadd.f32 0.0, %v6970
    %v6972 = vpop.f32.mrb[0].mxu0
    %6973 = vdwg.mxu0
    %6974 = vmatprep.subr.bf16.mxu0 0
    %6975 = vmatpush1.bf16.msra.mxu0 %v6880
    %6976 = vmatprep.subr.bf16.mxu0 0
    %6977 = vmatpush1.bf16.msra.mxu0 %v6881
    %6978 = vmatprep.subr.bf16.mxu0 0
    %6979 = vmatpush1.bf16.msra.mxu0 %v6882
    %6980 = vmatprep.subr.bf16.mxu0 0
    %6981 = vmatpush1.bf16.msra.mxu0 %v6883
    %6982 = vmatprep.subr.bf16.mxu0 0
    %6983 = vmatpush1.bf16.msra.mxu0 %v6884
    %6984 = vmatprep.subr.bf16.mxu0 0
    %6985 = vmatpush1.bf16.msra.mxu0 %v6885
    %6986 = vmatprep.subr.bf16.mxu0 0
    %6987 = vmatpush1.bf16.msra.mxu0 %v6886
    %6988 = vmatprep.subr.bf16.mxu0 0
    %6989 = vmatpush1.bf16.msra.mxu0 %v6887
    %6990 = vmatprep.subr.bf16.mxu0 0
    %6991 = vmatpush1.bf16.msra.mxu0 %v6888
    %6992 = vmatprep.subr.bf16.mxu0 0
    %6993 = vmatpush1.bf16.msra.mxu0 %v6889
    %6994 = vmatprep.subr.bf16.mxu0 0
    %6995 = vmatpush1.bf16.msra.mxu0 %v6890
    %6996 = vmatprep.subr.bf16.mxu0 0
    %6997 = vmatpush1.bf16.msra.mxu0 %v6891
    %6998 = vmatprep.subr.bf16.mxu0 0
    %6999 = vmatpush1.bf16.msra.mxu0 %v6892
    %7000 = vmatprep.subr.bf16.mxu0 0
    %7001 = vmatpush1.bf16.msra.mxu0 %v6893
    %7002 = vmatprep.subr.bf16.mxu0 0
    %7003 = vmatpush1.bf16.msra.mxu0 %v6894
    %7004 = vmatprep.subr.bf16.mxu0 0
    %7005 = vmatpush1.bf16.msra.mxu0 %v6895
    %7006 = vmatprep.mubr.bf16.mxu0 %v6667
    %7007 = vmatmul.mubr.bf16.gmra.mrb[0].mxu0 %v6666
    %v7008 = vpop.f32.mrb[0].mxu0
    %v7009 = vpop.f32.mrb[0].mxu0
    %v7010 = vpop.f32.mrb[0].mxu0
    %v7011 = vpop.f32.mrb[0].mxu0
    %7012 = vmatprep.mubr.bf16.mxu0 %v6671
    %7013 = vmatmul.mubr.bf16.gmra.mrb[0].mxu0 %v6670
    %v7014 = vpop.f32.mrb[0].mxu0
    %v7015 = vpop.f32.mrb[0].mxu0
    %v7016 = vpop.f32.mrb[0].mxu0
    %v7017 = vadd.f32 %v6971, %v7016
    %v7018 = vpop.f32.mrb[0].mxu0
    %7019 = vdwg.mxu0
    %v7020 = vadd.f32 %v6471, %v7017
    %s7021 = scalar_lea.vmem %s16, 1
    %v7022 = vld [vmem:[%s7021] sm:$0x1]
    %v7024 = vlaneseq
    %v7025 = vshrl.u32 %v7024, 7
    %v7026 = vsub.s32 0, %v7025
    %v7027 = vrot.slane %v7022, %v7026
    %v7029 = vadd.f32 %v7020, %v7027
    %v7030 = vadd.f32 %v4815, %v7029
    %s7031 = scalar_lea.vmem %s19, 1
    %v7032 = vld [vmem:[%s7031] sm:$0x1]
    %s7033 = scalar_lea.vmem %s20, 1
    %v7034 = vld [vmem:[%s7033] sm:$0x1]
    %v7035 = vsel %vm241, %v7030, 0.0
    %7036 = vadd.xlane.f32.xlu0 %v7035
    %v7037 = vpop.xlane.xlu0 %7036
    %v7038 = vmul.f32 %v7037, %v1292
    %v7039 = vsub.f32 %v7030, %v7038
    %v7040 = vmul.f32 %v7039, %v7039
    %v7041 = vsel %vm241, %v7040, 0.0
    %7042 = vadd.xlane.f32.xlu0 %v7041
    %v7043 = vpop.xlane.xlu0 %7042
    %v7044 = vmul.f32 %v7043, %v1292
    %v7045 = vadd.f32 %v7044, 1e-05
    %v7046 = vrsqrt.pop %v7045
    %v7047 = vmul.f32 %v7039, %v7046
    %v7049 = vlaneseq
    %v7050 = vshrl.u32 %v7049, 7
    %v7051 = vsub.s32 0, %v7050
    %v7052 = vrot.slane %v7032, %v7051
    %v7054 = vmul.f32 %v7047, %v7052
    %v7056 = vlaneseq
    %v7057 = vshrl.u32 %v7056, 7
    %v7058 = vsub.s32 0, %v7057
    %v7059 = vrot.slane %v7034, %v7058
    %v7061 = vadd.f32 %v7054, %v7059
    %v7062 = vpack.c.bf16 %v7061, %v7061
    %v7063 = vld [vmem:[%s21] sm:$0xf]
    %v7064 = vld [vmem:[%s21 + $0x4] sm:$0xf]
    %v7065 = vld [vmem:[%s21 + $0x8] sm:$0xf]
    %v7066 = vld [vmem:[%s21 + $0xc] sm:$0xf]
    %v7067 = vld [vmem:[%s22] sm:$0x1]
    %v7069 = vlaneseq
    %v7070 = vshrl.u32 %v7069, 7
    %v7071 = vsub.s32 0, %v7070
    %v7072 = vrot.slane %v7067, %v7071
    %v7078 = vunpack.c.l.b16 %v7063
    %v7079 = vunpack.c.l.b16 %v7064
    %v7080 = vunpack.c.l.b16 %v7065
    %v7081 = vunpack.c.l.b16 %v7066
    %v7082 = vpack.c.b16 %v7079, %v7078
    %v7083 = vpack.c.b16 %v7081, %v7080
    %v7087 = vsel %vm241, %v7062, 0
    %7089 = vmatprep.subr.bf16.mxu0 0
    %7090 = vmatpush1.bf16.msra.mxu0 %v7082
    %7091 = vmatprep.subr.bf16.mxu0 0
    %7092 = vmatpush1.bf16.msra.mxu0 %v7083
    %7093 = vmatprep.subr.bf16.mxu0 0
    %7094 = vmatpush1.bf16.msra.mxu0 0
    %7095 = vmatprep.subr.bf16.mxu0 0
    %7096 = vmatpush1.bf16.msra.mxu0 0
    %7097 = vmatprep.subr.bf16.mxu0 0
    %7098 = vmatpush1.bf16.msra.mxu0 0
    %7099 = vmatprep.subr.bf16.mxu0 0
    %7100 = vmatpush1.bf16.msra.mxu0 0
    %7101 = vmatprep.subr.bf16.mxu0 0
    %7102 = vmatpush1.bf16.msra.mxu0 0
    %7103 = vmatprep.subr.bf16.mxu0 0
    %7104 = vmatpush1.bf16.msra.mxu0 0
    %7105 = vmatprep.subr.bf16.mxu0 0
    %7106 = vmatpush1.bf16.msra.mxu0 0
    %7107 = vmatprep.subr.bf16.mxu0 0
    %7108 = vmatpush1.bf16.msra.mxu0 0
    %7109 = vmatprep.subr.bf16.mxu0 0
    %7110 = vmatpush1.bf16.msra.mxu0 0
    %7111 = vmatprep.subr.bf16.mxu0 0
    %7112 = vmatpush1.bf16.msra.mxu0 0
    %7113 = vmatprep.subr.bf16.mxu0 0
    %7114 = vmatpush1.bf16.msra.mxu0 0
    %7115 = vmatprep.subr.bf16.mxu0 0
    %7116 = vmatpush1.bf16.msra.mxu0 0
    %7117 = vmatprep.subr.bf16.mxu0 0
    %7118 = vmatpush1.bf16.msra.mxu0 0
    %7119 = vmatprep.subr.bf16.mxu0 0
    %7120 = vmatpush1.bf16.msra.mxu0 0
    %7121 = vmatprep.mubr.bf16.mxu0 0
    %7122 = vmatmul.mubr.bf16.gmra.mrb[0].mxu0 %v7087
    %v7123 = vpop.f32.mrb[0].mxu0
    %v7124 = vadd.f32 %v7072, %v7123
    %v7125 = vpop.f32.mrb[0].mxu0
    %v7126 = vpop.f32.mrb[0].mxu0
    %v7127 = vpop.f32.mrb[0].mxu0
    %7128 = vdwg.mxu0
    %7129 = vst [vmem:[#allocation2] sm:$0xff] %v7124
    // Predicated region
    $region94: #{tpu_custom_call.1} parent=1 // pred_check
      _
    $region95: #{tpu_custom_call.1} parent=1 // pred_check_branch
      %7131 = sbr.rel (0) target = $region97
    $region96: #{tpu_custom_call.1} parent=1 // pred_region
      %s7133 = ssub.s32 128, 128
      %7134 = vsyncadd [#allocation3], %s7133
      %s7136 = sshll.u32 [#allocation2], 4
      %s7137 = int_to_ptr.vmem [resolvable:$true] %s7136
      %7139 = dma.vmem_to_hbm [thread:$0]  %s7137, 128, %s23, [#allocation3]
    $region97: #{tpu_custom_call.1} parent=1 // pred_fallthru
      _
    // Predicated region
    $region98: #{tpu_custom_call.1} parent=1 // pred_check
      _
    $region99: #{tpu_custom_call.1} parent=1 // pred_check_branch
      %7141 = sbr.rel (0) target = $region101
    $region100: #{tpu_custom_call.1} parent=1 // pred_region
      %7142 = dma.done [#allocation3], 128
    $region101: #{tpu_custom_call.1} parent=1 // pred_fallthru
      _
    %7143 = vsyncpa [#allocation3], 1

</llo_original>
